<compile_context>
chip_gen: v7x
topology: tpu7x:2x2x1
jax: 0.10.0
libtpu: 0.0.40
codegen_flags: <defaults>
</compile_context>

<pallas_src>
import jax
import jax.numpy as jnp
from jax import lax
from jax.experimental import pallas as pl
from jax.experimental.pallas import tpu as pltpu

EPS = 1e-5
LANE = 128


def _round_up(x, m):
    return ((x + m - 1) // m) * m


def _pick_tile(dim, pref):
    """Use the preferred tile if it divides dim, else fall back to the full dim."""
    return pref if dim % pref == 0 else dim


def _make_layer_kernel(apply_bn_relu: bool, compute_stats: bool):
    """Kernel: [BN+ReLU] -> x @ W (K-tiled, f32 acc) -> +bias -> out (+ sum/sumsq)."""

    def kernel(*refs):
        if apply_bn_relu:
            x_ref, scale_ref, shift_ref, w_ref, b_ref = refs[:5]
            rest = refs[5:]
        else:
            x_ref, w_ref, b_ref = refs[:3]
            scale_ref = shift_ref = None
            rest = refs[3:]
        if compute_stats:
            out_ref, stats_ref, acc_ref = rest
        else:
            (out_ref, acc_ref) = rest
            stats_ref = None

        k = pl.program_id(1)
        nk = pl.num_programs(1)

        @pl.when(k == 0)
        def _init():
            acc_ref[...] = jnp.zeros_like(acc_ref)

        a = x_ref[...]  # f32 tile (TILE_N, TILE_K)
        if apply_bn_relu:
            # Folded BatchNorm (training-mode stats) + ReLU, kept in f32 on the VPU.
            a = jnp.maximum(a * scale_ref[...] + shift_ref[...], 0.0)

        # bf16 MXU matmul, f32 accumulation in VMEM scratch.
        acc_ref[...] += jnp.dot(
            a.astype(jnp.bfloat16), w_ref[...],
            preferred_element_type=jnp.float32)

        @pl.when(k == nk - 1)
        def _finalize():
            h = acc_ref[...] + b_ref[...]
            out_ref[...] = h.astype(out_ref.dtype)
            if compute_stats:
                s = jnp.sum(h, axis=0, keepdims=True)       # (1, F)
                ss = jnp.sum(h * h, axis=0, keepdims=True)   # (1, F)
                stats_ref[...] = jnp.concatenate([s, ss], axis=0)[None, :, :]

    return kernel


def _fused_layer(x, w_bf16, b, scale=None, shift=None, *, compute_stats,
                 tile_n_pref=256, tile_k_pref=256):
    """One (BN+ReLU ->) Linear layer as a batch-tiled, K-streamed pallas_call."""
    n, kdim = x.shape
    kdim_w, fout = w_bf16.shape
    assert kdim == kdim_w
    apply_bn_relu = scale is not None

    tile_n = _pick_tile(n, tile_n_pref)
    tile_k = _pick_tile(kdim, tile_k_pref)
    grid = (n // tile_n, kdim // tile_k)
    num_n = grid[0]

    in_specs = [pl.BlockSpec((tile_n, tile_k), lambda i, k: (i, k))]
    args = [x]
    if apply_bn_relu:
        in_specs += [pl.BlockSpec((1, tile_k), lambda i, k: (0, k)),
                     pl.BlockSpec((1, tile_k), lambda i, k: (0, k))]
        args += [scale, shift]
    in_specs += [pl.BlockSpec((tile_k, fout), lambda i, k: (k, 0)),
                 pl.BlockSpec((1, fout), lambda i, k: (0, 0))]
    args += [w_bf16, b]

    out_specs = [pl.BlockSpec((tile_n, fout), lambda i, k: (i, 0))]
    out_shape = [jax.ShapeDtypeStruct((n, fout), jnp.float32)]
    if compute_stats:
        out_specs.append(pl.BlockSpec((1, 2, fout), lambda i, k: (i, 0, 0)))
        out_shape.append(jax.ShapeDtypeStruct((num_n, 2, fout), jnp.float32))

    flops = 2 * n * kdim * fout
    bytes_accessed = (n * kdim * 4) + (kdim * fout * 2) + (n * fout * 4)

    outs = pl.pallas_call(
        _make_layer_kernel(apply_bn_relu, compute_stats),
        grid=grid,
        in_specs=in_specs,
        out_specs=out_specs,
        out_shape=out_shape,
        scratch_shapes=[pltpu.VMEM((tile_n, fout), jnp.float32)],
        compiler_params=pltpu.CompilerParams(
            dimension_semantics=("parallel", "arbitrary"),
            vmem_limit_bytes=48 * 1024 * 1024),
        cost_estimate=pl.CostEstimate(
            flops=flops, transcendentals=0, bytes_accessed=bytes_accessed),
    )(*args)

    if compute_stats:
        return outs[0], outs[1]
    return outs[0], None


def _finalize_bn(stats, n, gamma, beta):
    """Turn per-tile (sum, sumsq) into folded BN affine: scale, shift (f32)."""
    sums = jnp.sum(stats, axis=0)                       # (2, F)
    mean = sums[0] / n
    var = jnp.maximum(sums[1] / n - mean * mean, 0.0)   # biased (training) variance
    inv = lax.rsqrt(var + EPS)
    scale = gamma[0] * inv
    shift = beta[0] - mean * scale
    return scale[None, :], shift[None, :]


def simclr_projection_head(x, params):
    """x: [N, input_dim] f32.  Linear weights stored as [in, out]."""
    n, input_dim = x.shape
    h_dim = params["w1"].shape[1]
    out_dim = params["w3"].shape[1]
    assert h_dim % LANE == 0, "hidden_dim must be a multiple of 128"

    in_p = _round_up(input_dim, LANE)
    out_p = _round_up(out_dim, LANE)

    # Lane-pad narrow dims with zeros (mathematically exact) and pre-cast weights
    # to bf16 for the MXU.
    x_p = jnp.pad(x, ((0, 0), (0, in_p - input_dim)))
    w1 = jnp.pad(params["w1"], ((0, in_p - input_dim), (0, 0))).astype(jnp.bfloat16)
    w2 = params["w2"].astype(jnp.bfloat16)
    w3 = jnp.pad(params["w3"], ((0, 0), (0, out_p - out_dim))).astype(jnp.bfloat16)
    b3 = jnp.pad(params["b3"], ((0, 0), (0, out_p - out_dim)))

    # Layer 1: Linear (+ batch sufficient statistics).
    h1, st1 = _fused_layer(x_p, w1, params["b1"], compute_stats=True)
    sc1, sh1 = _finalize_bn(st1, n, params["g1"], params["be1"])

    # Layer 2: BN+ReLU (folded affine) -> Linear (+ statistics).
    h2, st2 = _fused_layer(h1, w2, params["b2"], scale=sc1, shift=sh1,
                           compute_stats=True)
    sc2, sh2 = _finalize_bn(st2, n, params["g2"], params["be2"])

    # Layer 3: BN+ReLU -> Linear (lane-padded output, sliced back down).
    out_padded, _ = _fused_layer(h2, w3, b3, scale=sc2, shift=sh2,
                                 compute_stats=False)
    return out_padded[:, :out_dim]


def init_params(key, input_dim, hidden_dim, output_dim):
    """Deterministic synthetic init. Linear weights stored as [in, out]."""
    k1, k2, k3 = jax.random.split(key, 3)

    def lin(k, fan_in, fan_out):
        bound = 1.0 / jnp.sqrt(jnp.float32(fan_in))
        kw, kb = jax.random.split(k)
        w = jax.random.uniform(kw, (fan_in, fan_out), jnp.float32, -bound, bound)
        b = jax.random.uniform(kb, (1, fan_out), jnp.float32, -bound, bound)
        return w, b

    w1, b1 = lin(k1, input_dim, hidden_dim)
    w2, b2 = lin(k2, hidden_dim, hidden_dim)
    w3, b3 = lin(k3, hidden_dim, output_dim)
    return {
        "w1": w1, "b1": b1,
        "g1": jnp.ones((1, hidden_dim), jnp.float32),
        "be1": jnp.zeros((1, hidden_dim), jnp.float32),
        "w2": w2, "b2": b2,
        "g2": jnp.ones((1, hidden_dim), jnp.float32),
        "be2": jnp.zeros((1, hidden_dim), jnp.float32),
        "w3": w3, "b3": b3,
    }


def reference_forward(x, p):
    """Plain-JAX reference matching PyTorch training-mode BN, with the same bf16
    matmul operands / f32 accumulation as the kernel."""
    def dot_bf16(a, w):
        return jnp.dot(a.astype(jnp.bfloat16), w.astype(jnp.bfloat16),
                       preferred_element_type=jnp.float32)

    def bn_relu(h, g, b):
        m = jnp.mean(h, axis=0, keepdims=True)
        v = jnp.mean(h * h, axis=0, keepdims=True) - m * m
        return jnp.maximum((h - m) * lax.rsqrt(v + EPS) * g + b, 0.0)

    h = dot_bf16(x, p["w1"]) + p["b1"]
    h = bn_relu(h, p["g1"], p["be1"])
    h = dot_bf16(h, p["w2"]) + p["b2"]
    h = bn_relu(h, p["g2"], p["be2"])
    return dot_bf16(h, p["w3"]) + p["b3"]


if __name__ == "__main__":
    # Small but tiling-exercising shapes: 2 batch tiles of 256, hidden split into
    # two K-tiles of 256, input/output dims (32) lane-padded to 128.
    N, INPUT_DIM, HIDDEN_DIM, OUTPUT_DIM = 512, 32, 512, 32

    key = jax.random.PRNGKey(0)
    kx, kp = jax.random.split(key)
    x = jax.random.normal(kx, (N, INPUT_DIM), jnp.float32)
    params = init_params(kp, INPUT_DIM, HIDDEN_DIM, OUTPUT_DIM)

    fwd = jax.jit(simclr_projection_head)
    out = jax.block_until_ready(fwd(x, params))

    ref = reference_forward(x, params)
    assert out.shape == (N, OUTPUT_DIM)
    max_err = float(jnp.max(jnp.abs(out - ref)))
    assert jnp.allclose(out, ref, atol=1e-2, rtol=1e-2), \
        f"mismatch vs JAX reference (max abs err {max_err})"

    print("KERNEL_OK")
</pallas_src>

<mosaic_0001>
module attributes {stable_mosaic.version = 11 : i64} {
  func.func @kernel(%arg0: i32, %arg1: i32, %arg2: memref<256x128xf32, #tpu.memory_space<vmem>>, %arg3: memref<128x512xbf16, #tpu.memory_space<vmem>>, %arg4: memref<1x512xf32, #tpu.memory_space<vmem>>, %arg5: memref<256x512xf32, #tpu.memory_space<vmem>>, %arg6: memref<1x2x512xf32, #tpu.memory_space<vmem>>, %arg7: memref<256x512xf32, #tpu.memory_space<vmem>>) attributes {dimension_semantics = [#tpu.dimension_semantics<parallel>, #tpu.dimension_semantics<arbitrary>], iteration_bounds = array<i64: 2, 1>, scalar_prefetch = 0 : i64, scratch_operands = 1 : i64, tpu.core_type = #tpu.core_type<tc>, window_params = [{transform_indices = @transform_0, window_bounds = array<i64: 256, 128>}, {transform_indices = @transform_1, window_bounds = array<i64: 128, 512>}, {pipeline_mode = #tpu.pipeline_mode<synchronous>, transform_indices = @transform_2, window_bounds = array<i64: 1, 512>}, {transform_indices = @transform_3, window_bounds = array<i64: 256, 512>}, {transform_indices = @transform_4, window_bounds = array<i64: 1, 2, 512>}]} {
    %c0_i32 = arith.constant 0 : i32
    %0 = arith.cmpi eq, %arg1, %c0_i32 : i32
    %1 = arith.extui %0 : i1 to i32
    %c0_i32_0 = arith.constant 0 : i32
    %2 = arith.cmpi ne, %1, %c0_i32_0 : i32
    scf.if %2 {
      %cst_10 = arith.constant 0.000000e+00 : f32
      %13 = vector.broadcast %cst_10 : f32 to vector<256x512xf32>
      %c0_11 = arith.constant 0 : index
      %c0_12 = arith.constant 0 : index
      %14 = vector.load %arg7[%c0_11, %c0_12] : memref<256x512xf32, #tpu.memory_space<vmem>>, vector<256x512xf32>
      tpu.vector_store %arg7[%c0_11, %c0_12], %13 {strides = array<i32>} : memref<256x512xf32, #tpu.memory_space<vmem>>, vector<256x512xf32>,
    } else {
    }
    %c0 = arith.constant 0 : index
    %c0_1 = arith.constant 0 : index
    %3 = vector.load %arg2[%c0, %c0_1] : memref<256x128xf32, #tpu.memory_space<vmem>>, vector<256x128xf32>
    %c0_2 = arith.constant 0 : index
    %c0_3 = arith.constant 0 : index
    %4 = vector.load %arg7[%c0_2, %c0_3] : memref<256x512xf32, #tpu.memory_space<vmem>>, vector<256x512xf32>
    %5 = arith.truncf %3 : vector<256x128xf32> to vector<256x128xbf16>
    %c0_4 = arith.constant 0 : index
    %c0_5 = arith.constant 0 : index
    %6 = vector.load %arg3[%c0_4, %c0_5] : memref<128x512xbf16, #tpu.memory_space<vmem>>, vector<128x512xbf16>
    %cst = arith.constant dense<0.000000e+00> : vector<256x512xf32>
    %7 = tpu.matmul %5, %6, %cst {dimension_numbers = #tpu.dot_dimension_numbers<[1], [0], [0], [1], [0, 0, 1, 1], [], []>} : vector<256x128xbf16>, vector<128x512xbf16>, vector<256x512xf32> -> vector<256x512xf32>
    %8 = arith.addf %4, %7 : vector<256x512xf32>
    %c0_6 = arith.constant 0 : index
    %c0_7 = arith.constant 0 : index
    %9 = vector.load %arg7[%c0_6, %c0_7] : memref<256x512xf32, #tpu.memory_space<vmem>>, vector<256x512xf32>
    tpu.vector_store %arg7[%c0_6, %c0_7], %8 {strides = array<i32>} : memref<256x512xf32, #tpu.memory_space<vmem>>, vector<256x512xf32>,
    %c0_i32_8 = arith.constant 0 : i32
    %10 = arith.cmpi eq, %arg1, %c0_i32_8 : i32
    %11 = arith.extui %10 : i1 to i32
    %c0_i32_9 = arith.constant 0 : i32
    %12 = arith.cmpi ne, %11, %c0_i32_9 : i32
    scf.if %12 {
      %c0_10 = arith.constant 0 : index
      %c0_11 = arith.constant 0 : index
      %13 = vector.load %arg7[%c0_10, %c0_11] : memref<256x512xf32, #tpu.memory_space<vmem>>, vector<256x512xf32>
      %c0_12 = arith.constant 0 : index
      %c0_13 = arith.constant 0 : index
      %14 = vector.load %arg4[%c0_12, %c0_13] : memref<1x512xf32, #tpu.memory_space<vmem>>, vector<1x512xf32>
      %15 = vector.broadcast %14 : vector<1x512xf32> to vector<256x512xf32>
      %16 = arith.addf %13, %15 : vector<256x512xf32>
      %c0_14 = arith.constant 0 : index
      %c0_15 = arith.constant 0 : index
      %17 = vector.load %arg5[%c0_14, %c0_15] : memref<256x512xf32, #tpu.memory_space<vmem>>, vector<256x512xf32>
      tpu.vector_store %arg5[%c0_14, %c0_15], %16 {strides = array<i32>} : memref<256x512xf32, #tpu.memory_space<vmem>>, vector<256x512xf32>,
      %cst_16 = arith.constant dense<0.000000e+00> : vector<512xf32>
      %18 = vector.multi_reduction <add>, %16, %cst_16 [0] : vector<256x512xf32> to vector<512xf32>
      %19 = vector.shape_cast %18 : vector<512xf32> to vector<1x512xf32>
      %20 = arith.mulf %16, %16 : vector<256x512xf32>
      %cst_17 = arith.constant dense<0.000000e+00> : vector<512xf32>
      %21 = vector.multi_reduction <add>, %20, %cst_17 [0] : vector<256x512xf32> to vector<512xf32>
      %22 = vector.shape_cast %21 : vector<512xf32> to vector<1x512xf32>
      %23 = tpu.concatenate %19, %22 in 0 : vector<1x512xf32>, vector<1x512xf32> -> vector<2x512xf32>
      %24 = vector.shape_cast %23 : vector<2x512xf32> to vector<1x2x512xf32>
      %c0_18 = arith.constant 0 : index
      %c0_19 = arith.constant 0 : index
      %c0_20 = arith.constant 0 : index
      %25 = vector.load %arg6[%c0_18, %c0_19, %c0_20] : memref<1x2x512xf32, #tpu.memory_space<vmem>>, vector<1x2x512xf32>
      tpu.vector_store %arg6[%c0_18, %c0_19, %c0_20], %24 {strides = array<i32>} : memref<1x2x512xf32, #tpu.memory_space<vmem>>, vector<1x2x512xf32>,
    } else {
    }
    return
  }
  func.func @transform_0(%arg0: i32, %arg1: i32) -> (i32, i32) {
    %c0_i32 = arith.constant 0 : i32
    return %arg0, %arg1 : i32, i32
  }
  func.func @transform_1(%arg0: i32, %arg1: i32) -> (i32, i32) {
    %c0_i32 = arith.constant 0 : i32
    %c0_i32_0 = arith.constant 0 : i32
    return %arg1, %c0_i32 : i32, i32
  }
  func.func @transform_2(%arg0: i32, %arg1: i32) -> (i32, i32) {
    %c0_i32 = arith.constant 0 : i32
    %c0_i32_0 = arith.constant 0 : i32
    %c0_i32_1 = arith.constant 0 : i32
    return %c0_i32, %c0_i32_0 : i32, i32
  }
  func.func @transform_3(%arg0: i32, %arg1: i32) -> (i32, i32) {
    %c0_i32 = arith.constant 0 : i32
    %c0_i32_0 = arith.constant 0 : i32
    return %arg0, %c0_i32 : i32, i32
  }
  func.func @transform_4(%arg0: i32, %arg1: i32) -> (i32, i32, i32) {
    %c0_i32 = arith.constant 0 : i32
    %c0_i32_0 = arith.constant 0 : i32
    %c0_i32_1 = arith.constant 0 : i32
    return %arg0, %c0_i32, %c0_i32_0 : i32, i32, i32
  }
}

module attributes {stable_mosaic.version = 11 : i64} {
  func.func @kernel(%arg0: i32, %arg1: i32, %arg2: memref<256x256xf32, #tpu.memory_space<vmem>>, %arg3: memref<1x256xf32, #tpu.memory_space<vmem>>, %arg4: memref<1x256xf32, #tpu.memory_space<vmem>>, %arg5: memref<256x512xbf16, #tpu.memory_space<vmem>>, %arg6: memref<1x512xf32, #tpu.memory_space<vmem>>, %arg7: memref<256x512xf32, #tpu.memory_space<vmem>>, %arg8: memref<1x2x512xf32, #tpu.memory_space<vmem>>, %arg9: memref<256x512xf32, #tpu.memory_space<vmem>>) attributes {dimension_semantics = [#tpu.dimension_semantics<parallel>, #tpu.dimension_semantics<arbitrary>], iteration_bounds = array<i64: 2, 2>, scalar_prefetch = 0 : i64, scratch_operands = 1 : i64, tpu.core_type = #tpu.core_type<tc>, window_params = [{transform_indices = @transform_0, window_bounds = array<i64: 256, 256>}, {transform_indices = @transform_1, window_bounds = array<i64: 1, 256>}, {transform_indices = @transform_2, window_bounds = array<i64: 1, 256>}, {transform_indices = @transform_3, window_bounds = array<i64: 256, 512>}, {pipeline_mode = #tpu.pipeline_mode<synchronous>, transform_indices = @transform_4, window_bounds = array<i64: 1, 512>}, {transform_indices = @transform_5, window_bounds = array<i64: 256, 512>}, {transform_indices = @transform_6, window_bounds = array<i64: 1, 2, 512>}]} {
    %c0_i32 = arith.constant 0 : i32
    %0 = arith.cmpi eq, %arg1, %c0_i32 : i32
    %1 = arith.extui %0 : i1 to i32
    %c0_i32_0 = arith.constant 0 : i32
    %2 = arith.cmpi ne, %1, %c0_i32_0 : i32
    scf.if %2 {
      %cst_14 = arith.constant 0.000000e+00 : f32
      %21 = vector.broadcast %cst_14 : f32 to vector<256x512xf32>
      %c0_15 = arith.constant 0 : index
      %c0_16 = arith.constant 0 : index
      %22 = vector.load %arg9[%c0_15, %c0_16] : memref<256x512xf32, #tpu.memory_space<vmem>>, vector<256x512xf32>
      tpu.vector_store %arg9[%c0_15, %c0_16], %21 {strides = array<i32>} : memref<256x512xf32, #tpu.memory_space<vmem>>, vector<256x512xf32>,
    } else {
    }
    %c0 = arith.constant 0 : index
    %c0_1 = arith.constant 0 : index
    %3 = vector.load %arg2[%c0, %c0_1] : memref<256x256xf32, #tpu.memory_space<vmem>>, vector<256x256xf32>
    %c0_2 = arith.constant 0 : index
    %c0_3 = arith.constant 0 : index
    %4 = vector.load %arg3[%c0_2, %c0_3] : memref<1x256xf32, #tpu.memory_space<vmem>>, vector<1x256xf32>
    %5 = vector.broadcast %4 : vector<1x256xf32> to vector<256x256xf32>
    %6 = arith.mulf %3, %5 : vector<256x256xf32>
    %c0_4 = arith.constant 0 : index
    %c0_5 = arith.constant 0 : index
    %7 = vector.load %arg4[%c0_4, %c0_5] : memref<1x256xf32, #tpu.memory_space<vmem>>, vector<1x256xf32>
    %8 = vector.broadcast %7 : vector<1x256xf32> to vector<256x256xf32>
    %9 = arith.addf %6, %8 : vector<256x256xf32>
    %cst = arith.constant 0.000000e+00 : f32
    %10 = vector.broadcast %cst : f32 to vector<256x256xf32>
    %11 = arith.maximumf %9, %10 : vector<256x256xf32>
    %c0_6 = arith.constant 0 : index
    %c0_7 = arith.constant 0 : index
    %12 = vector.load %arg9[%c0_6, %c0_7] : memref<256x512xf32, #tpu.memory_space<vmem>>, vector<256x512xf32>
    %13 = arith.truncf %11 : vector<256x256xf32> to vector<256x256xbf16>
    %c0_8 = arith.constant 0 : index
    %c0_9 = arith.constant 0 : index
    %14 = vector.load %arg5[%c0_8, %c0_9] : memref<256x512xbf16, #tpu.memory_space<vmem>>, vector<256x512xbf16>
    %cst_10 = arith.constant dense<0.000000e+00> : vector<256x512xf32>
    %15 = tpu.matmul %13, %14, %cst_10 {dimension_numbers = #tpu.dot_dimension_numbers<[1], [0], [0], [1], [0, 0, 1, 1], [], []>} : vector<256x256xbf16>, vector<256x512xbf16>, vector<256x512xf32> -> vector<256x512xf32>
    %16 = arith.addf %12, %15 : vector<256x512xf32>
    %c0_11 = arith.constant 0 : index
    %c0_12 = arith.constant 0 : index
    %17 = vector.load %arg9[%c0_11, %c0_12] : memref<256x512xf32, #tpu.memory_space<vmem>>, vector<256x512xf32>
    tpu.vector_store %arg9[%c0_11, %c0_12], %16 {strides = array<i32>} : memref<256x512xf32, #tpu.memory_space<vmem>>, vector<256x512xf32>,
    %c1_i32 = arith.constant 1 : i32
    %18 = arith.cmpi eq, %arg1, %c1_i32 : i32
    %19 = arith.extui %18 : i1 to i32
    %c0_i32_13 = arith.constant 0 : i32
    %20 = arith.cmpi ne, %19, %c0_i32_13 : i32
    scf.if %20 {
      %c0_14 = arith.constant 0 : index
      %c0_15 = arith.constant 0 : index
      %21 = vector.load %arg9[%c0_14, %c0_15] : memref<256x512xf32, #tpu.memory_space<vmem>>, vector<256x512xf32>
      %c0_16 = arith.constant 0 : index
      %c0_17 = arith.constant 0 : index
      %22 = vector.load %arg6[%c0_16, %c0_17] : memref<1x512xf32, #tpu.memory_space<vmem>>, vector<1x512xf32>
      %23 = vector.broadcast %22 : vector<1x512xf32> to vector<256x512xf32>
      %24 = arith.addf %21, %23 : vector<256x512xf32>
      %c0_18 = arith.constant 0 : index
      %c0_19 = arith.constant 0 : index
      %25 = vector.load %arg7[%c0_18, %c0_19] : memref<256x512xf32, #tpu.memory_space<vmem>>, vector<256x512xf32>
      tpu.vector_store %arg7[%c0_18, %c0_19], %24 {strides = array<i32>} : memref<256x512xf32, #tpu.memory_space<vmem>>, vector<256x512xf32>,
      %cst_20 = arith.constant dense<0.000000e+00> : vector<512xf32>
      %26 = vector.multi_reduction <add>, %24, %cst_20 [0] : vector<256x512xf32> to vector<512xf32>
      %27 = vector.shape_cast %26 : vector<512xf32> to vector<1x512xf32>
      %28 = arith.mulf %24, %24 : vector<256x512xf32>
      %cst_21 = arith.constant dense<0.000000e+00> : vector<512xf32>
      %29 = vector.multi_reduction <add>, %28, %cst_21 [0] : vector<256x512xf32> to vector<512xf32>
      %30 = vector.shape_cast %29 : vector<512xf32> to vector<1x512xf32>
      %31 = tpu.concatenate %27, %30 in 0 : vector<1x512xf32>, vector<1x512xf32> -> vector<2x512xf32>
      %32 = vector.shape_cast %31 : vector<2x512xf32> to vector<1x2x512xf32>
      %c0_22 = arith.constant 0 : index
      %c0_23 = arith.constant 0 : index
      %c0_24 = arith.constant 0 : index
      %33 = vector.load %arg8[%c0_22, %c0_23, %c0_24] : memref<1x2x512xf32, #tpu.memory_space<vmem>>, vector<1x2x512xf32>
      tpu.vector_store %arg8[%c0_22, %c0_23, %c0_24], %32 {strides = array<i32>} : memref<1x2x512xf32, #tpu.memory_space<vmem>>, vector<1x2x512xf32>,
    } else {
    }
    return
  }
  func.func @transform_0(%arg0: i32, %arg1: i32) -> (i32, i32) {
    %c0_i32 = arith.constant 0 : i32
    return %arg0, %arg1 : i32, i32
  }
  func.func @transform_1(%arg0: i32, %arg1: i32) -> (i32, i32) {
    %c0_i32 = arith.constant 0 : i32
    %c0_i32_0 = arith.constant 0 : i32
    return %c0_i32, %arg1 : i32, i32
  }
  func.func @transform_2(%arg0: i32, %arg1: i32) -> (i32, i32) {
    %c0_i32 = arith.constant 0 : i32
    %c0_i32_0 = arith.constant 0 : i32
    return %c0_i32, %arg1 : i32, i32
  }
  func.func @transform_3(%arg0: i32, %arg1: i32) -> (i32, i32) {
    %c0_i32 = arith.constant 0 : i32
    %c0_i32_0 = arith.constant 0 : i32
    return %arg1, %c0_i32 : i32, i32
  }
  func.func @transform_4(%arg0: i32, %arg1: i32) -> (i32, i32) {
    %c0_i32 = arith.constant 0 : i32
    %c0_i32_0 = arith.constant 0 : i32
    %c0_i32_1 = arith.constant 0 : i32
    return %c0_i32, %c0_i32_0 : i32, i32
  }
  func.func @transform_5(%arg0: i32, %arg1: i32) -> (i32, i32) {
    %c0_i32 = arith.constant 0 : i32
    %c0_i32_0 = arith.constant 0 : i32
    return %arg0, %c0_i32 : i32, i32
  }
  func.func @transform_6(%arg0: i32, %arg1: i32) -> (i32, i32, i32) {
    %c0_i32 = arith.constant 0 : i32
    %c0_i32_0 = arith.constant 0 : i32
    %c0_i32_1 = arith.constant 0 : i32
    return %arg0, %c0_i32, %c0_i32_0 : i32, i32, i32
  }
}

module attributes {stable_mosaic.version = 11 : i64} {
  func.func @kernel(%arg0: i32, %arg1: i32, %arg2: memref<256x256xf32, #tpu.memory_space<vmem>>, %arg3: memref<1x256xf32, #tpu.memory_space<vmem>>, %arg4: memref<1x256xf32, #tpu.memory_space<vmem>>, %arg5: memref<256x128xbf16, #tpu.memory_space<vmem>>, %arg6: memref<1x128xf32, #tpu.memory_space<vmem>>, %arg7: memref<256x128xf32, #tpu.memory_space<vmem>>, %arg8: memref<256x128xf32, #tpu.memory_space<vmem>>) attributes {dimension_semantics = [#tpu.dimension_semantics<parallel>, #tpu.dimension_semantics<arbitrary>], iteration_bounds = array<i64: 2, 2>, scalar_prefetch = 0 : i64, scratch_operands = 1 : i64, tpu.core_type = #tpu.core_type<tc>, window_params = [{transform_indices = @transform_0, window_bounds = array<i64: 256, 256>}, {transform_indices = @transform_1, window_bounds = array<i64: 1, 256>}, {transform_indices = @transform_2, window_bounds = array<i64: 1, 256>}, {transform_indices = @transform_3, window_bounds = array<i64: 256, 128>}, {pipeline_mode = #tpu.pipeline_mode<synchronous>, transform_indices = @transform_4, window_bounds = array<i64: 1, 128>}, {transform_indices = @transform_5, window_bounds = array<i64: 256, 128>}]} {
    %c0_i32 = arith.constant 0 : i32
    %0 = arith.cmpi eq, %arg1, %c0_i32 : i32
    %1 = arith.extui %0 : i1 to i32
    %c0_i32_0 = arith.constant 0 : i32
    %2 = arith.cmpi ne, %1, %c0_i32_0 : i32
    scf.if %2 {
      %cst_14 = arith.constant 0.000000e+00 : f32
      %21 = vector.broadcast %cst_14 : f32 to vector<256x128xf32>
      %c0_15 = arith.constant 0 : index
      %c0_16 = arith.constant 0 : index
      %22 = vector.load %arg8[%c0_15, %c0_16] : memref<256x128xf32, #tpu.memory_space<vmem>>, vector<256x128xf32>
      tpu.vector_store %arg8[%c0_15, %c0_16], %21 {strides = array<i32>} : memref<256x128xf32, #tpu.memory_space<vmem>>, vector<256x128xf32>,
    } else {
    }
    %c0 = arith.constant 0 : index
    %c0_1 = arith.constant 0 : index
    %3 = vector.load %arg2[%c0, %c0_1] : memref<256x256xf32, #tpu.memory_space<vmem>>, vector<256x256xf32>
    %c0_2 = arith.constant 0 : index
    %c0_3 = arith.constant 0 : index
    %4 = vector.load %arg3[%c0_2, %c0_3] : memref<1x256xf32, #tpu.memory_space<vmem>>, vector<1x256xf32>
    %5 = vector.broadcast %4 : vector<1x256xf32> to vector<256x256xf32>
    %6 = arith.mulf %3, %5 : vector<256x256xf32>
    %c0_4 = arith.constant 0 : index
    %c0_5 = arith.constant 0 : index
    %7 = vector.load %arg4[%c0_4, %c0_5] : memref<1x256xf32, #tpu.memory_space<vmem>>, vector<1x256xf32>
    %8 = vector.broadcast %7 : vector<1x256xf32> to vector<256x256xf32>
    %9 = arith.addf %6, %8 : vector<256x256xf32>
    %cst = arith.constant 0.000000e+00 : f32
    %10 = vector.broadcast %cst : f32 to vector<256x256xf32>
    %11 = arith.maximumf %9, %10 : vector<256x256xf32>
    %c0_6 = arith.constant 0 : index
    %c0_7 = arith.constant 0 : index
    %12 = vector.load %arg8[%c0_6, %c0_7] : memref<256x128xf32, #tpu.memory_space<vmem>>, vector<256x128xf32>
    %13 = arith.truncf %11 : vector<256x256xf32> to vector<256x256xbf16>
    %c0_8 = arith.constant 0 : index
    %c0_9 = arith.constant 0 : index
    %14 = vector.load %arg5[%c0_8, %c0_9] : memref<256x128xbf16, #tpu.memory_space<vmem>>, vector<256x128xbf16>
    %cst_10 = arith.constant dense<0.000000e+00> : vector<256x128xf32>
    %15 = tpu.matmul %13, %14, %cst_10 {dimension_numbers = #tpu.dot_dimension_numbers<[1], [0], [0], [1], [0, 0, 1, 1], [], []>} : vector<256x256xbf16>, vector<256x128xbf16>, vector<256x128xf32> -> vector<256x128xf32>
    %16 = arith.addf %12, %15 : vector<256x128xf32>
    %c0_11 = arith.constant 0 : index
    %c0_12 = arith.constant 0 : index
    %17 = vector.load %arg8[%c0_11, %c0_12] : memref<256x128xf32, #tpu.memory_space<vmem>>, vector<256x128xf32>
    tpu.vector_store %arg8[%c0_11, %c0_12], %16 {strides = array<i32>} : memref<256x128xf32, #tpu.memory_space<vmem>>, vector<256x128xf32>,
    %c1_i32 = arith.constant 1 : i32
    %18 = arith.cmpi eq, %arg1, %c1_i32 : i32
    %19 = arith.extui %18 : i1 to i32
    %c0_i32_13 = arith.constant 0 : i32
    %20 = arith.cmpi ne, %19, %c0_i32_13 : i32
    scf.if %20 {
      %c0_14 = arith.constant 0 : index
      %c0_15 = arith.constant 0 : index
      %21 = vector.load %arg8[%c0_14, %c0_15] : memref<256x128xf32, #tpu.memory_space<vmem>>, vector<256x128xf32>
      %c0_16 = arith.constant 0 : index
      %c0_17 = arith.constant 0 : index
      %22 = vector.load %arg6[%c0_16, %c0_17] : memref<1x128xf32, #tpu.memory_space<vmem>>, vector<1x128xf32>
      %23 = vector.broadcast %22 : vector<1x128xf32> to vector<256x128xf32>
      %24 = arith.addf %21, %23 : vector<256x128xf32>
      %c0_18 = arith.constant 0 : index
      %c0_19 = arith.constant 0 : index
      %25 = vector.load %arg7[%c0_18, %c0_19] : memref<256x128xf32, #tpu.memory_space<vmem>>, vector<256x128xf32>
      tpu.vector_store %arg7[%c0_18, %c0_19], %24 {strides = array<i32>} : memref<256x128xf32, #tpu.memory_space<vmem>>, vector<256x128xf32>,
    } else {
    }
    return
  }
  func.func @transform_0(%arg0: i32, %arg1: i32) -> (i32, i32) {
    %c0_i32 = arith.constant 0 : i32
    return %arg0, %arg1 : i32, i32
  }
  func.func @transform_1(%arg0: i32, %arg1: i32) -> (i32, i32) {
    %c0_i32 = arith.constant 0 : i32
    %c0_i32_0 = arith.constant 0 : i32
    return %c0_i32, %arg1 : i32, i32
  }
  func.func @transform_2(%arg0: i32, %arg1: i32) -> (i32, i32) {
    %c0_i32 = arith.constant 0 : i32
    %c0_i32_0 = arith.constant 0 : i32
    return %c0_i32, %arg1 : i32, i32
  }
  func.func @transform_3(%arg0: i32, %arg1: i32) -> (i32, i32) {
    %c0_i32 = arith.constant 0 : i32
    %c0_i32_0 = arith.constant 0 : i32
    return %arg1, %c0_i32 : i32, i32
  }
  func.func @transform_4(%arg0: i32, %arg1: i32) -> (i32, i32) {
    %c0_i32 = arith.constant 0 : i32
    %c0_i32_0 = arith.constant 0 : i32
    %c0_i32_1 = arith.constant 0 : i32
    return %c0_i32, %c0_i32_0 : i32, i32
  }
  func.func @transform_5(%arg0: i32, %arg1: i32) -> (i32, i32) {
    %c0_i32 = arith.constant 0 : i32
    %c0_i32_0 = arith.constant 0 : i32
    return %arg0, %c0_i32 : i32, i32
  }
}

</mosaic_0001>

<llo_original>
// kernel: simclr_projection_head.5
$region0: #{simclr_projection_head.5}
  #allocation0 [shape = 'u32[]', space=smem, size = 0x4, offset = 0x4, fixed_abs, tag = 'smem constant byte address 0x4 - core index']
  #allocation1 [shape = 'u32[144,128]{1,0:T(1,128)}', space=vmem, size = 0x12000, scoped, tag = 'internal scratch']
  #allocation2 [shape = 'f32[256,128]{1,0:T(8,128)}', space=vmem, size = 0x20000, scoped, tag = 'scratch operand']
  %s0 = inlined_call_operand.vmem [shape: f32[512,512], index: 0, kind: input, shape index: {}]
  %s1 = inlined_call_operand.vmem [shape: f32[1,512], index: 1, kind: input, shape index: {}]
  %s2 = inlined_call_operand.vmem [shape: f32[1,512], index: 2, kind: input, shape index: {}]
  %s3 = inlined_call_operand.vmem [shape: bf16[512,128], index: 3, kind: input, shape index: {}]
  %s4 = inlined_call_operand.vmem [shape: f32[1,128], index: 4, kind: input, shape index: {}]
  %s5 = inlined_call_operand.vmem [shape: f32[512,128], index: 5, kind: output, shape index: {}]
  %s6 = sld [smem:[#allocation0]]
  $region84: #{simclr_projection_head.5} parent=0
    _
  %s8 = ssub.s32 1, %s6
  %s9 = scalar_select 0, %s8, %s6
  $region1: #{simclr_projection_head.5} parent=0
    #allocation3 [shape = 'u8[524288]{0}', space=vmem, size = 0x80000, scoped, tag = 'input window, operand 0']
    loop: start=0, step=1, limit=6
    $region2: #{simclr_projection_head.5} parent=1 // loop_pre_header
      _
    $region3: #{simclr_projection_head.5} parent=1 // loop_header
      %s11 = sphi 0, %s15
      %p12 = scmp.ge.s32.totalorder %s11, 6
      %s18 = sphi 0, %s30
      %s19 = sphi 0, %s26
      %s20 = sphi 0, %s18
      %s21 = sphi 0, %s19
      %s22 = sphi 0, %s20
      %s23 = sphi 0, %s21
      %s35 = sphi 0, %s37
      %s38 = sphi 0, %s35
      %s39 = sphi 0, %s38
      %s55 = sphi 0, %s39
      %s61 = sphi 0, %s63
      %s64 = sphi 0, %s61
      %s65 = sphi 0, %s64
      %s81 = sphi 0, %s65
      %s87 = sphi 0, %s89
      %s90 = sphi 0, %s87
      %s91 = sphi 0, %s90
      %s107 = sphi 0, %s91
      %s113 = sphi 0, %s115
      %s116 = sphi 0, %s113
      %s117 = sphi 0, %s116
      %s133 = sphi 0, %s117
      %s137 = sphi 0, %s137
      %s139 = sphi 0, %s137
      %s140 = sphi 0, %s139
      %s154 = sphi 0, %s140
      %s160 = sphi 0, %s162
      %s163 = sphi 0, %s160
      %s164 = sphi 0, %s163
      %s180 = sphi 0, %s164
    $region4: #{simclr_projection_head.5} parent=1 // loop_header_branch
      %14 = sbr.rel (%p12) target = $region8
    $region5: #{simclr_projection_head.5} parent=1 // loop_body
      %s16 = ssub.s32 %s11, 1
      %s17 = ssub.s32 %s11, 2
      %s24 = sadd.s32 1, %s19
      %p25 = scmp.ge.s32.totalorder %s24, 2
      %s26 = scalar_select %p25, 0, %s24
      %s27 = sadd.s32 1, %s18
      %s28 = scalar_select %p25, %s27, %s18
      %p29 = scmp.ge.s32.totalorder %s28, 2
      %s30 = scalar_select %p29, 0, %s28
      %s31 = ssub.s32 %s18, %s30
      %s32 = ssub.s32 %s19, %s26
      %s33 = sor.u32 %s31, %s32
      %p34 = scmp.eq.s32.totalorder %s33, 0
      %s36 = sadd.s32 %s35, 1
      %s37 = scalar_select %p34, %s35, %s36
      %p40 = pneg %p34
      %p41 = scmp.eq.s32.totalorder %s11, 3
      %p42 = por %p40, %p41
      %p43 = scmp.ne.s32.totalorder %s35, %s38
      %p44 = scmp.eq.s32.totalorder %s11, 0
      %p45 = por %p43, %p44
      %p46 = scmp.ne.s32.totalorder %s35, %s38
      %p47 = scmp.eq.s32.totalorder %s16, 3
      %p48 = por %p46, %p47
      %p49 = scmp.ne.s32.totalorder %s38, %s39
      %p50 = scmp.eq.s32.totalorder %s16, 0
      %p51 = por %p49, %p50
      %p52 = scmp.ne.s32.totalorder %s38, %s39
      %p53 = scmp.eq.s32.totalorder %s17, 3
      %p54 = por %p52, %p53
      %p56 = scmp.ne.s32.totalorder %s39, %s55
      %p57 = scmp.eq.s32.totalorder %s17, 0
      %p58 = por %p56, %p57
      %s59 = ssub.s32 %s19, %s26
      %p60 = scmp.eq.s32.totalorder %s59, 0
      %s62 = sadd.s32 %s61, 1
      %s63 = scalar_select %p60, %s61, %s62
      %p66 = pneg %p60
      %p67 = scmp.eq.s32.totalorder %s11, 3
      %p68 = por %p66, %p67
      %p69 = scmp.ne.s32.totalorder %s61, %s64
      %p70 = scmp.eq.s32.totalorder %s11, 0
      %p71 = por %p69, %p70
      %p72 = scmp.ne.s32.totalorder %s61, %s64
      %p73 = scmp.eq.s32.totalorder %s16, 3
      %p74 = por %p72, %p73
      %p75 = scmp.ne.s32.totalorder %s64, %s65
      %p76 = scmp.eq.s32.totalorder %s16, 0
      %p77 = por %p75, %p76
      %p78 = scmp.ne.s32.totalorder %s64, %s65
      %p79 = scmp.eq.s32.totalorder %s17, 3
      %p80 = por %p78, %p79
      %p82 = scmp.ne.s32.totalorder %s65, %s81
      %p83 = scmp.eq.s32.totalorder %s17, 0
      %p84 = por %p82, %p83
      %s85 = ssub.s32 %s19, %s26
      %p86 = scmp.eq.s32.totalorder %s85, 0
      %s88 = sadd.s32 %s87, 1
      %s89 = scalar_select %p86, %s87, %s88
      %p92 = pneg %p86
      %p93 = scmp.eq.s32.totalorder %s11, 3
      %p94 = por %p92, %p93
      %p95 = scmp.ne.s32.totalorder %s87, %s90
      %p96 = scmp.eq.s32.totalorder %s11, 0
      %p97 = por %p95, %p96
      %p98 = scmp.ne.s32.totalorder %s87, %s90
      %p99 = scmp.eq.s32.totalorder %s16, 3
      %p100 = por %p98, %p99
      %p101 = scmp.ne.s32.totalorder %s90, %s91
      %p102 = scmp.eq.s32.totalorder %s16, 0
      %p103 = por %p101, %p102
      %p104 = scmp.ne.s32.totalorder %s90, %s91
      %p105 = scmp.eq.s32.totalorder %s17, 3
      %p106 = por %p104, %p105
      %p108 = scmp.ne.s32.totalorder %s91, %s107
      %p109 = scmp.eq.s32.totalorder %s17, 0
      %p110 = por %p108, %p109
      %s111 = ssub.s32 %s19, %s26
      %p112 = scmp.eq.s32.totalorder %s111, 0
      %s114 = sadd.s32 %s113, 1
      %s115 = scalar_select %p112, %s113, %s114
      %p118 = pneg %p112
      %p119 = scmp.eq.s32.totalorder %s11, 3
      %p120 = por %p118, %p119
      %p121 = scmp.ne.s32.totalorder %s113, %s116
      %p122 = scmp.eq.s32.totalorder %s11, 0
      %p123 = por %p121, %p122
      %p124 = scmp.ne.s32.totalorder %s113, %s116
      %p125 = scmp.eq.s32.totalorder %s16, 3
      %p126 = por %p124, %p125
      %p127 = scmp.ne.s32.totalorder %s116, %s117
      %p128 = scmp.eq.s32.totalorder %s16, 0
      %p129 = por %p127, %p128
      %p130 = scmp.ne.s32.totalorder %s116, %s117
      %p131 = scmp.eq.s32.totalorder %s17, 3
      %p132 = por %p130, %p131
      %p134 = scmp.ne.s32.totalorder %s117, %s133
      %p135 = scmp.eq.s32.totalorder %s17, 0
      %p136 = por %p134, %p135
      %s138 = sadd.s32 %s137, 1
      %p141 = scmp.eq.s32.totalorder %s11, 3
      %p142 = scmp.ne.s32.totalorder %s137, %s139
      %p143 = scmp.eq.s32.totalorder %s11, 0
      %p144 = por %p142, %p143
      %p145 = scmp.ne.s32.totalorder %s137, %s139
      %p146 = scmp.eq.s32.totalorder %s16, 3
      %p147 = por %p145, %p146
      %p148 = scmp.ne.s32.totalorder %s139, %s140
      %p149 = scmp.eq.s32.totalorder %s16, 0
      %p150 = por %p148, %p149
      %p151 = scmp.ne.s32.totalorder %s139, %s140
      %p152 = scmp.eq.s32.totalorder %s17, 3
      %p153 = por %p151, %p152
      %p155 = scmp.ne.s32.totalorder %s140, %s154
      %p156 = scmp.eq.s32.totalorder %s17, 0
      %p157 = por %p155, %p156
      %s158 = ssub.s32 %s18, %s30
      %p159 = scmp.eq.s32.totalorder %s158, 0
      %s161 = sadd.s32 %s160, 1
      %s162 = scalar_select %p159, %s160, %s161
      %p165 = pneg %p159
      %p166 = scmp.eq.s32.totalorder %s11, 3
      %p167 = por %p165, %p166
      %p168 = scmp.ne.s32.totalorder %s160, %s163
      %p169 = scmp.eq.s32.totalorder %s11, 0
      %p170 = por %p168, %p169
      %p171 = scmp.ne.s32.totalorder %s160, %s163
      %p172 = scmp.eq.s32.totalorder %s16, 3
      %p173 = por %p171, %p172
      %p174 = scmp.ne.s32.totalorder %s163, %s164
      %p175 = scmp.eq.s32.totalorder %s16, 0
      %p176 = por %p174, %p175
      %p177 = scmp.ne.s32.totalorder %s163, %s164
      %p178 = scmp.eq.s32.totalorder %s17, 3
      %p179 = por %p177, %p178
      %p181 = scmp.ne.s32.totalorder %s164, %s180
      %p182 = scmp.eq.s32.totalorder %s17, 0
      %p183 = por %p181, %p182
      %p184 = scmp.le.s32.totalorder 1, %s11
      %p185 = scmp.lt.s32.totalorder %s11, 5
      %p186 = pnand %p184, %p185
      %p187 = pneg %p186
      // Predicated region
      $region9: #{simclr_projection_head.5} parent=5 // pred_check
        _
      $region10: #{simclr_projection_head.5} parent=5 // pred_check_branch
        %189 = sbr.rel (%p186) target = $region12
      $region11: #{simclr_projection_head.5} parent=5 // pred_region
        %s190 = ssub.s32 %s11, 1
        // Predicated region
        $region13: #{simclr_projection_head.5} parent=11 // pred_check
          %p191 = pneg %p150
        $region14: #{simclr_projection_head.5} parent=11 // pred_check_branch
          %193 = sbr.rel (%p191) target = $region16
        $region15: #{simclr_projection_head.5} parent=11 // pred_region
          _
        $region16: #{simclr_projection_head.5} parent=11 // pred_fallthru
          _
      $region12: #{simclr_projection_head.5} parent=5 // pred_fallthru
        _
      %p194 = scmp.lt.s32.totalorder %s11, 4
      // Predicated region
      $region17: #{simclr_projection_head.5} parent=5 // pred_check
        %p195 = pneg %p194
      $region18: #{simclr_projection_head.5} parent=5 // pred_check_branch
        %197 = sbr.rel (%p195) target = $region20
      $region19: #{simclr_projection_head.5} parent=5 // pred_region
        // Predicated region
        $region21: #{simclr_projection_head.5} parent=19 // pred_check
          %p198 = pneg %p45
        $region22: #{simclr_projection_head.5} parent=19 // pred_check_branch
          %200 = sbr.rel (%p198) target = $region24
        $region23: #{simclr_projection_head.5} parent=19 // pred_region
          %s201 = sand.u32 %s35, 1
          %s202 = sand.u32 %s35, 1
          %s203 = smul.addr %s202, 512
          %s204 = scalar_lea.vmem [#allocation3], %s203
          %s205 = smul.u32 32, %s18
          %s206 = smul.u32 2, %s19
          %s207 = smul.addr %s205, 4
          %s208 = sadd.s32 %s206, %s207
          %s209 = smul.addr %s208, 8
          %s210 = scalar_lea.vmem %s0, %s209
          // Predicated region
          $region25: #{simclr_projection_head.5} parent=23 // pred_check
            _
          $region26: #{simclr_projection_head.5} parent=23 // pred_check_branch
            %212 = sbr.rel (0) target = $region28
          $region27: #{simclr_projection_head.5} parent=23 // pred_region
            // Predicated region
            $region29: #{simclr_projection_head.5} parent=27 // pred_check
              _
            $region30: #{simclr_projection_head.5} parent=27 // pred_check_branch
              %214 = sbr.rel (0) target = $region32
            $region31: #{simclr_projection_head.5} parent=27 // pred_region
              loop: start=0, step=1, limit=1
              $region33: #{simclr_projection_head.5} parent=31 // loop_pre_header
                _
              $region34: #{simclr_projection_head.5} parent=31 // loop_header
                %s216 = sphi 0, %s220
                %p217 = scmp.ge.s32.totalorder %s216, 1
                %s221 = sphi %s210, %s210
                %s222 = sphi %s204, %s204
              $region35: #{simclr_projection_head.5} parent=31 // loop_header_branch
                %219 = sbr.rel (%p217) target = $region39
              $region36: #{simclr_projection_head.5} parent=31 // loop_body
                %v223 = vld [vmem:[%s221] sm:$0xff]
                %224 = vst [vmem:[%s222] sm:$0xff] %v223
                %v225 = vld [vmem:[%s221 + $0x8] sm:$0xff]
                %226 = vst [vmem:[%s222 + $0x8] sm:$0xff] %v225
                %v227 = vld [vmem:[%s221 + $0x20] sm:$0xff]
                %228 = vst [vmem:[%s222 + $0x10] sm:$0xff] %v227
                %v229 = vld [vmem:[%s221 + $0x28] sm:$0xff]
                %230 = vst [vmem:[%s222 + $0x18] sm:$0xff] %v229
                %v231 = vld [vmem:[%s221 + $0x40] sm:$0xff]
                %232 = vst [vmem:[%s222 + $0x20] sm:$0xff] %v231
                %v233 = vld [vmem:[%s221 + $0x48] sm:$0xff]
                %234 = vst [vmem:[%s222 + $0x28] sm:$0xff] %v233
                %v235 = vld [vmem:[%s221 + $0x60] sm:$0xff]
                %236 = vst [vmem:[%s222 + $0x30] sm:$0xff] %v235
                %v237 = vld [vmem:[%s221 + $0x68] sm:$0xff]
                %238 = vst [vmem:[%s222 + $0x38] sm:$0xff] %v237
                %v239 = vld [vmem:[%s221 + $0x80] sm:$0xff]
                %240 = vst [vmem:[%s222 + $0x40] sm:$0xff] %v239
                %v241 = vld [vmem:[%s221 + $0x88] sm:$0xff]
                %242 = vst [vmem:[%s222 + $0x48] sm:$0xff] %v241
                %v243 = vld [vmem:[%s221 + $0xa0] sm:$0xff]
                %244 = vst [vmem:[%s222 + $0x50] sm:$0xff] %v243
                %v245 = vld [vmem:[%s221 + $0xa8] sm:$0xff]
                %246 = vst [vmem:[%s222 + $0x58] sm:$0xff] %v245
                %v247 = vld [vmem:[%s221 + $0xc0] sm:$0xff]
                %248 = vst [vmem:[%s222 + $0x60] sm:$0xff] %v247
                %v249 = vld [vmem:[%s221 + $0xc8] sm:$0xff]
                %250 = vst [vmem:[%s222 + $0x68] sm:$0xff] %v249
                %v251 = vld [vmem:[%s221 + $0xe0] sm:$0xff]
                %252 = vst [vmem:[%s222 + $0x70] sm:$0xff] %v251
                %v253 = vld [vmem:[%s221 + $0xe8] sm:$0xff]
                %254 = vst [vmem:[%s222 + $0x78] sm:$0xff] %v253
                %v255 = vld [vmem:[%s221 + $0x100] sm:$0xff]
                %256 = vst [vmem:[%s222 + $0x80] sm:$0xff] %v255
                %v257 = vld [vmem:[%s221 + $0x108] sm:$0xff]
                %258 = vst [vmem:[%s222 + $0x88] sm:$0xff] %v257
                %v259 = vld [vmem:[%s221 + $0x120] sm:$0xff]
                %260 = vst [vmem:[%s222 + $0x90] sm:$0xff] %v259
                %v261 = vld [vmem:[%s221 + $0x128] sm:$0xff]
                %262 = vst [vmem:[%s222 + $0x98] sm:$0xff] %v261
                %v263 = vld [vmem:[%s221 + $0x140] sm:$0xff]
                %264 = vst [vmem:[%s222 + $0xa0] sm:$0xff] %v263
                %v265 = vld [vmem:[%s221 + $0x148] sm:$0xff]
                %266 = vst [vmem:[%s222 + $0xa8] sm:$0xff] %v265
                %v267 = vld [vmem:[%s221 + $0x160] sm:$0xff]
                %268 = vst [vmem:[%s222 + $0xb0] sm:$0xff] %v267
                %v269 = vld [vmem:[%s221 + $0x168] sm:$0xff]
                %270 = vst [vmem:[%s222 + $0xb8] sm:$0xff] %v269
                %v271 = vld [vmem:[%s221 + $0x180] sm:$0xff]
                %272 = vst [vmem:[%s222 + $0xc0] sm:$0xff] %v271
                %v273 = vld [vmem:[%s221 + $0x188] sm:$0xff]
                %274 = vst [vmem:[%s222 + $0xc8] sm:$0xff] %v273
                %v275 = vld [vmem:[%s221 + $0x1a0] sm:$0xff]
                %276 = vst [vmem:[%s222 + $0xd0] sm:$0xff] %v275
                %v277 = vld [vmem:[%s221 + $0x1a8] sm:$0xff]
                %278 = vst [vmem:[%s222 + $0xd8] sm:$0xff] %v277
                %v279 = vld [vmem:[%s221 + $0x1c0] sm:$0xff]
                %280 = vst [vmem:[%s222 + $0xe0] sm:$0xff] %v279
                %v281 = vld [vmem:[%s221 + $0x1c8] sm:$0xff]
                %282 = vst [vmem:[%s222 + $0xe8] sm:$0xff] %v281
                %v283 = vld [vmem:[%s221 + $0x1e0] sm:$0xff]
                %284 = vst [vmem:[%s222 + $0xf0] sm:$0xff] %v283
                %v285 = vld [vmem:[%s221 + $0x1e8] sm:$0xff]
                %286 = vst [vmem:[%s222 + $0xf8] sm:$0xff] %v285
                %v287 = vld [vmem:[%s221 + $0x200] sm:$0xff]
                %288 = vst [vmem:[%s222 + $0x100] sm:$0xff] %v287
                %v289 = vld [vmem:[%s221 + $0x208] sm:$0xff]
                %290 = vst [vmem:[%s222 + $0x108] sm:$0xff] %v289
                %v291 = vld [vmem:[%s221 + $0x220] sm:$0xff]
                %292 = vst [vmem:[%s222 + $0x110] sm:$0xff] %v291
                %v293 = vld [vmem:[%s221 + $0x228] sm:$0xff]
                %294 = vst [vmem:[%s222 + $0x118] sm:$0xff] %v293
                %v295 = vld [vmem:[%s221 + $0x240] sm:$0xff]
                %296 = vst [vmem:[%s222 + $0x120] sm:$0xff] %v295
                %v297 = vld [vmem:[%s221 + $0x248] sm:$0xff]
                %298 = vst [vmem:[%s222 + $0x128] sm:$0xff] %v297
                %v299 = vld [vmem:[%s221 + $0x260] sm:$0xff]
                %300 = vst [vmem:[%s222 + $0x130] sm:$0xff] %v299
                %v301 = vld [vmem:[%s221 + $0x268] sm:$0xff]
                %302 = vst [vmem:[%s222 + $0x138] sm:$0xff] %v301
                %v303 = vld [vmem:[%s221 + $0x280] sm:$0xff]
                %304 = vst [vmem:[%s222 + $0x140] sm:$0xff] %v303
                %v305 = vld [vmem:[%s221 + $0x288] sm:$0xff]
                %306 = vst [vmem:[%s222 + $0x148] sm:$0xff] %v305
                %v307 = vld [vmem:[%s221 + $0x2a0] sm:$0xff]
                %308 = vst [vmem:[%s222 + $0x150] sm:$0xff] %v307
                %v309 = vld [vmem:[%s221 + $0x2a8] sm:$0xff]
                %310 = vst [vmem:[%s222 + $0x158] sm:$0xff] %v309
                %v311 = vld [vmem:[%s221 + $0x2c0] sm:$0xff]
                %312 = vst [vmem:[%s222 + $0x160] sm:$0xff] %v311
                %v313 = vld [vmem:[%s221 + $0x2c8] sm:$0xff]
                %314 = vst [vmem:[%s222 + $0x168] sm:$0xff] %v313
                %v315 = vld [vmem:[%s221 + $0x2e0] sm:$0xff]
                %316 = vst [vmem:[%s222 + $0x170] sm:$0xff] %v315
                %v317 = vld [vmem:[%s221 + $0x2e8] sm:$0xff]
                %318 = vst [vmem:[%s222 + $0x178] sm:$0xff] %v317
                %v319 = vld [vmem:[%s221 + $0x300] sm:$0xff]
                %320 = vst [vmem:[%s222 + $0x180] sm:$0xff] %v319
                %v321 = vld [vmem:[%s221 + $0x308] sm:$0xff]
                %322 = vst [vmem:[%s222 + $0x188] sm:$0xff] %v321
                %v323 = vld [vmem:[%s221 + $0x320] sm:$0xff]
                %324 = vst [vmem:[%s222 + $0x190] sm:$0xff] %v323
                %v325 = vld [vmem:[%s221 + $0x328] sm:$0xff]
                %326 = vst [vmem:[%s222 + $0x198] sm:$0xff] %v325
                %v327 = vld [vmem:[%s221 + $0x340] sm:$0xff]
                %328 = vst [vmem:[%s222 + $0x1a0] sm:$0xff] %v327
                %v329 = vld [vmem:[%s221 + $0x348] sm:$0xff]
                %330 = vst [vmem:[%s222 + $0x1a8] sm:$0xff] %v329
                %v331 = vld [vmem:[%s221 + $0x360] sm:$0xff]
                %332 = vst [vmem:[%s222 + $0x1b0] sm:$0xff] %v331
                %v333 = vld [vmem:[%s221 + $0x368] sm:$0xff]
                %334 = vst [vmem:[%s222 + $0x1b8] sm:$0xff] %v333
                %v335 = vld [vmem:[%s221 + $0x380] sm:$0xff]
                %336 = vst [vmem:[%s222 + $0x1c0] sm:$0xff] %v335
                %v337 = vld [vmem:[%s221 + $0x388] sm:$0xff]
                %338 = vst [vmem:[%s222 + $0x1c8] sm:$0xff] %v337
                %v339 = vld [vmem:[%s221 + $0x3a0] sm:$0xff]
                %340 = vst [vmem:[%s222 + $0x1d0] sm:$0xff] %v339
                %v341 = vld [vmem:[%s221 + $0x3a8] sm:$0xff]
                %342 = vst [vmem:[%s222 + $0x1d8] sm:$0xff] %v341
                %v343 = vld [vmem:[%s221 + $0x3c0] sm:$0xff]
                %344 = vst [vmem:[%s222 + $0x1e0] sm:$0xff] %v343
                %v345 = vld [vmem:[%s221 + $0x3c8] sm:$0xff]
                %346 = vst [vmem:[%s222 + $0x1e8] sm:$0xff] %v345
                %v347 = vld [vmem:[%s221 + $0x3e0] sm:$0xff]
                %348 = vst [vmem:[%s222 + $0x1f0] sm:$0xff] %v347
                %v349 = vld [vmem:[%s221 + $0x3e8] sm:$0xff]
                %350 = vst [vmem:[%s222 + $0x1f8] sm:$0xff] %v349
              $region37: #{simclr_projection_head.5} parent=31 // loop_footer
                %s220 = sadd.s32 1, %s216
              $region38: #{simclr_projection_head.5} parent=31 // loop_footer_branch
                %215 = sbr.rel target = $region34
              $region39: #{simclr_projection_head.5} parent=31 // loop_exit
                _
            $region32: #{simclr_projection_head.5} parent=27 // pred_fallthru
              _
            // Predicated region
            $region40: #{simclr_projection_head.5} parent=27 // pred_check
              _
            $region41: #{simclr_projection_head.5} parent=27 // pred_check_branch
              %352 = sbr.rel target = $region43
            $region42: #{simclr_projection_head.5} parent=27 // pred_region
              _
            $region43: #{simclr_projection_head.5} parent=27 // pred_fallthru
              _
          $region28: #{simclr_projection_head.5} parent=23 // pred_fallthru
            _
          %353 = vnop
        $region24: #{simclr_projection_head.5} parent=19 // pred_fallthru
          _
        // Predicated region
        $region44: #{simclr_projection_head.5} parent=19 // pred_check
          %p354 = pneg %p71
        $region45: #{simclr_projection_head.5} parent=19 // pred_check_branch
          %356 = sbr.rel (%p354) target = $region47
        $region46: #{simclr_projection_head.5} parent=19 // pred_region
          %s357 = smul.u32 2, %s19
          %p358 = scmp.lt.s32.totalorder %s357, 3
          %s359 = scalar_select %p358, %s357, 3
          %s360 = scalar_lea.vmem %s1, %s359
          %s361 = smul.u32 2, %s19
        $region47: #{simclr_projection_head.5} parent=19 // pred_fallthru
          _
        // Predicated region
        $region48: #{simclr_projection_head.5} parent=19 // pred_check
          %p362 = pneg %p97
        $region49: #{simclr_projection_head.5} parent=19 // pred_check_branch
          %364 = sbr.rel (%p362) target = $region51
        $region50: #{simclr_projection_head.5} parent=19 // pred_region
          %s365 = smul.u32 2, %s19
          %p366 = scmp.lt.s32.totalorder %s365, 3
          %s367 = scalar_select %p366, %s365, 3
          %s368 = scalar_lea.vmem %s2, %s367
          %s369 = smul.u32 2, %s19
        $region51: #{simclr_projection_head.5} parent=19 // pred_fallthru
          _
        // Predicated region
        $region52: #{simclr_projection_head.5} parent=19 // pred_check
          %p370 = pneg %p123
        $region53: #{simclr_projection_head.5} parent=19 // pred_check_branch
          %372 = sbr.rel (%p370) target = $region55
        $region54: #{simclr_projection_head.5} parent=19 // pred_region
          %s373 = smul.u32 32, %s19
          %p374 = scmp.lt.s32.totalorder %s373, 63
          %s375 = scalar_select %p374, %s373, 63
          %s376 = smul.addr %s375, 4
          %s377 = scalar_lea.vmem %s3, %s376
          %s378 = smul.u32 32, %s19
        $region55: #{simclr_projection_head.5} parent=19 // pred_fallthru
          _
      $region20: #{simclr_projection_head.5} parent=5 // pred_fallthru
        _
      %p379 = scmp.le.s32.totalorder 1, %s11
      %p380 = scmp.lt.s32.totalorder %s11, 5
      %p381 = pnand %p379, %p380
      %p382 = pneg %p381
      // Predicated region
      $region56: #{simclr_projection_head.5} parent=5 // pred_check
        _
      $region57: #{simclr_projection_head.5} parent=5 // pred_check_branch
        %384 = sbr.rel (%p381) target = $region59
      $region58: #{simclr_projection_head.5} parent=5 // pred_region
        %s385 = ssub.s32 %s11, 1
        %s386 = sand.u32 %s38, 1
        %s387 = sand.u32 %s38, 1
        %s388 = smul.addr %s387, 512
        %s389 = scalar_lea.vmem [#allocation3], %s388
        // Predicated region
        $region60: #{simclr_projection_head.5} parent=58 // pred_check
          %p390 = pneg %p51
        $region61: #{simclr_projection_head.5} parent=58 // pred_check_branch
          %392 = sbr.rel (%p390) target = $region63
        $region62: #{simclr_projection_head.5} parent=58 // pred_region
          _
        $region63: #{simclr_projection_head.5} parent=58 // pred_fallthru
          _
        %s393 = sand.u32 %s38, 1
        %s394 = sand.u32 %s38, 1
        %s395 = smul.addr %s394, 512
        %s396 = scalar_lea.vmem [#allocation3], %s395
        %p397 = pneg %p51
        %p398 = pneg %p48
        %s399 = smul.u32 2, %s21
        %p400 = scmp.lt.s32.totalorder %s399, 3
        %s401 = scalar_select %p400, %s399, 3
        %s402 = scalar_lea.vmem %s1, %s401
        %p403 = pneg %p77
        %p404 = pneg %p74
        %s405 = smul.u32 2, %s21
        %p406 = scmp.lt.s32.totalorder %s405, 3
        %s407 = scalar_select %p406, %s405, 3
        %s408 = scalar_lea.vmem %s2, %s407
        %p409 = pneg %p103
        %p410 = pneg %p100
        %s411 = smul.u32 32, %s21
        %p412 = scmp.lt.s32.totalorder %s411, 63
        %s413 = scalar_select %p412, %s411, 63
        %s414 = smul.addr %s413, 4
        %s415 = scalar_lea.vmem %s3, %s414
        %p416 = pneg %p129
        %p417 = pneg %p126
        %p418 = pneg %p150
        %p419 = pneg %p147
        %p420 = pneg %p176
        %p421 = pneg %p173
        %s422 = smul.u32 32, %s20
        %p423 = scmp.lt.s32.totalorder %s422, 63
        %s424 = scalar_select %p423, %s422, 63
        %s425 = smul.addr %s424, 8
        %s426 = scalar_lea.vmem %s5, %s425
        %s427 = smul.u32 32, %s20
        %s428 = smul.u32 2, %s21
        %s429 = smul.u32 2, %s21
        %p430 = scmp.lt.s32.totalorder %s429, 3
        %s431 = scalar_select %p430, %s429, 3
        %s432 = scalar_lea.vmem %s1, %s431
        %s433 = smul.u32 2, %s21
        %s434 = smul.u32 2, %s21
        %p435 = scmp.lt.s32.totalorder %s434, 3
        %s436 = scalar_select %p435, %s434, 3
        %s437 = scalar_lea.vmem %s2, %s436
        %s438 = smul.u32 2, %s21
        %s439 = smul.u32 32, %s21
        %p440 = scmp.lt.s32.totalorder %s439, 63
        %s441 = scalar_select %p440, %s439, 63
        %s442 = smul.addr %s441, 4
        %s443 = scalar_lea.vmem %s3, %s442
        %s444 = smul.u32 32, %s21
        %s445 = smul.u32 32, %s20
        %p446 = scmp.lt.s32.totalorder %s445, 63
        %s447 = scalar_select %p446, %s445, 63
        %s448 = smul.addr %s447, 8
        %s449 = scalar_lea.vmem %s5, %s448
        %s450 = smul.u32 32, %s20
        %p452 = scmp.eq.s32.totalorder %s21, 0
        // Predicated region
        $region64: #{simclr_projection_head.5} parent=58 // pred_check
          %p453 = pneg %p452
        $region65: #{simclr_projection_head.5} parent=58 // pred_check_branch
          %455 = sbr.rel (%p453) target = $region67
        $region66: #{simclr_projection_head.5} parent=58 // pred_region
          %456 = vst [vmem:[#allocation2] sm:$0xff] 0.0
          %457 = vst [vmem:[#allocation2 + $0x8] sm:$0xff] 0.0
          %458 = vst [vmem:[#allocation2 + $0x10] sm:$0xff] 0.0
          %459 = vst [vmem:[#allocation2 + $0x18] sm:$0xff] 0.0
          %460 = vst [vmem:[#allocation2 + $0x20] sm:$0xff] 0.0
          %461 = vst [vmem:[#allocation2 + $0x28] sm:$0xff] 0.0
          %462 = vst [vmem:[#allocation2 + $0x30] sm:$0xff] 0.0
          %463 = vst [vmem:[#allocation2 + $0x38] sm:$0xff] 0.0
          %464 = vst [vmem:[#allocation2 + $0x40] sm:$0xff] 0.0
          %465 = vst [vmem:[#allocation2 + $0x48] sm:$0xff] 0.0
          %466 = vst [vmem:[#allocation2 + $0x50] sm:$0xff] 0.0
          %467 = vst [vmem:[#allocation2 + $0x58] sm:$0xff] 0.0
          %468 = vst [vmem:[#allocation2 + $0x60] sm:$0xff] 0.0
          %469 = vst [vmem:[#allocation2 + $0x68] sm:$0xff] 0.0
          %470 = vst [vmem:[#allocation2 + $0x70] sm:$0xff] 0.0
          %471 = vst [vmem:[#allocation2 + $0x78] sm:$0xff] 0.0
          %472 = vst [vmem:[#allocation2 + $0x80] sm:$0xff] 0.0
          %473 = vst [vmem:[#allocation2 + $0x88] sm:$0xff] 0.0
          %474 = vst [vmem:[#allocation2 + $0x90] sm:$0xff] 0.0
          %475 = vst [vmem:[#allocation2 + $0x98] sm:$0xff] 0.0
          %476 = vst [vmem:[#allocation2 + $0xa0] sm:$0xff] 0.0
          %477 = vst [vmem:[#allocation2 + $0xa8] sm:$0xff] 0.0
          %478 = vst [vmem:[#allocation2 + $0xb0] sm:$0xff] 0.0
          %479 = vst [vmem:[#allocation2 + $0xb8] sm:$0xff] 0.0
          %480 = vst [vmem:[#allocation2 + $0xc0] sm:$0xff] 0.0
          %481 = vst [vmem:[#allocation2 + $0xc8] sm:$0xff] 0.0
          %482 = vst [vmem:[#allocation2 + $0xd0] sm:$0xff] 0.0
          %483 = vst [vmem:[#allocation2 + $0xd8] sm:$0xff] 0.0
          %484 = vst [vmem:[#allocation2 + $0xe0] sm:$0xff] 0.0
          %485 = vst [vmem:[#allocation2 + $0xe8] sm:$0xff] 0.0
          %486 = vst [vmem:[#allocation2 + $0xf0] sm:$0xff] 0.0
          %487 = vst [vmem:[#allocation2 + $0xf8] sm:$0xff] 0.0
        $region67: #{simclr_projection_head.5} parent=58 // pred_fallthru
          _
        %v488 = vld [vmem:[%s389] sm:$0xff]
        %v489 = vld [vmem:[%s389 + $0x8] sm:$0xff]
        %v490 = vld [vmem:[%s389 + $0x10] sm:$0xff]
        %v491 = vld [vmem:[%s389 + $0x18] sm:$0xff]
        %v492 = vld [vmem:[%s389 + $0x20] sm:$0xff]
        %v493 = vld [vmem:[%s389 + $0x28] sm:$0xff]
        %v494 = vld [vmem:[%s389 + $0x30] sm:$0xff]
        %v495 = vld [vmem:[%s389 + $0x38] sm:$0xff]
        %v496 = vld [vmem:[%s389 + $0x40] sm:$0xff]
        %v497 = vld [vmem:[%s389 + $0x48] sm:$0xff]
        %v498 = vld [vmem:[%s389 + $0x50] sm:$0xff]
        %v499 = vld [vmem:[%s389 + $0x58] sm:$0xff]
        %v500 = vld [vmem:[%s389 + $0x60] sm:$0xff]
        %v501 = vld [vmem:[%s389 + $0x68] sm:$0xff]
        %v502 = vld [vmem:[%s389 + $0x70] sm:$0xff]
        %v503 = vld [vmem:[%s389 + $0x78] sm:$0xff]
        %v504 = vld [vmem:[%s389 + $0x80] sm:$0xff]
        %v505 = vld [vmem:[%s389 + $0x88] sm:$0xff]
        %v506 = vld [vmem:[%s389 + $0x90] sm:$0xff]
        %v507 = vld [vmem:[%s389 + $0x98] sm:$0xff]
        %v508 = vld [vmem:[%s389 + $0xa0] sm:$0xff]
        %v509 = vld [vmem:[%s389 + $0xa8] sm:$0xff]
        %v510 = vld [vmem:[%s389 + $0xb0] sm:$0xff]
        %v511 = vld [vmem:[%s389 + $0xb8] sm:$0xff]
        %v512 = vld [vmem:[%s389 + $0xc0] sm:$0xff]
        %v513 = vld [vmem:[%s389 + $0xc8] sm:$0xff]
        %v514 = vld [vmem:[%s389 + $0xd0] sm:$0xff]
        %v515 = vld [vmem:[%s389 + $0xd8] sm:$0xff]
        %v516 = vld [vmem:[%s389 + $0xe0] sm:$0xff]
        %v517 = vld [vmem:[%s389 + $0xe8] sm:$0xff]
        %v518 = vld [vmem:[%s389 + $0xf0] sm:$0xff]
        %v519 = vld [vmem:[%s389 + $0xf8] sm:$0xff]
        %v520 = vld [vmem:[%s389 + $0x100] sm:$0xff]
        %v521 = vld [vmem:[%s389 + $0x108] sm:$0xff]
        %v522 = vld [vmem:[%s389 + $0x110] sm:$0xff]
        %v523 = vld [vmem:[%s389 + $0x118] sm:$0xff]
        %v524 = vld [vmem:[%s389 + $0x120] sm:$0xff]
        %v525 = vld [vmem:[%s389 + $0x128] sm:$0xff]
        %v526 = vld [vmem:[%s389 + $0x130] sm:$0xff]
        %v527 = vld [vmem:[%s389 + $0x138] sm:$0xff]
        %v528 = vld [vmem:[%s389 + $0x140] sm:$0xff]
        %v529 = vld [vmem:[%s389 + $0x148] sm:$0xff]
        %v530 = vld [vmem:[%s389 + $0x150] sm:$0xff]
        %v531 = vld [vmem:[%s389 + $0x158] sm:$0xff]
        %v532 = vld [vmem:[%s389 + $0x160] sm:$0xff]
        %v533 = vld [vmem:[%s389 + $0x168] sm:$0xff]
        %v534 = vld [vmem:[%s389 + $0x170] sm:$0xff]
        %v535 = vld [vmem:[%s389 + $0x178] sm:$0xff]
        %v536 = vld [vmem:[%s389 + $0x180] sm:$0xff]
        %v537 = vld [vmem:[%s389 + $0x188] sm:$0xff]
        %v538 = vld [vmem:[%s389 + $0x190] sm:$0xff]
        %v539 = vld [vmem:[%s389 + $0x198] sm:$0xff]
        %v540 = vld [vmem:[%s389 + $0x1a0] sm:$0xff]
        %v541 = vld [vmem:[%s389 + $0x1a8] sm:$0xff]
        %v542 = vld [vmem:[%s389 + $0x1b0] sm:$0xff]
        %v543 = vld [vmem:[%s389 + $0x1b8] sm:$0xff]
        %v544 = vld [vmem:[%s389 + $0x1c0] sm:$0xff]
        %v545 = vld [vmem:[%s389 + $0x1c8] sm:$0xff]
        %v546 = vld [vmem:[%s389 + $0x1d0] sm:$0xff]
        %v547 = vld [vmem:[%s389 + $0x1d8] sm:$0xff]
        %v548 = vld [vmem:[%s389 + $0x1e0] sm:$0xff]
        %v549 = vld [vmem:[%s389 + $0x1e8] sm:$0xff]
        %v550 = vld [vmem:[%s389 + $0x1f0] sm:$0xff]
        %v551 = vld [vmem:[%s389 + $0x1f8] sm:$0xff]
        %v552 = vld [vmem:[%s432] sm:$0x3]
        %v554 = vlaneseq
        %v555 = vshrl.u32 %v554, 7
        %v556 = vsub.s32 0, %v555
        %v557 = vrot.slane %v552, %v556
        %v558 = vlaneseq
        %v559 = vshrl.u32 %v558, 7
        %v560 = vsub.s32 1, %v559
        %v561 = vrot.slane %v552, %v560
        %v564 = vmul.f32 %v488, %v557
        %v565 = vmul.f32 %v489, %v561
        %v566 = vmul.f32 %v490, %v557
        %v567 = vmul.f32 %v491, %v561
        %v568 = vmul.f32 %v492, %v557
        %v569 = vmul.f32 %v493, %v561
        %v570 = vmul.f32 %v494, %v557
        %v571 = vmul.f32 %v495, %v561
        %v572 = vmul.f32 %v496, %v557
        %v573 = vmul.f32 %v497, %v561
        %v574 = vmul.f32 %v498, %v557
        %v575 = vmul.f32 %v499, %v561
        %v576 = vmul.f32 %v500, %v557
        %v577 = vmul.f32 %v501, %v561
        %v578 = vmul.f32 %v502, %v557
        %v579 = vmul.f32 %v503, %v561
        %v580 = vmul.f32 %v504, %v557
        %v581 = vmul.f32 %v505, %v561
        %v582 = vmul.f32 %v506, %v557
        %v583 = vmul.f32 %v507, %v561
        %v584 = vmul.f32 %v508, %v557
        %v585 = vmul.f32 %v509, %v561
        %v586 = vmul.f32 %v510, %v557
        %v587 = vmul.f32 %v511, %v561
        %v588 = vmul.f32 %v512, %v557
        %v589 = vmul.f32 %v513, %v561
        %v590 = vmul.f32 %v514, %v557
        %v591 = vmul.f32 %v515, %v561
        %v592 = vmul.f32 %v516, %v557
        %v593 = vmul.f32 %v517, %v561
        %v594 = vmul.f32 %v518, %v557
        %v595 = vmul.f32 %v519, %v561
        %v596 = vmul.f32 %v520, %v557
        %v597 = vmul.f32 %v521, %v561
        %v598 = vmul.f32 %v522, %v557
        %v599 = vmul.f32 %v523, %v561
        %v600 = vmul.f32 %v524, %v557
        %v601 = vmul.f32 %v525, %v561
        %v602 = vmul.f32 %v526, %v557
        %v603 = vmul.f32 %v527, %v561
        %v604 = vmul.f32 %v528, %v557
        %v605 = vmul.f32 %v529, %v561
        %v606 = vmul.f32 %v530, %v557
        %v607 = vmul.f32 %v531, %v561
        %v608 = vmul.f32 %v532, %v557
        %v609 = vmul.f32 %v533, %v561
        %v610 = vmul.f32 %v534, %v557
        %v611 = vmul.f32 %v535, %v561
        %v612 = vmul.f32 %v536, %v557
        %v613 = vmul.f32 %v537, %v561
        %v614 = vmul.f32 %v538, %v557
        %v615 = vmul.f32 %v539, %v561
        %v616 = vmul.f32 %v540, %v557
        %v617 = vmul.f32 %v541, %v561
        %v618 = vmul.f32 %v542, %v557
        %v619 = vmul.f32 %v543, %v561
        %v620 = vmul.f32 %v544, %v557
        %v621 = vmul.f32 %v545, %v561
        %v622 = vmul.f32 %v546, %v557
        %v623 = vmul.f32 %v547, %v561
        %v624 = vmul.f32 %v548, %v557
        %v625 = vmul.f32 %v549, %v561
        %v626 = vmul.f32 %v550, %v557
        %v627 = vmul.f32 %v551, %v561
        %v628 = vld [vmem:[%s437] sm:$0x3]
        %v630 = vlaneseq
        %v631 = vshrl.u32 %v630, 7
        %v632 = vsub.s32 0, %v631
        %v633 = vrot.slane %v628, %v632
        %v634 = vlaneseq
        %v635 = vshrl.u32 %v634, 7
        %v636 = vsub.s32 1, %v635
        %v637 = vrot.slane %v628, %v636
        %v640 = vadd.f32 %v564, %v633
        %v641 = vadd.f32 %v565, %v637
        %v642 = vadd.f32 %v566, %v633
        %v643 = vadd.f32 %v567, %v637
        %v644 = vadd.f32 %v568, %v633
        %v645 = vadd.f32 %v569, %v637
        %v646 = vadd.f32 %v570, %v633
        %v647 = vadd.f32 %v571, %v637
        %v648 = vadd.f32 %v572, %v633
        %v649 = vadd.f32 %v573, %v637
        %v650 = vadd.f32 %v574, %v633
        %v651 = vadd.f32 %v575, %v637
        %v652 = vadd.f32 %v576, %v633
        %v653 = vadd.f32 %v577, %v637
        %v654 = vadd.f32 %v578, %v633
        %v655 = vadd.f32 %v579, %v637
        %v656 = vadd.f32 %v580, %v633
        %v657 = vadd.f32 %v581, %v637
        %v658 = vadd.f32 %v582, %v633
        %v659 = vadd.f32 %v583, %v637
        %v660 = vadd.f32 %v584, %v633
        %v661 = vadd.f32 %v585, %v637
        %v662 = vadd.f32 %v586, %v633
        %v663 = vadd.f32 %v587, %v637
        %v664 = vadd.f32 %v588, %v633
        %v665 = vadd.f32 %v589, %v637
        %v666 = vadd.f32 %v590, %v633
        %v667 = vadd.f32 %v591, %v637
        %v668 = vadd.f32 %v592, %v633
        %v669 = vadd.f32 %v593, %v637
        %v670 = vadd.f32 %v594, %v633
        %v671 = vadd.f32 %v595, %v637
        %v672 = vadd.f32 %v596, %v633
        %v673 = vadd.f32 %v597, %v637
        %v674 = vadd.f32 %v598, %v633
        %v675 = vadd.f32 %v599, %v637
        %v676 = vadd.f32 %v600, %v633
        %v677 = vadd.f32 %v601, %v637
        %v678 = vadd.f32 %v602, %v633
        %v679 = vadd.f32 %v603, %v637
        %v680 = vadd.f32 %v604, %v633
        %v681 = vadd.f32 %v605, %v637
        %v682 = vadd.f32 %v606, %v633
        %v683 = vadd.f32 %v607, %v637
        %v684 = vadd.f32 %v608, %v633
        %v685 = vadd.f32 %v609, %v637
        %v686 = vadd.f32 %v610, %v633
        %v687 = vadd.f32 %v611, %v637
        %v688 = vadd.f32 %v612, %v633
        %v689 = vadd.f32 %v613, %v637
        %v690 = vadd.f32 %v614, %v633
        %v691 = vadd.f32 %v615, %v637
        %v692 = vadd.f32 %v616, %v633
        %v693 = vadd.f32 %v617, %v637
        %v694 = vadd.f32 %v618, %v633
        %v695 = vadd.f32 %v619, %v637
        %v696 = vadd.f32 %v620, %v633
        %v697 = vadd.f32 %v621, %v637
        %v698 = vadd.f32 %v622, %v633
        %v699 = vadd.f32 %v623, %v637
        %v700 = vadd.f32 %v624, %v633
        %v701 = vadd.f32 %v625, %v637
        %v702 = vadd.f32 %v626, %v633
        %v703 = vadd.f32 %v627, %v637
        %v704 = vmax.f32 %v640, 0.0
        %v705 = vmax.f32 %v641, 0.0
        %v706 = vmax.f32 %v642, 0.0
        %v707 = vmax.f32 %v643, 0.0
        %v708 = vmax.f32 %v644, 0.0
        %v709 = vmax.f32 %v645, 0.0
        %v710 = vmax.f32 %v646, 0.0
        %v711 = vmax.f32 %v647, 0.0
        %v712 = vmax.f32 %v648, 0.0
        %v713 = vmax.f32 %v649, 0.0
        %v714 = vmax.f32 %v650, 0.0
        %v715 = vmax.f32 %v651, 0.0
        %v716 = vmax.f32 %v652, 0.0
        %v717 = vmax.f32 %v653, 0.0
        %v718 = vmax.f32 %v654, 0.0
        %v719 = vmax.f32 %v655, 0.0
        %v720 = vmax.f32 %v656, 0.0
        %v721 = vmax.f32 %v657, 0.0
        %v722 = vmax.f32 %v658, 0.0
        %v723 = vmax.f32 %v659, 0.0
        %v724 = vmax.f32 %v660, 0.0
        %v725 = vmax.f32 %v661, 0.0
        %v726 = vmax.f32 %v662, 0.0
        %v727 = vmax.f32 %v663, 0.0
        %v728 = vmax.f32 %v664, 0.0
        %v729 = vmax.f32 %v665, 0.0
        %v730 = vmax.f32 %v666, 0.0
        %v731 = vmax.f32 %v667, 0.0
        %v732 = vmax.f32 %v668, 0.0
        %v733 = vmax.f32 %v669, 0.0
        %v734 = vmax.f32 %v670, 0.0
        %v735 = vmax.f32 %v671, 0.0
        %v736 = vmax.f32 %v672, 0.0
        %v737 = vmax.f32 %v673, 0.0
        %v738 = vmax.f32 %v674, 0.0
        %v739 = vmax.f32 %v675, 0.0
        %v740 = vmax.f32 %v676, 0.0
        %v741 = vmax.f32 %v677, 0.0
        %v742 = vmax.f32 %v678, 0.0
        %v743 = vmax.f32 %v679, 0.0
        %v744 = vmax.f32 %v680, 0.0
        %v745 = vmax.f32 %v681, 0.0
        %v746 = vmax.f32 %v682, 0.0
        %v747 = vmax.f32 %v683, 0.0
        %v748 = vmax.f32 %v684, 0.0
        %v749 = vmax.f32 %v685, 0.0
        %v750 = vmax.f32 %v686, 0.0
        %v751 = vmax.f32 %v687, 0.0
        %v752 = vmax.f32 %v688, 0.0
        %v753 = vmax.f32 %v689, 0.0
        %v754 = vmax.f32 %v690, 0.0
        %v755 = vmax.f32 %v691, 0.0
        %v756 = vmax.f32 %v692, 0.0
        %v757 = vmax.f32 %v693, 0.0
        %v758 = vmax.f32 %v694, 0.0
        %v759 = vmax.f32 %v695, 0.0
        %v760 = vmax.f32 %v696, 0.0
        %v761 = vmax.f32 %v697, 0.0
        %v762 = vmax.f32 %v698, 0.0
        %v763 = vmax.f32 %v699, 0.0
        %v764 = vmax.f32 %v700, 0.0
        %v765 = vmax.f32 %v701, 0.0
        %v766 = vmax.f32 %v702, 0.0
        %v767 = vmax.f32 %v703, 0.0
        %v768 = vld [vmem:[#allocation2] sm:$0xff]
        %v769 = vld [vmem:[#allocation2 + $0x8] sm:$0xff]
        %v770 = vld [vmem:[#allocation2 + $0x10] sm:$0xff]
        %v771 = vld [vmem:[#allocation2 + $0x18] sm:$0xff]
        %v772 = vld [vmem:[#allocation2 + $0x20] sm:$0xff]
        %v773 = vld [vmem:[#allocation2 + $0x28] sm:$0xff]
        %v774 = vld [vmem:[#allocation2 + $0x30] sm:$0xff]
        %v775 = vld [vmem:[#allocation2 + $0x38] sm:$0xff]
        %v776 = vld [vmem:[#allocation2 + $0x40] sm:$0xff]
        %v777 = vld [vmem:[#allocation2 + $0x48] sm:$0xff]
        %v778 = vld [vmem:[#allocation2 + $0x50] sm:$0xff]
        %v779 = vld [vmem:[#allocation2 + $0x58] sm:$0xff]
        %v780 = vld [vmem:[#allocation2 + $0x60] sm:$0xff]
        %v781 = vld [vmem:[#allocation2 + $0x68] sm:$0xff]
        %v782 = vld [vmem:[#allocation2 + $0x70] sm:$0xff]
        %v783 = vld [vmem:[#allocation2 + $0x78] sm:$0xff]
        %v784 = vld [vmem:[#allocation2 + $0x80] sm:$0xff]
        %v785 = vld [vmem:[#allocation2 + $0x88] sm:$0xff]
        %v786 = vld [vmem:[#allocation2 + $0x90] sm:$0xff]
        %v787 = vld [vmem:[#allocation2 + $0x98] sm:$0xff]
        %v788 = vld [vmem:[#allocation2 + $0xa0] sm:$0xff]
        %v789 = vld [vmem:[#allocation2 + $0xa8] sm:$0xff]
        %v790 = vld [vmem:[#allocation2 + $0xb0] sm:$0xff]
        %v791 = vld [vmem:[#allocation2 + $0xb8] sm:$0xff]
        %v792 = vld [vmem:[#allocation2 + $0xc0] sm:$0xff]
        %v793 = vld [vmem:[#allocation2 + $0xc8] sm:$0xff]
        %v794 = vld [vmem:[#allocation2 + $0xd0] sm:$0xff]
        %v795 = vld [vmem:[#allocation2 + $0xd8] sm:$0xff]
        %v796 = vld [vmem:[#allocation2 + $0xe0] sm:$0xff]
        %v797 = vld [vmem:[#allocation2 + $0xe8] sm:$0xff]
        %v798 = vld [vmem:[#allocation2 + $0xf0] sm:$0xff]
        %v799 = vld [vmem:[#allocation2 + $0xf8] sm:$0xff]
        %v800 = vpack.c.bf16 %v706, %v704
        %v801 = vpack.c.bf16 %v707, %v705
        %v802 = vpack.c.bf16 %v710, %v708
        %v803 = vpack.c.bf16 %v711, %v709
        %v804 = vpack.c.bf16 %v714, %v712
        %v805 = vpack.c.bf16 %v715, %v713
        %v806 = vpack.c.bf16 %v718, %v716
        %v807 = vpack.c.bf16 %v719, %v717
        %v808 = vpack.c.bf16 %v722, %v720
        %v809 = vpack.c.bf16 %v723, %v721
        %v810 = vpack.c.bf16 %v726, %v724
        %v811 = vpack.c.bf16 %v727, %v725
        %v812 = vpack.c.bf16 %v730, %v728
        %v813 = vpack.c.bf16 %v731, %v729
        %v814 = vpack.c.bf16 %v734, %v732
        %v815 = vpack.c.bf16 %v735, %v733
        %v816 = vpack.c.bf16 %v738, %v736
        %v817 = vpack.c.bf16 %v739, %v737
        %v818 = vpack.c.bf16 %v742, %v740
        %v819 = vpack.c.bf16 %v743, %v741
        %v820 = vpack.c.bf16 %v746, %v744
        %v821 = vpack.c.bf16 %v747, %v745
        %v822 = vpack.c.bf16 %v750, %v748
        %v823 = vpack.c.bf16 %v751, %v749
        %v824 = vpack.c.bf16 %v754, %v752
        %v825 = vpack.c.bf16 %v755, %v753
        %v826 = vpack.c.bf16 %v758, %v756
        %v827 = vpack.c.bf16 %v759, %v757
        %v828 = vpack.c.bf16 %v762, %v760
        %v829 = vpack.c.bf16 %v763, %v761
        %v830 = vpack.c.bf16 %v766, %v764
        %v831 = vpack.c.bf16 %v767, %v765
        %v832 = vld [vmem:[%s443] sm:$0xf]
        %v833 = vld [vmem:[%s443 + $0x4] sm:$0xf]
        %v834 = vld [vmem:[%s443 + $0x8] sm:$0xf]
        %v835 = vld [vmem:[%s443 + $0xc] sm:$0xf]
        %v836 = vld [vmem:[%s443 + $0x10] sm:$0xf]
        %v837 = vld [vmem:[%s443 + $0x14] sm:$0xf]
        %v838 = vld [vmem:[%s443 + $0x18] sm:$0xf]
        %v839 = vld [vmem:[%s443 + $0x1c] sm:$0xf]
        %v840 = vld [vmem:[%s443 + $0x20] sm:$0xf]
        %v841 = vld [vmem:[%s443 + $0x24] sm:$0xf]
        %v842 = vld [vmem:[%s443 + $0x28] sm:$0xf]
        %v843 = vld [vmem:[%s443 + $0x2c] sm:$0xf]
        %v844 = vld [vmem:[%s443 + $0x30] sm:$0xf]
        %v845 = vld [vmem:[%s443 + $0x34] sm:$0xf]
        %v846 = vld [vmem:[%s443 + $0x38] sm:$0xf]
        %v847 = vld [vmem:[%s443 + $0x3c] sm:$0xf]
        %v848 = vld [vmem:[%s443 + $0x40] sm:$0xf]
        %v849 = vld [vmem:[%s443 + $0x44] sm:$0xf]
        %v850 = vld [vmem:[%s443 + $0x48] sm:$0xf]
        %v851 = vld [vmem:[%s443 + $0x4c] sm:$0xf]
        %v852 = vld [vmem:[%s443 + $0x50] sm:$0xf]
        %v853 = vld [vmem:[%s443 + $0x54] sm:$0xf]
        %v854 = vld [vmem:[%s443 + $0x58] sm:$0xf]
        %v855 = vld [vmem:[%s443 + $0x5c] sm:$0xf]
        %v856 = vld [vmem:[%s443 + $0x60] sm:$0xf]
        %v857 = vld [vmem:[%s443 + $0x64] sm:$0xf]
        %v858 = vld [vmem:[%s443 + $0x68] sm:$0xf]
        %v859 = vld [vmem:[%s443 + $0x6c] sm:$0xf]
        %v860 = vld [vmem:[%s443 + $0x70] sm:$0xf]
        %v861 = vld [vmem:[%s443 + $0x74] sm:$0xf]
        %v862 = vld [vmem:[%s443 + $0x78] sm:$0xf]
        %v863 = vld [vmem:[%s443 + $0x7c] sm:$0xf]
        %v896 = vunpack.c.l.b16 %v832
        %v897 = vunpack.c.l.b16 %v833
        %v898 = vunpack.c.l.b16 %v834
        %v899 = vunpack.c.l.b16 %v835
        %v900 = vunpack.c.l.b16 %v836
        %v901 = vunpack.c.l.b16 %v837
        %v902 = vunpack.c.l.b16 %v838
        %v903 = vunpack.c.l.b16 %v839
        %v904 = vunpack.c.l.b16 %v840
        %v905 = vunpack.c.l.b16 %v841
        %v906 = vunpack.c.l.b16 %v842
        %v907 = vunpack.c.l.b16 %v843
        %v908 = vunpack.c.l.b16 %v844
        %v909 = vunpack.c.l.b16 %v845
        %v910 = vunpack.c.l.b16 %v846
        %v911 = vunpack.c.l.b16 %v847
        %v912 = vunpack.c.l.b16 %v848
        %v913 = vunpack.c.l.b16 %v849
        %v914 = vunpack.c.l.b16 %v850
        %v915 = vunpack.c.l.b16 %v851
        %v916 = vunpack.c.l.b16 %v852
        %v917 = vunpack.c.l.b16 %v853
        %v918 = vunpack.c.l.b16 %v854
        %v919 = vunpack.c.l.b16 %v855
        %v920 = vunpack.c.l.b16 %v856
        %v921 = vunpack.c.l.b16 %v857
        %v922 = vunpack.c.l.b16 %v858
        %v923 = vunpack.c.l.b16 %v859
        %v924 = vunpack.c.l.b16 %v860
        %v925 = vunpack.c.l.b16 %v861
        %v926 = vunpack.c.l.b16 %v862
        %v927 = vunpack.c.l.b16 %v863
        %v928 = vpack.c.b16 %v897, %v896
        %v929 = vpack.c.b16 %v899, %v898
        %v930 = vpack.c.b16 %v901, %v900
        %v931 = vpack.c.b16 %v903, %v902
        %v932 = vpack.c.b16 %v905, %v904
        %v933 = vpack.c.b16 %v907, %v906
        %v934 = vpack.c.b16 %v909, %v908
        %v935 = vpack.c.b16 %v911, %v910
        %v936 = vpack.c.b16 %v913, %v912
        %v937 = vpack.c.b16 %v915, %v914
        %v938 = vpack.c.b16 %v917, %v916
        %v939 = vpack.c.b16 %v919, %v918
        %v940 = vpack.c.b16 %v921, %v920
        %v941 = vpack.c.b16 %v923, %v922
        %v942 = vpack.c.b16 %v925, %v924
        %v943 = vpack.c.b16 %v927, %v926
        %960 = vmatprep.subr.bf16.mxu0 0
        %961 = vmatpush1.bf16.msra.mxu0 %v928
        %962 = vmatprep.subr.bf16.mxu0 0
        %963 = vmatpush1.bf16.msra.mxu0 %v929
        %964 = vmatprep.subr.bf16.mxu0 0
        %965 = vmatpush1.bf16.msra.mxu0 %v930
        %966 = vmatprep.subr.bf16.mxu0 0
        %967 = vmatpush1.bf16.msra.mxu0 %v931
        %968 = vmatprep.subr.bf16.mxu0 0
        %969 = vmatpush1.bf16.msra.mxu0 %v932
        %970 = vmatprep.subr.bf16.mxu0 0
        %971 = vmatpush1.bf16.msra.mxu0 %v933
        %972 = vmatprep.subr.bf16.mxu0 0
        %973 = vmatpush1.bf16.msra.mxu0 %v934
        %974 = vmatprep.subr.bf16.mxu0 0
        %975 = vmatpush1.bf16.msra.mxu0 %v935
        %976 = vmatprep.subr.bf16.mxu0 0
        %977 = vmatpush1.bf16.msra.mxu0 %v936
        %978 = vmatprep.subr.bf16.mxu0 0
        %979 = vmatpush1.bf16.msra.mxu0 %v937
        %980 = vmatprep.subr.bf16.mxu0 0
        %981 = vmatpush1.bf16.msra.mxu0 %v938
        %982 = vmatprep.subr.bf16.mxu0 0
        %983 = vmatpush1.bf16.msra.mxu0 %v939
        %984 = vmatprep.subr.bf16.mxu0 0
        %985 = vmatpush1.bf16.msra.mxu0 %v940
        %986 = vmatprep.subr.bf16.mxu0 0
        %987 = vmatpush1.bf16.msra.mxu0 %v941
        %988 = vmatprep.subr.bf16.mxu0 0
        %989 = vmatpush1.bf16.msra.mxu0 %v942
        %990 = vmatprep.subr.bf16.mxu0 0
        %991 = vmatpush1.bf16.msra.mxu0 %v943
        %992 = vmatprep.mubr.bf16.mxu0 %v801
        %993 = vmatmul.mubr.bf16.gmra.mrb[0].mxu0 %v800
        %v994 = vpop.f32.mrb[0].mxu0
        %v995 = vadd.f32 0.0, %v994
        %v996 = vpop.f32.mrb[0].mxu0
        %v997 = vpop.f32.mrb[0].mxu0
        %v998 = vadd.f32 0.0, %v997
        %v999 = vpop.f32.mrb[0].mxu0
        %1000 = vmatprep.mubr.bf16.mxu0 %v803
        %1001 = vmatmul.mubr.bf16.gmra.mrb[0].mxu0 %v802
        %v1002 = vpop.f32.mrb[0].mxu0
        %v1003 = vadd.f32 0.0, %v1002
        %v1004 = vpop.f32.mrb[0].mxu0
        %v1005 = vpop.f32.mrb[0].mxu0
        %v1006 = vadd.f32 0.0, %v1005
        %v1007 = vpop.f32.mrb[0].mxu0
        %1008 = vmatprep.mubr.bf16.mxu0 %v805
        %1009 = vmatmul.mubr.bf16.gmra.mrb[0].mxu0 %v804
        %v1010 = vpop.f32.mrb[0].mxu0
        %v1011 = vadd.f32 0.0, %v1010
        %v1012 = vpop.f32.mrb[0].mxu0
        %v1013 = vpop.f32.mrb[0].mxu0
        %v1014 = vadd.f32 0.0, %v1013
        %v1015 = vpop.f32.mrb[0].mxu0
        %1016 = vmatprep.mubr.bf16.mxu0 %v807
        %1017 = vmatmul.mubr.bf16.gmra.mrb[0].mxu0 %v806
        %v1018 = vpop.f32.mrb[0].mxu0
        %v1019 = vadd.f32 0.0, %v1018
        %v1020 = vpop.f32.mrb[0].mxu0
        %v1021 = vpop.f32.mrb[0].mxu0
        %v1022 = vadd.f32 0.0, %v1021
        %v1023 = vpop.f32.mrb[0].mxu0
        %1024 = vmatprep.mubr.bf16.mxu0 %v809
        %1025 = vmatmul.mubr.bf16.gmra.mrb[0].mxu0 %v808
        %v1026 = vpop.f32.mrb[0].mxu0
        %v1027 = vadd.f32 0.0, %v1026
        %v1028 = vpop.f32.mrb[0].mxu0
        %v1029 = vpop.f32.mrb[0].mxu0
        %v1030 = vadd.f32 0.0, %v1029
        %v1031 = vpop.f32.mrb[0].mxu0
        %1032 = vmatprep.mubr.bf16.mxu0 %v811
        %1033 = vmatmul.mubr.bf16.gmra.mrb[0].mxu0 %v810
        %v1034 = vpop.f32.mrb[0].mxu0
        %v1035 = vadd.f32 0.0, %v1034
        %v1036 = vpop.f32.mrb[0].mxu0
        %v1037 = vpop.f32.mrb[0].mxu0
        %v1038 = vadd.f32 0.0, %v1037
        %v1039 = vpop.f32.mrb[0].mxu0
        %1040 = vmatprep.mubr.bf16.mxu0 %v813
        %1041 = vmatmul.mubr.bf16.gmra.mrb[0].mxu0 %v812
        %v1042 = vpop.f32.mrb[0].mxu0
        %v1043 = vadd.f32 0.0, %v1042
        %v1044 = vpop.f32.mrb[0].mxu0
        %v1045 = vpop.f32.mrb[0].mxu0
        %v1046 = vadd.f32 0.0, %v1045
        %v1047 = vpop.f32.mrb[0].mxu0
        %1048 = vmatprep.mubr.bf16.mxu0 %v815
        %1049 = vmatmul.mubr.bf16.gmra.mrb[0].mxu0 %v814
        %v1050 = vpop.f32.mrb[0].mxu0
        %v1051 = vadd.f32 0.0, %v1050
        %v1052 = vpop.f32.mrb[0].mxu0
        %v1053 = vpop.f32.mrb[0].mxu0
        %v1054 = vadd.f32 0.0, %v1053
        %v1055 = vpop.f32.mrb[0].mxu0
        %1056 = vmatprep.mubr.bf16.mxu0 %v817
        %1057 = vmatmul.mubr.bf16.gmra.mrb[0].mxu0 %v816
        %v1058 = vpop.f32.mrb[0].mxu0
        %v1059 = vadd.f32 0.0, %v1058
        %v1060 = vpop.f32.mrb[0].mxu0
        %v1061 = vpop.f32.mrb[0].mxu0
        %v1062 = vadd.f32 0.0, %v1061
        %v1063 = vpop.f32.mrb[0].mxu0
        %1064 = vmatprep.mubr.bf16.mxu0 %v819
        %1065 = vmatmul.mubr.bf16.gmra.mrb[0].mxu0 %v818
        %v1066 = vpop.f32.mrb[0].mxu0
        %v1067 = vadd.f32 0.0, %v1066
        %v1068 = vpop.f32.mrb[0].mxu0
        %v1069 = vpop.f32.mrb[0].mxu0
        %v1070 = vadd.f32 0.0, %v1069
        %v1071 = vpop.f32.mrb[0].mxu0
        %1072 = vmatprep.mubr.bf16.mxu0 %v821
        %1073 = vmatmul.mubr.bf16.gmra.mrb[0].mxu0 %v820
        %v1074 = vpop.f32.mrb[0].mxu0
        %v1075 = vadd.f32 0.0, %v1074
        %v1076 = vpop.f32.mrb[0].mxu0
        %v1077 = vpop.f32.mrb[0].mxu0
        %v1078 = vadd.f32 0.0, %v1077
        %v1079 = vpop.f32.mrb[0].mxu0
        %1080 = vmatprep.mubr.bf16.mxu0 %v823
        %1081 = vmatmul.mubr.bf16.gmra.mrb[0].mxu0 %v822
        %v1082 = vpop.f32.mrb[0].mxu0
        %v1083 = vadd.f32 0.0, %v1082
        %v1084 = vpop.f32.mrb[0].mxu0
        %v1085 = vpop.f32.mrb[0].mxu0
        %v1086 = vadd.f32 0.0, %v1085
        %v1087 = vpop.f32.mrb[0].mxu0
        %1088 = vmatprep.mubr.bf16.mxu0 %v825
        %1089 = vmatmul.mubr.bf16.gmra.mrb[0].mxu0 %v824
        %v1090 = vpop.f32.mrb[0].mxu0
        %v1091 = vadd.f32 0.0, %v1090
        %v1092 = vpop.f32.mrb[0].mxu0
        %v1093 = vpop.f32.mrb[0].mxu0
        %v1094 = vadd.f32 0.0, %v1093
        %v1095 = vpop.f32.mrb[0].mxu0
        %1096 = vmatprep.mubr.bf16.mxu0 %v827
        %1097 = vmatmul.mubr.bf16.gmra.mrb[0].mxu0 %v826
        %v1098 = vpop.f32.mrb[0].mxu0
        %v1099 = vadd.f32 0.0, %v1098
        %v1100 = vpop.f32.mrb[0].mxu0
        %v1101 = vpop.f32.mrb[0].mxu0
        %v1102 = vadd.f32 0.0, %v1101
        %v1103 = vpop.f32.mrb[0].mxu0
        %1104 = vmatprep.mubr.bf16.mxu0 %v829
        %1105 = vmatmul.mubr.bf16.gmra.mrb[0].mxu0 %v828
        %v1106 = vpop.f32.mrb[0].mxu0
        %v1107 = vadd.f32 0.0, %v1106
        %v1108 = vpop.f32.mrb[0].mxu0
        %v1109 = vpop.f32.mrb[0].mxu0
        %v1110 = vadd.f32 0.0, %v1109
        %v1111 = vpop.f32.mrb[0].mxu0
        %1112 = vmatprep.mubr.bf16.mxu0 %v831
        %1113 = vmatmul.mubr.bf16.gmra.mrb[0].mxu0 %v830
        %v1114 = vpop.f32.mrb[0].mxu0
        %v1115 = vadd.f32 0.0, %v1114
        %v1116 = vpop.f32.mrb[0].mxu0
        %v1117 = vpop.f32.mrb[0].mxu0
        %v1118 = vadd.f32 0.0, %v1117
        %v1119 = vpop.f32.mrb[0].mxu0
        %1120 = vdwg.mxu0
        %v1121 = vadd.f32 %v768, %v995
        %v1122 = vadd.f32 %v769, %v998
        %v1123 = vadd.f32 %v770, %v1003
        %v1124 = vadd.f32 %v771, %v1006
        %v1125 = vadd.f32 %v772, %v1011
        %v1126 = vadd.f32 %v773, %v1014
        %v1127 = vadd.f32 %v774, %v1019
        %v1128 = vadd.f32 %v775, %v1022
        %v1129 = vadd.f32 %v776, %v1027
        %v1130 = vadd.f32 %v777, %v1030
        %v1131 = vadd.f32 %v778, %v1035
        %v1132 = vadd.f32 %v779, %v1038
        %v1133 = vadd.f32 %v780, %v1043
        %v1134 = vadd.f32 %v781, %v1046
        %v1135 = vadd.f32 %v782, %v1051
        %v1136 = vadd.f32 %v783, %v1054
        %v1137 = vadd.f32 %v784, %v1059
        %v1138 = vadd.f32 %v785, %v1062
        %v1139 = vadd.f32 %v786, %v1067
        %v1140 = vadd.f32 %v787, %v1070
        %v1141 = vadd.f32 %v788, %v1075
        %v1142 = vadd.f32 %v789, %v1078
        %v1143 = vadd.f32 %v790, %v1083
        %v1144 = vadd.f32 %v791, %v1086
        %v1145 = vadd.f32 %v792, %v1091
        %v1146 = vadd.f32 %v793, %v1094
        %v1147 = vadd.f32 %v794, %v1099
        %v1148 = vadd.f32 %v795, %v1102
        %v1149 = vadd.f32 %v796, %v1107
        %v1150 = vadd.f32 %v797, %v1110
        %v1151 = vadd.f32 %v798, %v1115
        %v1152 = vadd.f32 %v799, %v1118
        %1153 = vst [vmem:[#allocation2] sm:$0xff] %v1121
        %1154 = vst [vmem:[#allocation2 + $0x8] sm:$0xff] %v1122
        %1155 = vst [vmem:[#allocation2 + $0x10] sm:$0xff] %v1123
        %1156 = vst [vmem:[#allocation2 + $0x18] sm:$0xff] %v1124
        %1157 = vst [vmem:[#allocation2 + $0x20] sm:$0xff] %v1125
        %1158 = vst [vmem:[#allocation2 + $0x28] sm:$0xff] %v1126
        %1159 = vst [vmem:[#allocation2 + $0x30] sm:$0xff] %v1127
        %1160 = vst [vmem:[#allocation2 + $0x38] sm:$0xff] %v1128
        %1161 = vst [vmem:[#allocation2 + $0x40] sm:$0xff] %v1129
        %1162 = vst [vmem:[#allocation2 + $0x48] sm:$0xff] %v1130
        %1163 = vst [vmem:[#allocation2 + $0x50] sm:$0xff] %v1131
        %1164 = vst [vmem:[#allocation2 + $0x58] sm:$0xff] %v1132
        %1165 = vst [vmem:[#allocation2 + $0x60] sm:$0xff] %v1133
        %1166 = vst [vmem:[#allocation2 + $0x68] sm:$0xff] %v1134
        %1167 = vst [vmem:[#allocation2 + $0x70] sm:$0xff] %v1135
        %1168 = vst [vmem:[#allocation2 + $0x78] sm:$0xff] %v1136
        %1169 = vst [vmem:[#allocation2 + $0x80] sm:$0xff] %v1137
        %1170 = vst [vmem:[#allocation2 + $0x88] sm:$0xff] %v1138
        %1171 = vst [vmem:[#allocation2 + $0x90] sm:$0xff] %v1139
        %1172 = vst [vmem:[#allocation2 + $0x98] sm:$0xff] %v1140
        %1173 = vst [vmem:[#allocation2 + $0xa0] sm:$0xff] %v1141
        %1174 = vst [vmem:[#allocation2 + $0xa8] sm:$0xff] %v1142
        %1175 = vst [vmem:[#allocation2 + $0xb0] sm:$0xff] %v1143
        %1176 = vst [vmem:[#allocation2 + $0xb8] sm:$0xff] %v1144
        %1177 = vst [vmem:[#allocation2 + $0xc0] sm:$0xff] %v1145
        %1178 = vst [vmem:[#allocation2 + $0xc8] sm:$0xff] %v1146
        %1179 = vst [vmem:[#allocation2 + $0xd0] sm:$0xff] %v1147
        %1180 = vst [vmem:[#allocation2 + $0xd8] sm:$0xff] %v1148
        %1181 = vst [vmem:[#allocation2 + $0xe0] sm:$0xff] %v1149
        %1182 = vst [vmem:[#allocation2 + $0xe8] sm:$0xff] %v1150
        %1183 = vst [vmem:[#allocation2 + $0xf0] sm:$0xff] %v1151
        %1184 = vst [vmem:[#allocation2 + $0xf8] sm:$0xff] %v1152
        %p1185 = scmp.eq.s32.totalorder %s21, 1
        // Predicated region
        $region68: #{simclr_projection_head.5} parent=58 // pred_check
          %p1186 = pneg %p1185
        $region69: #{simclr_projection_head.5} parent=58 // pred_check_branch
          %1188 = sbr.rel (%p1186) target = $region71
        $region70: #{simclr_projection_head.5} parent=58 // pred_region
          %v1189 = vld [vmem:[#allocation2] sm:$0xff]
          %v1190 = vld [vmem:[#allocation2 + $0x8] sm:$0xff]
          %v1191 = vld [vmem:[#allocation2 + $0x10] sm:$0xff]
          %v1192 = vld [vmem:[#allocation2 + $0x18] sm:$0xff]
          %v1193 = vld [vmem:[#allocation2 + $0x20] sm:$0xff]
          %v1194 = vld [vmem:[#allocation2 + $0x28] sm:$0xff]
          %v1195 = vld [vmem:[#allocation2 + $0x30] sm:$0xff]
          %v1196 = vld [vmem:[#allocation2 + $0x38] sm:$0xff]
          %v1197 = vld [vmem:[#allocation2 + $0x40] sm:$0xff]
          %v1198 = vld [vmem:[#allocation2 + $0x48] sm:$0xff]
          %v1199 = vld [vmem:[#allocation2 + $0x50] sm:$0xff]
          %v1200 = vld [vmem:[#allocation2 + $0x58] sm:$0xff]
          %v1201 = vld [vmem:[#allocation2 + $0x60] sm:$0xff]
          %v1202 = vld [vmem:[#allocation2 + $0x68] sm:$0xff]
          %v1203 = vld [vmem:[#allocation2 + $0x70] sm:$0xff]
          %v1204 = vld [vmem:[#allocation2 + $0x78] sm:$0xff]
          %v1205 = vld [vmem:[#allocation2 + $0x80] sm:$0xff]
          %v1206 = vld [vmem:[#allocation2 + $0x88] sm:$0xff]
          %v1207 = vld [vmem:[#allocation2 + $0x90] sm:$0xff]
          %v1208 = vld [vmem:[#allocation2 + $0x98] sm:$0xff]
          %v1209 = vld [vmem:[#allocation2 + $0xa0] sm:$0xff]
          %v1210 = vld [vmem:[#allocation2 + $0xa8] sm:$0xff]
          %v1211 = vld [vmem:[#allocation2 + $0xb0] sm:$0xff]
          %v1212 = vld [vmem:[#allocation2 + $0xb8] sm:$0xff]
          %v1213 = vld [vmem:[#allocation2 + $0xc0] sm:$0xff]
          %v1214 = vld [vmem:[#allocation2 + $0xc8] sm:$0xff]
          %v1215 = vld [vmem:[#allocation2 + $0xd0] sm:$0xff]
          %v1216 = vld [vmem:[#allocation2 + $0xd8] sm:$0xff]
          %v1217 = vld [vmem:[#allocation2 + $0xe0] sm:$0xff]
          %v1218 = vld [vmem:[#allocation2 + $0xe8] sm:$0xff]
          %v1219 = vld [vmem:[#allocation2 + $0xf0] sm:$0xff]
          %v1220 = vld [vmem:[#allocation2 + $0xf8] sm:$0xff]
          %v1221 = vld [vmem:[%s4] sm:$0x1]
          %v1223 = vlaneseq
          %v1224 = vshrl.u32 %v1223, 7
          %v1225 = vsub.s32 0, %v1224
          %v1226 = vrot.slane %v1221, %v1225
          %v1228 = vadd.f32 %v1189, %v1226
          %v1229 = vadd.f32 %v1190, %v1226
          %v1230 = vadd.f32 %v1191, %v1226
          %v1231 = vadd.f32 %v1192, %v1226
          %v1232 = vadd.f32 %v1193, %v1226
          %v1233 = vadd.f32 %v1194, %v1226
          %v1234 = vadd.f32 %v1195, %v1226
          %v1235 = vadd.f32 %v1196, %v1226
          %v1236 = vadd.f32 %v1197, %v1226
          %v1237 = vadd.f32 %v1198, %v1226
          %v1238 = vadd.f32 %v1199, %v1226
          %v1239 = vadd.f32 %v1200, %v1226
          %v1240 = vadd.f32 %v1201, %v1226
          %v1241 = vadd.f32 %v1202, %v1226
          %v1242 = vadd.f32 %v1203, %v1226
          %v1243 = vadd.f32 %v1204, %v1226
          %v1244 = vadd.f32 %v1205, %v1226
          %v1245 = vadd.f32 %v1206, %v1226
          %v1246 = vadd.f32 %v1207, %v1226
          %v1247 = vadd.f32 %v1208, %v1226
          %v1248 = vadd.f32 %v1209, %v1226
          %v1249 = vadd.f32 %v1210, %v1226
          %v1250 = vadd.f32 %v1211, %v1226
          %v1251 = vadd.f32 %v1212, %v1226
          %v1252 = vadd.f32 %v1213, %v1226
          %v1253 = vadd.f32 %v1214, %v1226
          %v1254 = vadd.f32 %v1215, %v1226
          %v1255 = vadd.f32 %v1216, %v1226
          %v1256 = vadd.f32 %v1217, %v1226
          %v1257 = vadd.f32 %v1218, %v1226
          %v1258 = vadd.f32 %v1219, %v1226
          %v1259 = vadd.f32 %v1220, %v1226
          %1260 = vst [vmem:[%s449] sm:$0xff] %v1228
          %1261 = vst [vmem:[%s449 + $0x8] sm:$0xff] %v1229
          %1262 = vst [vmem:[%s449 + $0x10] sm:$0xff] %v1230
          %1263 = vst [vmem:[%s449 + $0x18] sm:$0xff] %v1231
          %1264 = vst [vmem:[%s449 + $0x20] sm:$0xff] %v1232
          %1265 = vst [vmem:[%s449 + $0x28] sm:$0xff] %v1233
          %1266 = vst [vmem:[%s449 + $0x30] sm:$0xff] %v1234
          %1267 = vst [vmem:[%s449 + $0x38] sm:$0xff] %v1235
          %1268 = vst [vmem:[%s449 + $0x40] sm:$0xff] %v1236
          %1269 = vst [vmem:[%s449 + $0x48] sm:$0xff] %v1237
          %1270 = vst [vmem:[%s449 + $0x50] sm:$0xff] %v1238
          %1271 = vst [vmem:[%s449 + $0x58] sm:$0xff] %v1239
          %1272 = vst [vmem:[%s449 + $0x60] sm:$0xff] %v1240
          %1273 = vst [vmem:[%s449 + $0x68] sm:$0xff] %v1241
          %1274 = vst [vmem:[%s449 + $0x70] sm:$0xff] %v1242
          %1275 = vst [vmem:[%s449 + $0x78] sm:$0xff] %v1243
          %1276 = vst [vmem:[%s449 + $0x80] sm:$0xff] %v1244
          %1277 = vst [vmem:[%s449 + $0x88] sm:$0xff] %v1245
          %1278 = vst [vmem:[%s449 + $0x90] sm:$0xff] %v1246
          %1279 = vst [vmem:[%s449 + $0x98] sm:$0xff] %v1247
          %1280 = vst [vmem:[%s449 + $0xa0] sm:$0xff] %v1248
          %1281 = vst [vmem:[%s449 + $0xa8] sm:$0xff] %v1249
          %1282 = vst [vmem:[%s449 + $0xb0] sm:$0xff] %v1250
          %1283 = vst [vmem:[%s449 + $0xb8] sm:$0xff] %v1251
          %1284 = vst [vmem:[%s449 + $0xc0] sm:$0xff] %v1252
          %1285 = vst [vmem:[%s449 + $0xc8] sm:$0xff] %v1253
          %1286 = vst [vmem:[%s449 + $0xd0] sm:$0xff] %v1254
          %1287 = vst [vmem:[%s449 + $0xd8] sm:$0xff] %v1255
          %1288 = vst [vmem:[%s449 + $0xe0] sm:$0xff] %v1256
          %1289 = vst [vmem:[%s449 + $0xe8] sm:$0xff] %v1257
          %1290 = vst [vmem:[%s449 + $0xf0] sm:$0xff] %v1258
          %1291 = vst [vmem:[%s449 + $0xf8] sm:$0xff] %v1259
        $region71: #{simclr_projection_head.5} parent=58 // pred_fallthru
          _
        %s1292 = smul.u32 32, %s20
        %p1293 = scmp.lt.s32.totalorder %s1292, 63
        %s1294 = scalar_select %p1293, %s1292, 63
        %s1295 = smul.addr %s1294, 8
        %s1296 = scalar_lea.vmem %s5, %s1295
        // Predicated region
        $region72: #{simclr_projection_head.5} parent=58 // pred_check
          %p1297 = pneg %p173
        $region73: #{simclr_projection_head.5} parent=58 // pred_check_branch
          %1299 = sbr.rel (%p1297) target = $region75
        $region74: #{simclr_projection_head.5} parent=58 // pred_region
          %s1300 = smul.u32 32, %s20
        $region75: #{simclr_projection_head.5} parent=58 // pred_fallthru
          _
      $region59: #{simclr_projection_head.5} parent=5 // pred_fallthru
        _
      %p1301 = scmp.le.s32.totalorder 2, %s11
      // Predicated region
      $region76: #{simclr_projection_head.5} parent=5 // pred_check
        %p1302 = pneg %p1301
      $region77: #{simclr_projection_head.5} parent=5 // pred_check_branch
        %1304 = sbr.rel (%p1302) target = $region79
      $region78: #{simclr_projection_head.5} parent=5 // pred_region
        %s1305 = ssub.s32 %s11, 2
        // Predicated region
        $region80: #{simclr_projection_head.5} parent=78 // pred_check
          %p1306 = pneg %p179
        $region81: #{simclr_projection_head.5} parent=78 // pred_check_branch
          %1308 = sbr.rel (%p1306) target = $region83
        $region82: #{simclr_projection_head.5} parent=78 // pred_region
          %s1309 = smul.u32 32, %s22
          %p1310 = scmp.lt.s32.totalorder %s1309, 63
          %s1311 = scalar_select %p1310, %s1309, 63
          %s1312 = smul.addr %s1311, 8
          %s1313 = scalar_lea.vmem %s5, %s1312
        $region83: #{simclr_projection_head.5} parent=78 // pred_fallthru
          _
      $region79: #{simclr_projection_head.5} parent=5 // pred_fallthru
        _
    $region6: #{simclr_projection_head.5} parent=1 // loop_footer
      %s15 = sadd.s32 1, %s11
    $region7: #{simclr_projection_head.5} parent=1 // loop_footer_branch
      %10 = sbr.rel target = $region3
    $region8: #{simclr_projection_head.5} parent=1 // loop_exit
      _

// kernel: simclr_projection_head.3
$region0: #{simclr_projection_head.3}
  #allocation0 [shape = 'u32[]', space=smem, size = 0x4, offset = 0x4, fixed_abs, tag = 'smem constant byte address 0x4 - core index']
  #allocation1 [shape = 'u32[144,128]{1,0:T(1,128)}', space=vmem, size = 0x12000, scoped, tag = 'internal scratch']
  #allocation2 [shape = 'f32[256,512]{1,0:T(8,128)}', space=vmem, size = 0x80000, scoped, tag = 'scratch operand']
  %s0 = inlined_call_operand.vmem [shape: f32[512,128], index: 0, kind: input, shape index: {}]
  %s1 = inlined_call_operand.vmem [shape: bf16[128,512], index: 1, kind: input, shape index: {}]
  %s2 = inlined_call_operand.vmem [shape: f32[1,512], index: 2, kind: input, shape index: {}]
  %s3 = inlined_call_operand.vmem [shape: f32[512,512], index: 3, kind: output, shape index: {0}]
  %s4 = inlined_call_operand.vmem [shape: f32[2,2,512], index: 4, kind: output, shape index: {1}]
  %5 = xla_tuple %s3, %s4
  %s6 = sld [smem:[#allocation0]]
  $region61: #{simclr_projection_head.3} parent=0
    _
  %s8 = ssub.s32 1, %s6
  %s9 = scalar_select 0, %s8, %s6
  loop: start=0, step=1, limit=4
  $region2: #{simclr_projection_head.3} parent=0 // loop_pre_header
    _
  $region3: #{simclr_projection_head.3} parent=0 // loop_header
    %s11 = sphi 0, %s15
    %p12 = scmp.ge.s32.totalorder %s11, 4
    %s18 = sphi 0, %s30
    %s19 = sphi 0, %s26
    %s20 = sphi 0, %s18
    %s21 = sphi 0, %s19
    %s22 = sphi 0, %s20
    %s23 = sphi 0, %s21
    %s35 = sphi 0, %s37
    %s38 = sphi 0, %s35
    %s39 = sphi 0, %s38
    %s55 = sphi 0, %s39
    %s61 = sphi 0, %s63
    %s64 = sphi 0, %s61
    %s65 = sphi 0, %s64
    %s81 = sphi 0, %s65
    %s85 = sphi 0, %s85
    %s87 = sphi 0, %s85
    %s88 = sphi 0, %s87
    %s102 = sphi 0, %s88
    %s108 = sphi 0, %s110
    %s111 = sphi 0, %s108
    %s112 = sphi 0, %s111
    %s128 = sphi 0, %s112
    %s134 = sphi 0, %s136
    %s137 = sphi 0, %s134
    %s138 = sphi 0, %s137
    %s154 = sphi 0, %s138
  $region4: #{simclr_projection_head.3} parent=0 // loop_header_branch
    %14 = sbr.rel (%p12) target = $region8
  $region5: #{simclr_projection_head.3} parent=0 // loop_body
    %s16 = ssub.s32 %s11, 1
    %s17 = ssub.s32 %s11, 2
    %s24 = sadd.s32 1, %s19
    %p25 = scmp.ge.s32.totalorder %s24, 1
    %s26 = scalar_select %p25, 0, %s24
    %s27 = sadd.s32 1, %s18
    %s28 = scalar_select %p25, %s27, %s18
    %p29 = scmp.ge.s32.totalorder %s28, 2
    %s30 = scalar_select %p29, 0, %s28
    %s31 = ssub.s32 %s18, %s30
    %s32 = ssub.s32 %s19, %s26
    %s33 = sor.u32 %s31, %s32
    %p34 = scmp.eq.s32.totalorder %s33, 0
    %s36 = sadd.s32 %s35, 1
    %s37 = scalar_select %p34, %s35, %s36
    %p40 = pneg %p34
    %p41 = scmp.eq.s32.totalorder %s11, 1
    %p42 = por %p40, %p41
    %p43 = scmp.ne.s32.totalorder %s35, %s38
    %p44 = scmp.eq.s32.totalorder %s11, 0
    %p45 = por %p43, %p44
    %p46 = scmp.ne.s32.totalorder %s35, %s38
    %p47 = scmp.eq.s32.totalorder %s16, 1
    %p48 = por %p46, %p47
    %p49 = scmp.ne.s32.totalorder %s38, %s39
    %p50 = scmp.eq.s32.totalorder %s16, 0
    %p51 = por %p49, %p50
    %p52 = scmp.ne.s32.totalorder %s38, %s39
    %p53 = scmp.eq.s32.totalorder %s17, 1
    %p54 = por %p52, %p53
    %p56 = scmp.ne.s32.totalorder %s39, %s55
    %p57 = scmp.eq.s32.totalorder %s17, 0
    %p58 = por %p56, %p57
    %s59 = ssub.s32 %s19, %s26
    %p60 = scmp.eq.s32.totalorder %s59, 0
    %s62 = sadd.s32 %s61, 1
    %s63 = scalar_select %p60, %s61, %s62
    %p66 = pneg %p60
    %p67 = scmp.eq.s32.totalorder %s11, 1
    %p68 = por %p66, %p67
    %p69 = scmp.ne.s32.totalorder %s61, %s64
    %p70 = scmp.eq.s32.totalorder %s11, 0
    %p71 = por %p69, %p70
    %p72 = scmp.ne.s32.totalorder %s61, %s64
    %p73 = scmp.eq.s32.totalorder %s16, 1
    %p74 = por %p72, %p73
    %p75 = scmp.ne.s32.totalorder %s64, %s65
    %p76 = scmp.eq.s32.totalorder %s16, 0
    %p77 = por %p75, %p76
    %p78 = scmp.ne.s32.totalorder %s64, %s65
    %p79 = scmp.eq.s32.totalorder %s17, 1
    %p80 = por %p78, %p79
    %p82 = scmp.ne.s32.totalorder %s65, %s81
    %p83 = scmp.eq.s32.totalorder %s17, 0
    %p84 = por %p82, %p83
    %s86 = sadd.s32 %s85, 1
    %p89 = scmp.eq.s32.totalorder %s11, 1
    %p90 = scmp.ne.s32.totalorder %s85, %s87
    %p91 = scmp.eq.s32.totalorder %s11, 0
    %p92 = por %p90, %p91
    %p93 = scmp.ne.s32.totalorder %s85, %s87
    %p94 = scmp.eq.s32.totalorder %s16, 1
    %p95 = por %p93, %p94
    %p96 = scmp.ne.s32.totalorder %s87, %s88
    %p97 = scmp.eq.s32.totalorder %s16, 0
    %p98 = por %p96, %p97
    %p99 = scmp.ne.s32.totalorder %s87, %s88
    %p100 = scmp.eq.s32.totalorder %s17, 1
    %p101 = por %p99, %p100
    %p103 = scmp.ne.s32.totalorder %s88, %s102
    %p104 = scmp.eq.s32.totalorder %s17, 0
    %p105 = por %p103, %p104
    %s106 = ssub.s32 %s18, %s30
    %p107 = scmp.eq.s32.totalorder %s106, 0
    %s109 = sadd.s32 %s108, 1
    %s110 = scalar_select %p107, %s108, %s109
    %p113 = pneg %p107
    %p114 = scmp.eq.s32.totalorder %s11, 1
    %p115 = por %p113, %p114
    %p116 = scmp.ne.s32.totalorder %s108, %s111
    %p117 = scmp.eq.s32.totalorder %s11, 0
    %p118 = por %p116, %p117
    %p119 = scmp.ne.s32.totalorder %s108, %s111
    %p120 = scmp.eq.s32.totalorder %s16, 1
    %p121 = por %p119, %p120
    %p122 = scmp.ne.s32.totalorder %s111, %s112
    %p123 = scmp.eq.s32.totalorder %s16, 0
    %p124 = por %p122, %p123
    %p125 = scmp.ne.s32.totalorder %s111, %s112
    %p126 = scmp.eq.s32.totalorder %s17, 1
    %p127 = por %p125, %p126
    %p129 = scmp.ne.s32.totalorder %s112, %s128
    %p130 = scmp.eq.s32.totalorder %s17, 0
    %p131 = por %p129, %p130
    %s132 = ssub.s32 %s18, %s30
    %p133 = scmp.eq.s32.totalorder %s132, 0
    %s135 = sadd.s32 %s134, 1
    %s136 = scalar_select %p133, %s134, %s135
    %p139 = pneg %p133
    %p140 = scmp.eq.s32.totalorder %s11, 1
    %p141 = por %p139, %p140
    %p142 = scmp.ne.s32.totalorder %s134, %s137
    %p143 = scmp.eq.s32.totalorder %s11, 0
    %p144 = por %p142, %p143
    %p145 = scmp.ne.s32.totalorder %s134, %s137
    %p146 = scmp.eq.s32.totalorder %s16, 1
    %p147 = por %p145, %p146
    %p148 = scmp.ne.s32.totalorder %s137, %s138
    %p149 = scmp.eq.s32.totalorder %s16, 0
    %p150 = por %p148, %p149
    %p151 = scmp.ne.s32.totalorder %s137, %s138
    %p152 = scmp.eq.s32.totalorder %s17, 1
    %p153 = por %p151, %p152
    %p155 = scmp.ne.s32.totalorder %s138, %s154
    %p156 = scmp.eq.s32.totalorder %s17, 0
    %p157 = por %p155, %p156
    %p158 = scmp.le.s32.totalorder 1, %s11
    %p159 = scmp.lt.s32.totalorder %s11, 3
    %p160 = pnand %p158, %p159
    %p161 = pneg %p160
    // Predicated region
    $region9: #{simclr_projection_head.3} parent=5 // pred_check
      _
    $region10: #{simclr_projection_head.3} parent=5 // pred_check_branch
      %163 = sbr.rel (%p160) target = $region12
    $region11: #{simclr_projection_head.3} parent=5 // pred_region
      %s164 = ssub.s32 %s11, 1
      // Predicated region
      $region13: #{simclr_projection_head.3} parent=11 // pred_check
        %p165 = pneg %p77
      $region14: #{simclr_projection_head.3} parent=11 // pred_check_branch
        %167 = sbr.rel (%p165) target = $region16
      $region15: #{simclr_projection_head.3} parent=11 // pred_region
        %s168 = smul.u32 16, %s21
        %p169 = scmp.lt.s32.totalorder %s168, 15
        %s170 = scalar_select %p169, %s168, 15
        %s171 = smul.addr %s170, 4
        %s172 = smul.addr %s171, 4
        %s173 = scalar_lea.vmem %s1, %s172
        %s174 = smul.u32 16, %s21
      $region16: #{simclr_projection_head.3} parent=11 // pred_fallthru
        _
      // Predicated region
      $region17: #{simclr_projection_head.3} parent=11 // pred_check
        %p175 = pneg %p98
      $region18: #{simclr_projection_head.3} parent=11 // pred_check_branch
        %177 = sbr.rel (%p175) target = $region20
      $region19: #{simclr_projection_head.3} parent=11 // pred_region
        _
      $region20: #{simclr_projection_head.3} parent=11 // pred_fallthru
        _
    $region12: #{simclr_projection_head.3} parent=5 // pred_fallthru
      _
    %p178 = scmp.lt.s32.totalorder %s11, 2
    // Predicated region
    $region21: #{simclr_projection_head.3} parent=5 // pred_check
      %p179 = pneg %p178
    $region22: #{simclr_projection_head.3} parent=5 // pred_check_branch
      %181 = sbr.rel (%p179) target = $region24
    $region23: #{simclr_projection_head.3} parent=5 // pred_region
      // Predicated region
      $region25: #{simclr_projection_head.3} parent=23 // pred_check
        %p182 = pneg %p45
      $region26: #{simclr_projection_head.3} parent=23 // pred_check_branch
        %184 = sbr.rel (%p182) target = $region28
      $region27: #{simclr_projection_head.3} parent=23 // pred_region
        %s185 = smul.u32 32, %s18
        %p186 = scmp.lt.s32.totalorder %s185, 63
        %s187 = scalar_select %p186, %s185, 63
        %p188 = scmp.lt.s32.totalorder %s19, 0
        %s189 = scalar_select %p188, %s19, 0
        %s190 = sadd.s32 %s189, %s187
        %s191 = smul.addr %s190, 8
        %s192 = scalar_lea.vmem %s0, %s191
        %s193 = smul.u32 32, %s18
      $region28: #{simclr_projection_head.3} parent=23 // pred_fallthru
        _
    $region24: #{simclr_projection_head.3} parent=5 // pred_fallthru
      _
    %p194 = scmp.le.s32.totalorder 1, %s11
    %p195 = scmp.lt.s32.totalorder %s11, 3
    %p196 = pnand %p194, %p195
    %p197 = pneg %p196
    // Predicated region
    $region29: #{simclr_projection_head.3} parent=5 // pred_check
      _
    $region30: #{simclr_projection_head.3} parent=5 // pred_check_branch
      %199 = sbr.rel (%p196) target = $region32
    $region31: #{simclr_projection_head.3} parent=5 // pred_region
      %s200 = ssub.s32 %s11, 1
      %s201 = smul.u32 32, %s20
      %p202 = scmp.lt.s32.totalorder %s201, 63
      %s203 = scalar_select %p202, %s201, 63
      %p204 = scmp.lt.s32.totalorder %s21, 0
      %s205 = scalar_select %p204, %s21, 0
      %s206 = sadd.s32 %s205, %s203
      %s207 = smul.addr %s206, 8
      %s208 = scalar_lea.vmem %s0, %s207
      %p209 = pneg %p51
      %p210 = pneg %p48
      %s211 = smul.u32 16, %s21
      %p212 = scmp.lt.s32.totalorder %s211, 15
      %s213 = scalar_select %p212, %s211, 15
      %s214 = smul.addr %s213, 4
      %s215 = smul.addr %s214, 4
      %s216 = scalar_lea.vmem %s1, %s215
      %p217 = pneg %p77
      %p218 = pneg %p74
      %p219 = pneg %p98
      %p220 = pneg %p95
      %p221 = pneg %p124
      %p222 = pneg %p121
      %s223 = smul.u32 32, %s20
      %p224 = scmp.lt.s32.totalorder %s223, 63
      %s225 = scalar_select %p224, %s223, 63
      %s226 = smul.addr %s225, 4
      %s227 = smul.addr %s226, 8
      %s228 = scalar_lea.vmem %s3, %s227
      %p229 = pneg %p150
      %p230 = pneg %p147
      %p231 = scmp.lt.s32.totalorder %s20, 1
      %s232 = scalar_select %p231, %s20, 1
      %s233 = smul.addr %s232, 4
      %s234 = smul.addr %s233, 2
      %s235 = scalar_lea.vmem %s4, %s234
      %s236 = smul.u32 32, %s20
      %p237 = scmp.lt.s32.totalorder %s236, 63
      %s238 = scalar_select %p237, %s236, 63
      %p239 = scmp.lt.s32.totalorder %s21, 0
      %s240 = scalar_select %p239, %s21, 0
      %s241 = sadd.s32 %s240, %s238
      %s242 = smul.addr %s241, 8
      %s243 = scalar_lea.vmem %s0, %s242
      %s244 = smul.u32 32, %s20
      %s245 = smul.u32 16, %s21
      %p246 = scmp.lt.s32.totalorder %s245, 15
      %s247 = scalar_select %p246, %s245, 15
      %s248 = smul.addr %s247, 4
      %s249 = smul.addr %s248, 4
      %s250 = scalar_lea.vmem %s1, %s249
      %s251 = smul.u32 16, %s21
      %s252 = smul.u32 32, %s20
      %p253 = scmp.lt.s32.totalorder %s252, 63
      %s254 = scalar_select %p253, %s252, 63
      %s255 = smul.addr %s254, 4
      %s256 = smul.addr %s255, 8
      %s257 = scalar_lea.vmem %s3, %s256
      %s258 = smul.u32 32, %s20
      %p259 = scmp.lt.s32.totalorder %s20, 1
      %s260 = scalar_select %p259, %s20, 1
      %s261 = smul.addr %s260, 4
      %s262 = smul.addr %s261, 2
      %s263 = scalar_lea.vmem %s4, %s262
      %p265 = scmp.eq.s32.totalorder %s21, 0
      // Predicated region
      $region33: #{simclr_projection_head.3} parent=31 // pred_check
        %p266 = pneg %p265
      $region34: #{simclr_projection_head.3} parent=31 // pred_check_branch
        %268 = sbr.rel (%p266) target = $region36
      $region35: #{simclr_projection_head.3} parent=31 // pred_region
        %269 = vst [vmem:[#allocation2] sm:$0xff] 0.0
        %270 = vst [vmem:[#allocation2 + $0x8] sm:$0xff] 0.0
        %271 = vst [vmem:[#allocation2 + $0x10] sm:$0xff] 0.0
        %272 = vst [vmem:[#allocation2 + $0x18] sm:$0xff] 0.0
        %273 = vst [vmem:[#allocation2 + $0x20] sm:$0xff] 0.0
        %274 = vst [vmem:[#allocation2 + $0x28] sm:$0xff] 0.0
        %275 = vst [vmem:[#allocation2 + $0x30] sm:$0xff] 0.0
        %276 = vst [vmem:[#allocation2 + $0x38] sm:$0xff] 0.0
        %277 = vst [vmem:[#allocation2 + $0x40] sm:$0xff] 0.0
        %278 = vst [vmem:[#allocation2 + $0x48] sm:$0xff] 0.0
        %279 = vst [vmem:[#allocation2 + $0x50] sm:$0xff] 0.0
        %280 = vst [vmem:[#allocation2 + $0x58] sm:$0xff] 0.0
        %281 = vst [vmem:[#allocation2 + $0x60] sm:$0xff] 0.0
        %282 = vst [vmem:[#allocation2 + $0x68] sm:$0xff] 0.0
        %283 = vst [vmem:[#allocation2 + $0x70] sm:$0xff] 0.0
        %284 = vst [vmem:[#allocation2 + $0x78] sm:$0xff] 0.0
        %285 = vst [vmem:[#allocation2 + $0x80] sm:$0xff] 0.0
        %286 = vst [vmem:[#allocation2 + $0x88] sm:$0xff] 0.0
        %287 = vst [vmem:[#allocation2 + $0x90] sm:$0xff] 0.0
        %288 = vst [vmem:[#allocation2 + $0x98] sm:$0xff] 0.0
        %289 = vst [vmem:[#allocation2 + $0xa0] sm:$0xff] 0.0
        %290 = vst [vmem:[#allocation2 + $0xa8] sm:$0xff] 0.0
        %291 = vst [vmem:[#allocation2 + $0xb0] sm:$0xff] 0.0
        %292 = vst [vmem:[#allocation2 + $0xb8] sm:$0xff] 0.0
        %293 = vst [vmem:[#allocation2 + $0xc0] sm:$0xff] 0.0
        %294 = vst [vmem:[#allocation2 + $0xc8] sm:$0xff] 0.0
        %295 = vst [vmem:[#allocation2 + $0xd0] sm:$0xff] 0.0
        %296 = vst [vmem:[#allocation2 + $0xd8] sm:$0xff] 0.0
        %297 = vst [vmem:[#allocation2 + $0xe0] sm:$0xff] 0.0
        %298 = vst [vmem:[#allocation2 + $0xe8] sm:$0xff] 0.0
        %299 = vst [vmem:[#allocation2 + $0xf0] sm:$0xff] 0.0
        %300 = vst [vmem:[#allocation2 + $0xf8] sm:$0xff] 0.0
        %301 = vst [vmem:[#allocation2 + $0x100] sm:$0xff] 0.0
        %302 = vst [vmem:[#allocation2 + $0x108] sm:$0xff] 0.0
        %303 = vst [vmem:[#allocation2 + $0x110] sm:$0xff] 0.0
        %304 = vst [vmem:[#allocation2 + $0x118] sm:$0xff] 0.0
        %305 = vst [vmem:[#allocation2 + $0x120] sm:$0xff] 0.0
        %306 = vst [vmem:[#allocation2 + $0x128] sm:$0xff] 0.0
        %307 = vst [vmem:[#allocation2 + $0x130] sm:$0xff] 0.0
        %308 = vst [vmem:[#allocation2 + $0x138] sm:$0xff] 0.0
        %309 = vst [vmem:[#allocation2 + $0x140] sm:$0xff] 0.0
        %310 = vst [vmem:[#allocation2 + $0x148] sm:$0xff] 0.0
        %311 = vst [vmem:[#allocation2 + $0x150] sm:$0xff] 0.0
        %312 = vst [vmem:[#allocation2 + $0x158] sm:$0xff] 0.0
        %313 = vst [vmem:[#allocation2 + $0x160] sm:$0xff] 0.0
        %314 = vst [vmem:[#allocation2 + $0x168] sm:$0xff] 0.0
        %315 = vst [vmem:[#allocation2 + $0x170] sm:$0xff] 0.0
        %316 = vst [vmem:[#allocation2 + $0x178] sm:$0xff] 0.0
        %317 = vst [vmem:[#allocation2 + $0x180] sm:$0xff] 0.0
        %318 = vst [vmem:[#allocation2 + $0x188] sm:$0xff] 0.0
        %319 = vst [vmem:[#allocation2 + $0x190] sm:$0xff] 0.0
        %320 = vst [vmem:[#allocation2 + $0x198] sm:$0xff] 0.0
        %321 = vst [vmem:[#allocation2 + $0x1a0] sm:$0xff] 0.0
        %322 = vst [vmem:[#allocation2 + $0x1a8] sm:$0xff] 0.0
        %323 = vst [vmem:[#allocation2 + $0x1b0] sm:$0xff] 0.0
        %324 = vst [vmem:[#allocation2 + $0x1b8] sm:$0xff] 0.0
        %325 = vst [vmem:[#allocation2 + $0x1c0] sm:$0xff] 0.0
        %326 = vst [vmem:[#allocation2 + $0x1c8] sm:$0xff] 0.0
        %327 = vst [vmem:[#allocation2 + $0x1d0] sm:$0xff] 0.0
        %328 = vst [vmem:[#allocation2 + $0x1d8] sm:$0xff] 0.0
        %329 = vst [vmem:[#allocation2 + $0x1e0] sm:$0xff] 0.0
        %330 = vst [vmem:[#allocation2 + $0x1e8] sm:$0xff] 0.0
        %331 = vst [vmem:[#allocation2 + $0x1f0] sm:$0xff] 0.0
        %332 = vst [vmem:[#allocation2 + $0x1f8] sm:$0xff] 0.0
        %333 = vst [vmem:[#allocation2 + $0x200] sm:$0xff] 0.0
        %334 = vst [vmem:[#allocation2 + $0x208] sm:$0xff] 0.0
        %335 = vst [vmem:[#allocation2 + $0x210] sm:$0xff] 0.0
        %336 = vst [vmem:[#allocation2 + $0x218] sm:$0xff] 0.0
        %337 = vst [vmem:[#allocation2 + $0x220] sm:$0xff] 0.0
        %338 = vst [vmem:[#allocation2 + $0x228] sm:$0xff] 0.0
        %339 = vst [vmem:[#allocation2 + $0x230] sm:$0xff] 0.0
        %340 = vst [vmem:[#allocation2 + $0x238] sm:$0xff] 0.0
        %341 = vst [vmem:[#allocation2 + $0x240] sm:$0xff] 0.0
        %342 = vst [vmem:[#allocation2 + $0x248] sm:$0xff] 0.0
        %343 = vst [vmem:[#allocation2 + $0x250] sm:$0xff] 0.0
        %344 = vst [vmem:[#allocation2 + $0x258] sm:$0xff] 0.0
        %345 = vst [vmem:[#allocation2 + $0x260] sm:$0xff] 0.0
        %346 = vst [vmem:[#allocation2 + $0x268] sm:$0xff] 0.0
        %347 = vst [vmem:[#allocation2 + $0x270] sm:$0xff] 0.0
        %348 = vst [vmem:[#allocation2 + $0x278] sm:$0xff] 0.0
        %349 = vst [vmem:[#allocation2 + $0x280] sm:$0xff] 0.0
        %350 = vst [vmem:[#allocation2 + $0x288] sm:$0xff] 0.0
        %351 = vst [vmem:[#allocation2 + $0x290] sm:$0xff] 0.0
        %352 = vst [vmem:[#allocation2 + $0x298] sm:$0xff] 0.0
        %353 = vst [vmem:[#allocation2 + $0x2a0] sm:$0xff] 0.0
        %354 = vst [vmem:[#allocation2 + $0x2a8] sm:$0xff] 0.0
        %355 = vst [vmem:[#allocation2 + $0x2b0] sm:$0xff] 0.0
        %356 = vst [vmem:[#allocation2 + $0x2b8] sm:$0xff] 0.0
        %357 = vst [vmem:[#allocation2 + $0x2c0] sm:$0xff] 0.0
        %358 = vst [vmem:[#allocation2 + $0x2c8] sm:$0xff] 0.0
        %359 = vst [vmem:[#allocation2 + $0x2d0] sm:$0xff] 0.0
        %360 = vst [vmem:[#allocation2 + $0x2d8] sm:$0xff] 0.0
        %361 = vst [vmem:[#allocation2 + $0x2e0] sm:$0xff] 0.0
        %362 = vst [vmem:[#allocation2 + $0x2e8] sm:$0xff] 0.0
        %363 = vst [vmem:[#allocation2 + $0x2f0] sm:$0xff] 0.0
        %364 = vst [vmem:[#allocation2 + $0x2f8] sm:$0xff] 0.0
        %365 = vst [vmem:[#allocation2 + $0x300] sm:$0xff] 0.0
        %366 = vst [vmem:[#allocation2 + $0x308] sm:$0xff] 0.0
        %367 = vst [vmem:[#allocation2 + $0x310] sm:$0xff] 0.0
        %368 = vst [vmem:[#allocation2 + $0x318] sm:$0xff] 0.0
        %369 = vst [vmem:[#allocation2 + $0x320] sm:$0xff] 0.0
        %370 = vst [vmem:[#allocation2 + $0x328] sm:$0xff] 0.0
        %371 = vst [vmem:[#allocation2 + $0x330] sm:$0xff] 0.0
        %372 = vst [vmem:[#allocation2 + $0x338] sm:$0xff] 0.0
        %373 = vst [vmem:[#allocation2 + $0x340] sm:$0xff] 0.0
        %374 = vst [vmem:[#allocation2 + $0x348] sm:$0xff] 0.0
        %375 = vst [vmem:[#allocation2 + $0x350] sm:$0xff] 0.0
        %376 = vst [vmem:[#allocation2 + $0x358] sm:$0xff] 0.0
        %377 = vst [vmem:[#allocation2 + $0x360] sm:$0xff] 0.0
        %378 = vst [vmem:[#allocation2 + $0x368] sm:$0xff] 0.0
        %379 = vst [vmem:[#allocation2 + $0x370] sm:$0xff] 0.0
        %380 = vst [vmem:[#allocation2 + $0x378] sm:$0xff] 0.0
        %381 = vst [vmem:[#allocation2 + $0x380] sm:$0xff] 0.0
        %382 = vst [vmem:[#allocation2 + $0x388] sm:$0xff] 0.0
        %383 = vst [vmem:[#allocation2 + $0x390] sm:$0xff] 0.0
        %384 = vst [vmem:[#allocation2 + $0x398] sm:$0xff] 0.0
        %385 = vst [vmem:[#allocation2 + $0x3a0] sm:$0xff] 0.0
        %386 = vst [vmem:[#allocation2 + $0x3a8] sm:$0xff] 0.0
        %387 = vst [vmem:[#allocation2 + $0x3b0] sm:$0xff] 0.0
        %388 = vst [vmem:[#allocation2 + $0x3b8] sm:$0xff] 0.0
        %389 = vst [vmem:[#allocation2 + $0x3c0] sm:$0xff] 0.0
        %390 = vst [vmem:[#allocation2 + $0x3c8] sm:$0xff] 0.0
        %391 = vst [vmem:[#allocation2 + $0x3d0] sm:$0xff] 0.0
        %392 = vst [vmem:[#allocation2 + $0x3d8] sm:$0xff] 0.0
        %393 = vst [vmem:[#allocation2 + $0x3e0] sm:$0xff] 0.0
        %394 = vst [vmem:[#allocation2 + $0x3e8] sm:$0xff] 0.0
        %395 = vst [vmem:[#allocation2 + $0x3f0] sm:$0xff] 0.0
        %396 = vst [vmem:[#allocation2 + $0x3f8] sm:$0xff] 0.0
      $region36: #{simclr_projection_head.3} parent=31 // pred_fallthru
        _
      %v397 = vld [vmem:[%s243] sm:$0xff]
      %v398 = vld [vmem:[%s243 + $0x8] sm:$0xff]
      %v399 = vld [vmem:[%s243 + $0x10] sm:$0xff]
      %v400 = vld [vmem:[%s243 + $0x18] sm:$0xff]
      %v401 = vld [vmem:[%s243 + $0x20] sm:$0xff]
      %v402 = vld [vmem:[%s243 + $0x28] sm:$0xff]
      %v403 = vld [vmem:[%s243 + $0x30] sm:$0xff]
      %v404 = vld [vmem:[%s243 + $0x38] sm:$0xff]
      %v405 = vld [vmem:[%s243 + $0x40] sm:$0xff]
      %v406 = vld [vmem:[%s243 + $0x48] sm:$0xff]
      %v407 = vld [vmem:[%s243 + $0x50] sm:$0xff]
      %v408 = vld [vmem:[%s243 + $0x58] sm:$0xff]
      %v409 = vld [vmem:[%s243 + $0x60] sm:$0xff]
      %v410 = vld [vmem:[%s243 + $0x68] sm:$0xff]
      %v411 = vld [vmem:[%s243 + $0x70] sm:$0xff]
      %v412 = vld [vmem:[%s243 + $0x78] sm:$0xff]
      %v413 = vld [vmem:[%s243 + $0x80] sm:$0xff]
      %v414 = vld [vmem:[%s243 + $0x88] sm:$0xff]
      %v415 = vld [vmem:[%s243 + $0x90] sm:$0xff]
      %v416 = vld [vmem:[%s243 + $0x98] sm:$0xff]
      %v417 = vld [vmem:[%s243 + $0xa0] sm:$0xff]
      %v418 = vld [vmem:[%s243 + $0xa8] sm:$0xff]
      %v419 = vld [vmem:[%s243 + $0xb0] sm:$0xff]
      %v420 = vld [vmem:[%s243 + $0xb8] sm:$0xff]
      %v421 = vld [vmem:[%s243 + $0xc0] sm:$0xff]
      %v422 = vld [vmem:[%s243 + $0xc8] sm:$0xff]
      %v423 = vld [vmem:[%s243 + $0xd0] sm:$0xff]
      %v424 = vld [vmem:[%s243 + $0xd8] sm:$0xff]
      %v425 = vld [vmem:[%s243 + $0xe0] sm:$0xff]
      %v426 = vld [vmem:[%s243 + $0xe8] sm:$0xff]
      %v427 = vld [vmem:[%s243 + $0xf0] sm:$0xff]
      %v428 = vld [vmem:[%s243 + $0xf8] sm:$0xff]
      %v429 = vld [vmem:[#allocation2] sm:$0xff]
      %v430 = vld [vmem:[#allocation2 + $0x8] sm:$0xff]
      %v431 = vld [vmem:[#allocation2 + $0x10] sm:$0xff]
      %v432 = vld [vmem:[#allocation2 + $0x18] sm:$0xff]
      %v433 = vld [vmem:[#allocation2 + $0x20] sm:$0xff]
      %v434 = vld [vmem:[#allocation2 + $0x28] sm:$0xff]
      %v435 = vld [vmem:[#allocation2 + $0x30] sm:$0xff]
      %v436 = vld [vmem:[#allocation2 + $0x38] sm:$0xff]
      %v437 = vld [vmem:[#allocation2 + $0x40] sm:$0xff]
      %v438 = vld [vmem:[#allocation2 + $0x48] sm:$0xff]
      %v439 = vld [vmem:[#allocation2 + $0x50] sm:$0xff]
      %v440 = vld [vmem:[#allocation2 + $0x58] sm:$0xff]
      %v441 = vld [vmem:[#allocation2 + $0x60] sm:$0xff]
      %v442 = vld [vmem:[#allocation2 + $0x68] sm:$0xff]
      %v443 = vld [vmem:[#allocation2 + $0x70] sm:$0xff]
      %v444 = vld [vmem:[#allocation2 + $0x78] sm:$0xff]
      %v445 = vld [vmem:[#allocation2 + $0x80] sm:$0xff]
      %v446 = vld [vmem:[#allocation2 + $0x88] sm:$0xff]
      %v447 = vld [vmem:[#allocation2 + $0x90] sm:$0xff]
      %v448 = vld [vmem:[#allocation2 + $0x98] sm:$0xff]
      %v449 = vld [vmem:[#allocation2 + $0xa0] sm:$0xff]
      %v450 = vld [vmem:[#allocation2 + $0xa8] sm:$0xff]
      %v451 = vld [vmem:[#allocation2 + $0xb0] sm:$0xff]
      %v452 = vld [vmem:[#allocation2 + $0xb8] sm:$0xff]
      %v453 = vld [vmem:[#allocation2 + $0xc0] sm:$0xff]
      %v454 = vld [vmem:[#allocation2 + $0xc8] sm:$0xff]
      %v455 = vld [vmem:[#allocation2 + $0xd0] sm:$0xff]
      %v456 = vld [vmem:[#allocation2 + $0xd8] sm:$0xff]
      %v457 = vld [vmem:[#allocation2 + $0xe0] sm:$0xff]
      %v458 = vld [vmem:[#allocation2 + $0xe8] sm:$0xff]
      %v459 = vld [vmem:[#allocation2 + $0xf0] sm:$0xff]
      %v460 = vld [vmem:[#allocation2 + $0xf8] sm:$0xff]
      %v461 = vld [vmem:[#allocation2 + $0x100] sm:$0xff]
      %v462 = vld [vmem:[#allocation2 + $0x108] sm:$0xff]
      %v463 = vld [vmem:[#allocation2 + $0x110] sm:$0xff]
      %v464 = vld [vmem:[#allocation2 + $0x118] sm:$0xff]
      %v465 = vld [vmem:[#allocation2 + $0x120] sm:$0xff]
      %v466 = vld [vmem:[#allocation2 + $0x128] sm:$0xff]
      %v467 = vld [vmem:[#allocation2 + $0x130] sm:$0xff]
      %v468 = vld [vmem:[#allocation2 + $0x138] sm:$0xff]
      %v469 = vld [vmem:[#allocation2 + $0x140] sm:$0xff]
      %v470 = vld [vmem:[#allocation2 + $0x148] sm:$0xff]
      %v471 = vld [vmem:[#allocation2 + $0x150] sm:$0xff]
      %v472 = vld [vmem:[#allocation2 + $0x158] sm:$0xff]
      %v473 = vld [vmem:[#allocation2 + $0x160] sm:$0xff]
      %v474 = vld [vmem:[#allocation2 + $0x168] sm:$0xff]
      %v475 = vld [vmem:[#allocation2 + $0x170] sm:$0xff]
      %v476 = vld [vmem:[#allocation2 + $0x178] sm:$0xff]
      %v477 = vld [vmem:[#allocation2 + $0x180] sm:$0xff]
      %v478 = vld [vmem:[#allocation2 + $0x188] sm:$0xff]
      %v479 = vld [vmem:[#allocation2 + $0x190] sm:$0xff]
      %v480 = vld [vmem:[#allocation2 + $0x198] sm:$0xff]
      %v481 = vld [vmem:[#allocation2 + $0x1a0] sm:$0xff]
      %v482 = vld [vmem:[#allocation2 + $0x1a8] sm:$0xff]
      %v483 = vld [vmem:[#allocation2 + $0x1b0] sm:$0xff]
      %v484 = vld [vmem:[#allocation2 + $0x1b8] sm:$0xff]
      %v485 = vld [vmem:[#allocation2 + $0x1c0] sm:$0xff]
      %v486 = vld [vmem:[#allocation2 + $0x1c8] sm:$0xff]
      %v487 = vld [vmem:[#allocation2 + $0x1d0] sm:$0xff]
      %v488 = vld [vmem:[#allocation2 + $0x1d8] sm:$0xff]
      %v489 = vld [vmem:[#allocation2 + $0x1e0] sm:$0xff]
      %v490 = vld [vmem:[#allocation2 + $0x1e8] sm:$0xff]
      %v491 = vld [vmem:[#allocation2 + $0x1f0] sm:$0xff]
      %v492 = vld [vmem:[#allocation2 + $0x1f8] sm:$0xff]
      %v493 = vld [vmem:[#allocation2 + $0x200] sm:$0xff]
      %v494 = vld [vmem:[#allocation2 + $0x208] sm:$0xff]
      %v495 = vld [vmem:[#allocation2 + $0x210] sm:$0xff]
      %v496 = vld [vmem:[#allocation2 + $0x218] sm:$0xff]
      %v497 = vld [vmem:[#allocation2 + $0x220] sm:$0xff]
      %v498 = vld [vmem:[#allocation2 + $0x228] sm:$0xff]
      %v499 = vld [vmem:[#allocation2 + $0x230] sm:$0xff]
      %v500 = vld [vmem:[#allocation2 + $0x238] sm:$0xff]
      %v501 = vld [vmem:[#allocation2 + $0x240] sm:$0xff]
      %v502 = vld [vmem:[#allocation2 + $0x248] sm:$0xff]
      %v503 = vld [vmem:[#allocation2 + $0x250] sm:$0xff]
      %v504 = vld [vmem:[#allocation2 + $0x258] sm:$0xff]
      %v505 = vld [vmem:[#allocation2 + $0x260] sm:$0xff]
      %v506 = vld [vmem:[#allocation2 + $0x268] sm:$0xff]
      %v507 = vld [vmem:[#allocation2 + $0x270] sm:$0xff]
      %v508 = vld [vmem:[#allocation2 + $0x278] sm:$0xff]
      %v509 = vld [vmem:[#allocation2 + $0x280] sm:$0xff]
      %v510 = vld [vmem:[#allocation2 + $0x288] sm:$0xff]
      %v511 = vld [vmem:[#allocation2 + $0x290] sm:$0xff]
      %v512 = vld [vmem:[#allocation2 + $0x298] sm:$0xff]
      %v513 = vld [vmem:[#allocation2 + $0x2a0] sm:$0xff]
      %v514 = vld [vmem:[#allocation2 + $0x2a8] sm:$0xff]
      %v515 = vld [vmem:[#allocation2 + $0x2b0] sm:$0xff]
      %v516 = vld [vmem:[#allocation2 + $0x2b8] sm:$0xff]
      %v517 = vld [vmem:[#allocation2 + $0x2c0] sm:$0xff]
      %v518 = vld [vmem:[#allocation2 + $0x2c8] sm:$0xff]
      %v519 = vld [vmem:[#allocation2 + $0x2d0] sm:$0xff]
      %v520 = vld [vmem:[#allocation2 + $0x2d8] sm:$0xff]
      %v521 = vld [vmem:[#allocation2 + $0x2e0] sm:$0xff]
      %v522 = vld [vmem:[#allocation2 + $0x2e8] sm:$0xff]
      %v523 = vld [vmem:[#allocation2 + $0x2f0] sm:$0xff]
      %v524 = vld [vmem:[#allocation2 + $0x2f8] sm:$0xff]
      %v525 = vld [vmem:[#allocation2 + $0x300] sm:$0xff]
      %v526 = vld [vmem:[#allocation2 + $0x308] sm:$0xff]
      %v527 = vld [vmem:[#allocation2 + $0x310] sm:$0xff]
      %v528 = vld [vmem:[#allocation2 + $0x318] sm:$0xff]
      %v529 = vld [vmem:[#allocation2 + $0x320] sm:$0xff]
      %v530 = vld [vmem:[#allocation2 + $0x328] sm:$0xff]
      %v531 = vld [vmem:[#allocation2 + $0x330] sm:$0xff]
      %v532 = vld [vmem:[#allocation2 + $0x338] sm:$0xff]
      %v533 = vld [vmem:[#allocation2 + $0x340] sm:$0xff]
      %v534 = vld [vmem:[#allocation2 + $0x348] sm:$0xff]
      %v535 = vld [vmem:[#allocation2 + $0x350] sm:$0xff]
      %v536 = vld [vmem:[#allocation2 + $0x358] sm:$0xff]
      %v537 = vld [vmem:[#allocation2 + $0x360] sm:$0xff]
      %v538 = vld [vmem:[#allocation2 + $0x368] sm:$0xff]
      %v539 = vld [vmem:[#allocation2 + $0x370] sm:$0xff]
      %v540 = vld [vmem:[#allocation2 + $0x378] sm:$0xff]
      %v541 = vld [vmem:[#allocation2 + $0x380] sm:$0xff]
      %v542 = vld [vmem:[#allocation2 + $0x388] sm:$0xff]
      %v543 = vld [vmem:[#allocation2 + $0x390] sm:$0xff]
      %v544 = vld [vmem:[#allocation2 + $0x398] sm:$0xff]
      %v545 = vld [vmem:[#allocation2 + $0x3a0] sm:$0xff]
      %v546 = vld [vmem:[#allocation2 + $0x3a8] sm:$0xff]
      %v547 = vld [vmem:[#allocation2 + $0x3b0] sm:$0xff]
      %v548 = vld [vmem:[#allocation2 + $0x3b8] sm:$0xff]
      %v549 = vld [vmem:[#allocation2 + $0x3c0] sm:$0xff]
      %v550 = vld [vmem:[#allocation2 + $0x3c8] sm:$0xff]
      %v551 = vld [vmem:[#allocation2 + $0x3d0] sm:$0xff]
      %v552 = vld [vmem:[#allocation2 + $0x3d8] sm:$0xff]
      %v553 = vld [vmem:[#allocation2 + $0x3e0] sm:$0xff]
      %v554 = vld [vmem:[#allocation2 + $0x3e8] sm:$0xff]
      %v555 = vld [vmem:[#allocation2 + $0x3f0] sm:$0xff]
      %v556 = vld [vmem:[#allocation2 + $0x3f8] sm:$0xff]
      %v557 = vpack.c.bf16 %v398, %v397
      %v558 = vpack.c.bf16 %v400, %v399
      %v559 = vpack.c.bf16 %v402, %v401
      %v560 = vpack.c.bf16 %v404, %v403
      %v561 = vpack.c.bf16 %v406, %v405
      %v562 = vpack.c.bf16 %v408, %v407
      %v563 = vpack.c.bf16 %v410, %v409
      %v564 = vpack.c.bf16 %v412, %v411
      %v565 = vpack.c.bf16 %v414, %v413
      %v566 = vpack.c.bf16 %v416, %v415
      %v567 = vpack.c.bf16 %v418, %v417
      %v568 = vpack.c.bf16 %v420, %v419
      %v569 = vpack.c.bf16 %v422, %v421
      %v570 = vpack.c.bf16 %v424, %v423
      %v571 = vpack.c.bf16 %v426, %v425
      %v572 = vpack.c.bf16 %v428, %v427
      %v573 = vld [vmem:[%s250] sm:$0xff]
      %v574 = vld [vmem:[%s250 + $0x8] sm:$0xff]
      %v575 = vld [vmem:[%s250 + $0x10] sm:$0xff]
      %v576 = vld [vmem:[%s250 + $0x18] sm:$0xff]
      %v577 = vld [vmem:[%s250 + $0x20] sm:$0xff]
      %v578 = vld [vmem:[%s250 + $0x28] sm:$0xff]
      %v579 = vld [vmem:[%s250 + $0x30] sm:$0xff]
      %v580 = vld [vmem:[%s250 + $0x38] sm:$0xff]
      %v581 = vld [vmem:[%s250 + $0x40] sm:$0xff]
      %v582 = vld [vmem:[%s250 + $0x48] sm:$0xff]
      %v583 = vld [vmem:[%s250 + $0x50] sm:$0xff]
      %v584 = vld [vmem:[%s250 + $0x58] sm:$0xff]
      %v585 = vld [vmem:[%s250 + $0x60] sm:$0xff]
      %v586 = vld [vmem:[%s250 + $0x68] sm:$0xff]
      %v587 = vld [vmem:[%s250 + $0x70] sm:$0xff]
      %v588 = vld [vmem:[%s250 + $0x78] sm:$0xff]
      %v589 = vld [vmem:[%s250 + $0x80] sm:$0xff]
      %v590 = vld [vmem:[%s250 + $0x88] sm:$0xff]
      %v591 = vld [vmem:[%s250 + $0x90] sm:$0xff]
      %v592 = vld [vmem:[%s250 + $0x98] sm:$0xff]
      %v593 = vld [vmem:[%s250 + $0xa0] sm:$0xff]
      %v594 = vld [vmem:[%s250 + $0xa8] sm:$0xff]
      %v595 = vld [vmem:[%s250 + $0xb0] sm:$0xff]
      %v596 = vld [vmem:[%s250 + $0xb8] sm:$0xff]
      %v597 = vld [vmem:[%s250 + $0xc0] sm:$0xff]
      %v598 = vld [vmem:[%s250 + $0xc8] sm:$0xff]
      %v599 = vld [vmem:[%s250 + $0xd0] sm:$0xff]
      %v600 = vld [vmem:[%s250 + $0xd8] sm:$0xff]
      %v601 = vld [vmem:[%s250 + $0xe0] sm:$0xff]
      %v602 = vld [vmem:[%s250 + $0xe8] sm:$0xff]
      %v603 = vld [vmem:[%s250 + $0xf0] sm:$0xff]
      %v604 = vld [vmem:[%s250 + $0xf8] sm:$0xff]
      %v637 = vunpack.c.l.b16 %v573
      %v638 = vunpack.c.h.b16 %v573
      %v639 = vunpack.c.l.b16 %v574
      %v640 = vunpack.c.h.b16 %v574
      %v641 = vunpack.c.l.b16 %v575
      %v642 = vunpack.c.h.b16 %v575
      %v643 = vunpack.c.l.b16 %v576
      %v644 = vunpack.c.h.b16 %v576
      %v645 = vunpack.c.l.b16 %v577
      %v646 = vunpack.c.h.b16 %v577
      %v647 = vunpack.c.l.b16 %v578
      %v648 = vunpack.c.h.b16 %v578
      %v649 = vunpack.c.l.b16 %v579
      %v650 = vunpack.c.h.b16 %v579
      %v651 = vunpack.c.l.b16 %v580
      %v652 = vunpack.c.h.b16 %v580
      %v653 = vunpack.c.l.b16 %v581
      %v654 = vunpack.c.h.b16 %v581
      %v655 = vunpack.c.l.b16 %v582
      %v656 = vunpack.c.h.b16 %v582
      %v657 = vunpack.c.l.b16 %v583
      %v658 = vunpack.c.h.b16 %v583
      %v659 = vunpack.c.l.b16 %v584
      %v660 = vunpack.c.h.b16 %v584
      %v661 = vunpack.c.l.b16 %v585
      %v662 = vunpack.c.h.b16 %v585
      %v663 = vunpack.c.l.b16 %v586
      %v664 = vunpack.c.h.b16 %v586
      %v665 = vunpack.c.l.b16 %v587
      %v666 = vunpack.c.h.b16 %v587
      %v667 = vunpack.c.l.b16 %v588
      %v668 = vunpack.c.h.b16 %v588
      %v669 = vunpack.c.l.b16 %v589
      %v670 = vunpack.c.h.b16 %v589
      %v671 = vunpack.c.l.b16 %v590
      %v672 = vunpack.c.h.b16 %v590
      %v673 = vunpack.c.l.b16 %v591
      %v674 = vunpack.c.h.b16 %v591
      %v675 = vunpack.c.l.b16 %v592
      %v676 = vunpack.c.h.b16 %v592
      %v677 = vunpack.c.l.b16 %v593
      %v678 = vunpack.c.h.b16 %v593
      %v679 = vunpack.c.l.b16 %v594
      %v680 = vunpack.c.h.b16 %v594
      %v681 = vunpack.c.l.b16 %v595
      %v682 = vunpack.c.h.b16 %v595
      %v683 = vunpack.c.l.b16 %v596
      %v684 = vunpack.c.h.b16 %v596
      %v685 = vunpack.c.l.b16 %v597
      %v686 = vunpack.c.h.b16 %v597
      %v687 = vunpack.c.l.b16 %v598
      %v688 = vunpack.c.h.b16 %v598
      %v689 = vunpack.c.l.b16 %v599
      %v690 = vunpack.c.h.b16 %v599
      %v691 = vunpack.c.l.b16 %v600
      %v692 = vunpack.c.h.b16 %v600
      %v693 = vunpack.c.l.b16 %v601
      %v694 = vunpack.c.h.b16 %v601
      %v695 = vunpack.c.l.b16 %v602
      %v696 = vunpack.c.h.b16 %v602
      %v697 = vunpack.c.l.b16 %v603
      %v698 = vunpack.c.h.b16 %v603
      %v699 = vunpack.c.l.b16 %v604
      %v700 = vunpack.c.h.b16 %v604
      %v701 = vpack.c.b16 %v641, %v637
      %v702 = vpack.c.b16 %v642, %v638
      %v703 = vpack.c.b16 %v643, %v639
      %v704 = vpack.c.b16 %v644, %v640
      %v705 = vpack.c.b16 %v649, %v645
      %v706 = vpack.c.b16 %v650, %v646
      %v707 = vpack.c.b16 %v651, %v647
      %v708 = vpack.c.b16 %v652, %v648
      %v709 = vpack.c.b16 %v657, %v653
      %v710 = vpack.c.b16 %v658, %v654
      %v711 = vpack.c.b16 %v659, %v655
      %v712 = vpack.c.b16 %v660, %v656
      %v713 = vpack.c.b16 %v665, %v661
      %v714 = vpack.c.b16 %v666, %v662
      %v715 = vpack.c.b16 %v667, %v663
      %v716 = vpack.c.b16 %v668, %v664
      %v717 = vpack.c.b16 %v673, %v669
      %v718 = vpack.c.b16 %v674, %v670
      %v719 = vpack.c.b16 %v675, %v671
      %v720 = vpack.c.b16 %v676, %v672
      %v721 = vpack.c.b16 %v681, %v677
      %v722 = vpack.c.b16 %v682, %v678
      %v723 = vpack.c.b16 %v683, %v679
      %v724 = vpack.c.b16 %v684, %v680
      %v725 = vpack.c.b16 %v689, %v685
      %v726 = vpack.c.b16 %v690, %v686
      %v727 = vpack.c.b16 %v691, %v687
      %v728 = vpack.c.b16 %v692, %v688
      %v729 = vpack.c.b16 %v697, %v693
      %v730 = vpack.c.b16 %v698, %v694
      %v731 = vpack.c.b16 %v699, %v695
      %v732 = vpack.c.b16 %v700, %v696
      %765 = vmatprep.subr.bf16.mxu0 %v702
      %766 = vmatpush1.bf16.msra.mxu0 %v701
      %767 = vmatprep.subr.bf16.mxu0 %v706
      %768 = vmatpush1.bf16.msra.mxu0 %v705
      %769 = vmatprep.subr.bf16.mxu0 %v710
      %770 = vmatpush1.bf16.msra.mxu0 %v709
      %771 = vmatprep.subr.bf16.mxu0 %v714
      %772 = vmatpush1.bf16.msra.mxu0 %v713
      %773 = vmatprep.subr.bf16.mxu0 %v718
      %774 = vmatpush1.bf16.msra.mxu0 %v717
      %775 = vmatprep.subr.bf16.mxu0 %v722
      %776 = vmatpush1.bf16.msra.mxu0 %v721
      %777 = vmatprep.subr.bf16.mxu0 %v726
      %778 = vmatpush1.bf16.msra.mxu0 %v725
      %779 = vmatprep.subr.bf16.mxu0 %v730
      %780 = vmatpush1.bf16.msra.mxu0 %v729
      %781 = vmatprep.subr.bf16.mxu0 0
      %782 = vmatpush1.bf16.msra.mxu0 0
      %783 = vmatprep.subr.bf16.mxu0 0
      %784 = vmatpush1.bf16.msra.mxu0 0
      %785 = vmatprep.subr.bf16.mxu0 0
      %786 = vmatpush1.bf16.msra.mxu0 0
      %787 = vmatprep.subr.bf16.mxu0 0
      %788 = vmatpush1.bf16.msra.mxu0 0
      %789 = vmatprep.subr.bf16.mxu0 0
      %790 = vmatpush1.bf16.msra.mxu0 0
      %791 = vmatprep.subr.bf16.mxu0 0
      %792 = vmatpush1.bf16.msra.mxu0 0
      %793 = vmatprep.subr.bf16.mxu0 0
      %794 = vmatpush1.bf16.msra.mxu0 0
      %795 = vmatprep.subr.bf16.mxu0 0
      %796 = vmatpush1.bf16.msra.mxu0 0
      %797 = vmatprep.mubr.bf16.mxu0 0
      %798 = vmatmul.mubr.bf16.gmra.mrb[0].mxu0 %v557
      %v799 = vpop.f32.mrb[0].mxu0
      %v800 = vadd.f32 0.0, %v799
      %v801 = vpop.f32.mrb[0].mxu0
      %v802 = vadd.f32 0.0, %v801
      %v803 = vpop.f32.mrb[0].mxu0
      %v804 = vadd.f32 0.0, %v803
      %v805 = vpop.f32.mrb[0].mxu0
      %v806 = vadd.f32 0.0, %v805
      %807 = vmatprep.mubr.bf16.mxu0 0
      %808 = vmatmul.mubr.bf16.gmra.mrb[0].mxu0 %v558
      %v809 = vpop.f32.mrb[0].mxu0
      %v810 = vadd.f32 0.0, %v809
      %v811 = vpop.f32.mrb[0].mxu0
      %v812 = vadd.f32 0.0, %v811
      %v813 = vpop.f32.mrb[0].mxu0
      %v814 = vadd.f32 0.0, %v813
      %v815 = vpop.f32.mrb[0].mxu0
      %v816 = vadd.f32 0.0, %v815
      %817 = vmatprep.mubr.bf16.mxu0 0
      %818 = vmatmul.mubr.bf16.gmra.mrb[0].mxu0 %v559
      %v819 = vpop.f32.mrb[0].mxu0
      %v820 = vadd.f32 0.0, %v819
      %v821 = vpop.f32.mrb[0].mxu0
      %v822 = vadd.f32 0.0, %v821
      %v823 = vpop.f32.mrb[0].mxu0
      %v824 = vadd.f32 0.0, %v823
      %v825 = vpop.f32.mrb[0].mxu0
      %v826 = vadd.f32 0.0, %v825
      %827 = vmatprep.mubr.bf16.mxu0 0
      %828 = vmatmul.mubr.bf16.gmra.mrb[0].mxu0 %v560
      %v829 = vpop.f32.mrb[0].mxu0
      %v830 = vadd.f32 0.0, %v829
      %v831 = vpop.f32.mrb[0].mxu0
      %v832 = vadd.f32 0.0, %v831
      %v833 = vpop.f32.mrb[0].mxu0
      %v834 = vadd.f32 0.0, %v833
      %v835 = vpop.f32.mrb[0].mxu0
      %v836 = vadd.f32 0.0, %v835
      %837 = vmatprep.mubr.bf16.mxu0 0
      %838 = vmatmul.mubr.bf16.gmra.mrb[0].mxu0 %v561
      %v839 = vpop.f32.mrb[0].mxu0
      %v840 = vadd.f32 0.0, %v839
      %v841 = vpop.f32.mrb[0].mxu0
      %v842 = vadd.f32 0.0, %v841
      %v843 = vpop.f32.mrb[0].mxu0
      %v844 = vadd.f32 0.0, %v843
      %v845 = vpop.f32.mrb[0].mxu0
      %v846 = vadd.f32 0.0, %v845
      %847 = vmatprep.mubr.bf16.mxu0 0
      %848 = vmatmul.mubr.bf16.gmra.mrb[0].mxu0 %v562
      %v849 = vpop.f32.mrb[0].mxu0
      %v850 = vadd.f32 0.0, %v849
      %v851 = vpop.f32.mrb[0].mxu0
      %v852 = vadd.f32 0.0, %v851
      %v853 = vpop.f32.mrb[0].mxu0
      %v854 = vadd.f32 0.0, %v853
      %v855 = vpop.f32.mrb[0].mxu0
      %v856 = vadd.f32 0.0, %v855
      %857 = vmatprep.mubr.bf16.mxu0 0
      %858 = vmatmul.mubr.bf16.gmra.mrb[0].mxu0 %v563
      %v859 = vpop.f32.mrb[0].mxu0
      %v860 = vadd.f32 0.0, %v859
      %v861 = vpop.f32.mrb[0].mxu0
      %v862 = vadd.f32 0.0, %v861
      %v863 = vpop.f32.mrb[0].mxu0
      %v864 = vadd.f32 0.0, %v863
      %v865 = vpop.f32.mrb[0].mxu0
      %v866 = vadd.f32 0.0, %v865
      %867 = vmatprep.mubr.bf16.mxu0 0
      %868 = vmatmul.mubr.bf16.gmra.mrb[0].mxu0 %v564
      %v869 = vpop.f32.mrb[0].mxu0
      %v870 = vadd.f32 0.0, %v869
      %v871 = vpop.f32.mrb[0].mxu0
      %v872 = vadd.f32 0.0, %v871
      %v873 = vpop.f32.mrb[0].mxu0
      %v874 = vadd.f32 0.0, %v873
      %v875 = vpop.f32.mrb[0].mxu0
      %v876 = vadd.f32 0.0, %v875
      %877 = vmatprep.mubr.bf16.mxu0 0
      %878 = vmatmul.mubr.bf16.gmra.mrb[0].mxu0 %v565
      %v879 = vpop.f32.mrb[0].mxu0
      %v880 = vadd.f32 0.0, %v879
      %v881 = vpop.f32.mrb[0].mxu0
      %v882 = vadd.f32 0.0, %v881
      %v883 = vpop.f32.mrb[0].mxu0
      %v884 = vadd.f32 0.0, %v883
      %v885 = vpop.f32.mrb[0].mxu0
      %v886 = vadd.f32 0.0, %v885
      %887 = vmatprep.mubr.bf16.mxu0 0
      %888 = vmatmul.mubr.bf16.gmra.mrb[0].mxu0 %v566
      %v889 = vpop.f32.mrb[0].mxu0
      %v890 = vadd.f32 0.0, %v889
      %v891 = vpop.f32.mrb[0].mxu0
      %v892 = vadd.f32 0.0, %v891
      %v893 = vpop.f32.mrb[0].mxu0
      %v894 = vadd.f32 0.0, %v893
      %v895 = vpop.f32.mrb[0].mxu0
      %v896 = vadd.f32 0.0, %v895
      %897 = vmatprep.mubr.bf16.mxu0 0
      %898 = vmatmul.mubr.bf16.gmra.mrb[0].mxu0 %v567
      %v899 = vpop.f32.mrb[0].mxu0
      %v900 = vadd.f32 0.0, %v899
      %v901 = vpop.f32.mrb[0].mxu0
      %v902 = vadd.f32 0.0, %v901
      %v903 = vpop.f32.mrb[0].mxu0
      %v904 = vadd.f32 0.0, %v903
      %v905 = vpop.f32.mrb[0].mxu0
      %v906 = vadd.f32 0.0, %v905
      %907 = vmatprep.mubr.bf16.mxu0 0
      %908 = vmatmul.mubr.bf16.gmra.mrb[0].mxu0 %v568
      %v909 = vpop.f32.mrb[0].mxu0
      %v910 = vadd.f32 0.0, %v909
      %v911 = vpop.f32.mrb[0].mxu0
      %v912 = vadd.f32 0.0, %v911
      %v913 = vpop.f32.mrb[0].mxu0
      %v914 = vadd.f32 0.0, %v913
      %v915 = vpop.f32.mrb[0].mxu0
      %v916 = vadd.f32 0.0, %v915
      %917 = vmatprep.mubr.bf16.mxu0 0
      %918 = vmatmul.mubr.bf16.gmra.mrb[0].mxu0 %v569
      %v919 = vpop.f32.mrb[0].mxu0
      %v920 = vadd.f32 0.0, %v919
      %v921 = vpop.f32.mrb[0].mxu0
      %v922 = vadd.f32 0.0, %v921
      %v923 = vpop.f32.mrb[0].mxu0
      %v924 = vadd.f32 0.0, %v923
      %v925 = vpop.f32.mrb[0].mxu0
      %v926 = vadd.f32 0.0, %v925
      %927 = vmatprep.mubr.bf16.mxu0 0
      %928 = vmatmul.mubr.bf16.gmra.mrb[0].mxu0 %v570
      %v929 = vpop.f32.mrb[0].mxu0
      %v930 = vadd.f32 0.0, %v929
      %v931 = vpop.f32.mrb[0].mxu0
      %v932 = vadd.f32 0.0, %v931
      %v933 = vpop.f32.mrb[0].mxu0
      %v934 = vadd.f32 0.0, %v933
      %v935 = vpop.f32.mrb[0].mxu0
      %v936 = vadd.f32 0.0, %v935
      %937 = vmatprep.mubr.bf16.mxu0 0
      %938 = vmatmul.mubr.bf16.gmra.mrb[0].mxu0 %v571
      %v939 = vpop.f32.mrb[0].mxu0
      %v940 = vadd.f32 0.0, %v939
      %v941 = vpop.f32.mrb[0].mxu0
      %v942 = vadd.f32 0.0, %v941
      %v943 = vpop.f32.mrb[0].mxu0
      %v944 = vadd.f32 0.0, %v943
      %v945 = vpop.f32.mrb[0].mxu0
      %v946 = vadd.f32 0.0, %v945
      %947 = vmatprep.mubr.bf16.mxu0 0
      %948 = vmatmul.mubr.bf16.gmra.mrb[0].mxu0 %v572
      %v949 = vpop.f32.mrb[0].mxu0
      %v950 = vadd.f32 0.0, %v949
      %v951 = vpop.f32.mrb[0].mxu0
      %v952 = vadd.f32 0.0, %v951
      %v953 = vpop.f32.mrb[0].mxu0
      %v954 = vadd.f32 0.0, %v953
      %v955 = vpop.f32.mrb[0].mxu0
      %v956 = vadd.f32 0.0, %v955
      %957 = vdwg.mxu0
      %958 = vmatprep.subr.bf16.mxu0 %v704
      %959 = vmatpush1.bf16.msra.mxu0 %v703
      %960 = vmatprep.subr.bf16.mxu0 %v708
      %961 = vmatpush1.bf16.msra.mxu0 %v707
      %962 = vmatprep.subr.bf16.mxu0 %v712
      %963 = vmatpush1.bf16.msra.mxu0 %v711
      %964 = vmatprep.subr.bf16.mxu0 %v716
      %965 = vmatpush1.bf16.msra.mxu0 %v715
      %966 = vmatprep.subr.bf16.mxu0 %v720
      %967 = vmatpush1.bf16.msra.mxu0 %v719
      %968 = vmatprep.subr.bf16.mxu0 %v724
      %969 = vmatpush1.bf16.msra.mxu0 %v723
      %970 = vmatprep.subr.bf16.mxu0 %v728
      %971 = vmatpush1.bf16.msra.mxu0 %v727
      %972 = vmatprep.subr.bf16.mxu0 %v732
      %973 = vmatpush1.bf16.msra.mxu0 %v731
      %974 = vmatprep.subr.bf16.mxu0 0
      %975 = vmatpush1.bf16.msra.mxu0 0
      %976 = vmatprep.subr.bf16.mxu0 0
      %977 = vmatpush1.bf16.msra.mxu0 0
      %978 = vmatprep.subr.bf16.mxu0 0
      %979 = vmatpush1.bf16.msra.mxu0 0
      %980 = vmatprep.subr.bf16.mxu0 0
      %981 = vmatpush1.bf16.msra.mxu0 0
      %982 = vmatprep.subr.bf16.mxu0 0
      %983 = vmatpush1.bf16.msra.mxu0 0
      %984 = vmatprep.subr.bf16.mxu0 0
      %985 = vmatpush1.bf16.msra.mxu0 0
      %986 = vmatprep.subr.bf16.mxu0 0
      %987 = vmatpush1.bf16.msra.mxu0 0
      %988 = vmatprep.subr.bf16.mxu0 0
      %989 = vmatpush1.bf16.msra.mxu0 0
      %990 = vmatprep.mubr.bf16.mxu0 0
      %991 = vmatmul.mubr.bf16.gmra.mrb[0].mxu0 %v557
      %v992 = vpop.f32.mrb[0].mxu0
      %v993 = vadd.f32 0.0, %v992
      %v994 = vpop.f32.mrb[0].mxu0
      %v995 = vadd.f32 0.0, %v994
      %v996 = vpop.f32.mrb[0].mxu0
      %v997 = vadd.f32 0.0, %v996
      %v998 = vpop.f32.mrb[0].mxu0
      %v999 = vadd.f32 0.0, %v998
      %1000 = vmatprep.mubr.bf16.mxu0 0
      %1001 = vmatmul.mubr.bf16.gmra.mrb[0].mxu0 %v558
      %v1002 = vpop.f32.mrb[0].mxu0
      %v1003 = vadd.f32 0.0, %v1002
      %v1004 = vpop.f32.mrb[0].mxu0
      %v1005 = vadd.f32 0.0, %v1004
      %v1006 = vpop.f32.mrb[0].mxu0
      %v1007 = vadd.f32 0.0, %v1006
      %v1008 = vpop.f32.mrb[0].mxu0
      %v1009 = vadd.f32 0.0, %v1008
      %1010 = vmatprep.mubr.bf16.mxu0 0
      %1011 = vmatmul.mubr.bf16.gmra.mrb[0].mxu0 %v559
      %v1012 = vpop.f32.mrb[0].mxu0
      %v1013 = vadd.f32 0.0, %v1012
      %v1014 = vpop.f32.mrb[0].mxu0
      %v1015 = vadd.f32 0.0, %v1014
      %v1016 = vpop.f32.mrb[0].mxu0
      %v1017 = vadd.f32 0.0, %v1016
      %v1018 = vpop.f32.mrb[0].mxu0
      %v1019 = vadd.f32 0.0, %v1018
      %1020 = vmatprep.mubr.bf16.mxu0 0
      %1021 = vmatmul.mubr.bf16.gmra.mrb[0].mxu0 %v560
      %v1022 = vpop.f32.mrb[0].mxu0
      %v1023 = vadd.f32 0.0, %v1022
      %v1024 = vpop.f32.mrb[0].mxu0
      %v1025 = vadd.f32 0.0, %v1024
      %v1026 = vpop.f32.mrb[0].mxu0
      %v1027 = vadd.f32 0.0, %v1026
      %v1028 = vpop.f32.mrb[0].mxu0
      %v1029 = vadd.f32 0.0, %v1028
      %1030 = vmatprep.mubr.bf16.mxu0 0
      %1031 = vmatmul.mubr.bf16.gmra.mrb[0].mxu0 %v561
      %v1032 = vpop.f32.mrb[0].mxu0
      %v1033 = vadd.f32 0.0, %v1032
      %v1034 = vpop.f32.mrb[0].mxu0
      %v1035 = vadd.f32 0.0, %v1034
      %v1036 = vpop.f32.mrb[0].mxu0
      %v1037 = vadd.f32 0.0, %v1036
      %v1038 = vpop.f32.mrb[0].mxu0
      %v1039 = vadd.f32 0.0, %v1038
      %1040 = vmatprep.mubr.bf16.mxu0 0
      %1041 = vmatmul.mubr.bf16.gmra.mrb[0].mxu0 %v562
      %v1042 = vpop.f32.mrb[0].mxu0
      %v1043 = vadd.f32 0.0, %v1042
      %v1044 = vpop.f32.mrb[0].mxu0
      %v1045 = vadd.f32 0.0, %v1044
      %v1046 = vpop.f32.mrb[0].mxu0
      %v1047 = vadd.f32 0.0, %v1046
      %v1048 = vpop.f32.mrb[0].mxu0
      %v1049 = vadd.f32 0.0, %v1048
      %1050 = vmatprep.mubr.bf16.mxu0 0
      %1051 = vmatmul.mubr.bf16.gmra.mrb[0].mxu0 %v563
      %v1052 = vpop.f32.mrb[0].mxu0
      %v1053 = vadd.f32 0.0, %v1052
      %v1054 = vpop.f32.mrb[0].mxu0
      %v1055 = vadd.f32 0.0, %v1054
      %v1056 = vpop.f32.mrb[0].mxu0
      %v1057 = vadd.f32 0.0, %v1056
      %v1058 = vpop.f32.mrb[0].mxu0
      %v1059 = vadd.f32 0.0, %v1058
      %1060 = vmatprep.mubr.bf16.mxu0 0
      %1061 = vmatmul.mubr.bf16.gmra.mrb[0].mxu0 %v564
      %v1062 = vpop.f32.mrb[0].mxu0
      %v1063 = vadd.f32 0.0, %v1062
      %v1064 = vpop.f32.mrb[0].mxu0
      %v1065 = vadd.f32 0.0, %v1064
      %v1066 = vpop.f32.mrb[0].mxu0
      %v1067 = vadd.f32 0.0, %v1066
      %v1068 = vpop.f32.mrb[0].mxu0
      %v1069 = vadd.f32 0.0, %v1068
      %1070 = vmatprep.mubr.bf16.mxu0 0
      %1071 = vmatmul.mubr.bf16.gmra.mrb[0].mxu0 %v565
      %v1072 = vpop.f32.mrb[0].mxu0
      %v1073 = vadd.f32 0.0, %v1072
      %v1074 = vpop.f32.mrb[0].mxu0
      %v1075 = vadd.f32 0.0, %v1074
      %v1076 = vpop.f32.mrb[0].mxu0
      %v1077 = vadd.f32 0.0, %v1076
      %v1078 = vpop.f32.mrb[0].mxu0
      %v1079 = vadd.f32 0.0, %v1078
      %1080 = vmatprep.mubr.bf16.mxu0 0
      %1081 = vmatmul.mubr.bf16.gmra.mrb[0].mxu0 %v566
      %v1082 = vpop.f32.mrb[0].mxu0
      %v1083 = vadd.f32 0.0, %v1082
      %v1084 = vpop.f32.mrb[0].mxu0
      %v1085 = vadd.f32 0.0, %v1084
      %v1086 = vpop.f32.mrb[0].mxu0
      %v1087 = vadd.f32 0.0, %v1086
      %v1088 = vpop.f32.mrb[0].mxu0
      %v1089 = vadd.f32 0.0, %v1088
      %1090 = vmatprep.mubr.bf16.mxu0 0
      %1091 = vmatmul.mubr.bf16.gmra.mrb[0].mxu0 %v567
      %v1092 = vpop.f32.mrb[0].mxu0
      %v1093 = vadd.f32 0.0, %v1092
      %v1094 = vpop.f32.mrb[0].mxu0
      %v1095 = vadd.f32 0.0, %v1094
      %v1096 = vpop.f32.mrb[0].mxu0
      %v1097 = vadd.f32 0.0, %v1096
      %v1098 = vpop.f32.mrb[0].mxu0
      %v1099 = vadd.f32 0.0, %v1098
      %1100 = vmatprep.mubr.bf16.mxu0 0
      %1101 = vmatmul.mubr.bf16.gmra.mrb[0].mxu0 %v568
      %v1102 = vpop.f32.mrb[0].mxu0
      %v1103 = vadd.f32 0.0, %v1102
      %v1104 = vpop.f32.mrb[0].mxu0
      %v1105 = vadd.f32 0.0, %v1104
      %v1106 = vpop.f32.mrb[0].mxu0
      %v1107 = vadd.f32 0.0, %v1106
      %v1108 = vpop.f32.mrb[0].mxu0
      %v1109 = vadd.f32 0.0, %v1108
      %1110 = vmatprep.mubr.bf16.mxu0 0
      %1111 = vmatmul.mubr.bf16.gmra.mrb[0].mxu0 %v569
      %v1112 = vpop.f32.mrb[0].mxu0
      %v1113 = vadd.f32 0.0, %v1112
      %v1114 = vpop.f32.mrb[0].mxu0
      %v1115 = vadd.f32 0.0, %v1114
      %v1116 = vpop.f32.mrb[0].mxu0
      %v1117 = vadd.f32 0.0, %v1116
      %v1118 = vpop.f32.mrb[0].mxu0
      %v1119 = vadd.f32 0.0, %v1118
      %1120 = vmatprep.mubr.bf16.mxu0 0
      %1121 = vmatmul.mubr.bf16.gmra.mrb[0].mxu0 %v570
      %v1122 = vpop.f32.mrb[0].mxu0
      %v1123 = vadd.f32 0.0, %v1122
      %v1124 = vpop.f32.mrb[0].mxu0
      %v1125 = vadd.f32 0.0, %v1124
      %v1126 = vpop.f32.mrb[0].mxu0
      %v1127 = vadd.f32 0.0, %v1126
      %v1128 = vpop.f32.mrb[0].mxu0
      %v1129 = vadd.f32 0.0, %v1128
      %1130 = vmatprep.mubr.bf16.mxu0 0
      %1131 = vmatmul.mubr.bf16.gmra.mrb[0].mxu0 %v571
      %v1132 = vpop.f32.mrb[0].mxu0
      %v1133 = vadd.f32 0.0, %v1132
      %v1134 = vpop.f32.mrb[0].mxu0
      %v1135 = vadd.f32 0.0, %v1134
      %v1136 = vpop.f32.mrb[0].mxu0
      %v1137 = vadd.f32 0.0, %v1136
      %v1138 = vpop.f32.mrb[0].mxu0
      %v1139 = vadd.f32 0.0, %v1138
      %1140 = vmatprep.mubr.bf16.mxu0 0
      %1141 = vmatmul.mubr.bf16.gmra.mrb[0].mxu0 %v572
      %v1142 = vpop.f32.mrb[0].mxu0
      %v1143 = vadd.f32 0.0, %v1142
      %v1144 = vpop.f32.mrb[0].mxu0
      %v1145 = vadd.f32 0.0, %v1144
      %v1146 = vpop.f32.mrb[0].mxu0
      %v1147 = vadd.f32 0.0, %v1146
      %v1148 = vpop.f32.mrb[0].mxu0
      %v1149 = vadd.f32 0.0, %v1148
      %1150 = vdwg.mxu0
      %v1151 = vadd.f32 %v429, %v800
      %v1152 = vadd.f32 %v430, %v802
      %v1153 = vadd.f32 %v431, %v993
      %v1154 = vadd.f32 %v432, %v995
      %v1155 = vadd.f32 %v433, %v804
      %v1156 = vadd.f32 %v434, %v806
      %v1157 = vadd.f32 %v435, %v997
      %v1158 = vadd.f32 %v436, %v999
      %v1159 = vadd.f32 %v437, %v810
      %v1160 = vadd.f32 %v438, %v812
      %v1161 = vadd.f32 %v439, %v1003
      %v1162 = vadd.f32 %v440, %v1005
      %v1163 = vadd.f32 %v441, %v814
      %v1164 = vadd.f32 %v442, %v816
      %v1165 = vadd.f32 %v443, %v1007
      %v1166 = vadd.f32 %v444, %v1009
      %v1167 = vadd.f32 %v445, %v820
      %v1168 = vadd.f32 %v446, %v822
      %v1169 = vadd.f32 %v447, %v1013
      %v1170 = vadd.f32 %v448, %v1015
      %v1171 = vadd.f32 %v449, %v824
      %v1172 = vadd.f32 %v450, %v826
      %v1173 = vadd.f32 %v451, %v1017
      %v1174 = vadd.f32 %v452, %v1019
      %v1175 = vadd.f32 %v453, %v830
      %v1176 = vadd.f32 %v454, %v832
      %v1177 = vadd.f32 %v455, %v1023
      %v1178 = vadd.f32 %v456, %v1025
      %v1179 = vadd.f32 %v457, %v834
      %v1180 = vadd.f32 %v458, %v836
      %v1181 = vadd.f32 %v459, %v1027
      %v1182 = vadd.f32 %v460, %v1029
      %v1183 = vadd.f32 %v461, %v840
      %v1184 = vadd.f32 %v462, %v842
      %v1185 = vadd.f32 %v463, %v1033
      %v1186 = vadd.f32 %v464, %v1035
      %v1187 = vadd.f32 %v465, %v844
      %v1188 = vadd.f32 %v466, %v846
      %v1189 = vadd.f32 %v467, %v1037
      %v1190 = vadd.f32 %v468, %v1039
      %v1191 = vadd.f32 %v469, %v850
      %v1192 = vadd.f32 %v470, %v852
      %v1193 = vadd.f32 %v471, %v1043
      %v1194 = vadd.f32 %v472, %v1045
      %v1195 = vadd.f32 %v473, %v854
      %v1196 = vadd.f32 %v474, %v856
      %v1197 = vadd.f32 %v475, %v1047
      %v1198 = vadd.f32 %v476, %v1049
      %v1199 = vadd.f32 %v477, %v860
      %v1200 = vadd.f32 %v478, %v862
      %v1201 = vadd.f32 %v479, %v1053
      %v1202 = vadd.f32 %v480, %v1055
      %v1203 = vadd.f32 %v481, %v864
      %v1204 = vadd.f32 %v482, %v866
      %v1205 = vadd.f32 %v483, %v1057
      %v1206 = vadd.f32 %v484, %v1059
      %v1207 = vadd.f32 %v485, %v870
      %v1208 = vadd.f32 %v486, %v872
      %v1209 = vadd.f32 %v487, %v1063
      %v1210 = vadd.f32 %v488, %v1065
      %v1211 = vadd.f32 %v489, %v874
      %v1212 = vadd.f32 %v490, %v876
      %v1213 = vadd.f32 %v491, %v1067
      %v1214 = vadd.f32 %v492, %v1069
      %v1215 = vadd.f32 %v493, %v880
      %v1216 = vadd.f32 %v494, %v882
      %v1217 = vadd.f32 %v495, %v1073
      %v1218 = vadd.f32 %v496, %v1075
      %v1219 = vadd.f32 %v497, %v884
      %v1220 = vadd.f32 %v498, %v886
      %v1221 = vadd.f32 %v499, %v1077
      %v1222 = vadd.f32 %v500, %v1079
      %v1223 = vadd.f32 %v501, %v890
      %v1224 = vadd.f32 %v502, %v892
      %v1225 = vadd.f32 %v503, %v1083
      %v1226 = vadd.f32 %v504, %v1085
      %v1227 = vadd.f32 %v505, %v894
      %v1228 = vadd.f32 %v506, %v896
      %v1229 = vadd.f32 %v507, %v1087
      %v1230 = vadd.f32 %v508, %v1089
      %v1231 = vadd.f32 %v509, %v900
      %v1232 = vadd.f32 %v510, %v902
      %v1233 = vadd.f32 %v511, %v1093
      %v1234 = vadd.f32 %v512, %v1095
      %v1235 = vadd.f32 %v513, %v904
      %v1236 = vadd.f32 %v514, %v906
      %v1237 = vadd.f32 %v515, %v1097
      %v1238 = vadd.f32 %v516, %v1099
      %v1239 = vadd.f32 %v517, %v910
      %v1240 = vadd.f32 %v518, %v912
      %v1241 = vadd.f32 %v519, %v1103
      %v1242 = vadd.f32 %v520, %v1105
      %v1243 = vadd.f32 %v521, %v914
      %v1244 = vadd.f32 %v522, %v916
      %v1245 = vadd.f32 %v523, %v1107
      %v1246 = vadd.f32 %v524, %v1109
      %v1247 = vadd.f32 %v525, %v920
      %v1248 = vadd.f32 %v526, %v922
      %v1249 = vadd.f32 %v527, %v1113
      %v1250 = vadd.f32 %v528, %v1115
      %v1251 = vadd.f32 %v529, %v924
      %v1252 = vadd.f32 %v530, %v926
      %v1253 = vadd.f32 %v531, %v1117
      %v1254 = vadd.f32 %v532, %v1119
      %v1255 = vadd.f32 %v533, %v930
      %v1256 = vadd.f32 %v534, %v932
      %v1257 = vadd.f32 %v535, %v1123
      %v1258 = vadd.f32 %v536, %v1125
      %v1259 = vadd.f32 %v537, %v934
      %v1260 = vadd.f32 %v538, %v936
      %v1261 = vadd.f32 %v539, %v1127
      %v1262 = vadd.f32 %v540, %v1129
      %v1263 = vadd.f32 %v541, %v940
      %v1264 = vadd.f32 %v542, %v942
      %v1265 = vadd.f32 %v543, %v1133
      %v1266 = vadd.f32 %v544, %v1135
      %v1267 = vadd.f32 %v545, %v944
      %v1268 = vadd.f32 %v546, %v946
      %v1269 = vadd.f32 %v547, %v1137
      %v1270 = vadd.f32 %v548, %v1139
      %v1271 = vadd.f32 %v549, %v950
      %v1272 = vadd.f32 %v550, %v952
      %v1273 = vadd.f32 %v551, %v1143
      %v1274 = vadd.f32 %v552, %v1145
      %v1275 = vadd.f32 %v553, %v954
      %v1276 = vadd.f32 %v554, %v956
      %v1277 = vadd.f32 %v555, %v1147
      %v1278 = vadd.f32 %v556, %v1149
      %1279 = vst [vmem:[#allocation2] sm:$0xff] %v1151
      %1280 = vst [vmem:[#allocation2 + $0x8] sm:$0xff] %v1152
      %1281 = vst [vmem:[#allocation2 + $0x10] sm:$0xff] %v1153
      %1282 = vst [vmem:[#allocation2 + $0x18] sm:$0xff] %v1154
      %1283 = vst [vmem:[#allocation2 + $0x20] sm:$0xff] %v1155
      %1284 = vst [vmem:[#allocation2 + $0x28] sm:$0xff] %v1156
      %1285 = vst [vmem:[#allocation2 + $0x30] sm:$0xff] %v1157
      %1286 = vst [vmem:[#allocation2 + $0x38] sm:$0xff] %v1158
      %1287 = vst [vmem:[#allocation2 + $0x40] sm:$0xff] %v1159
      %1288 = vst [vmem:[#allocation2 + $0x48] sm:$0xff] %v1160
      %1289 = vst [vmem:[#allocation2 + $0x50] sm:$0xff] %v1161
      %1290 = vst [vmem:[#allocation2 + $0x58] sm:$0xff] %v1162
      %1291 = vst [vmem:[#allocation2 + $0x60] sm:$0xff] %v1163
      %1292 = vst [vmem:[#allocation2 + $0x68] sm:$0xff] %v1164
      %1293 = vst [vmem:[#allocation2 + $0x70] sm:$0xff] %v1165
      %1294 = vst [vmem:[#allocation2 + $0x78] sm:$0xff] %v1166
      %1295 = vst [vmem:[#allocation2 + $0x80] sm:$0xff] %v1167
      %1296 = vst [vmem:[#allocation2 + $0x88] sm:$0xff] %v1168
      %1297 = vst [vmem:[#allocation2 + $0x90] sm:$0xff] %v1169
      %1298 = vst [vmem:[#allocation2 + $0x98] sm:$0xff] %v1170
      %1299 = vst [vmem:[#allocation2 + $0xa0] sm:$0xff] %v1171
      %1300 = vst [vmem:[#allocation2 + $0xa8] sm:$0xff] %v1172
      %1301 = vst [vmem:[#allocation2 + $0xb0] sm:$0xff] %v1173
      %1302 = vst [vmem:[#allocation2 + $0xb8] sm:$0xff] %v1174
      %1303 = vst [vmem:[#allocation2 + $0xc0] sm:$0xff] %v1175
      %1304 = vst [vmem:[#allocation2 + $0xc8] sm:$0xff] %v1176
      %1305 = vst [vmem:[#allocation2 + $0xd0] sm:$0xff] %v1177
      %1306 = vst [vmem:[#allocation2 + $0xd8] sm:$0xff] %v1178
      %1307 = vst [vmem:[#allocation2 + $0xe0] sm:$0xff] %v1179
      %1308 = vst [vmem:[#allocation2 + $0xe8] sm:$0xff] %v1180
      %1309 = vst [vmem:[#allocation2 + $0xf0] sm:$0xff] %v1181
      %1310 = vst [vmem:[#allocation2 + $0xf8] sm:$0xff] %v1182
      %1311 = vst [vmem:[#allocation2 + $0x100] sm:$0xff] %v1183
      %1312 = vst [vmem:[#allocation2 + $0x108] sm:$0xff] %v1184
      %1313 = vst [vmem:[#allocation2 + $0x110] sm:$0xff] %v1185
      %1314 = vst [vmem:[#allocation2 + $0x118] sm:$0xff] %v1186
      %1315 = vst [vmem:[#allocation2 + $0x120] sm:$0xff] %v1187
      %1316 = vst [vmem:[#allocation2 + $0x128] sm:$0xff] %v1188
      %1317 = vst [vmem:[#allocation2 + $0x130] sm:$0xff] %v1189
      %1318 = vst [vmem:[#allocation2 + $0x138] sm:$0xff] %v1190
      %1319 = vst [vmem:[#allocation2 + $0x140] sm:$0xff] %v1191
      %1320 = vst [vmem:[#allocation2 + $0x148] sm:$0xff] %v1192
      %1321 = vst [vmem:[#allocation2 + $0x150] sm:$0xff] %v1193
      %1322 = vst [vmem:[#allocation2 + $0x158] sm:$0xff] %v1194
      %1323 = vst [vmem:[#allocation2 + $0x160] sm:$0xff] %v1195
      %1324 = vst [vmem:[#allocation2 + $0x168] sm:$0xff] %v1196
      %1325 = vst [vmem:[#allocation2 + $0x170] sm:$0xff] %v1197
      %1326 = vst [vmem:[#allocation2 + $0x178] sm:$0xff] %v1198
      %1327 = vst [vmem:[#allocation2 + $0x180] sm:$0xff] %v1199
      %1328 = vst [vmem:[#allocation2 + $0x188] sm:$0xff] %v1200
      %1329 = vst [vmem:[#allocation2 + $0x190] sm:$0xff] %v1201
      %1330 = vst [vmem:[#allocation2 + $0x198] sm:$0xff] %v1202
      %1331 = vst [vmem:[#allocation2 + $0x1a0] sm:$0xff] %v1203
      %1332 = vst [vmem:[#allocation2 + $0x1a8] sm:$0xff] %v1204
      %1333 = vst [vmem:[#allocation2 + $0x1b0] sm:$0xff] %v1205
      %1334 = vst [vmem:[#allocation2 + $0x1b8] sm:$0xff] %v1206
      %1335 = vst [vmem:[#allocation2 + $0x1c0] sm:$0xff] %v1207
      %1336 = vst [vmem:[#allocation2 + $0x1c8] sm:$0xff] %v1208
      %1337 = vst [vmem:[#allocation2 + $0x1d0] sm:$0xff] %v1209
      %1338 = vst [vmem:[#allocation2 + $0x1d8] sm:$0xff] %v1210
      %1339 = vst [vmem:[#allocation2 + $0x1e0] sm:$0xff] %v1211
      %1340 = vst [vmem:[#allocation2 + $0x1e8] sm:$0xff] %v1212
      %1341 = vst [vmem:[#allocation2 + $0x1f0] sm:$0xff] %v1213
      %1342 = vst [vmem:[#allocation2 + $0x1f8] sm:$0xff] %v1214
      %1343 = vst [vmem:[#allocation2 + $0x200] sm:$0xff] %v1215
      %1344 = vst [vmem:[#allocation2 + $0x208] sm:$0xff] %v1216
      %1345 = vst [vmem:[#allocation2 + $0x210] sm:$0xff] %v1217
      %1346 = vst [vmem:[#allocation2 + $0x218] sm:$0xff] %v1218
      %1347 = vst [vmem:[#allocation2 + $0x220] sm:$0xff] %v1219
      %1348 = vst [vmem:[#allocation2 + $0x228] sm:$0xff] %v1220
      %1349 = vst [vmem:[#allocation2 + $0x230] sm:$0xff] %v1221
      %1350 = vst [vmem:[#allocation2 + $0x238] sm:$0xff] %v1222
      %1351 = vst [vmem:[#allocation2 + $0x240] sm:$0xff] %v1223
      %1352 = vst [vmem:[#allocation2 + $0x248] sm:$0xff] %v1224
      %1353 = vst [vmem:[#allocation2 + $0x250] sm:$0xff] %v1225
      %1354 = vst [vmem:[#allocation2 + $0x258] sm:$0xff] %v1226
      %1355 = vst [vmem:[#allocation2 + $0x260] sm:$0xff] %v1227
      %1356 = vst [vmem:[#allocation2 + $0x268] sm:$0xff] %v1228
      %1357 = vst [vmem:[#allocation2 + $0x270] sm:$0xff] %v1229
      %1358 = vst [vmem:[#allocation2 + $0x278] sm:$0xff] %v1230
      %1359 = vst [vmem:[#allocation2 + $0x280] sm:$0xff] %v1231
      %1360 = vst [vmem:[#allocation2 + $0x288] sm:$0xff] %v1232
      %1361 = vst [vmem:[#allocation2 + $0x290] sm:$0xff] %v1233
      %1362 = vst [vmem:[#allocation2 + $0x298] sm:$0xff] %v1234
      %1363 = vst [vmem:[#allocation2 + $0x2a0] sm:$0xff] %v1235
      %1364 = vst [vmem:[#allocation2 + $0x2a8] sm:$0xff] %v1236
      %1365 = vst [vmem:[#allocation2 + $0x2b0] sm:$0xff] %v1237
      %1366 = vst [vmem:[#allocation2 + $0x2b8] sm:$0xff] %v1238
      %1367 = vst [vmem:[#allocation2 + $0x2c0] sm:$0xff] %v1239
      %1368 = vst [vmem:[#allocation2 + $0x2c8] sm:$0xff] %v1240
      %1369 = vst [vmem:[#allocation2 + $0x2d0] sm:$0xff] %v1241
      %1370 = vst [vmem:[#allocation2 + $0x2d8] sm:$0xff] %v1242
      %1371 = vst [vmem:[#allocation2 + $0x2e0] sm:$0xff] %v1243
      %1372 = vst [vmem:[#allocation2 + $0x2e8] sm:$0xff] %v1244
      %1373 = vst [vmem:[#allocation2 + $0x2f0] sm:$0xff] %v1245
      %1374 = vst [vmem:[#allocation2 + $0x2f8] sm:$0xff] %v1246
      %1375 = vst [vmem:[#allocation2 + $0x300] sm:$0xff] %v1247
      %1376 = vst [vmem:[#allocation2 + $0x308] sm:$0xff] %v1248
      %1377 = vst [vmem:[#allocation2 + $0x310] sm:$0xff] %v1249
      %1378 = vst [vmem:[#allocation2 + $0x318] sm:$0xff] %v1250
      %1379 = vst [vmem:[#allocation2 + $0x320] sm:$0xff] %v1251
      %1380 = vst [vmem:[#allocation2 + $0x328] sm:$0xff] %v1252
      %1381 = vst [vmem:[#allocation2 + $0x330] sm:$0xff] %v1253
      %1382 = vst [vmem:[#allocation2 + $0x338] sm:$0xff] %v1254
      %1383 = vst [vmem:[#allocation2 + $0x340] sm:$0xff] %v1255
      %1384 = vst [vmem:[#allocation2 + $0x348] sm:$0xff] %v1256
      %1385 = vst [vmem:[#allocation2 + $0x350] sm:$0xff] %v1257
      %1386 = vst [vmem:[#allocation2 + $0x358] sm:$0xff] %v1258
      %1387 = vst [vmem:[#allocation2 + $0x360] sm:$0xff] %v1259
      %1388 = vst [vmem:[#allocation2 + $0x368] sm:$0xff] %v1260
      %1389 = vst [vmem:[#allocation2 + $0x370] sm:$0xff] %v1261
      %1390 = vst [vmem:[#allocation2 + $0x378] sm:$0xff] %v1262
      %1391 = vst [vmem:[#allocation2 + $0x380] sm:$0xff] %v1263
      %1392 = vst [vmem:[#allocation2 + $0x388] sm:$0xff] %v1264
      %1393 = vst [vmem:[#allocation2 + $0x390] sm:$0xff] %v1265
      %1394 = vst [vmem:[#allocation2 + $0x398] sm:$0xff] %v1266
      %1395 = vst [vmem:[#allocation2 + $0x3a0] sm:$0xff] %v1267
      %1396 = vst [vmem:[#allocation2 + $0x3a8] sm:$0xff] %v1268
      %1397 = vst [vmem:[#allocation2 + $0x3b0] sm:$0xff] %v1269
      %1398 = vst [vmem:[#allocation2 + $0x3b8] sm:$0xff] %v1270
      %1399 = vst [vmem:[#allocation2 + $0x3c0] sm:$0xff] %v1271
      %1400 = vst [vmem:[#allocation2 + $0x3c8] sm:$0xff] %v1272
      %1401 = vst [vmem:[#allocation2 + $0x3d0] sm:$0xff] %v1273
      %1402 = vst [vmem:[#allocation2 + $0x3d8] sm:$0xff] %v1274
      %1403 = vst [vmem:[#allocation2 + $0x3e0] sm:$0xff] %v1275
      %1404 = vst [vmem:[#allocation2 + $0x3e8] sm:$0xff] %v1276
      %1405 = vst [vmem:[#allocation2 + $0x3f0] sm:$0xff] %v1277
      %1406 = vst [vmem:[#allocation2 + $0x3f8] sm:$0xff] %v1278
      // Predicated region
      $region37: #{simclr_projection_head.3} parent=31 // pred_check
        %p1407 = pneg %p265
      $region38: #{simclr_projection_head.3} parent=31 // pred_check_branch
        %1409 = sbr.rel (%p1407) target = $region40
      $region39: #{simclr_projection_head.3} parent=31 // pred_region
        %v1410 = vld [vmem:[#allocation2] sm:$0xff]
        %v1411 = vld [vmem:[#allocation2 + $0x8] sm:$0xff]
        %v1412 = vld [vmem:[#allocation2 + $0x10] sm:$0xff]
        %v1413 = vld [vmem:[#allocation2 + $0x18] sm:$0xff]
        %v1414 = vld [vmem:[#allocation2 + $0x20] sm:$0xff]
        %v1415 = vld [vmem:[#allocation2 + $0x28] sm:$0xff]
        %v1416 = vld [vmem:[#allocation2 + $0x30] sm:$0xff]
        %v1417 = vld [vmem:[#allocation2 + $0x38] sm:$0xff]
        %v1418 = vld [vmem:[#allocation2 + $0x40] sm:$0xff]
        %v1419 = vld [vmem:[#allocation2 + $0x48] sm:$0xff]
        %v1420 = vld [vmem:[#allocation2 + $0x50] sm:$0xff]
        %v1421 = vld [vmem:[#allocation2 + $0x58] sm:$0xff]
        %v1422 = vld [vmem:[#allocation2 + $0x60] sm:$0xff]
        %v1423 = vld [vmem:[#allocation2 + $0x68] sm:$0xff]
        %v1424 = vld [vmem:[#allocation2 + $0x70] sm:$0xff]
        %v1425 = vld [vmem:[#allocation2 + $0x78] sm:$0xff]
        %v1426 = vld [vmem:[#allocation2 + $0x80] sm:$0xff]
        %v1427 = vld [vmem:[#allocation2 + $0x88] sm:$0xff]
        %v1428 = vld [vmem:[#allocation2 + $0x90] sm:$0xff]
        %v1429 = vld [vmem:[#allocation2 + $0x98] sm:$0xff]
        %v1430 = vld [vmem:[#allocation2 + $0xa0] sm:$0xff]
        %v1431 = vld [vmem:[#allocation2 + $0xa8] sm:$0xff]
        %v1432 = vld [vmem:[#allocation2 + $0xb0] sm:$0xff]
        %v1433 = vld [vmem:[#allocation2 + $0xb8] sm:$0xff]
        %v1434 = vld [vmem:[#allocation2 + $0xc0] sm:$0xff]
        %v1435 = vld [vmem:[#allocation2 + $0xc8] sm:$0xff]
        %v1436 = vld [vmem:[#allocation2 + $0xd0] sm:$0xff]
        %v1437 = vld [vmem:[#allocation2 + $0xd8] sm:$0xff]
        %v1438 = vld [vmem:[#allocation2 + $0xe0] sm:$0xff]
        %v1439 = vld [vmem:[#allocation2 + $0xe8] sm:$0xff]
        %v1440 = vld [vmem:[#allocation2 + $0xf0] sm:$0xff]
        %v1441 = vld [vmem:[#allocation2 + $0xf8] sm:$0xff]
        %v1442 = vld [vmem:[#allocation2 + $0x100] sm:$0xff]
        %v1443 = vld [vmem:[#allocation2 + $0x108] sm:$0xff]
        %v1444 = vld [vmem:[#allocation2 + $0x110] sm:$0xff]
        %v1445 = vld [vmem:[#allocation2 + $0x118] sm:$0xff]
        %v1446 = vld [vmem:[#allocation2 + $0x120] sm:$0xff]
        %v1447 = vld [vmem:[#allocation2 + $0x128] sm:$0xff]
        %v1448 = vld [vmem:[#allocation2 + $0x130] sm:$0xff]
        %v1449 = vld [vmem:[#allocation2 + $0x138] sm:$0xff]
        %v1450 = vld [vmem:[#allocation2 + $0x140] sm:$0xff]
        %v1451 = vld [vmem:[#allocation2 + $0x148] sm:$0xff]
        %v1452 = vld [vmem:[#allocation2 + $0x150] sm:$0xff]
        %v1453 = vld [vmem:[#allocation2 + $0x158] sm:$0xff]
        %v1454 = vld [vmem:[#allocation2 + $0x160] sm:$0xff]
        %v1455 = vld [vmem:[#allocation2 + $0x168] sm:$0xff]
        %v1456 = vld [vmem:[#allocation2 + $0x170] sm:$0xff]
        %v1457 = vld [vmem:[#allocation2 + $0x178] sm:$0xff]
        %v1458 = vld [vmem:[#allocation2 + $0x180] sm:$0xff]
        %v1459 = vld [vmem:[#allocation2 + $0x188] sm:$0xff]
        %v1460 = vld [vmem:[#allocation2 + $0x190] sm:$0xff]
        %v1461 = vld [vmem:[#allocation2 + $0x198] sm:$0xff]
        %v1462 = vld [vmem:[#allocation2 + $0x1a0] sm:$0xff]
        %v1463 = vld [vmem:[#allocation2 + $0x1a8] sm:$0xff]
        %v1464 = vld [vmem:[#allocation2 + $0x1b0] sm:$0xff]
        %v1465 = vld [vmem:[#allocation2 + $0x1b8] sm:$0xff]
        %v1466 = vld [vmem:[#allocation2 + $0x1c0] sm:$0xff]
        %v1467 = vld [vmem:[#allocation2 + $0x1c8] sm:$0xff]
        %v1468 = vld [vmem:[#allocation2 + $0x1d0] sm:$0xff]
        %v1469 = vld [vmem:[#allocation2 + $0x1d8] sm:$0xff]
        %v1470 = vld [vmem:[#allocation2 + $0x1e0] sm:$0xff]
        %v1471 = vld [vmem:[#allocation2 + $0x1e8] sm:$0xff]
        %v1472 = vld [vmem:[#allocation2 + $0x1f0] sm:$0xff]
        %v1473 = vld [vmem:[#allocation2 + $0x1f8] sm:$0xff]
        %v1474 = vld [vmem:[#allocation2 + $0x200] sm:$0xff]
        %v1475 = vld [vmem:[#allocation2 + $0x208] sm:$0xff]
        %v1476 = vld [vmem:[#allocation2 + $0x210] sm:$0xff]
        %v1477 = vld [vmem:[#allocation2 + $0x218] sm:$0xff]
        %v1478 = vld [vmem:[#allocation2 + $0x220] sm:$0xff]
        %v1479 = vld [vmem:[#allocation2 + $0x228] sm:$0xff]
        %v1480 = vld [vmem:[#allocation2 + $0x230] sm:$0xff]
        %v1481 = vld [vmem:[#allocation2 + $0x238] sm:$0xff]
        %v1482 = vld [vmem:[#allocation2 + $0x240] sm:$0xff]
        %v1483 = vld [vmem:[#allocation2 + $0x248] sm:$0xff]
        %v1484 = vld [vmem:[#allocation2 + $0x250] sm:$0xff]
        %v1485 = vld [vmem:[#allocation2 + $0x258] sm:$0xff]
        %v1486 = vld [vmem:[#allocation2 + $0x260] sm:$0xff]
        %v1487 = vld [vmem:[#allocation2 + $0x268] sm:$0xff]
        %v1488 = vld [vmem:[#allocation2 + $0x270] sm:$0xff]
        %v1489 = vld [vmem:[#allocation2 + $0x278] sm:$0xff]
        %v1490 = vld [vmem:[#allocation2 + $0x280] sm:$0xff]
        %v1491 = vld [vmem:[#allocation2 + $0x288] sm:$0xff]
        %v1492 = vld [vmem:[#allocation2 + $0x290] sm:$0xff]
        %v1493 = vld [vmem:[#allocation2 + $0x298] sm:$0xff]
        %v1494 = vld [vmem:[#allocation2 + $0x2a0] sm:$0xff]
        %v1495 = vld [vmem:[#allocation2 + $0x2a8] sm:$0xff]
        %v1496 = vld [vmem:[#allocation2 + $0x2b0] sm:$0xff]
        %v1497 = vld [vmem:[#allocation2 + $0x2b8] sm:$0xff]
        %v1498 = vld [vmem:[#allocation2 + $0x2c0] sm:$0xff]
        %v1499 = vld [vmem:[#allocation2 + $0x2c8] sm:$0xff]
        %v1500 = vld [vmem:[#allocation2 + $0x2d0] sm:$0xff]
        %v1501 = vld [vmem:[#allocation2 + $0x2d8] sm:$0xff]
        %v1502 = vld [vmem:[#allocation2 + $0x2e0] sm:$0xff]
        %v1503 = vld [vmem:[#allocation2 + $0x2e8] sm:$0xff]
        %v1504 = vld [vmem:[#allocation2 + $0x2f0] sm:$0xff]
        %v1505 = vld [vmem:[#allocation2 + $0x2f8] sm:$0xff]
        %v1506 = vld [vmem:[#allocation2 + $0x300] sm:$0xff]
        %v1507 = vld [vmem:[#allocation2 + $0x308] sm:$0xff]
        %v1508 = vld [vmem:[#allocation2 + $0x310] sm:$0xff]
        %v1509 = vld [vmem:[#allocation2 + $0x318] sm:$0xff]
        %v1510 = vld [vmem:[#allocation2 + $0x320] sm:$0xff]
        %v1511 = vld [vmem:[#allocation2 + $0x328] sm:$0xff]
        %v1512 = vld [vmem:[#allocation2 + $0x330] sm:$0xff]
        %v1513 = vld [vmem:[#allocation2 + $0x338] sm:$0xff]
        %v1514 = vld [vmem:[#allocation2 + $0x340] sm:$0xff]
        %v1515 = vld [vmem:[#allocation2 + $0x348] sm:$0xff]
        %v1516 = vld [vmem:[#allocation2 + $0x350] sm:$0xff]
        %v1517 = vld [vmem:[#allocation2 + $0x358] sm:$0xff]
        %v1518 = vld [vmem:[#allocation2 + $0x360] sm:$0xff]
        %v1519 = vld [vmem:[#allocation2 + $0x368] sm:$0xff]
        %v1520 = vld [vmem:[#allocation2 + $0x370] sm:$0xff]
        %v1521 = vld [vmem:[#allocation2 + $0x378] sm:$0xff]
        %v1522 = vld [vmem:[#allocation2 + $0x380] sm:$0xff]
        %v1523 = vld [vmem:[#allocation2 + $0x388] sm:$0xff]
        %v1524 = vld [vmem:[#allocation2 + $0x390] sm:$0xff]
        %v1525 = vld [vmem:[#allocation2 + $0x398] sm:$0xff]
        %v1526 = vld [vmem:[#allocation2 + $0x3a0] sm:$0xff]
        %v1527 = vld [vmem:[#allocation2 + $0x3a8] sm:$0xff]
        %v1528 = vld [vmem:[#allocation2 + $0x3b0] sm:$0xff]
        %v1529 = vld [vmem:[#allocation2 + $0x3b8] sm:$0xff]
        %v1530 = vld [vmem:[#allocation2 + $0x3c0] sm:$0xff]
        %v1531 = vld [vmem:[#allocation2 + $0x3c8] sm:$0xff]
        %v1532 = vld [vmem:[#allocation2 + $0x3d0] sm:$0xff]
        %v1533 = vld [vmem:[#allocation2 + $0x3d8] sm:$0xff]
        %v1534 = vld [vmem:[#allocation2 + $0x3e0] sm:$0xff]
        %v1535 = vld [vmem:[#allocation2 + $0x3e8] sm:$0xff]
        %v1536 = vld [vmem:[#allocation2 + $0x3f0] sm:$0xff]
        %v1537 = vld [vmem:[#allocation2 + $0x3f8] sm:$0xff]
        %v1538 = vld [vmem:[%s2] sm:$0xf]
        %v1540 = vlaneseq
        %v1541 = vshrl.u32 %v1540, 7
        %v1542 = vsub.s32 0, %v1541
        %v1543 = vrot.slane %v1538, %v1542
        %v1544 = vlaneseq
        %v1545 = vshrl.u32 %v1544, 7
        %v1546 = vsub.s32 1, %v1545
        %v1547 = vrot.slane %v1538, %v1546
        %v1548 = vlaneseq
        %v1549 = vshrl.u32 %v1548, 7
        %v1550 = vsub.s32 2, %v1549
        %v1551 = vrot.slane %v1538, %v1550
        %v1552 = vlaneseq
        %v1553 = vshrl.u32 %v1552, 7
        %v1554 = vsub.s32 3, %v1553
        %v1555 = vrot.slane %v1538, %v1554
        %v1560 = vadd.f32 %v1410, %v1543
        %v1561 = vadd.f32 %v1411, %v1547
        %v1562 = vadd.f32 %v1412, %v1551
        %v1563 = vadd.f32 %v1413, %v1555
        %v1564 = vadd.f32 %v1414, %v1543
        %v1565 = vadd.f32 %v1415, %v1547
        %v1566 = vadd.f32 %v1416, %v1551
        %v1567 = vadd.f32 %v1417, %v1555
        %v1568 = vadd.f32 %v1418, %v1543
        %v1569 = vadd.f32 %v1419, %v1547
        %v1570 = vadd.f32 %v1420, %v1551
        %v1571 = vadd.f32 %v1421, %v1555
        %v1572 = vadd.f32 %v1422, %v1543
        %v1573 = vadd.f32 %v1423, %v1547
        %v1574 = vadd.f32 %v1424, %v1551
        %v1575 = vadd.f32 %v1425, %v1555
        %v1576 = vadd.f32 %v1426, %v1543
        %v1577 = vadd.f32 %v1427, %v1547
        %v1578 = vadd.f32 %v1428, %v1551
        %v1579 = vadd.f32 %v1429, %v1555
        %v1580 = vadd.f32 %v1430, %v1543
        %v1581 = vadd.f32 %v1431, %v1547
        %v1582 = vadd.f32 %v1432, %v1551
        %v1583 = vadd.f32 %v1433, %v1555
        %v1584 = vadd.f32 %v1434, %v1543
        %v1585 = vadd.f32 %v1435, %v1547
        %v1586 = vadd.f32 %v1436, %v1551
        %v1587 = vadd.f32 %v1437, %v1555
        %v1588 = vadd.f32 %v1438, %v1543
        %v1589 = vadd.f32 %v1439, %v1547
        %v1590 = vadd.f32 %v1440, %v1551
        %v1591 = vadd.f32 %v1441, %v1555
        %v1592 = vadd.f32 %v1442, %v1543
        %v1593 = vadd.f32 %v1443, %v1547
        %v1594 = vadd.f32 %v1444, %v1551
        %v1595 = vadd.f32 %v1445, %v1555
        %v1596 = vadd.f32 %v1446, %v1543
        %v1597 = vadd.f32 %v1447, %v1547
        %v1598 = vadd.f32 %v1448, %v1551
        %v1599 = vadd.f32 %v1449, %v1555
        %v1600 = vadd.f32 %v1450, %v1543
        %v1601 = vadd.f32 %v1451, %v1547
        %v1602 = vadd.f32 %v1452, %v1551
        %v1603 = vadd.f32 %v1453, %v1555
        %v1604 = vadd.f32 %v1454, %v1543
        %v1605 = vadd.f32 %v1455, %v1547
        %v1606 = vadd.f32 %v1456, %v1551
        %v1607 = vadd.f32 %v1457, %v1555
        %v1608 = vadd.f32 %v1458, %v1543
        %v1609 = vadd.f32 %v1459, %v1547
        %v1610 = vadd.f32 %v1460, %v1551
        %v1611 = vadd.f32 %v1461, %v1555
        %v1612 = vadd.f32 %v1462, %v1543
        %v1613 = vadd.f32 %v1463, %v1547
        %v1614 = vadd.f32 %v1464, %v1551
        %v1615 = vadd.f32 %v1465, %v1555
        %v1616 = vadd.f32 %v1466, %v1543
        %v1617 = vadd.f32 %v1467, %v1547
        %v1618 = vadd.f32 %v1468, %v1551
        %v1619 = vadd.f32 %v1469, %v1555
        %v1620 = vadd.f32 %v1470, %v1543
        %v1621 = vadd.f32 %v1471, %v1547
        %v1622 = vadd.f32 %v1472, %v1551
        %v1623 = vadd.f32 %v1473, %v1555
        %v1624 = vadd.f32 %v1474, %v1543
        %v1625 = vadd.f32 %v1475, %v1547
        %v1626 = vadd.f32 %v1476, %v1551
        %v1627 = vadd.f32 %v1477, %v1555
        %v1628 = vadd.f32 %v1478, %v1543
        %v1629 = vadd.f32 %v1479, %v1547
        %v1630 = vadd.f32 %v1480, %v1551
        %v1631 = vadd.f32 %v1481, %v1555
        %v1632 = vadd.f32 %v1482, %v1543
        %v1633 = vadd.f32 %v1483, %v1547
        %v1634 = vadd.f32 %v1484, %v1551
        %v1635 = vadd.f32 %v1485, %v1555
        %v1636 = vadd.f32 %v1486, %v1543
        %v1637 = vadd.f32 %v1487, %v1547
        %v1638 = vadd.f32 %v1488, %v1551
        %v1639 = vadd.f32 %v1489, %v1555
        %v1640 = vadd.f32 %v1490, %v1543
        %v1641 = vadd.f32 %v1491, %v1547
        %v1642 = vadd.f32 %v1492, %v1551
        %v1643 = vadd.f32 %v1493, %v1555
        %v1644 = vadd.f32 %v1494, %v1543
        %v1645 = vadd.f32 %v1495, %v1547
        %v1646 = vadd.f32 %v1496, %v1551
        %v1647 = vadd.f32 %v1497, %v1555
        %v1648 = vadd.f32 %v1498, %v1543
        %v1649 = vadd.f32 %v1499, %v1547
        %v1650 = vadd.f32 %v1500, %v1551
        %v1651 = vadd.f32 %v1501, %v1555
        %v1652 = vadd.f32 %v1502, %v1543
        %v1653 = vadd.f32 %v1503, %v1547
        %v1654 = vadd.f32 %v1504, %v1551
        %v1655 = vadd.f32 %v1505, %v1555
        %v1656 = vadd.f32 %v1506, %v1543
        %v1657 = vadd.f32 %v1507, %v1547
        %v1658 = vadd.f32 %v1508, %v1551
        %v1659 = vadd.f32 %v1509, %v1555
        %v1660 = vadd.f32 %v1510, %v1543
        %v1661 = vadd.f32 %v1511, %v1547
        %v1662 = vadd.f32 %v1512, %v1551
        %v1663 = vadd.f32 %v1513, %v1555
        %v1664 = vadd.f32 %v1514, %v1543
        %v1665 = vadd.f32 %v1515, %v1547
        %v1666 = vadd.f32 %v1516, %v1551
        %v1667 = vadd.f32 %v1517, %v1555
        %v1668 = vadd.f32 %v1518, %v1543
        %v1669 = vadd.f32 %v1519, %v1547
        %v1670 = vadd.f32 %v1520, %v1551
        %v1671 = vadd.f32 %v1521, %v1555
        %v1672 = vadd.f32 %v1522, %v1543
        %v1673 = vadd.f32 %v1523, %v1547
        %v1674 = vadd.f32 %v1524, %v1551
        %v1675 = vadd.f32 %v1525, %v1555
        %v1676 = vadd.f32 %v1526, %v1543
        %v1677 = vadd.f32 %v1527, %v1547
        %v1678 = vadd.f32 %v1528, %v1551
        %v1679 = vadd.f32 %v1529, %v1555
        %v1680 = vadd.f32 %v1530, %v1543
        %v1681 = vadd.f32 %v1531, %v1547
        %v1682 = vadd.f32 %v1532, %v1551
        %v1683 = vadd.f32 %v1533, %v1555
        %v1684 = vadd.f32 %v1534, %v1543
        %v1685 = vadd.f32 %v1535, %v1547
        %v1686 = vadd.f32 %v1536, %v1551
        %v1687 = vadd.f32 %v1537, %v1555
        %1688 = vst [vmem:[%s257] sm:$0xff] %v1560
        %1689 = vst [vmem:[%s257 + $0x8] sm:$0xff] %v1561
        %1690 = vst [vmem:[%s257 + $0x10] sm:$0xff] %v1562
        %1691 = vst [vmem:[%s257 + $0x18] sm:$0xff] %v1563
        %1692 = vst [vmem:[%s257 + $0x20] sm:$0xff] %v1564
        %1693 = vst [vmem:[%s257 + $0x28] sm:$0xff] %v1565
        %1694 = vst [vmem:[%s257 + $0x30] sm:$0xff] %v1566
        %1695 = vst [vmem:[%s257 + $0x38] sm:$0xff] %v1567
        %1696 = vst [vmem:[%s257 + $0x40] sm:$0xff] %v1568
        %1697 = vst [vmem:[%s257 + $0x48] sm:$0xff] %v1569
        %1698 = vst [vmem:[%s257 + $0x50] sm:$0xff] %v1570
        %1699 = vst [vmem:[%s257 + $0x58] sm:$0xff] %v1571
        %1700 = vst [vmem:[%s257 + $0x60] sm:$0xff] %v1572
        %1701 = vst [vmem:[%s257 + $0x68] sm:$0xff] %v1573
        %1702 = vst [vmem:[%s257 + $0x70] sm:$0xff] %v1574
        %1703 = vst [vmem:[%s257 + $0x78] sm:$0xff] %v1575
        %1704 = vst [vmem:[%s257 + $0x80] sm:$0xff] %v1576
        %1705 = vst [vmem:[%s257 + $0x88] sm:$0xff] %v1577
        %1706 = vst [vmem:[%s257 + $0x90] sm:$0xff] %v1578
        %1707 = vst [vmem:[%s257 + $0x98] sm:$0xff] %v1579
        %1708 = vst [vmem:[%s257 + $0xa0] sm:$0xff] %v1580
        %1709 = vst [vmem:[%s257 + $0xa8] sm:$0xff] %v1581
        %1710 = vst [vmem:[%s257 + $0xb0] sm:$0xff] %v1582
        %1711 = vst [vmem:[%s257 + $0xb8] sm:$0xff] %v1583
        %1712 = vst [vmem:[%s257 + $0xc0] sm:$0xff] %v1584
        %1713 = vst [vmem:[%s257 + $0xc8] sm:$0xff] %v1585
        %1714 = vst [vmem:[%s257 + $0xd0] sm:$0xff] %v1586
        %1715 = vst [vmem:[%s257 + $0xd8] sm:$0xff] %v1587
        %1716 = vst [vmem:[%s257 + $0xe0] sm:$0xff] %v1588
        %1717 = vst [vmem:[%s257 + $0xe8] sm:$0xff] %v1589
        %1718 = vst [vmem:[%s257 + $0xf0] sm:$0xff] %v1590
        %1719 = vst [vmem:[%s257 + $0xf8] sm:$0xff] %v1591
        %1720 = vst [vmem:[%s257 + $0x100] sm:$0xff] %v1592
        %1721 = vst [vmem:[%s257 + $0x108] sm:$0xff] %v1593
        %1722 = vst [vmem:[%s257 + $0x110] sm:$0xff] %v1594
        %1723 = vst [vmem:[%s257 + $0x118] sm:$0xff] %v1595
        %1724 = vst [vmem:[%s257 + $0x120] sm:$0xff] %v1596
        %1725 = vst [vmem:[%s257 + $0x128] sm:$0xff] %v1597
        %1726 = vst [vmem:[%s257 + $0x130] sm:$0xff] %v1598
        %1727 = vst [vmem:[%s257 + $0x138] sm:$0xff] %v1599
        %1728 = vst [vmem:[%s257 + $0x140] sm:$0xff] %v1600
        %1729 = vst [vmem:[%s257 + $0x148] sm:$0xff] %v1601
        %1730 = vst [vmem:[%s257 + $0x150] sm:$0xff] %v1602
        %1731 = vst [vmem:[%s257 + $0x158] sm:$0xff] %v1603
        %1732 = vst [vmem:[%s257 + $0x160] sm:$0xff] %v1604
        %1733 = vst [vmem:[%s257 + $0x168] sm:$0xff] %v1605
        %1734 = vst [vmem:[%s257 + $0x170] sm:$0xff] %v1606
        %1735 = vst [vmem:[%s257 + $0x178] sm:$0xff] %v1607
        %1736 = vst [vmem:[%s257 + $0x180] sm:$0xff] %v1608
        %1737 = vst [vmem:[%s257 + $0x188] sm:$0xff] %v1609
        %1738 = vst [vmem:[%s257 + $0x190] sm:$0xff] %v1610
        %1739 = vst [vmem:[%s257 + $0x198] sm:$0xff] %v1611
        %1740 = vst [vmem:[%s257 + $0x1a0] sm:$0xff] %v1612
        %1741 = vst [vmem:[%s257 + $0x1a8] sm:$0xff] %v1613
        %1742 = vst [vmem:[%s257 + $0x1b0] sm:$0xff] %v1614
        %1743 = vst [vmem:[%s257 + $0x1b8] sm:$0xff] %v1615
        %1744 = vst [vmem:[%s257 + $0x1c0] sm:$0xff] %v1616
        %1745 = vst [vmem:[%s257 + $0x1c8] sm:$0xff] %v1617
        %1746 = vst [vmem:[%s257 + $0x1d0] sm:$0xff] %v1618
        %1747 = vst [vmem:[%s257 + $0x1d8] sm:$0xff] %v1619
        %1748 = vst [vmem:[%s257 + $0x1e0] sm:$0xff] %v1620
        %1749 = vst [vmem:[%s257 + $0x1e8] sm:$0xff] %v1621
        %1750 = vst [vmem:[%s257 + $0x1f0] sm:$0xff] %v1622
        %1751 = vst [vmem:[%s257 + $0x1f8] sm:$0xff] %v1623
        %1752 = vst [vmem:[%s257 + $0x200] sm:$0xff] %v1624
        %1753 = vst [vmem:[%s257 + $0x208] sm:$0xff] %v1625
        %1754 = vst [vmem:[%s257 + $0x210] sm:$0xff] %v1626
        %1755 = vst [vmem:[%s257 + $0x218] sm:$0xff] %v1627
        %1756 = vst [vmem:[%s257 + $0x220] sm:$0xff] %v1628
        %1757 = vst [vmem:[%s257 + $0x228] sm:$0xff] %v1629
        %1758 = vst [vmem:[%s257 + $0x230] sm:$0xff] %v1630
        %1759 = vst [vmem:[%s257 + $0x238] sm:$0xff] %v1631
        %1760 = vst [vmem:[%s257 + $0x240] sm:$0xff] %v1632
        %1761 = vst [vmem:[%s257 + $0x248] sm:$0xff] %v1633
        %1762 = vst [vmem:[%s257 + $0x250] sm:$0xff] %v1634
        %1763 = vst [vmem:[%s257 + $0x258] sm:$0xff] %v1635
        %1764 = vst [vmem:[%s257 + $0x260] sm:$0xff] %v1636
        %1765 = vst [vmem:[%s257 + $0x268] sm:$0xff] %v1637
        %1766 = vst [vmem:[%s257 + $0x270] sm:$0xff] %v1638
        %1767 = vst [vmem:[%s257 + $0x278] sm:$0xff] %v1639
        %1768 = vst [vmem:[%s257 + $0x280] sm:$0xff] %v1640
        %1769 = vst [vmem:[%s257 + $0x288] sm:$0xff] %v1641
        %1770 = vst [vmem:[%s257 + $0x290] sm:$0xff] %v1642
        %1771 = vst [vmem:[%s257 + $0x298] sm:$0xff] %v1643
        %1772 = vst [vmem:[%s257 + $0x2a0] sm:$0xff] %v1644
        %1773 = vst [vmem:[%s257 + $0x2a8] sm:$0xff] %v1645
        %1774 = vst [vmem:[%s257 + $0x2b0] sm:$0xff] %v1646
        %1775 = vst [vmem:[%s257 + $0x2b8] sm:$0xff] %v1647
        %1776 = vst [vmem:[%s257 + $0x2c0] sm:$0xff] %v1648
        %1777 = vst [vmem:[%s257 + $0x2c8] sm:$0xff] %v1649
        %1778 = vst [vmem:[%s257 + $0x2d0] sm:$0xff] %v1650
        %1779 = vst [vmem:[%s257 + $0x2d8] sm:$0xff] %v1651
        %1780 = vst [vmem:[%s257 + $0x2e0] sm:$0xff] %v1652
        %1781 = vst [vmem:[%s257 + $0x2e8] sm:$0xff] %v1653
        %1782 = vst [vmem:[%s257 + $0x2f0] sm:$0xff] %v1654
        %1783 = vst [vmem:[%s257 + $0x2f8] sm:$0xff] %v1655
        %1784 = vst [vmem:[%s257 + $0x300] sm:$0xff] %v1656
        %1785 = vst [vmem:[%s257 + $0x308] sm:$0xff] %v1657
        %1786 = vst [vmem:[%s257 + $0x310] sm:$0xff] %v1658
        %1787 = vst [vmem:[%s257 + $0x318] sm:$0xff] %v1659
        %1788 = vst [vmem:[%s257 + $0x320] sm:$0xff] %v1660
        %1789 = vst [vmem:[%s257 + $0x328] sm:$0xff] %v1661
        %1790 = vst [vmem:[%s257 + $0x330] sm:$0xff] %v1662
        %1791 = vst [vmem:[%s257 + $0x338] sm:$0xff] %v1663
        %1792 = vst [vmem:[%s257 + $0x340] sm:$0xff] %v1664
        %1793 = vst [vmem:[%s257 + $0x348] sm:$0xff] %v1665
        %1794 = vst [vmem:[%s257 + $0x350] sm:$0xff] %v1666
        %1795 = vst [vmem:[%s257 + $0x358] sm:$0xff] %v1667
        %1796 = vst [vmem:[%s257 + $0x360] sm:$0xff] %v1668
        %1797 = vst [vmem:[%s257 + $0x368] sm:$0xff] %v1669
        %1798 = vst [vmem:[%s257 + $0x370] sm:$0xff] %v1670
        %1799 = vst [vmem:[%s257 + $0x378] sm:$0xff] %v1671
        %1800 = vst [vmem:[%s257 + $0x380] sm:$0xff] %v1672
        %1801 = vst [vmem:[%s257 + $0x388] sm:$0xff] %v1673
        %1802 = vst [vmem:[%s257 + $0x390] sm:$0xff] %v1674
        %1803 = vst [vmem:[%s257 + $0x398] sm:$0xff] %v1675
        %1804 = vst [vmem:[%s257 + $0x3a0] sm:$0xff] %v1676
        %1805 = vst [vmem:[%s257 + $0x3a8] sm:$0xff] %v1677
        %1806 = vst [vmem:[%s257 + $0x3b0] sm:$0xff] %v1678
        %1807 = vst [vmem:[%s257 + $0x3b8] sm:$0xff] %v1679
        %1808 = vst [vmem:[%s257 + $0x3c0] sm:$0xff] %v1680
        %1809 = vst [vmem:[%s257 + $0x3c8] sm:$0xff] %v1681
        %1810 = vst [vmem:[%s257 + $0x3d0] sm:$0xff] %v1682
        %1811 = vst [vmem:[%s257 + $0x3d8] sm:$0xff] %v1683
        %1812 = vst [vmem:[%s257 + $0x3e0] sm:$0xff] %v1684
        %1813 = vst [vmem:[%s257 + $0x3e8] sm:$0xff] %v1685
        %1814 = vst [vmem:[%s257 + $0x3f0] sm:$0xff] %v1686
        %1815 = vst [vmem:[%s257 + $0x3f8] sm:$0xff] %v1687
        %v1816 = vadd.f32 %v1560, %v1564
        %v1817 = vadd.f32 %v1816, %v1568
        %v1818 = vadd.f32 %v1817, %v1572
        %v1819 = vadd.f32 %v1818, %v1576
        %v1820 = vadd.f32 %v1819, %v1580
        %v1821 = vadd.f32 %v1820, %v1584
        %v1822 = vadd.f32 %v1821, %v1588
        %v1823 = vadd.f32 %v1822, %v1592
        %v1824 = vadd.f32 %v1823, %v1596
        %v1825 = vadd.f32 %v1824, %v1600
        %v1826 = vadd.f32 %v1825, %v1604
        %v1827 = vadd.f32 %v1826, %v1608
        %v1828 = vadd.f32 %v1827, %v1612
        %v1829 = vadd.f32 %v1828, %v1616
        %v1830 = vadd.f32 %v1829, %v1620
        %v1831 = vadd.f32 %v1830, %v1624
        %v1832 = vadd.f32 %v1831, %v1628
        %v1833 = vadd.f32 %v1832, %v1632
        %v1834 = vadd.f32 %v1833, %v1636
        %v1835 = vadd.f32 %v1834, %v1640
        %v1836 = vadd.f32 %v1835, %v1644
        %v1837 = vadd.f32 %v1836, %v1648
        %v1838 = vadd.f32 %v1837, %v1652
        %v1839 = vadd.f32 %v1838, %v1656
        %v1840 = vadd.f32 %v1839, %v1660
        %v1841 = vadd.f32 %v1840, %v1664
        %v1842 = vadd.f32 %v1841, %v1668
        %v1843 = vadd.f32 %v1842, %v1672
        %v1844 = vadd.f32 %v1843, %v1676
        %v1845 = vadd.f32 %v1844, %v1680
        %v1846 = vadd.f32 %v1845, %v1684
        %v1847 = vrot.slane %v1846, 4
        %v1848 = vadd.f32 %v1846, %v1847
        %v1849 = vrot.slane %v1848, 2
        %v1850 = vadd.f32 %v1848, %v1849
        %v1851 = vrot.slane %v1850, 1
        %v1852 = vadd.f32 %v1850, %v1851
        %v1853 = vadd.f32 %v1561, %v1565
        %v1854 = vadd.f32 %v1853, %v1569
        %v1855 = vadd.f32 %v1854, %v1573
        %v1856 = vadd.f32 %v1855, %v1577
        %v1857 = vadd.f32 %v1856, %v1581
        %v1858 = vadd.f32 %v1857, %v1585
        %v1859 = vadd.f32 %v1858, %v1589
        %v1860 = vadd.f32 %v1859, %v1593
        %v1861 = vadd.f32 %v1860, %v1597
        %v1862 = vadd.f32 %v1861, %v1601
        %v1863 = vadd.f32 %v1862, %v1605
        %v1864 = vadd.f32 %v1863, %v1609
        %v1865 = vadd.f32 %v1864, %v1613
        %v1866 = vadd.f32 %v1865, %v1617
        %v1867 = vadd.f32 %v1866, %v1621
        %v1868 = vadd.f32 %v1867, %v1625
        %v1869 = vadd.f32 %v1868, %v1629
        %v1870 = vadd.f32 %v1869, %v1633
        %v1871 = vadd.f32 %v1870, %v1637
        %v1872 = vadd.f32 %v1871, %v1641
        %v1873 = vadd.f32 %v1872, %v1645
        %v1874 = vadd.f32 %v1873, %v1649
        %v1875 = vadd.f32 %v1874, %v1653
        %v1876 = vadd.f32 %v1875, %v1657
        %v1877 = vadd.f32 %v1876, %v1661
        %v1878 = vadd.f32 %v1877, %v1665
        %v1879 = vadd.f32 %v1878, %v1669
        %v1880 = vadd.f32 %v1879, %v1673
        %v1881 = vadd.f32 %v1880, %v1677
        %v1882 = vadd.f32 %v1881, %v1681
        %v1883 = vadd.f32 %v1882, %v1685
        %v1884 = vrot.slane %v1883, 4
        %v1885 = vadd.f32 %v1883, %v1884
        %v1886 = vrot.slane %v1885, 2
        %v1887 = vadd.f32 %v1885, %v1886
        %v1888 = vrot.slane %v1887, 1
        %v1889 = vadd.f32 %v1887, %v1888
        %v1890 = vadd.f32 %v1562, %v1566
        %v1891 = vadd.f32 %v1890, %v1570
        %v1892 = vadd.f32 %v1891, %v1574
        %v1893 = vadd.f32 %v1892, %v1578
        %v1894 = vadd.f32 %v1893, %v1582
        %v1895 = vadd.f32 %v1894, %v1586
        %v1896 = vadd.f32 %v1895, %v1590
        %v1897 = vadd.f32 %v1896, %v1594
        %v1898 = vadd.f32 %v1897, %v1598
        %v1899 = vadd.f32 %v1898, %v1602
        %v1900 = vadd.f32 %v1899, %v1606
        %v1901 = vadd.f32 %v1900, %v1610
        %v1902 = vadd.f32 %v1901, %v1614
        %v1903 = vadd.f32 %v1902, %v1618
        %v1904 = vadd.f32 %v1903, %v1622
        %v1905 = vadd.f32 %v1904, %v1626
        %v1906 = vadd.f32 %v1905, %v1630
        %v1907 = vadd.f32 %v1906, %v1634
        %v1908 = vadd.f32 %v1907, %v1638
        %v1909 = vadd.f32 %v1908, %v1642
        %v1910 = vadd.f32 %v1909, %v1646
        %v1911 = vadd.f32 %v1910, %v1650
        %v1912 = vadd.f32 %v1911, %v1654
        %v1913 = vadd.f32 %v1912, %v1658
        %v1914 = vadd.f32 %v1913, %v1662
        %v1915 = vadd.f32 %v1914, %v1666
        %v1916 = vadd.f32 %v1915, %v1670
        %v1917 = vadd.f32 %v1916, %v1674
        %v1918 = vadd.f32 %v1917, %v1678
        %v1919 = vadd.f32 %v1918, %v1682
        %v1920 = vadd.f32 %v1919, %v1686
        %v1921 = vrot.slane %v1920, 4
        %v1922 = vadd.f32 %v1920, %v1921
        %v1923 = vrot.slane %v1922, 2
        %v1924 = vadd.f32 %v1922, %v1923
        %v1925 = vrot.slane %v1924, 1
        %v1926 = vadd.f32 %v1924, %v1925
        %v1927 = vadd.f32 %v1563, %v1567
        %v1928 = vadd.f32 %v1927, %v1571
        %v1929 = vadd.f32 %v1928, %v1575
        %v1930 = vadd.f32 %v1929, %v1579
        %v1931 = vadd.f32 %v1930, %v1583
        %v1932 = vadd.f32 %v1931, %v1587
        %v1933 = vadd.f32 %v1932, %v1591
        %v1934 = vadd.f32 %v1933, %v1595
        %v1935 = vadd.f32 %v1934, %v1599
        %v1936 = vadd.f32 %v1935, %v1603
        %v1937 = vadd.f32 %v1936, %v1607
        %v1938 = vadd.f32 %v1937, %v1611
        %v1939 = vadd.f32 %v1938, %v1615
        %v1940 = vadd.f32 %v1939, %v1619
        %v1941 = vadd.f32 %v1940, %v1623
        %v1942 = vadd.f32 %v1941, %v1627
        %v1943 = vadd.f32 %v1942, %v1631
        %v1944 = vadd.f32 %v1943, %v1635
        %v1945 = vadd.f32 %v1944, %v1639
        %v1946 = vadd.f32 %v1945, %v1643
        %v1947 = vadd.f32 %v1946, %v1647
        %v1948 = vadd.f32 %v1947, %v1651
        %v1949 = vadd.f32 %v1948, %v1655
        %v1950 = vadd.f32 %v1949, %v1659
        %v1951 = vadd.f32 %v1950, %v1663
        %v1952 = vadd.f32 %v1951, %v1667
        %v1953 = vadd.f32 %v1952, %v1671
        %v1954 = vadd.f32 %v1953, %v1675
        %v1955 = vadd.f32 %v1954, %v1679
        %v1956 = vadd.f32 %v1955, %v1683
        %v1957 = vadd.f32 %v1956, %v1687
        %v1958 = vrot.slane %v1957, 4
        %v1959 = vadd.f32 %v1957, %v1958
        %v1960 = vrot.slane %v1959, 2
        %v1961 = vadd.f32 %v1959, %v1960
        %v1962 = vrot.slane %v1961, 1
        %v1963 = vadd.f32 %v1961, %v1962
        %v1964 = vmul.f32 %v1560, %v1560
        %v1965 = vmul.f32 %v1561, %v1561
        %v1966 = vmul.f32 %v1562, %v1562
        %v1967 = vmul.f32 %v1563, %v1563
        %v1968 = vmul.f32 %v1564, %v1564
        %v1969 = vmul.f32 %v1565, %v1565
        %v1970 = vmul.f32 %v1566, %v1566
        %v1971 = vmul.f32 %v1567, %v1567
        %v1972 = vmul.f32 %v1568, %v1568
        %v1973 = vmul.f32 %v1569, %v1569
        %v1974 = vmul.f32 %v1570, %v1570
        %v1975 = vmul.f32 %v1571, %v1571
        %v1976 = vmul.f32 %v1572, %v1572
        %v1977 = vmul.f32 %v1573, %v1573
        %v1978 = vmul.f32 %v1574, %v1574
        %v1979 = vmul.f32 %v1575, %v1575
        %v1980 = vmul.f32 %v1576, %v1576
        %v1981 = vmul.f32 %v1577, %v1577
        %v1982 = vmul.f32 %v1578, %v1578
        %v1983 = vmul.f32 %v1579, %v1579
        %v1984 = vmul.f32 %v1580, %v1580
        %v1985 = vmul.f32 %v1581, %v1581
        %v1986 = vmul.f32 %v1582, %v1582
        %v1987 = vmul.f32 %v1583, %v1583
        %v1988 = vmul.f32 %v1584, %v1584
        %v1989 = vmul.f32 %v1585, %v1585
        %v1990 = vmul.f32 %v1586, %v1586
        %v1991 = vmul.f32 %v1587, %v1587
        %v1992 = vmul.f32 %v1588, %v1588
        %v1993 = vmul.f32 %v1589, %v1589
        %v1994 = vmul.f32 %v1590, %v1590
        %v1995 = vmul.f32 %v1591, %v1591
        %v1996 = vmul.f32 %v1592, %v1592
        %v1997 = vmul.f32 %v1593, %v1593
        %v1998 = vmul.f32 %v1594, %v1594
        %v1999 = vmul.f32 %v1595, %v1595
        %v2000 = vmul.f32 %v1596, %v1596
        %v2001 = vmul.f32 %v1597, %v1597
        %v2002 = vmul.f32 %v1598, %v1598
        %v2003 = vmul.f32 %v1599, %v1599
        %v2004 = vmul.f32 %v1600, %v1600
        %v2005 = vmul.f32 %v1601, %v1601
        %v2006 = vmul.f32 %v1602, %v1602
        %v2007 = vmul.f32 %v1603, %v1603
        %v2008 = vmul.f32 %v1604, %v1604
        %v2009 = vmul.f32 %v1605, %v1605
        %v2010 = vmul.f32 %v1606, %v1606
        %v2011 = vmul.f32 %v1607, %v1607
        %v2012 = vmul.f32 %v1608, %v1608
        %v2013 = vmul.f32 %v1609, %v1609
        %v2014 = vmul.f32 %v1610, %v1610
        %v2015 = vmul.f32 %v1611, %v1611
        %v2016 = vmul.f32 %v1612, %v1612
        %v2017 = vmul.f32 %v1613, %v1613
        %v2018 = vmul.f32 %v1614, %v1614
        %v2019 = vmul.f32 %v1615, %v1615
        %v2020 = vmul.f32 %v1616, %v1616
        %v2021 = vmul.f32 %v1617, %v1617
        %v2022 = vmul.f32 %v1618, %v1618
        %v2023 = vmul.f32 %v1619, %v1619
        %v2024 = vmul.f32 %v1620, %v1620
        %v2025 = vmul.f32 %v1621, %v1621
        %v2026 = vmul.f32 %v1622, %v1622
        %v2027 = vmul.f32 %v1623, %v1623
        %v2028 = vmul.f32 %v1624, %v1624
        %v2029 = vmul.f32 %v1625, %v1625
        %v2030 = vmul.f32 %v1626, %v1626
        %v2031 = vmul.f32 %v1627, %v1627
        %v2032 = vmul.f32 %v1628, %v1628
        %v2033 = vmul.f32 %v1629, %v1629
        %v2034 = vmul.f32 %v1630, %v1630
        %v2035 = vmul.f32 %v1631, %v1631
        %v2036 = vmul.f32 %v1632, %v1632
        %v2037 = vmul.f32 %v1633, %v1633
        %v2038 = vmul.f32 %v1634, %v1634
        %v2039 = vmul.f32 %v1635, %v1635
        %v2040 = vmul.f32 %v1636, %v1636
        %v2041 = vmul.f32 %v1637, %v1637
        %v2042 = vmul.f32 %v1638, %v1638
        %v2043 = vmul.f32 %v1639, %v1639
        %v2044 = vmul.f32 %v1640, %v1640
        %v2045 = vmul.f32 %v1641, %v1641
        %v2046 = vmul.f32 %v1642, %v1642
        %v2047 = vmul.f32 %v1643, %v1643
        %v2048 = vmul.f32 %v1644, %v1644
        %v2049 = vmul.f32 %v1645, %v1645
        %v2050 = vmul.f32 %v1646, %v1646
        %v2051 = vmul.f32 %v1647, %v1647
        %v2052 = vmul.f32 %v1648, %v1648
        %v2053 = vmul.f32 %v1649, %v1649
        %v2054 = vmul.f32 %v1650, %v1650
        %v2055 = vmul.f32 %v1651, %v1651
        %v2056 = vmul.f32 %v1652, %v1652
        %v2057 = vmul.f32 %v1653, %v1653
        %v2058 = vmul.f32 %v1654, %v1654
        %v2059 = vmul.f32 %v1655, %v1655
        %v2060 = vmul.f32 %v1656, %v1656
        %v2061 = vmul.f32 %v1657, %v1657
        %v2062 = vmul.f32 %v1658, %v1658
        %v2063 = vmul.f32 %v1659, %v1659
        %v2064 = vmul.f32 %v1660, %v1660
        %v2065 = vmul.f32 %v1661, %v1661
        %v2066 = vmul.f32 %v1662, %v1662
        %v2067 = vmul.f32 %v1663, %v1663
        %v2068 = vmul.f32 %v1664, %v1664
        %v2069 = vmul.f32 %v1665, %v1665
        %v2070 = vmul.f32 %v1666, %v1666
        %v2071 = vmul.f32 %v1667, %v1667
        %v2072 = vmul.f32 %v1668, %v1668
        %v2073 = vmul.f32 %v1669, %v1669
        %v2074 = vmul.f32 %v1670, %v1670
        %v2075 = vmul.f32 %v1671, %v1671
        %v2076 = vmul.f32 %v1672, %v1672
        %v2077 = vmul.f32 %v1673, %v1673
        %v2078 = vmul.f32 %v1674, %v1674
        %v2079 = vmul.f32 %v1675, %v1675
        %v2080 = vmul.f32 %v1676, %v1676
        %v2081 = vmul.f32 %v1677, %v1677
        %v2082 = vmul.f32 %v1678, %v1678
        %v2083 = vmul.f32 %v1679, %v1679
        %v2084 = vmul.f32 %v1680, %v1680
        %v2085 = vmul.f32 %v1681, %v1681
        %v2086 = vmul.f32 %v1682, %v1682
        %v2087 = vmul.f32 %v1683, %v1683
        %v2088 = vmul.f32 %v1684, %v1684
        %v2089 = vmul.f32 %v1685, %v1685
        %v2090 = vmul.f32 %v1686, %v1686
        %v2091 = vmul.f32 %v1687, %v1687
        %v2092 = vadd.f32 %v1964, %v1968
        %v2093 = vadd.f32 %v2092, %v1972
        %v2094 = vadd.f32 %v2093, %v1976
        %v2095 = vadd.f32 %v2094, %v1980
        %v2096 = vadd.f32 %v2095, %v1984
        %v2097 = vadd.f32 %v2096, %v1988
        %v2098 = vadd.f32 %v2097, %v1992
        %v2099 = vadd.f32 %v2098, %v1996
        %v2100 = vadd.f32 %v2099, %v2000
        %v2101 = vadd.f32 %v2100, %v2004
        %v2102 = vadd.f32 %v2101, %v2008
        %v2103 = vadd.f32 %v2102, %v2012
        %v2104 = vadd.f32 %v2103, %v2016
        %v2105 = vadd.f32 %v2104, %v2020
        %v2106 = vadd.f32 %v2105, %v2024
        %v2107 = vadd.f32 %v2106, %v2028
        %v2108 = vadd.f32 %v2107, %v2032
        %v2109 = vadd.f32 %v2108, %v2036
        %v2110 = vadd.f32 %v2109, %v2040
        %v2111 = vadd.f32 %v2110, %v2044
        %v2112 = vadd.f32 %v2111, %v2048
        %v2113 = vadd.f32 %v2112, %v2052
        %v2114 = vadd.f32 %v2113, %v2056
        %v2115 = vadd.f32 %v2114, %v2060
        %v2116 = vadd.f32 %v2115, %v2064
        %v2117 = vadd.f32 %v2116, %v2068
        %v2118 = vadd.f32 %v2117, %v2072
        %v2119 = vadd.f32 %v2118, %v2076
        %v2120 = vadd.f32 %v2119, %v2080
        %v2121 = vadd.f32 %v2120, %v2084
        %v2122 = vadd.f32 %v2121, %v2088
        %v2123 = vrot.slane %v2122, 4
        %v2124 = vadd.f32 %v2122, %v2123
        %v2125 = vrot.slane %v2124, 2
        %v2126 = vadd.f32 %v2124, %v2125
        %v2127 = vrot.slane %v2126, 1
        %v2128 = vadd.f32 %v2126, %v2127
        %v2129 = vadd.f32 %v1965, %v1969
        %v2130 = vadd.f32 %v2129, %v1973
        %v2131 = vadd.f32 %v2130, %v1977
        %v2132 = vadd.f32 %v2131, %v1981
        %v2133 = vadd.f32 %v2132, %v1985
        %v2134 = vadd.f32 %v2133, %v1989
        %v2135 = vadd.f32 %v2134, %v1993
        %v2136 = vadd.f32 %v2135, %v1997
        %v2137 = vadd.f32 %v2136, %v2001
        %v2138 = vadd.f32 %v2137, %v2005
        %v2139 = vadd.f32 %v2138, %v2009
        %v2140 = vadd.f32 %v2139, %v2013
        %v2141 = vadd.f32 %v2140, %v2017
        %v2142 = vadd.f32 %v2141, %v2021
        %v2143 = vadd.f32 %v2142, %v2025
        %v2144 = vadd.f32 %v2143, %v2029
        %v2145 = vadd.f32 %v2144, %v2033
        %v2146 = vadd.f32 %v2145, %v2037
        %v2147 = vadd.f32 %v2146, %v2041
        %v2148 = vadd.f32 %v2147, %v2045
        %v2149 = vadd.f32 %v2148, %v2049
        %v2150 = vadd.f32 %v2149, %v2053
        %v2151 = vadd.f32 %v2150, %v2057
        %v2152 = vadd.f32 %v2151, %v2061
        %v2153 = vadd.f32 %v2152, %v2065
        %v2154 = vadd.f32 %v2153, %v2069
        %v2155 = vadd.f32 %v2154, %v2073
        %v2156 = vadd.f32 %v2155, %v2077
        %v2157 = vadd.f32 %v2156, %v2081
        %v2158 = vadd.f32 %v2157, %v2085
        %v2159 = vadd.f32 %v2158, %v2089
        %v2160 = vrot.slane %v2159, 4
        %v2161 = vadd.f32 %v2159, %v2160
        %v2162 = vrot.slane %v2161, 2
        %v2163 = vadd.f32 %v2161, %v2162
        %v2164 = vrot.slane %v2163, 1
        %v2165 = vadd.f32 %v2163, %v2164
        %v2166 = vadd.f32 %v1966, %v1970
        %v2167 = vadd.f32 %v2166, %v1974
        %v2168 = vadd.f32 %v2167, %v1978
        %v2169 = vadd.f32 %v2168, %v1982
        %v2170 = vadd.f32 %v2169, %v1986
        %v2171 = vadd.f32 %v2170, %v1990
        %v2172 = vadd.f32 %v2171, %v1994
        %v2173 = vadd.f32 %v2172, %v1998
        %v2174 = vadd.f32 %v2173, %v2002
        %v2175 = vadd.f32 %v2174, %v2006
        %v2176 = vadd.f32 %v2175, %v2010
        %v2177 = vadd.f32 %v2176, %v2014
        %v2178 = vadd.f32 %v2177, %v2018
        %v2179 = vadd.f32 %v2178, %v2022
        %v2180 = vadd.f32 %v2179, %v2026
        %v2181 = vadd.f32 %v2180, %v2030
        %v2182 = vadd.f32 %v2181, %v2034
        %v2183 = vadd.f32 %v2182, %v2038
        %v2184 = vadd.f32 %v2183, %v2042
        %v2185 = vadd.f32 %v2184, %v2046
        %v2186 = vadd.f32 %v2185, %v2050
        %v2187 = vadd.f32 %v2186, %v2054
        %v2188 = vadd.f32 %v2187, %v2058
        %v2189 = vadd.f32 %v2188, %v2062
        %v2190 = vadd.f32 %v2189, %v2066
        %v2191 = vadd.f32 %v2190, %v2070
        %v2192 = vadd.f32 %v2191, %v2074
        %v2193 = vadd.f32 %v2192, %v2078
        %v2194 = vadd.f32 %v2193, %v2082
        %v2195 = vadd.f32 %v2194, %v2086
        %v2196 = vadd.f32 %v2195, %v2090
        %v2197 = vrot.slane %v2196, 4
        %v2198 = vadd.f32 %v2196, %v2197
        %v2199 = vrot.slane %v2198, 2
        %v2200 = vadd.f32 %v2198, %v2199
        %v2201 = vrot.slane %v2200, 1
        %v2202 = vadd.f32 %v2200, %v2201
        %v2203 = vadd.f32 %v1967, %v1971
        %v2204 = vadd.f32 %v2203, %v1975
        %v2205 = vadd.f32 %v2204, %v1979
        %v2206 = vadd.f32 %v2205, %v1983
        %v2207 = vadd.f32 %v2206, %v1987
        %v2208 = vadd.f32 %v2207, %v1991
        %v2209 = vadd.f32 %v2208, %v1995
        %v2210 = vadd.f32 %v2209, %v1999
        %v2211 = vadd.f32 %v2210, %v2003
        %v2212 = vadd.f32 %v2211, %v2007
        %v2213 = vadd.f32 %v2212, %v2011
        %v2214 = vadd.f32 %v2213, %v2015
        %v2215 = vadd.f32 %v2214, %v2019
        %v2216 = vadd.f32 %v2215, %v2023
        %v2217 = vadd.f32 %v2216, %v2027
        %v2218 = vadd.f32 %v2217, %v2031
        %v2219 = vadd.f32 %v2218, %v2035
        %v2220 = vadd.f32 %v2219, %v2039
        %v2221 = vadd.f32 %v2220, %v2043
        %v2222 = vadd.f32 %v2221, %v2047
        %v2223 = vadd.f32 %v2222, %v2051
        %v2224 = vadd.f32 %v2223, %v2055
        %v2225 = vadd.f32 %v2224, %v2059
        %v2226 = vadd.f32 %v2225, %v2063
        %v2227 = vadd.f32 %v2226, %v2067
        %v2228 = vadd.f32 %v2227, %v2071
        %v2229 = vadd.f32 %v2228, %v2075
        %v2230 = vadd.f32 %v2229, %v2079
        %v2231 = vadd.f32 %v2230, %v2083
        %v2232 = vadd.f32 %v2231, %v2087
        %v2233 = vadd.f32 %v2232, %v2091
        %v2234 = vrot.slane %v2233, 4
        %v2235 = vadd.f32 %v2233, %v2234
        %v2236 = vrot.slane %v2235, 2
        %v2237 = vadd.f32 %v2235, %v2236
        %v2238 = vrot.slane %v2237, 1
        %v2239 = vadd.f32 %v2237, %v2238
        %vm2240 = vcmask 1040384
        %v2241 = vsel %vm2240, %v1852, %v2128
        %v2242 = vsel %vm2240, %v1889, %v2165
        %v2243 = vsel %vm2240, %v1926, %v2202
        %v2244 = vsel %vm2240, %v1963, %v2239
        %v2249 = vcombine.low %v2241, %v2242
        %v2250 = vcombine.low %v2243, %v2244
        %v2252 = vunpack.c.l.s4 1983009808
        %v2253 = vunpack.c.0.s8 %v2252
        %v2254 = vlaneseq
        %v2255 = vshrl.u32 %v2254, 7
        %v2256 = vsub.s32 %v2253, %v2255
        %v2257 = vrot.slane %v2249, %v2256
        %v2259 = vunpack.c.l.s4 1983009808
        %v2260 = vunpack.c.0.s8 %v2259
        %v2261 = vlaneseq
        %v2262 = vshrl.u32 %v2261, 7
        %v2263 = vsub.s32 %v2260, %v2262
        %v2264 = vrot.slane %v2250, %v2263
        %v2265 = vcombine.low %v2257, %v2264
        %2267 = vst [vmem:[%s263] sm:$0xff] %v2265
      $region40: #{simclr_projection_head.3} parent=31 // pred_fallthru
        _
      %s2268 = smul.u32 32, %s20
      %p2269 = scmp.lt.s32.totalorder %s2268, 63
      %s2270 = scalar_select %p2269, %s2268, 63
      %s2271 = smul.addr %s2270, 4
      %s2272 = smul.addr %s2271, 8
      %s2273 = scalar_lea.vmem %s3, %s2272
      %p2274 = scmp.lt.s32.totalorder %s20, 1
      %s2275 = scalar_select %p2274, %s20, 1
      %s2276 = smul.addr %s2275, 4
      %s2277 = smul.addr %s2276, 2
      %s2278 = scalar_lea.vmem %s4, %s2277
      // Predicated region
      $region41: #{simclr_projection_head.3} parent=31 // pred_check
        %p2279 = pneg %p121
      $region42: #{simclr_projection_head.3} parent=31 // pred_check_branch
        %2281 = sbr.rel (%p2279) target = $region44
      $region43: #{simclr_projection_head.3} parent=31 // pred_region
        %s2282 = smul.u32 32, %s20
      $region44: #{simclr_projection_head.3} parent=31 // pred_fallthru
        _
      // Predicated region
      $region45: #{simclr_projection_head.3} parent=31 // pred_check
        %p2283 = pneg %p147
      $region46: #{simclr_projection_head.3} parent=31 // pred_check_branch
        %2285 = sbr.rel (%p2283) target = $region48
      $region47: #{simclr_projection_head.3} parent=31 // pred_region
        _
      $region48: #{simclr_projection_head.3} parent=31 // pred_fallthru
        _
    $region32: #{simclr_projection_head.3} parent=5 // pred_fallthru
      _
    %p2286 = scmp.le.s32.totalorder 2, %s11
    // Predicated region
    $region49: #{simclr_projection_head.3} parent=5 // pred_check
      %p2287 = pneg %p2286
    $region50: #{simclr_projection_head.3} parent=5 // pred_check_branch
      %2289 = sbr.rel (%p2287) target = $region52
    $region51: #{simclr_projection_head.3} parent=5 // pred_region
      %s2290 = ssub.s32 %s11, 2
      // Predicated region
      $region53: #{simclr_projection_head.3} parent=51 // pred_check
        %p2291 = pneg %p127
      $region54: #{simclr_projection_head.3} parent=51 // pred_check_branch
        %2293 = sbr.rel (%p2291) target = $region56
      $region55: #{simclr_projection_head.3} parent=51 // pred_region
        %s2294 = smul.u32 32, %s22
        %p2295 = scmp.lt.s32.totalorder %s2294, 63
        %s2296 = scalar_select %p2295, %s2294, 63
        %s2297 = smul.addr %s2296, 4
        %s2298 = smul.addr %s2297, 8
        %s2299 = scalar_lea.vmem %s3, %s2298
      $region56: #{simclr_projection_head.3} parent=51 // pred_fallthru
        _
      // Predicated region
      $region57: #{simclr_projection_head.3} parent=51 // pred_check
        %p2300 = pneg %p153
      $region58: #{simclr_projection_head.3} parent=51 // pred_check_branch
        %2302 = sbr.rel (%p2300) target = $region60
      $region59: #{simclr_projection_head.3} parent=51 // pred_region
        %p2303 = scmp.lt.s32.totalorder %s22, 1
        %s2304 = scalar_select %p2303, %s22, 1
        %s2305 = smul.addr %s2304, 4
        %s2306 = smul.addr %s2305, 2
        %s2307 = scalar_lea.vmem %s4, %s2306
      $region60: #{simclr_projection_head.3} parent=51 // pred_fallthru
        _
    $region52: #{simclr_projection_head.3} parent=5 // pred_fallthru
      _
  $region6: #{simclr_projection_head.3} parent=0 // loop_footer
    %s15 = sadd.s32 1, %s11
  $region7: #{simclr_projection_head.3} parent=0 // loop_footer_branch
    %10 = sbr.rel target = $region3
  $region8: #{simclr_projection_head.3} parent=0 // loop_exit
    _

// kernel: simclr_projection_head.4
$region0: #{simclr_projection_head.4}
  #allocation0 [shape = 'u32[]', space=smem, size = 0x4, offset = 0x4, fixed_abs, tag = 'smem constant byte address 0x4 - core index']
  #allocation1 [shape = 'u32[144,128]{1,0:T(1,128)}', space=vmem, size = 0x12000, scoped, tag = 'internal scratch']
  #allocation2 [shape = 'f32[256,512]{1,0:T(8,128)}', space=vmem, size = 0x80000, scoped, tag = 'scratch operand']
  %s0 = inlined_call_operand.vmem [shape: f32[512,512], index: 0, kind: input, shape index: {}]
  %s1 = inlined_call_operand.vmem [shape: f32[1,512], index: 1, kind: input, shape index: {}]
  %s2 = inlined_call_operand.vmem [shape: f32[1,512], index: 2, kind: input, shape index: {}]
  %s3 = inlined_call_operand.vmem [shape: bf16[512,512], index: 3, kind: input, shape index: {}]
  %s4 = inlined_call_operand.vmem [shape: f32[1,512], index: 4, kind: input, shape index: {}]
  %s5 = inlined_call_operand.vmem [shape: f32[512,512], index: 5, kind: output, shape index: {0}]
  %s6 = inlined_call_operand.vmem [shape: f32[2,2,512], index: 6, kind: output, shape index: {1}]
  %7 = xla_tuple %s5, %s6
  %s8 = sld [smem:[#allocation0]]
  $region92: #{simclr_projection_head.4} parent=0
    _
  %s10 = ssub.s32 1, %s8
  %s11 = scalar_select 0, %s10, %s8
  $region1: #{simclr_projection_head.4} parent=0
    #allocation3 [shape = 'u8[524288]{0}', space=vmem, size = 0x80000, scoped, tag = 'input window, operand 0']
    loop: start=0, step=1, limit=6
    $region2: #{simclr_projection_head.4} parent=1 // loop_pre_header
      _
    $region3: #{simclr_projection_head.4} parent=1 // loop_header
      %s13 = sphi 0, %s17
      %p14 = scmp.ge.s32.totalorder %s13, 6
      %s20 = sphi 0, %s32
      %s21 = sphi 0, %s28
      %s22 = sphi 0, %s20
      %s23 = sphi 0, %s21
      %s24 = sphi 0, %s22
      %s25 = sphi 0, %s23
      %s37 = sphi 0, %s39
      %s40 = sphi 0, %s37
      %s41 = sphi 0, %s40
      %s57 = sphi 0, %s41
      %s63 = sphi 0, %s65
      %s66 = sphi 0, %s63
      %s67 = sphi 0, %s66
      %s83 = sphi 0, %s67
      %s89 = sphi 0, %s91
      %s92 = sphi 0, %s89
      %s93 = sphi 0, %s92
      %s109 = sphi 0, %s93
      %s115 = sphi 0, %s117
      %s118 = sphi 0, %s115
      %s119 = sphi 0, %s118
      %s135 = sphi 0, %s119
      %s139 = sphi 0, %s139
      %s141 = sphi 0, %s139
      %s142 = sphi 0, %s141
      %s156 = sphi 0, %s142
      %s162 = sphi 0, %s164
      %s165 = sphi 0, %s162
      %s166 = sphi 0, %s165
      %s182 = sphi 0, %s166
      %s188 = sphi 0, %s190
      %s191 = sphi 0, %s188
      %s192 = sphi 0, %s191
      %s208 = sphi 0, %s192
    $region4: #{simclr_projection_head.4} parent=1 // loop_header_branch
      %16 = sbr.rel (%p14) target = $region8
    $region5: #{simclr_projection_head.4} parent=1 // loop_body
      %s18 = ssub.s32 %s13, 1
      %s19 = ssub.s32 %s13, 2
      %s26 = sadd.s32 1, %s21
      %p27 = scmp.ge.s32.totalorder %s26, 2
      %s28 = scalar_select %p27, 0, %s26
      %s29 = sadd.s32 1, %s20
      %s30 = scalar_select %p27, %s29, %s20
      %p31 = scmp.ge.s32.totalorder %s30, 2
      %s32 = scalar_select %p31, 0, %s30
      %s33 = ssub.s32 %s20, %s32
      %s34 = ssub.s32 %s21, %s28
      %s35 = sor.u32 %s33, %s34
      %p36 = scmp.eq.s32.totalorder %s35, 0
      %s38 = sadd.s32 %s37, 1
      %s39 = scalar_select %p36, %s37, %s38
      %p42 = pneg %p36
      %p43 = scmp.eq.s32.totalorder %s13, 3
      %p44 = por %p42, %p43
      %p45 = scmp.ne.s32.totalorder %s37, %s40
      %p46 = scmp.eq.s32.totalorder %s13, 0
      %p47 = por %p45, %p46
      %p48 = scmp.ne.s32.totalorder %s37, %s40
      %p49 = scmp.eq.s32.totalorder %s18, 3
      %p50 = por %p48, %p49
      %p51 = scmp.ne.s32.totalorder %s40, %s41
      %p52 = scmp.eq.s32.totalorder %s18, 0
      %p53 = por %p51, %p52
      %p54 = scmp.ne.s32.totalorder %s40, %s41
      %p55 = scmp.eq.s32.totalorder %s19, 3
      %p56 = por %p54, %p55
      %p58 = scmp.ne.s32.totalorder %s41, %s57
      %p59 = scmp.eq.s32.totalorder %s19, 0
      %p60 = por %p58, %p59
      %s61 = ssub.s32 %s21, %s28
      %p62 = scmp.eq.s32.totalorder %s61, 0
      %s64 = sadd.s32 %s63, 1
      %s65 = scalar_select %p62, %s63, %s64
      %p68 = pneg %p62
      %p69 = scmp.eq.s32.totalorder %s13, 3
      %p70 = por %p68, %p69
      %p71 = scmp.ne.s32.totalorder %s63, %s66
      %p72 = scmp.eq.s32.totalorder %s13, 0
      %p73 = por %p71, %p72
      %p74 = scmp.ne.s32.totalorder %s63, %s66
      %p75 = scmp.eq.s32.totalorder %s18, 3
      %p76 = por %p74, %p75
      %p77 = scmp.ne.s32.totalorder %s66, %s67
      %p78 = scmp.eq.s32.totalorder %s18, 0
      %p79 = por %p77, %p78
      %p80 = scmp.ne.s32.totalorder %s66, %s67
      %p81 = scmp.eq.s32.totalorder %s19, 3
      %p82 = por %p80, %p81
      %p84 = scmp.ne.s32.totalorder %s67, %s83
      %p85 = scmp.eq.s32.totalorder %s19, 0
      %p86 = por %p84, %p85
      %s87 = ssub.s32 %s21, %s28
      %p88 = scmp.eq.s32.totalorder %s87, 0
      %s90 = sadd.s32 %s89, 1
      %s91 = scalar_select %p88, %s89, %s90
      %p94 = pneg %p88
      %p95 = scmp.eq.s32.totalorder %s13, 3
      %p96 = por %p94, %p95
      %p97 = scmp.ne.s32.totalorder %s89, %s92
      %p98 = scmp.eq.s32.totalorder %s13, 0
      %p99 = por %p97, %p98
      %p100 = scmp.ne.s32.totalorder %s89, %s92
      %p101 = scmp.eq.s32.totalorder %s18, 3
      %p102 = por %p100, %p101
      %p103 = scmp.ne.s32.totalorder %s92, %s93
      %p104 = scmp.eq.s32.totalorder %s18, 0
      %p105 = por %p103, %p104
      %p106 = scmp.ne.s32.totalorder %s92, %s93
      %p107 = scmp.eq.s32.totalorder %s19, 3
      %p108 = por %p106, %p107
      %p110 = scmp.ne.s32.totalorder %s93, %s109
      %p111 = scmp.eq.s32.totalorder %s19, 0
      %p112 = por %p110, %p111
      %s113 = ssub.s32 %s21, %s28
      %p114 = scmp.eq.s32.totalorder %s113, 0
      %s116 = sadd.s32 %s115, 1
      %s117 = scalar_select %p114, %s115, %s116
      %p120 = pneg %p114
      %p121 = scmp.eq.s32.totalorder %s13, 3
      %p122 = por %p120, %p121
      %p123 = scmp.ne.s32.totalorder %s115, %s118
      %p124 = scmp.eq.s32.totalorder %s13, 0
      %p125 = por %p123, %p124
      %p126 = scmp.ne.s32.totalorder %s115, %s118
      %p127 = scmp.eq.s32.totalorder %s18, 3
      %p128 = por %p126, %p127
      %p129 = scmp.ne.s32.totalorder %s118, %s119
      %p130 = scmp.eq.s32.totalorder %s18, 0
      %p131 = por %p129, %p130
      %p132 = scmp.ne.s32.totalorder %s118, %s119
      %p133 = scmp.eq.s32.totalorder %s19, 3
      %p134 = por %p132, %p133
      %p136 = scmp.ne.s32.totalorder %s119, %s135
      %p137 = scmp.eq.s32.totalorder %s19, 0
      %p138 = por %p136, %p137
      %s140 = sadd.s32 %s139, 1
      %p143 = scmp.eq.s32.totalorder %s13, 3
      %p144 = scmp.ne.s32.totalorder %s139, %s141
      %p145 = scmp.eq.s32.totalorder %s13, 0
      %p146 = por %p144, %p145
      %p147 = scmp.ne.s32.totalorder %s139, %s141
      %p148 = scmp.eq.s32.totalorder %s18, 3
      %p149 = por %p147, %p148
      %p150 = scmp.ne.s32.totalorder %s141, %s142
      %p151 = scmp.eq.s32.totalorder %s18, 0
      %p152 = por %p150, %p151
      %p153 = scmp.ne.s32.totalorder %s141, %s142
      %p154 = scmp.eq.s32.totalorder %s19, 3
      %p155 = por %p153, %p154
      %p157 = scmp.ne.s32.totalorder %s142, %s156
      %p158 = scmp.eq.s32.totalorder %s19, 0
      %p159 = por %p157, %p158
      %s160 = ssub.s32 %s20, %s32
      %p161 = scmp.eq.s32.totalorder %s160, 0
      %s163 = sadd.s32 %s162, 1
      %s164 = scalar_select %p161, %s162, %s163
      %p167 = pneg %p161
      %p168 = scmp.eq.s32.totalorder %s13, 3
      %p169 = por %p167, %p168
      %p170 = scmp.ne.s32.totalorder %s162, %s165
      %p171 = scmp.eq.s32.totalorder %s13, 0
      %p172 = por %p170, %p171
      %p173 = scmp.ne.s32.totalorder %s162, %s165
      %p174 = scmp.eq.s32.totalorder %s18, 3
      %p175 = por %p173, %p174
      %p176 = scmp.ne.s32.totalorder %s165, %s166
      %p177 = scmp.eq.s32.totalorder %s18, 0
      %p178 = por %p176, %p177
      %p179 = scmp.ne.s32.totalorder %s165, %s166
      %p180 = scmp.eq.s32.totalorder %s19, 3
      %p181 = por %p179, %p180
      %p183 = scmp.ne.s32.totalorder %s166, %s182
      %p184 = scmp.eq.s32.totalorder %s19, 0
      %p185 = por %p183, %p184
      %s186 = ssub.s32 %s20, %s32
      %p187 = scmp.eq.s32.totalorder %s186, 0
      %s189 = sadd.s32 %s188, 1
      %s190 = scalar_select %p187, %s188, %s189
      %p193 = pneg %p187
      %p194 = scmp.eq.s32.totalorder %s13, 3
      %p195 = por %p193, %p194
      %p196 = scmp.ne.s32.totalorder %s188, %s191
      %p197 = scmp.eq.s32.totalorder %s13, 0
      %p198 = por %p196, %p197
      %p199 = scmp.ne.s32.totalorder %s188, %s191
      %p200 = scmp.eq.s32.totalorder %s18, 3
      %p201 = por %p199, %p200
      %p202 = scmp.ne.s32.totalorder %s191, %s192
      %p203 = scmp.eq.s32.totalorder %s18, 0
      %p204 = por %p202, %p203
      %p205 = scmp.ne.s32.totalorder %s191, %s192
      %p206 = scmp.eq.s32.totalorder %s19, 3
      %p207 = por %p205, %p206
      %p209 = scmp.ne.s32.totalorder %s192, %s208
      %p210 = scmp.eq.s32.totalorder %s19, 0
      %p211 = por %p209, %p210
      %p212 = scmp.le.s32.totalorder 1, %s13
      %p213 = scmp.lt.s32.totalorder %s13, 5
      %p214 = pnand %p212, %p213
      %p215 = pneg %p214
      // Predicated region
      $region9: #{simclr_projection_head.4} parent=5 // pred_check
        _
      $region10: #{simclr_projection_head.4} parent=5 // pred_check_branch
        %217 = sbr.rel (%p214) target = $region12
      $region11: #{simclr_projection_head.4} parent=5 // pred_region
        %s218 = ssub.s32 %s13, 1
        // Predicated region
        $region13: #{simclr_projection_head.4} parent=11 // pred_check
          %p219 = pneg %p152
        $region14: #{simclr_projection_head.4} parent=11 // pred_check_branch
          %221 = sbr.rel (%p219) target = $region16
        $region15: #{simclr_projection_head.4} parent=11 // pred_region
          _
        $region16: #{simclr_projection_head.4} parent=11 // pred_fallthru
          _
      $region12: #{simclr_projection_head.4} parent=5 // pred_fallthru
        _
      %p222 = scmp.lt.s32.totalorder %s13, 4
      // Predicated region
      $region17: #{simclr_projection_head.4} parent=5 // pred_check
        %p223 = pneg %p222
      $region18: #{simclr_projection_head.4} parent=5 // pred_check_branch
        %225 = sbr.rel (%p223) target = $region20
      $region19: #{simclr_projection_head.4} parent=5 // pred_region
        // Predicated region
        $region21: #{simclr_projection_head.4} parent=19 // pred_check
          %p226 = pneg %p47
        $region22: #{simclr_projection_head.4} parent=19 // pred_check_branch
          %228 = sbr.rel (%p226) target = $region24
        $region23: #{simclr_projection_head.4} parent=19 // pred_region
          %s229 = sand.u32 %s37, 1
          %s230 = sand.u32 %s37, 1
          %s231 = smul.addr %s230, 512
          %s232 = scalar_lea.vmem [#allocation3], %s231
          %s233 = smul.u32 32, %s20
          %s234 = smul.u32 2, %s21
          %s235 = smul.addr %s233, 4
          %s236 = sadd.s32 %s234, %s235
          %s237 = smul.addr %s236, 8
          %s238 = scalar_lea.vmem %s0, %s237
          // Predicated region
          $region25: #{simclr_projection_head.4} parent=23 // pred_check
            _
          $region26: #{simclr_projection_head.4} parent=23 // pred_check_branch
            %240 = sbr.rel (0) target = $region28
          $region27: #{simclr_projection_head.4} parent=23 // pred_region
            // Predicated region
            $region29: #{simclr_projection_head.4} parent=27 // pred_check
              _
            $region30: #{simclr_projection_head.4} parent=27 // pred_check_branch
              %242 = sbr.rel (0) target = $region32
            $region31: #{simclr_projection_head.4} parent=27 // pred_region
              loop: start=0, step=1, limit=1
              $region33: #{simclr_projection_head.4} parent=31 // loop_pre_header
                _
              $region34: #{simclr_projection_head.4} parent=31 // loop_header
                %s244 = sphi 0, %s248
                %p245 = scmp.ge.s32.totalorder %s244, 1
                %s249 = sphi %s238, %s238
                %s250 = sphi %s232, %s232
              $region35: #{simclr_projection_head.4} parent=31 // loop_header_branch
                %247 = sbr.rel (%p245) target = $region39
              $region36: #{simclr_projection_head.4} parent=31 // loop_body
                %v251 = vld [vmem:[%s249] sm:$0xff]
                %252 = vst [vmem:[%s250] sm:$0xff] %v251
                %v253 = vld [vmem:[%s249 + $0x8] sm:$0xff]
                %254 = vst [vmem:[%s250 + $0x8] sm:$0xff] %v253
                %v255 = vld [vmem:[%s249 + $0x20] sm:$0xff]
                %256 = vst [vmem:[%s250 + $0x10] sm:$0xff] %v255
                %v257 = vld [vmem:[%s249 + $0x28] sm:$0xff]
                %258 = vst [vmem:[%s250 + $0x18] sm:$0xff] %v257
                %v259 = vld [vmem:[%s249 + $0x40] sm:$0xff]
                %260 = vst [vmem:[%s250 + $0x20] sm:$0xff] %v259
                %v261 = vld [vmem:[%s249 + $0x48] sm:$0xff]
                %262 = vst [vmem:[%s250 + $0x28] sm:$0xff] %v261
                %v263 = vld [vmem:[%s249 + $0x60] sm:$0xff]
                %264 = vst [vmem:[%s250 + $0x30] sm:$0xff] %v263
                %v265 = vld [vmem:[%s249 + $0x68] sm:$0xff]
                %266 = vst [vmem:[%s250 + $0x38] sm:$0xff] %v265
                %v267 = vld [vmem:[%s249 + $0x80] sm:$0xff]
                %268 = vst [vmem:[%s250 + $0x40] sm:$0xff] %v267
                %v269 = vld [vmem:[%s249 + $0x88] sm:$0xff]
                %270 = vst [vmem:[%s250 + $0x48] sm:$0xff] %v269
                %v271 = vld [vmem:[%s249 + $0xa0] sm:$0xff]
                %272 = vst [vmem:[%s250 + $0x50] sm:$0xff] %v271
                %v273 = vld [vmem:[%s249 + $0xa8] sm:$0xff]
                %274 = vst [vmem:[%s250 + $0x58] sm:$0xff] %v273
                %v275 = vld [vmem:[%s249 + $0xc0] sm:$0xff]
                %276 = vst [vmem:[%s250 + $0x60] sm:$0xff] %v275
                %v277 = vld [vmem:[%s249 + $0xc8] sm:$0xff]
                %278 = vst [vmem:[%s250 + $0x68] sm:$0xff] %v277
                %v279 = vld [vmem:[%s249 + $0xe0] sm:$0xff]
                %280 = vst [vmem:[%s250 + $0x70] sm:$0xff] %v279
                %v281 = vld [vmem:[%s249 + $0xe8] sm:$0xff]
                %282 = vst [vmem:[%s250 + $0x78] sm:$0xff] %v281
                %v283 = vld [vmem:[%s249 + $0x100] sm:$0xff]
                %284 = vst [vmem:[%s250 + $0x80] sm:$0xff] %v283
                %v285 = vld [vmem:[%s249 + $0x108] sm:$0xff]
                %286 = vst [vmem:[%s250 + $0x88] sm:$0xff] %v285
                %v287 = vld [vmem:[%s249 + $0x120] sm:$0xff]
                %288 = vst [vmem:[%s250 + $0x90] sm:$0xff] %v287
                %v289 = vld [vmem:[%s249 + $0x128] sm:$0xff]
                %290 = vst [vmem:[%s250 + $0x98] sm:$0xff] %v289
                %v291 = vld [vmem:[%s249 + $0x140] sm:$0xff]
                %292 = vst [vmem:[%s250 + $0xa0] sm:$0xff] %v291
                %v293 = vld [vmem:[%s249 + $0x148] sm:$0xff]
                %294 = vst [vmem:[%s250 + $0xa8] sm:$0xff] %v293
                %v295 = vld [vmem:[%s249 + $0x160] sm:$0xff]
                %296 = vst [vmem:[%s250 + $0xb0] sm:$0xff] %v295
                %v297 = vld [vmem:[%s249 + $0x168] sm:$0xff]
                %298 = vst [vmem:[%s250 + $0xb8] sm:$0xff] %v297
                %v299 = vld [vmem:[%s249 + $0x180] sm:$0xff]
                %300 = vst [vmem:[%s250 + $0xc0] sm:$0xff] %v299
                %v301 = vld [vmem:[%s249 + $0x188] sm:$0xff]
                %302 = vst [vmem:[%s250 + $0xc8] sm:$0xff] %v301
                %v303 = vld [vmem:[%s249 + $0x1a0] sm:$0xff]
                %304 = vst [vmem:[%s250 + $0xd0] sm:$0xff] %v303
                %v305 = vld [vmem:[%s249 + $0x1a8] sm:$0xff]
                %306 = vst [vmem:[%s250 + $0xd8] sm:$0xff] %v305
                %v307 = vld [vmem:[%s249 + $0x1c0] sm:$0xff]
                %308 = vst [vmem:[%s250 + $0xe0] sm:$0xff] %v307
                %v309 = vld [vmem:[%s249 + $0x1c8] sm:$0xff]
                %310 = vst [vmem:[%s250 + $0xe8] sm:$0xff] %v309
                %v311 = vld [vmem:[%s249 + $0x1e0] sm:$0xff]
                %312 = vst [vmem:[%s250 + $0xf0] sm:$0xff] %v311
                %v313 = vld [vmem:[%s249 + $0x1e8] sm:$0xff]
                %314 = vst [vmem:[%s250 + $0xf8] sm:$0xff] %v313
                %v315 = vld [vmem:[%s249 + $0x200] sm:$0xff]
                %316 = vst [vmem:[%s250 + $0x100] sm:$0xff] %v315
                %v317 = vld [vmem:[%s249 + $0x208] sm:$0xff]
                %318 = vst [vmem:[%s250 + $0x108] sm:$0xff] %v317
                %v319 = vld [vmem:[%s249 + $0x220] sm:$0xff]
                %320 = vst [vmem:[%s250 + $0x110] sm:$0xff] %v319
                %v321 = vld [vmem:[%s249 + $0x228] sm:$0xff]
                %322 = vst [vmem:[%s250 + $0x118] sm:$0xff] %v321
                %v323 = vld [vmem:[%s249 + $0x240] sm:$0xff]
                %324 = vst [vmem:[%s250 + $0x120] sm:$0xff] %v323
                %v325 = vld [vmem:[%s249 + $0x248] sm:$0xff]
                %326 = vst [vmem:[%s250 + $0x128] sm:$0xff] %v325
                %v327 = vld [vmem:[%s249 + $0x260] sm:$0xff]
                %328 = vst [vmem:[%s250 + $0x130] sm:$0xff] %v327
                %v329 = vld [vmem:[%s249 + $0x268] sm:$0xff]
                %330 = vst [vmem:[%s250 + $0x138] sm:$0xff] %v329
                %v331 = vld [vmem:[%s249 + $0x280] sm:$0xff]
                %332 = vst [vmem:[%s250 + $0x140] sm:$0xff] %v331
                %v333 = vld [vmem:[%s249 + $0x288] sm:$0xff]
                %334 = vst [vmem:[%s250 + $0x148] sm:$0xff] %v333
                %v335 = vld [vmem:[%s249 + $0x2a0] sm:$0xff]
                %336 = vst [vmem:[%s250 + $0x150] sm:$0xff] %v335
                %v337 = vld [vmem:[%s249 + $0x2a8] sm:$0xff]
                %338 = vst [vmem:[%s250 + $0x158] sm:$0xff] %v337
                %v339 = vld [vmem:[%s249 + $0x2c0] sm:$0xff]
                %340 = vst [vmem:[%s250 + $0x160] sm:$0xff] %v339
                %v341 = vld [vmem:[%s249 + $0x2c8] sm:$0xff]
                %342 = vst [vmem:[%s250 + $0x168] sm:$0xff] %v341
                %v343 = vld [vmem:[%s249 + $0x2e0] sm:$0xff]
                %344 = vst [vmem:[%s250 + $0x170] sm:$0xff] %v343
                %v345 = vld [vmem:[%s249 + $0x2e8] sm:$0xff]
                %346 = vst [vmem:[%s250 + $0x178] sm:$0xff] %v345
                %v347 = vld [vmem:[%s249 + $0x300] sm:$0xff]
                %348 = vst [vmem:[%s250 + $0x180] sm:$0xff] %v347
                %v349 = vld [vmem:[%s249 + $0x308] sm:$0xff]
                %350 = vst [vmem:[%s250 + $0x188] sm:$0xff] %v349
                %v351 = vld [vmem:[%s249 + $0x320] sm:$0xff]
                %352 = vst [vmem:[%s250 + $0x190] sm:$0xff] %v351
                %v353 = vld [vmem:[%s249 + $0x328] sm:$0xff]
                %354 = vst [vmem:[%s250 + $0x198] sm:$0xff] %v353
                %v355 = vld [vmem:[%s249 + $0x340] sm:$0xff]
                %356 = vst [vmem:[%s250 + $0x1a0] sm:$0xff] %v355
                %v357 = vld [vmem:[%s249 + $0x348] sm:$0xff]
                %358 = vst [vmem:[%s250 + $0x1a8] sm:$0xff] %v357
                %v359 = vld [vmem:[%s249 + $0x360] sm:$0xff]
                %360 = vst [vmem:[%s250 + $0x1b0] sm:$0xff] %v359
                %v361 = vld [vmem:[%s249 + $0x368] sm:$0xff]
                %362 = vst [vmem:[%s250 + $0x1b8] sm:$0xff] %v361
                %v363 = vld [vmem:[%s249 + $0x380] sm:$0xff]
                %364 = vst [vmem:[%s250 + $0x1c0] sm:$0xff] %v363
                %v365 = vld [vmem:[%s249 + $0x388] sm:$0xff]
                %366 = vst [vmem:[%s250 + $0x1c8] sm:$0xff] %v365
                %v367 = vld [vmem:[%s249 + $0x3a0] sm:$0xff]
                %368 = vst [vmem:[%s250 + $0x1d0] sm:$0xff] %v367
                %v369 = vld [vmem:[%s249 + $0x3a8] sm:$0xff]
                %370 = vst [vmem:[%s250 + $0x1d8] sm:$0xff] %v369
                %v371 = vld [vmem:[%s249 + $0x3c0] sm:$0xff]
                %372 = vst [vmem:[%s250 + $0x1e0] sm:$0xff] %v371
                %v373 = vld [vmem:[%s249 + $0x3c8] sm:$0xff]
                %374 = vst [vmem:[%s250 + $0x1e8] sm:$0xff] %v373
                %v375 = vld [vmem:[%s249 + $0x3e0] sm:$0xff]
                %376 = vst [vmem:[%s250 + $0x1f0] sm:$0xff] %v375
                %v377 = vld [vmem:[%s249 + $0x3e8] sm:$0xff]
                %378 = vst [vmem:[%s250 + $0x1f8] sm:$0xff] %v377
              $region37: #{simclr_projection_head.4} parent=31 // loop_footer
                %s248 = sadd.s32 1, %s244
              $region38: #{simclr_projection_head.4} parent=31 // loop_footer_branch
                %243 = sbr.rel target = $region34
              $region39: #{simclr_projection_head.4} parent=31 // loop_exit
                _
            $region32: #{simclr_projection_head.4} parent=27 // pred_fallthru
              _
            // Predicated region
            $region40: #{simclr_projection_head.4} parent=27 // pred_check
              _
            $region41: #{simclr_projection_head.4} parent=27 // pred_check_branch
              %380 = sbr.rel target = $region43
            $region42: #{simclr_projection_head.4} parent=27 // pred_region
              _
            $region43: #{simclr_projection_head.4} parent=27 // pred_fallthru
              _
          $region28: #{simclr_projection_head.4} parent=23 // pred_fallthru
            _
          %381 = vnop
        $region24: #{simclr_projection_head.4} parent=19 // pred_fallthru
          _
        // Predicated region
        $region44: #{simclr_projection_head.4} parent=19 // pred_check
          %p382 = pneg %p73
        $region45: #{simclr_projection_head.4} parent=19 // pred_check_branch
          %384 = sbr.rel (%p382) target = $region47
        $region46: #{simclr_projection_head.4} parent=19 // pred_region
          %s385 = smul.u32 2, %s21
          %p386 = scmp.lt.s32.totalorder %s385, 3
          %s387 = scalar_select %p386, %s385, 3
          %s388 = scalar_lea.vmem %s1, %s387
          %s389 = smul.u32 2, %s21
        $region47: #{simclr_projection_head.4} parent=19 // pred_fallthru
          _
        // Predicated region
        $region48: #{simclr_projection_head.4} parent=19 // pred_check
          %p390 = pneg %p99
        $region49: #{simclr_projection_head.4} parent=19 // pred_check_branch
          %392 = sbr.rel (%p390) target = $region51
        $region50: #{simclr_projection_head.4} parent=19 // pred_region
          %s393 = smul.u32 2, %s21
          %p394 = scmp.lt.s32.totalorder %s393, 3
          %s395 = scalar_select %p394, %s393, 3
          %s396 = scalar_lea.vmem %s2, %s395
          %s397 = smul.u32 2, %s21
        $region51: #{simclr_projection_head.4} parent=19 // pred_fallthru
          _
        // Predicated region
        $region52: #{simclr_projection_head.4} parent=19 // pred_check
          %p398 = pneg %p125
        $region53: #{simclr_projection_head.4} parent=19 // pred_check_branch
          %400 = sbr.rel (%p398) target = $region55
        $region54: #{simclr_projection_head.4} parent=19 // pred_region
          %s401 = smul.u32 32, %s21
          %p402 = scmp.lt.s32.totalorder %s401, 63
          %s403 = scalar_select %p402, %s401, 63
          %s404 = smul.addr %s403, 4
          %s405 = smul.addr %s404, 4
          %s406 = scalar_lea.vmem %s3, %s405
          %s407 = smul.u32 32, %s21
        $region55: #{simclr_projection_head.4} parent=19 // pred_fallthru
          _
      $region20: #{simclr_projection_head.4} parent=5 // pred_fallthru
        _
      %p408 = scmp.le.s32.totalorder 1, %s13
      %p409 = scmp.lt.s32.totalorder %s13, 5
      %p410 = pnand %p408, %p409
      %p411 = pneg %p410
      // Predicated region
      $region56: #{simclr_projection_head.4} parent=5 // pred_check
        _
      $region57: #{simclr_projection_head.4} parent=5 // pred_check_branch
        %413 = sbr.rel (%p410) target = $region59
      $region58: #{simclr_projection_head.4} parent=5 // pred_region
        %s414 = ssub.s32 %s13, 1
        %s415 = sand.u32 %s40, 1
        %s416 = sand.u32 %s40, 1
        %s417 = smul.addr %s416, 512
        %s418 = scalar_lea.vmem [#allocation3], %s417
        // Predicated region
        $region60: #{simclr_projection_head.4} parent=58 // pred_check
          %p419 = pneg %p53
        $region61: #{simclr_projection_head.4} parent=58 // pred_check_branch
          %421 = sbr.rel (%p419) target = $region63
        $region62: #{simclr_projection_head.4} parent=58 // pred_region
          _
        $region63: #{simclr_projection_head.4} parent=58 // pred_fallthru
          _
        %s422 = sand.u32 %s40, 1
        %s423 = sand.u32 %s40, 1
        %s424 = smul.addr %s423, 512
        %s425 = scalar_lea.vmem [#allocation3], %s424
        %p426 = pneg %p53
        %p427 = pneg %p50
        %s428 = smul.u32 2, %s23
        %p429 = scmp.lt.s32.totalorder %s428, 3
        %s430 = scalar_select %p429, %s428, 3
        %s431 = scalar_lea.vmem %s1, %s430
        %p432 = pneg %p79
        %p433 = pneg %p76
        %s434 = smul.u32 2, %s23
        %p435 = scmp.lt.s32.totalorder %s434, 3
        %s436 = scalar_select %p435, %s434, 3
        %s437 = scalar_lea.vmem %s2, %s436
        %p438 = pneg %p105
        %p439 = pneg %p102
        %s440 = smul.u32 32, %s23
        %p441 = scmp.lt.s32.totalorder %s440, 63
        %s442 = scalar_select %p441, %s440, 63
        %s443 = smul.addr %s442, 4
        %s444 = smul.addr %s443, 4
        %s445 = scalar_lea.vmem %s3, %s444
        %p446 = pneg %p131
        %p447 = pneg %p128
        %p448 = pneg %p152
        %p449 = pneg %p149
        %p450 = pneg %p178
        %p451 = pneg %p175
        %s452 = smul.u32 32, %s22
        %p453 = scmp.lt.s32.totalorder %s452, 63
        %s454 = scalar_select %p453, %s452, 63
        %s455 = smul.addr %s454, 4
        %s456 = smul.addr %s455, 8
        %s457 = scalar_lea.vmem %s5, %s456
        %p458 = pneg %p204
        %p459 = pneg %p201
        %p460 = scmp.lt.s32.totalorder %s22, 1
        %s461 = scalar_select %p460, %s22, 1
        %s462 = smul.addr %s461, 4
        %s463 = smul.addr %s462, 2
        %s464 = scalar_lea.vmem %s6, %s463
        %s465 = smul.u32 32, %s22
        %s466 = smul.u32 2, %s23
        %s467 = smul.u32 2, %s23
        %p468 = scmp.lt.s32.totalorder %s467, 3
        %s469 = scalar_select %p468, %s467, 3
        %s470 = scalar_lea.vmem %s1, %s469
        %s471 = smul.u32 2, %s23
        %s472 = smul.u32 2, %s23
        %p473 = scmp.lt.s32.totalorder %s472, 3
        %s474 = scalar_select %p473, %s472, 3
        %s475 = scalar_lea.vmem %s2, %s474
        %s476 = smul.u32 2, %s23
        %s477 = smul.u32 32, %s23
        %p478 = scmp.lt.s32.totalorder %s477, 63
        %s479 = scalar_select %p478, %s477, 63
        %s480 = smul.addr %s479, 4
        %s481 = smul.addr %s480, 4
        %s482 = scalar_lea.vmem %s3, %s481
        %s483 = smul.u32 32, %s23
        %s484 = smul.u32 32, %s22
        %p485 = scmp.lt.s32.totalorder %s484, 63
        %s486 = scalar_select %p485, %s484, 63
        %s487 = smul.addr %s486, 4
        %s488 = smul.addr %s487, 8
        %s489 = scalar_lea.vmem %s5, %s488
        %s490 = smul.u32 32, %s22
        %p491 = scmp.lt.s32.totalorder %s22, 1
        %s492 = scalar_select %p491, %s22, 1
        %s493 = smul.addr %s492, 4
        %s494 = smul.addr %s493, 2
        %s495 = scalar_lea.vmem %s6, %s494
        %p496 = scmp.eq.s32.totalorder %s23, 0
        // Predicated region
        $region64: #{simclr_projection_head.4} parent=58 // pred_check
          %p497 = pneg %p496
        $region65: #{simclr_projection_head.4} parent=58 // pred_check_branch
          %499 = sbr.rel (%p497) target = $region67
        $region66: #{simclr_projection_head.4} parent=58 // pred_region
          %500 = vst [vmem:[#allocation2] sm:$0xff] 0.0
          %501 = vst [vmem:[#allocation2 + $0x8] sm:$0xff] 0.0
          %502 = vst [vmem:[#allocation2 + $0x10] sm:$0xff] 0.0
          %503 = vst [vmem:[#allocation2 + $0x18] sm:$0xff] 0.0
          %504 = vst [vmem:[#allocation2 + $0x20] sm:$0xff] 0.0
          %505 = vst [vmem:[#allocation2 + $0x28] sm:$0xff] 0.0
          %506 = vst [vmem:[#allocation2 + $0x30] sm:$0xff] 0.0
          %507 = vst [vmem:[#allocation2 + $0x38] sm:$0xff] 0.0
          %508 = vst [vmem:[#allocation2 + $0x40] sm:$0xff] 0.0
          %509 = vst [vmem:[#allocation2 + $0x48] sm:$0xff] 0.0
          %510 = vst [vmem:[#allocation2 + $0x50] sm:$0xff] 0.0
          %511 = vst [vmem:[#allocation2 + $0x58] sm:$0xff] 0.0
          %512 = vst [vmem:[#allocation2 + $0x60] sm:$0xff] 0.0
          %513 = vst [vmem:[#allocation2 + $0x68] sm:$0xff] 0.0
          %514 = vst [vmem:[#allocation2 + $0x70] sm:$0xff] 0.0
          %515 = vst [vmem:[#allocation2 + $0x78] sm:$0xff] 0.0
          %516 = vst [vmem:[#allocation2 + $0x80] sm:$0xff] 0.0
          %517 = vst [vmem:[#allocation2 + $0x88] sm:$0xff] 0.0
          %518 = vst [vmem:[#allocation2 + $0x90] sm:$0xff] 0.0
          %519 = vst [vmem:[#allocation2 + $0x98] sm:$0xff] 0.0
          %520 = vst [vmem:[#allocation2 + $0xa0] sm:$0xff] 0.0
          %521 = vst [vmem:[#allocation2 + $0xa8] sm:$0xff] 0.0
          %522 = vst [vmem:[#allocation2 + $0xb0] sm:$0xff] 0.0
          %523 = vst [vmem:[#allocation2 + $0xb8] sm:$0xff] 0.0
          %524 = vst [vmem:[#allocation2 + $0xc0] sm:$0xff] 0.0
          %525 = vst [vmem:[#allocation2 + $0xc8] sm:$0xff] 0.0
          %526 = vst [vmem:[#allocation2 + $0xd0] sm:$0xff] 0.0
          %527 = vst [vmem:[#allocation2 + $0xd8] sm:$0xff] 0.0
          %528 = vst [vmem:[#allocation2 + $0xe0] sm:$0xff] 0.0
          %529 = vst [vmem:[#allocation2 + $0xe8] sm:$0xff] 0.0
          %530 = vst [vmem:[#allocation2 + $0xf0] sm:$0xff] 0.0
          %531 = vst [vmem:[#allocation2 + $0xf8] sm:$0xff] 0.0
          %532 = vst [vmem:[#allocation2 + $0x100] sm:$0xff] 0.0
          %533 = vst [vmem:[#allocation2 + $0x108] sm:$0xff] 0.0
          %534 = vst [vmem:[#allocation2 + $0x110] sm:$0xff] 0.0
          %535 = vst [vmem:[#allocation2 + $0x118] sm:$0xff] 0.0
          %536 = vst [vmem:[#allocation2 + $0x120] sm:$0xff] 0.0
          %537 = vst [vmem:[#allocation2 + $0x128] sm:$0xff] 0.0
          %538 = vst [vmem:[#allocation2 + $0x130] sm:$0xff] 0.0
          %539 = vst [vmem:[#allocation2 + $0x138] sm:$0xff] 0.0
          %540 = vst [vmem:[#allocation2 + $0x140] sm:$0xff] 0.0
          %541 = vst [vmem:[#allocation2 + $0x148] sm:$0xff] 0.0
          %542 = vst [vmem:[#allocation2 + $0x150] sm:$0xff] 0.0
          %543 = vst [vmem:[#allocation2 + $0x158] sm:$0xff] 0.0
          %544 = vst [vmem:[#allocation2 + $0x160] sm:$0xff] 0.0
          %545 = vst [vmem:[#allocation2 + $0x168] sm:$0xff] 0.0
          %546 = vst [vmem:[#allocation2 + $0x170] sm:$0xff] 0.0
          %547 = vst [vmem:[#allocation2 + $0x178] sm:$0xff] 0.0
          %548 = vst [vmem:[#allocation2 + $0x180] sm:$0xff] 0.0
          %549 = vst [vmem:[#allocation2 + $0x188] sm:$0xff] 0.0
          %550 = vst [vmem:[#allocation2 + $0x190] sm:$0xff] 0.0
          %551 = vst [vmem:[#allocation2 + $0x198] sm:$0xff] 0.0
          %552 = vst [vmem:[#allocation2 + $0x1a0] sm:$0xff] 0.0
          %553 = vst [vmem:[#allocation2 + $0x1a8] sm:$0xff] 0.0
          %554 = vst [vmem:[#allocation2 + $0x1b0] sm:$0xff] 0.0
          %555 = vst [vmem:[#allocation2 + $0x1b8] sm:$0xff] 0.0
          %556 = vst [vmem:[#allocation2 + $0x1c0] sm:$0xff] 0.0
          %557 = vst [vmem:[#allocation2 + $0x1c8] sm:$0xff] 0.0
          %558 = vst [vmem:[#allocation2 + $0x1d0] sm:$0xff] 0.0
          %559 = vst [vmem:[#allocation2 + $0x1d8] sm:$0xff] 0.0
          %560 = vst [vmem:[#allocation2 + $0x1e0] sm:$0xff] 0.0
          %561 = vst [vmem:[#allocation2 + $0x1e8] sm:$0xff] 0.0
          %562 = vst [vmem:[#allocation2 + $0x1f0] sm:$0xff] 0.0
          %563 = vst [vmem:[#allocation2 + $0x1f8] sm:$0xff] 0.0
          %564 = vst [vmem:[#allocation2 + $0x200] sm:$0xff] 0.0
          %565 = vst [vmem:[#allocation2 + $0x208] sm:$0xff] 0.0
          %566 = vst [vmem:[#allocation2 + $0x210] sm:$0xff] 0.0
          %567 = vst [vmem:[#allocation2 + $0x218] sm:$0xff] 0.0
          %568 = vst [vmem:[#allocation2 + $0x220] sm:$0xff] 0.0
          %569 = vst [vmem:[#allocation2 + $0x228] sm:$0xff] 0.0
          %570 = vst [vmem:[#allocation2 + $0x230] sm:$0xff] 0.0
          %571 = vst [vmem:[#allocation2 + $0x238] sm:$0xff] 0.0
          %572 = vst [vmem:[#allocation2 + $0x240] sm:$0xff] 0.0
          %573 = vst [vmem:[#allocation2 + $0x248] sm:$0xff] 0.0
          %574 = vst [vmem:[#allocation2 + $0x250] sm:$0xff] 0.0
          %575 = vst [vmem:[#allocation2 + $0x258] sm:$0xff] 0.0
          %576 = vst [vmem:[#allocation2 + $0x260] sm:$0xff] 0.0
          %577 = vst [vmem:[#allocation2 + $0x268] sm:$0xff] 0.0
          %578 = vst [vmem:[#allocation2 + $0x270] sm:$0xff] 0.0
          %579 = vst [vmem:[#allocation2 + $0x278] sm:$0xff] 0.0
          %580 = vst [vmem:[#allocation2 + $0x280] sm:$0xff] 0.0
          %581 = vst [vmem:[#allocation2 + $0x288] sm:$0xff] 0.0
          %582 = vst [vmem:[#allocation2 + $0x290] sm:$0xff] 0.0
          %583 = vst [vmem:[#allocation2 + $0x298] sm:$0xff] 0.0
          %584 = vst [vmem:[#allocation2 + $0x2a0] sm:$0xff] 0.0
          %585 = vst [vmem:[#allocation2 + $0x2a8] sm:$0xff] 0.0
          %586 = vst [vmem:[#allocation2 + $0x2b0] sm:$0xff] 0.0
          %587 = vst [vmem:[#allocation2 + $0x2b8] sm:$0xff] 0.0
          %588 = vst [vmem:[#allocation2 + $0x2c0] sm:$0xff] 0.0
          %589 = vst [vmem:[#allocation2 + $0x2c8] sm:$0xff] 0.0
          %590 = vst [vmem:[#allocation2 + $0x2d0] sm:$0xff] 0.0
          %591 = vst [vmem:[#allocation2 + $0x2d8] sm:$0xff] 0.0
          %592 = vst [vmem:[#allocation2 + $0x2e0] sm:$0xff] 0.0
          %593 = vst [vmem:[#allocation2 + $0x2e8] sm:$0xff] 0.0
          %594 = vst [vmem:[#allocation2 + $0x2f0] sm:$0xff] 0.0
          %595 = vst [vmem:[#allocation2 + $0x2f8] sm:$0xff] 0.0
          %596 = vst [vmem:[#allocation2 + $0x300] sm:$0xff] 0.0
          %597 = vst [vmem:[#allocation2 + $0x308] sm:$0xff] 0.0
          %598 = vst [vmem:[#allocation2 + $0x310] sm:$0xff] 0.0
          %599 = vst [vmem:[#allocation2 + $0x318] sm:$0xff] 0.0
          %600 = vst [vmem:[#allocation2 + $0x320] sm:$0xff] 0.0
          %601 = vst [vmem:[#allocation2 + $0x328] sm:$0xff] 0.0
          %602 = vst [vmem:[#allocation2 + $0x330] sm:$0xff] 0.0
          %603 = vst [vmem:[#allocation2 + $0x338] sm:$0xff] 0.0
          %604 = vst [vmem:[#allocation2 + $0x340] sm:$0xff] 0.0
          %605 = vst [vmem:[#allocation2 + $0x348] sm:$0xff] 0.0
          %606 = vst [vmem:[#allocation2 + $0x350] sm:$0xff] 0.0
          %607 = vst [vmem:[#allocation2 + $0x358] sm:$0xff] 0.0
          %608 = vst [vmem:[#allocation2 + $0x360] sm:$0xff] 0.0
          %609 = vst [vmem:[#allocation2 + $0x368] sm:$0xff] 0.0
          %610 = vst [vmem:[#allocation2 + $0x370] sm:$0xff] 0.0
          %611 = vst [vmem:[#allocation2 + $0x378] sm:$0xff] 0.0
          %612 = vst [vmem:[#allocation2 + $0x380] sm:$0xff] 0.0
          %613 = vst [vmem:[#allocation2 + $0x388] sm:$0xff] 0.0
          %614 = vst [vmem:[#allocation2 + $0x390] sm:$0xff] 0.0
          %615 = vst [vmem:[#allocation2 + $0x398] sm:$0xff] 0.0
          %616 = vst [vmem:[#allocation2 + $0x3a0] sm:$0xff] 0.0
          %617 = vst [vmem:[#allocation2 + $0x3a8] sm:$0xff] 0.0
          %618 = vst [vmem:[#allocation2 + $0x3b0] sm:$0xff] 0.0
          %619 = vst [vmem:[#allocation2 + $0x3b8] sm:$0xff] 0.0
          %620 = vst [vmem:[#allocation2 + $0x3c0] sm:$0xff] 0.0
          %621 = vst [vmem:[#allocation2 + $0x3c8] sm:$0xff] 0.0
          %622 = vst [vmem:[#allocation2 + $0x3d0] sm:$0xff] 0.0
          %623 = vst [vmem:[#allocation2 + $0x3d8] sm:$0xff] 0.0
          %624 = vst [vmem:[#allocation2 + $0x3e0] sm:$0xff] 0.0
          %625 = vst [vmem:[#allocation2 + $0x3e8] sm:$0xff] 0.0
          %626 = vst [vmem:[#allocation2 + $0x3f0] sm:$0xff] 0.0
          %627 = vst [vmem:[#allocation2 + $0x3f8] sm:$0xff] 0.0
        $region67: #{simclr_projection_head.4} parent=58 // pred_fallthru
          _
        %v628 = vld [vmem:[%s418] sm:$0xff]
        %v629 = vld [vmem:[%s418 + $0x8] sm:$0xff]
        %v630 = vld [vmem:[%s418 + $0x10] sm:$0xff]
        %v631 = vld [vmem:[%s418 + $0x18] sm:$0xff]
        %v632 = vld [vmem:[%s418 + $0x20] sm:$0xff]
        %v633 = vld [vmem:[%s418 + $0x28] sm:$0xff]
        %v634 = vld [vmem:[%s418 + $0x30] sm:$0xff]
        %v635 = vld [vmem:[%s418 + $0x38] sm:$0xff]
        %v636 = vld [vmem:[%s418 + $0x40] sm:$0xff]
        %v637 = vld [vmem:[%s418 + $0x48] sm:$0xff]
        %v638 = vld [vmem:[%s418 + $0x50] sm:$0xff]
        %v639 = vld [vmem:[%s418 + $0x58] sm:$0xff]
        %v640 = vld [vmem:[%s418 + $0x60] sm:$0xff]
        %v641 = vld [vmem:[%s418 + $0x68] sm:$0xff]
        %v642 = vld [vmem:[%s418 + $0x70] sm:$0xff]
        %v643 = vld [vmem:[%s418 + $0x78] sm:$0xff]
        %v644 = vld [vmem:[%s418 + $0x80] sm:$0xff]
        %v645 = vld [vmem:[%s418 + $0x88] sm:$0xff]
        %v646 = vld [vmem:[%s418 + $0x90] sm:$0xff]
        %v647 = vld [vmem:[%s418 + $0x98] sm:$0xff]
        %v648 = vld [vmem:[%s418 + $0xa0] sm:$0xff]
        %v649 = vld [vmem:[%s418 + $0xa8] sm:$0xff]
        %v650 = vld [vmem:[%s418 + $0xb0] sm:$0xff]
        %v651 = vld [vmem:[%s418 + $0xb8] sm:$0xff]
        %v652 = vld [vmem:[%s418 + $0xc0] sm:$0xff]
        %v653 = vld [vmem:[%s418 + $0xc8] sm:$0xff]
        %v654 = vld [vmem:[%s418 + $0xd0] sm:$0xff]
        %v655 = vld [vmem:[%s418 + $0xd8] sm:$0xff]
        %v656 = vld [vmem:[%s418 + $0xe0] sm:$0xff]
        %v657 = vld [vmem:[%s418 + $0xe8] sm:$0xff]
        %v658 = vld [vmem:[%s418 + $0xf0] sm:$0xff]
        %v659 = vld [vmem:[%s418 + $0xf8] sm:$0xff]
        %v660 = vld [vmem:[%s418 + $0x100] sm:$0xff]
        %v661 = vld [vmem:[%s418 + $0x108] sm:$0xff]
        %v662 = vld [vmem:[%s418 + $0x110] sm:$0xff]
        %v663 = vld [vmem:[%s418 + $0x118] sm:$0xff]
        %v664 = vld [vmem:[%s418 + $0x120] sm:$0xff]
        %v665 = vld [vmem:[%s418 + $0x128] sm:$0xff]
        %v666 = vld [vmem:[%s418 + $0x130] sm:$0xff]
        %v667 = vld [vmem:[%s418 + $0x138] sm:$0xff]
        %v668 = vld [vmem:[%s418 + $0x140] sm:$0xff]
        %v669 = vld [vmem:[%s418 + $0x148] sm:$0xff]
        %v670 = vld [vmem:[%s418 + $0x150] sm:$0xff]
        %v671 = vld [vmem:[%s418 + $0x158] sm:$0xff]
        %v672 = vld [vmem:[%s418 + $0x160] sm:$0xff]
        %v673 = vld [vmem:[%s418 + $0x168] sm:$0xff]
        %v674 = vld [vmem:[%s418 + $0x170] sm:$0xff]
        %v675 = vld [vmem:[%s418 + $0x178] sm:$0xff]
        %v676 = vld [vmem:[%s418 + $0x180] sm:$0xff]
        %v677 = vld [vmem:[%s418 + $0x188] sm:$0xff]
        %v678 = vld [vmem:[%s418 + $0x190] sm:$0xff]
        %v679 = vld [vmem:[%s418 + $0x198] sm:$0xff]
        %v680 = vld [vmem:[%s418 + $0x1a0] sm:$0xff]
        %v681 = vld [vmem:[%s418 + $0x1a8] sm:$0xff]
        %v682 = vld [vmem:[%s418 + $0x1b0] sm:$0xff]
        %v683 = vld [vmem:[%s418 + $0x1b8] sm:$0xff]
        %v684 = vld [vmem:[%s418 + $0x1c0] sm:$0xff]
        %v685 = vld [vmem:[%s418 + $0x1c8] sm:$0xff]
        %v686 = vld [vmem:[%s418 + $0x1d0] sm:$0xff]
        %v687 = vld [vmem:[%s418 + $0x1d8] sm:$0xff]
        %v688 = vld [vmem:[%s418 + $0x1e0] sm:$0xff]
        %v689 = vld [vmem:[%s418 + $0x1e8] sm:$0xff]
        %v690 = vld [vmem:[%s418 + $0x1f0] sm:$0xff]
        %v691 = vld [vmem:[%s418 + $0x1f8] sm:$0xff]
        %v692 = vld [vmem:[%s470] sm:$0x3]
        %v694 = vlaneseq
        %v695 = vshrl.u32 %v694, 7
        %v696 = vsub.s32 0, %v695
        %v697 = vrot.slane %v692, %v696
        %v698 = vlaneseq
        %v699 = vshrl.u32 %v698, 7
        %v700 = vsub.s32 1, %v699
        %v701 = vrot.slane %v692, %v700
        %v704 = vmul.f32 %v628, %v697
        %v705 = vmul.f32 %v629, %v701
        %v706 = vmul.f32 %v630, %v697
        %v707 = vmul.f32 %v631, %v701
        %v708 = vmul.f32 %v632, %v697
        %v709 = vmul.f32 %v633, %v701
        %v710 = vmul.f32 %v634, %v697
        %v711 = vmul.f32 %v635, %v701
        %v712 = vmul.f32 %v636, %v697
        %v713 = vmul.f32 %v637, %v701
        %v714 = vmul.f32 %v638, %v697
        %v715 = vmul.f32 %v639, %v701
        %v716 = vmul.f32 %v640, %v697
        %v717 = vmul.f32 %v641, %v701
        %v718 = vmul.f32 %v642, %v697
        %v719 = vmul.f32 %v643, %v701
        %v720 = vmul.f32 %v644, %v697
        %v721 = vmul.f32 %v645, %v701
        %v722 = vmul.f32 %v646, %v697
        %v723 = vmul.f32 %v647, %v701
        %v724 = vmul.f32 %v648, %v697
        %v725 = vmul.f32 %v649, %v701
        %v726 = vmul.f32 %v650, %v697
        %v727 = vmul.f32 %v651, %v701
        %v728 = vmul.f32 %v652, %v697
        %v729 = vmul.f32 %v653, %v701
        %v730 = vmul.f32 %v654, %v697
        %v731 = vmul.f32 %v655, %v701
        %v732 = vmul.f32 %v656, %v697
        %v733 = vmul.f32 %v657, %v701
        %v734 = vmul.f32 %v658, %v697
        %v735 = vmul.f32 %v659, %v701
        %v736 = vmul.f32 %v660, %v697
        %v737 = vmul.f32 %v661, %v701
        %v738 = vmul.f32 %v662, %v697
        %v739 = vmul.f32 %v663, %v701
        %v740 = vmul.f32 %v664, %v697
        %v741 = vmul.f32 %v665, %v701
        %v742 = vmul.f32 %v666, %v697
        %v743 = vmul.f32 %v667, %v701
        %v744 = vmul.f32 %v668, %v697
        %v745 = vmul.f32 %v669, %v701
        %v746 = vmul.f32 %v670, %v697
        %v747 = vmul.f32 %v671, %v701
        %v748 = vmul.f32 %v672, %v697
        %v749 = vmul.f32 %v673, %v701
        %v750 = vmul.f32 %v674, %v697
        %v751 = vmul.f32 %v675, %v701
        %v752 = vmul.f32 %v676, %v697
        %v753 = vmul.f32 %v677, %v701
        %v754 = vmul.f32 %v678, %v697
        %v755 = vmul.f32 %v679, %v701
        %v756 = vmul.f32 %v680, %v697
        %v757 = vmul.f32 %v681, %v701
        %v758 = vmul.f32 %v682, %v697
        %v759 = vmul.f32 %v683, %v701
        %v760 = vmul.f32 %v684, %v697
        %v761 = vmul.f32 %v685, %v701
        %v762 = vmul.f32 %v686, %v697
        %v763 = vmul.f32 %v687, %v701
        %v764 = vmul.f32 %v688, %v697
        %v765 = vmul.f32 %v689, %v701
        %v766 = vmul.f32 %v690, %v697
        %v767 = vmul.f32 %v691, %v701
        %v768 = vld [vmem:[%s475] sm:$0x3]
        %v770 = vlaneseq
        %v771 = vshrl.u32 %v770, 7
        %v772 = vsub.s32 0, %v771
        %v773 = vrot.slane %v768, %v772
        %v774 = vlaneseq
        %v775 = vshrl.u32 %v774, 7
        %v776 = vsub.s32 1, %v775
        %v777 = vrot.slane %v768, %v776
        %v780 = vadd.f32 %v704, %v773
        %v781 = vadd.f32 %v705, %v777
        %v782 = vadd.f32 %v706, %v773
        %v783 = vadd.f32 %v707, %v777
        %v784 = vadd.f32 %v708, %v773
        %v785 = vadd.f32 %v709, %v777
        %v786 = vadd.f32 %v710, %v773
        %v787 = vadd.f32 %v711, %v777
        %v788 = vadd.f32 %v712, %v773
        %v789 = vadd.f32 %v713, %v777
        %v790 = vadd.f32 %v714, %v773
        %v791 = vadd.f32 %v715, %v777
        %v792 = vadd.f32 %v716, %v773
        %v793 = vadd.f32 %v717, %v777
        %v794 = vadd.f32 %v718, %v773
        %v795 = vadd.f32 %v719, %v777
        %v796 = vadd.f32 %v720, %v773
        %v797 = vadd.f32 %v721, %v777
        %v798 = vadd.f32 %v722, %v773
        %v799 = vadd.f32 %v723, %v777
        %v800 = vadd.f32 %v724, %v773
        %v801 = vadd.f32 %v725, %v777
        %v802 = vadd.f32 %v726, %v773
        %v803 = vadd.f32 %v727, %v777
        %v804 = vadd.f32 %v728, %v773
        %v805 = vadd.f32 %v729, %v777
        %v806 = vadd.f32 %v730, %v773
        %v807 = vadd.f32 %v731, %v777
        %v808 = vadd.f32 %v732, %v773
        %v809 = vadd.f32 %v733, %v777
        %v810 = vadd.f32 %v734, %v773
        %v811 = vadd.f32 %v735, %v777
        %v812 = vadd.f32 %v736, %v773
        %v813 = vadd.f32 %v737, %v777
        %v814 = vadd.f32 %v738, %v773
        %v815 = vadd.f32 %v739, %v777
        %v816 = vadd.f32 %v740, %v773
        %v817 = vadd.f32 %v741, %v777
        %v818 = vadd.f32 %v742, %v773
        %v819 = vadd.f32 %v743, %v777
        %v820 = vadd.f32 %v744, %v773
        %v821 = vadd.f32 %v745, %v777
        %v822 = vadd.f32 %v746, %v773
        %v823 = vadd.f32 %v747, %v777
        %v824 = vadd.f32 %v748, %v773
        %v825 = vadd.f32 %v749, %v777
        %v826 = vadd.f32 %v750, %v773
        %v827 = vadd.f32 %v751, %v777
        %v828 = vadd.f32 %v752, %v773
        %v829 = vadd.f32 %v753, %v777
        %v830 = vadd.f32 %v754, %v773
        %v831 = vadd.f32 %v755, %v777
        %v832 = vadd.f32 %v756, %v773
        %v833 = vadd.f32 %v757, %v777
        %v834 = vadd.f32 %v758, %v773
        %v835 = vadd.f32 %v759, %v777
        %v836 = vadd.f32 %v760, %v773
        %v837 = vadd.f32 %v761, %v777
        %v838 = vadd.f32 %v762, %v773
        %v839 = vadd.f32 %v763, %v777
        %v840 = vadd.f32 %v764, %v773
        %v841 = vadd.f32 %v765, %v777
        %v842 = vadd.f32 %v766, %v773
        %v843 = vadd.f32 %v767, %v777
        %v844 = vmax.f32 %v780, 0.0
        %v845 = vmax.f32 %v781, 0.0
        %v846 = vmax.f32 %v782, 0.0
        %v847 = vmax.f32 %v783, 0.0
        %v848 = vmax.f32 %v784, 0.0
        %v849 = vmax.f32 %v785, 0.0
        %v850 = vmax.f32 %v786, 0.0
        %v851 = vmax.f32 %v787, 0.0
        %v852 = vmax.f32 %v788, 0.0
        %v853 = vmax.f32 %v789, 0.0
        %v854 = vmax.f32 %v790, 0.0
        %v855 = vmax.f32 %v791, 0.0
        %v856 = vmax.f32 %v792, 0.0
        %v857 = vmax.f32 %v793, 0.0
        %v858 = vmax.f32 %v794, 0.0
        %v859 = vmax.f32 %v795, 0.0
        %v860 = vmax.f32 %v796, 0.0
        %v861 = vmax.f32 %v797, 0.0
        %v862 = vmax.f32 %v798, 0.0
        %v863 = vmax.f32 %v799, 0.0
        %v864 = vmax.f32 %v800, 0.0
        %v865 = vmax.f32 %v801, 0.0
        %v866 = vmax.f32 %v802, 0.0
        %v867 = vmax.f32 %v803, 0.0
        %v868 = vmax.f32 %v804, 0.0
        %v869 = vmax.f32 %v805, 0.0
        %v870 = vmax.f32 %v806, 0.0
        %v871 = vmax.f32 %v807, 0.0
        %v872 = vmax.f32 %v808, 0.0
        %v873 = vmax.f32 %v809, 0.0
        %v874 = vmax.f32 %v810, 0.0
        %v875 = vmax.f32 %v811, 0.0
        %v876 = vmax.f32 %v812, 0.0
        %v877 = vmax.f32 %v813, 0.0
        %v878 = vmax.f32 %v814, 0.0
        %v879 = vmax.f32 %v815, 0.0
        %v880 = vmax.f32 %v816, 0.0
        %v881 = vmax.f32 %v817, 0.0
        %v882 = vmax.f32 %v818, 0.0
        %v883 = vmax.f32 %v819, 0.0
        %v884 = vmax.f32 %v820, 0.0
        %v885 = vmax.f32 %v821, 0.0
        %v886 = vmax.f32 %v822, 0.0
        %v887 = vmax.f32 %v823, 0.0
        %v888 = vmax.f32 %v824, 0.0
        %v889 = vmax.f32 %v825, 0.0
        %v890 = vmax.f32 %v826, 0.0
        %v891 = vmax.f32 %v827, 0.0
        %v892 = vmax.f32 %v828, 0.0
        %v893 = vmax.f32 %v829, 0.0
        %v894 = vmax.f32 %v830, 0.0
        %v895 = vmax.f32 %v831, 0.0
        %v896 = vmax.f32 %v832, 0.0
        %v897 = vmax.f32 %v833, 0.0
        %v898 = vmax.f32 %v834, 0.0
        %v899 = vmax.f32 %v835, 0.0
        %v900 = vmax.f32 %v836, 0.0
        %v901 = vmax.f32 %v837, 0.0
        %v902 = vmax.f32 %v838, 0.0
        %v903 = vmax.f32 %v839, 0.0
        %v904 = vmax.f32 %v840, 0.0
        %v905 = vmax.f32 %v841, 0.0
        %v906 = vmax.f32 %v842, 0.0
        %v907 = vmax.f32 %v843, 0.0
        %v908 = vld [vmem:[#allocation2] sm:$0xff]
        %v909 = vld [vmem:[#allocation2 + $0x8] sm:$0xff]
        %v910 = vld [vmem:[#allocation2 + $0x10] sm:$0xff]
        %v911 = vld [vmem:[#allocation2 + $0x18] sm:$0xff]
        %v912 = vld [vmem:[#allocation2 + $0x20] sm:$0xff]
        %v913 = vld [vmem:[#allocation2 + $0x28] sm:$0xff]
        %v914 = vld [vmem:[#allocation2 + $0x30] sm:$0xff]
        %v915 = vld [vmem:[#allocation2 + $0x38] sm:$0xff]
        %v916 = vld [vmem:[#allocation2 + $0x40] sm:$0xff]
        %v917 = vld [vmem:[#allocation2 + $0x48] sm:$0xff]
        %v918 = vld [vmem:[#allocation2 + $0x50] sm:$0xff]
        %v919 = vld [vmem:[#allocation2 + $0x58] sm:$0xff]
        %v920 = vld [vmem:[#allocation2 + $0x60] sm:$0xff]
        %v921 = vld [vmem:[#allocation2 + $0x68] sm:$0xff]
        %v922 = vld [vmem:[#allocation2 + $0x70] sm:$0xff]
        %v923 = vld [vmem:[#allocation2 + $0x78] sm:$0xff]
        %v924 = vld [vmem:[#allocation2 + $0x80] sm:$0xff]
        %v925 = vld [vmem:[#allocation2 + $0x88] sm:$0xff]
        %v926 = vld [vmem:[#allocation2 + $0x90] sm:$0xff]
        %v927 = vld [vmem:[#allocation2 + $0x98] sm:$0xff]
        %v928 = vld [vmem:[#allocation2 + $0xa0] sm:$0xff]
        %v929 = vld [vmem:[#allocation2 + $0xa8] sm:$0xff]
        %v930 = vld [vmem:[#allocation2 + $0xb0] sm:$0xff]
        %v931 = vld [vmem:[#allocation2 + $0xb8] sm:$0xff]
        %v932 = vld [vmem:[#allocation2 + $0xc0] sm:$0xff]
        %v933 = vld [vmem:[#allocation2 + $0xc8] sm:$0xff]
        %v934 = vld [vmem:[#allocation2 + $0xd0] sm:$0xff]
        %v935 = vld [vmem:[#allocation2 + $0xd8] sm:$0xff]
        %v936 = vld [vmem:[#allocation2 + $0xe0] sm:$0xff]
        %v937 = vld [vmem:[#allocation2 + $0xe8] sm:$0xff]
        %v938 = vld [vmem:[#allocation2 + $0xf0] sm:$0xff]
        %v939 = vld [vmem:[#allocation2 + $0xf8] sm:$0xff]
        %v940 = vld [vmem:[#allocation2 + $0x100] sm:$0xff]
        %v941 = vld [vmem:[#allocation2 + $0x108] sm:$0xff]
        %v942 = vld [vmem:[#allocation2 + $0x110] sm:$0xff]
        %v943 = vld [vmem:[#allocation2 + $0x118] sm:$0xff]
        %v944 = vld [vmem:[#allocation2 + $0x120] sm:$0xff]
        %v945 = vld [vmem:[#allocation2 + $0x128] sm:$0xff]
        %v946 = vld [vmem:[#allocation2 + $0x130] sm:$0xff]
        %v947 = vld [vmem:[#allocation2 + $0x138] sm:$0xff]
        %v948 = vld [vmem:[#allocation2 + $0x140] sm:$0xff]
        %v949 = vld [vmem:[#allocation2 + $0x148] sm:$0xff]
        %v950 = vld [vmem:[#allocation2 + $0x150] sm:$0xff]
        %v951 = vld [vmem:[#allocation2 + $0x158] sm:$0xff]
        %v952 = vld [vmem:[#allocation2 + $0x160] sm:$0xff]
        %v953 = vld [vmem:[#allocation2 + $0x168] sm:$0xff]
        %v954 = vld [vmem:[#allocation2 + $0x170] sm:$0xff]
        %v955 = vld [vmem:[#allocation2 + $0x178] sm:$0xff]
        %v956 = vld [vmem:[#allocation2 + $0x180] sm:$0xff]
        %v957 = vld [vmem:[#allocation2 + $0x188] sm:$0xff]
        %v958 = vld [vmem:[#allocation2 + $0x190] sm:$0xff]
        %v959 = vld [vmem:[#allocation2 + $0x198] sm:$0xff]
        %v960 = vld [vmem:[#allocation2 + $0x1a0] sm:$0xff]
        %v961 = vld [vmem:[#allocation2 + $0x1a8] sm:$0xff]
        %v962 = vld [vmem:[#allocation2 + $0x1b0] sm:$0xff]
        %v963 = vld [vmem:[#allocation2 + $0x1b8] sm:$0xff]
        %v964 = vld [vmem:[#allocation2 + $0x1c0] sm:$0xff]
        %v965 = vld [vmem:[#allocation2 + $0x1c8] sm:$0xff]
        %v966 = vld [vmem:[#allocation2 + $0x1d0] sm:$0xff]
        %v967 = vld [vmem:[#allocation2 + $0x1d8] sm:$0xff]
        %v968 = vld [vmem:[#allocation2 + $0x1e0] sm:$0xff]
        %v969 = vld [vmem:[#allocation2 + $0x1e8] sm:$0xff]
        %v970 = vld [vmem:[#allocation2 + $0x1f0] sm:$0xff]
        %v971 = vld [vmem:[#allocation2 + $0x1f8] sm:$0xff]
        %v972 = vld [vmem:[#allocation2 + $0x200] sm:$0xff]
        %v973 = vld [vmem:[#allocation2 + $0x208] sm:$0xff]
        %v974 = vld [vmem:[#allocation2 + $0x210] sm:$0xff]
        %v975 = vld [vmem:[#allocation2 + $0x218] sm:$0xff]
        %v976 = vld [vmem:[#allocation2 + $0x220] sm:$0xff]
        %v977 = vld [vmem:[#allocation2 + $0x228] sm:$0xff]
        %v978 = vld [vmem:[#allocation2 + $0x230] sm:$0xff]
        %v979 = vld [vmem:[#allocation2 + $0x238] sm:$0xff]
        %v980 = vld [vmem:[#allocation2 + $0x240] sm:$0xff]
        %v981 = vld [vmem:[#allocation2 + $0x248] sm:$0xff]
        %v982 = vld [vmem:[#allocation2 + $0x250] sm:$0xff]
        %v983 = vld [vmem:[#allocation2 + $0x258] sm:$0xff]
        %v984 = vld [vmem:[#allocation2 + $0x260] sm:$0xff]
        %v985 = vld [vmem:[#allocation2 + $0x268] sm:$0xff]
        %v986 = vld [vmem:[#allocation2 + $0x270] sm:$0xff]
        %v987 = vld [vmem:[#allocation2 + $0x278] sm:$0xff]
        %v988 = vld [vmem:[#allocation2 + $0x280] sm:$0xff]
        %v989 = vld [vmem:[#allocation2 + $0x288] sm:$0xff]
        %v990 = vld [vmem:[#allocation2 + $0x290] sm:$0xff]
        %v991 = vld [vmem:[#allocation2 + $0x298] sm:$0xff]
        %v992 = vld [vmem:[#allocation2 + $0x2a0] sm:$0xff]
        %v993 = vld [vmem:[#allocation2 + $0x2a8] sm:$0xff]
        %v994 = vld [vmem:[#allocation2 + $0x2b0] sm:$0xff]
        %v995 = vld [vmem:[#allocation2 + $0x2b8] sm:$0xff]
        %v996 = vld [vmem:[#allocation2 + $0x2c0] sm:$0xff]
        %v997 = vld [vmem:[#allocation2 + $0x2c8] sm:$0xff]
        %v998 = vld [vmem:[#allocation2 + $0x2d0] sm:$0xff]
        %v999 = vld [vmem:[#allocation2 + $0x2d8] sm:$0xff]
        %v1000 = vld [vmem:[#allocation2 + $0x2e0] sm:$0xff]
        %v1001 = vld [vmem:[#allocation2 + $0x2e8] sm:$0xff]
        %v1002 = vld [vmem:[#allocation2 + $0x2f0] sm:$0xff]
        %v1003 = vld [vmem:[#allocation2 + $0x2f8] sm:$0xff]
        %v1004 = vld [vmem:[#allocation2 + $0x300] sm:$0xff]
        %v1005 = vld [vmem:[#allocation2 + $0x308] sm:$0xff]
        %v1006 = vld [vmem:[#allocation2 + $0x310] sm:$0xff]
        %v1007 = vld [vmem:[#allocation2 + $0x318] sm:$0xff]
        %v1008 = vld [vmem:[#allocation2 + $0x320] sm:$0xff]
        %v1009 = vld [vmem:[#allocation2 + $0x328] sm:$0xff]
        %v1010 = vld [vmem:[#allocation2 + $0x330] sm:$0xff]
        %v1011 = vld [vmem:[#allocation2 + $0x338] sm:$0xff]
        %v1012 = vld [vmem:[#allocation2 + $0x340] sm:$0xff]
        %v1013 = vld [vmem:[#allocation2 + $0x348] sm:$0xff]
        %v1014 = vld [vmem:[#allocation2 + $0x350] sm:$0xff]
        %v1015 = vld [vmem:[#allocation2 + $0x358] sm:$0xff]
        %v1016 = vld [vmem:[#allocation2 + $0x360] sm:$0xff]
        %v1017 = vld [vmem:[#allocation2 + $0x368] sm:$0xff]
        %v1018 = vld [vmem:[#allocation2 + $0x370] sm:$0xff]
        %v1019 = vld [vmem:[#allocation2 + $0x378] sm:$0xff]
        %v1020 = vld [vmem:[#allocation2 + $0x380] sm:$0xff]
        %v1021 = vld [vmem:[#allocation2 + $0x388] sm:$0xff]
        %v1022 = vld [vmem:[#allocation2 + $0x390] sm:$0xff]
        %v1023 = vld [vmem:[#allocation2 + $0x398] sm:$0xff]
        %v1024 = vld [vmem:[#allocation2 + $0x3a0] sm:$0xff]
        %v1025 = vld [vmem:[#allocation2 + $0x3a8] sm:$0xff]
        %v1026 = vld [vmem:[#allocation2 + $0x3b0] sm:$0xff]
        %v1027 = vld [vmem:[#allocation2 + $0x3b8] sm:$0xff]
        %v1028 = vld [vmem:[#allocation2 + $0x3c0] sm:$0xff]
        %v1029 = vld [vmem:[#allocation2 + $0x3c8] sm:$0xff]
        %v1030 = vld [vmem:[#allocation2 + $0x3d0] sm:$0xff]
        %v1031 = vld [vmem:[#allocation2 + $0x3d8] sm:$0xff]
        %v1032 = vld [vmem:[#allocation2 + $0x3e0] sm:$0xff]
        %v1033 = vld [vmem:[#allocation2 + $0x3e8] sm:$0xff]
        %v1034 = vld [vmem:[#allocation2 + $0x3f0] sm:$0xff]
        %v1035 = vld [vmem:[#allocation2 + $0x3f8] sm:$0xff]
        %v1036 = vpack.c.bf16 %v846, %v844
        %v1037 = vpack.c.bf16 %v847, %v845
        %v1038 = vpack.c.bf16 %v850, %v848
        %v1039 = vpack.c.bf16 %v851, %v849
        %v1040 = vpack.c.bf16 %v854, %v852
        %v1041 = vpack.c.bf16 %v855, %v853
        %v1042 = vpack.c.bf16 %v858, %v856
        %v1043 = vpack.c.bf16 %v859, %v857
        %v1044 = vpack.c.bf16 %v862, %v860
        %v1045 = vpack.c.bf16 %v863, %v861
        %v1046 = vpack.c.bf16 %v866, %v864
        %v1047 = vpack.c.bf16 %v867, %v865
        %v1048 = vpack.c.bf16 %v870, %v868
        %v1049 = vpack.c.bf16 %v871, %v869
        %v1050 = vpack.c.bf16 %v874, %v872
        %v1051 = vpack.c.bf16 %v875, %v873
        %v1052 = vpack.c.bf16 %v878, %v876
        %v1053 = vpack.c.bf16 %v879, %v877
        %v1054 = vpack.c.bf16 %v882, %v880
        %v1055 = vpack.c.bf16 %v883, %v881
        %v1056 = vpack.c.bf16 %v886, %v884
        %v1057 = vpack.c.bf16 %v887, %v885
        %v1058 = vpack.c.bf16 %v890, %v888
        %v1059 = vpack.c.bf16 %v891, %v889
        %v1060 = vpack.c.bf16 %v894, %v892
        %v1061 = vpack.c.bf16 %v895, %v893
        %v1062 = vpack.c.bf16 %v898, %v896
        %v1063 = vpack.c.bf16 %v899, %v897
        %v1064 = vpack.c.bf16 %v902, %v900
        %v1065 = vpack.c.bf16 %v903, %v901
        %v1066 = vpack.c.bf16 %v906, %v904
        %v1067 = vpack.c.bf16 %v907, %v905
        %v1068 = vld [vmem:[%s482] sm:$0xff]
        %v1069 = vld [vmem:[%s482 + $0x8] sm:$0xff]
        %v1070 = vld [vmem:[%s482 + $0x10] sm:$0xff]
        %v1071 = vld [vmem:[%s482 + $0x18] sm:$0xff]
        %v1072 = vld [vmem:[%s482 + $0x20] sm:$0xff]
        %v1073 = vld [vmem:[%s482 + $0x28] sm:$0xff]
        %v1074 = vld [vmem:[%s482 + $0x30] sm:$0xff]
        %v1075 = vld [vmem:[%s482 + $0x38] sm:$0xff]
        %v1076 = vld [vmem:[%s482 + $0x40] sm:$0xff]
        %v1077 = vld [vmem:[%s482 + $0x48] sm:$0xff]
        %v1078 = vld [vmem:[%s482 + $0x50] sm:$0xff]
        %v1079 = vld [vmem:[%s482 + $0x58] sm:$0xff]
        %v1080 = vld [vmem:[%s482 + $0x60] sm:$0xff]
        %v1081 = vld [vmem:[%s482 + $0x68] sm:$0xff]
        %v1082 = vld [vmem:[%s482 + $0x70] sm:$0xff]
        %v1083 = vld [vmem:[%s482 + $0x78] sm:$0xff]
        %v1084 = vld [vmem:[%s482 + $0x80] sm:$0xff]
        %v1085 = vld [vmem:[%s482 + $0x88] sm:$0xff]
        %v1086 = vld [vmem:[%s482 + $0x90] sm:$0xff]
        %v1087 = vld [vmem:[%s482 + $0x98] sm:$0xff]
        %v1088 = vld [vmem:[%s482 + $0xa0] sm:$0xff]
        %v1089 = vld [vmem:[%s482 + $0xa8] sm:$0xff]
        %v1090 = vld [vmem:[%s482 + $0xb0] sm:$0xff]
        %v1091 = vld [vmem:[%s482 + $0xb8] sm:$0xff]
        %v1092 = vld [vmem:[%s482 + $0xc0] sm:$0xff]
        %v1093 = vld [vmem:[%s482 + $0xc8] sm:$0xff]
        %v1094 = vld [vmem:[%s482 + $0xd0] sm:$0xff]
        %v1095 = vld [vmem:[%s482 + $0xd8] sm:$0xff]
        %v1096 = vld [vmem:[%s482 + $0xe0] sm:$0xff]
        %v1097 = vld [vmem:[%s482 + $0xe8] sm:$0xff]
        %v1098 = vld [vmem:[%s482 + $0xf0] sm:$0xff]
        %v1099 = vld [vmem:[%s482 + $0xf8] sm:$0xff]
        %v1100 = vld [vmem:[%s482 + $0x100] sm:$0xff]
        %v1101 = vld [vmem:[%s482 + $0x108] sm:$0xff]
        %v1102 = vld [vmem:[%s482 + $0x110] sm:$0xff]
        %v1103 = vld [vmem:[%s482 + $0x118] sm:$0xff]
        %v1104 = vld [vmem:[%s482 + $0x120] sm:$0xff]
        %v1105 = vld [vmem:[%s482 + $0x128] sm:$0xff]
        %v1106 = vld [vmem:[%s482 + $0x130] sm:$0xff]
        %v1107 = vld [vmem:[%s482 + $0x138] sm:$0xff]
        %v1108 = vld [vmem:[%s482 + $0x140] sm:$0xff]
        %v1109 = vld [vmem:[%s482 + $0x148] sm:$0xff]
        %v1110 = vld [vmem:[%s482 + $0x150] sm:$0xff]
        %v1111 = vld [vmem:[%s482 + $0x158] sm:$0xff]
        %v1112 = vld [vmem:[%s482 + $0x160] sm:$0xff]
        %v1113 = vld [vmem:[%s482 + $0x168] sm:$0xff]
        %v1114 = vld [vmem:[%s482 + $0x170] sm:$0xff]
        %v1115 = vld [vmem:[%s482 + $0x178] sm:$0xff]
        %v1116 = vld [vmem:[%s482 + $0x180] sm:$0xff]
        %v1117 = vld [vmem:[%s482 + $0x188] sm:$0xff]
        %v1118 = vld [vmem:[%s482 + $0x190] sm:$0xff]
        %v1119 = vld [vmem:[%s482 + $0x198] sm:$0xff]
        %v1120 = vld [vmem:[%s482 + $0x1a0] sm:$0xff]
        %v1121 = vld [vmem:[%s482 + $0x1a8] sm:$0xff]
        %v1122 = vld [vmem:[%s482 + $0x1b0] sm:$0xff]
        %v1123 = vld [vmem:[%s482 + $0x1b8] sm:$0xff]
        %v1124 = vld [vmem:[%s482 + $0x1c0] sm:$0xff]
        %v1125 = vld [vmem:[%s482 + $0x1c8] sm:$0xff]
        %v1126 = vld [vmem:[%s482 + $0x1d0] sm:$0xff]
        %v1127 = vld [vmem:[%s482 + $0x1d8] sm:$0xff]
        %v1128 = vld [vmem:[%s482 + $0x1e0] sm:$0xff]
        %v1129 = vld [vmem:[%s482 + $0x1e8] sm:$0xff]
        %v1130 = vld [vmem:[%s482 + $0x1f0] sm:$0xff]
        %v1131 = vld [vmem:[%s482 + $0x1f8] sm:$0xff]
        %v1196 = vunpack.c.l.b16 %v1068
        %v1197 = vunpack.c.h.b16 %v1068
        %v1198 = vunpack.c.l.b16 %v1069
        %v1199 = vunpack.c.h.b16 %v1069
        %v1200 = vunpack.c.l.b16 %v1070
        %v1201 = vunpack.c.h.b16 %v1070
        %v1202 = vunpack.c.l.b16 %v1071
        %v1203 = vunpack.c.h.b16 %v1071
        %v1204 = vunpack.c.l.b16 %v1072
        %v1205 = vunpack.c.h.b16 %v1072
        %v1206 = vunpack.c.l.b16 %v1073
        %v1207 = vunpack.c.h.b16 %v1073
        %v1208 = vunpack.c.l.b16 %v1074
        %v1209 = vunpack.c.h.b16 %v1074
        %v1210 = vunpack.c.l.b16 %v1075
        %v1211 = vunpack.c.h.b16 %v1075
        %v1212 = vunpack.c.l.b16 %v1076
        %v1213 = vunpack.c.h.b16 %v1076
        %v1214 = vunpack.c.l.b16 %v1077
        %v1215 = vunpack.c.h.b16 %v1077
        %v1216 = vunpack.c.l.b16 %v1078
        %v1217 = vunpack.c.h.b16 %v1078
        %v1218 = vunpack.c.l.b16 %v1079
        %v1219 = vunpack.c.h.b16 %v1079
        %v1220 = vunpack.c.l.b16 %v1080
        %v1221 = vunpack.c.h.b16 %v1080
        %v1222 = vunpack.c.l.b16 %v1081
        %v1223 = vunpack.c.h.b16 %v1081
        %v1224 = vunpack.c.l.b16 %v1082
        %v1225 = vunpack.c.h.b16 %v1082
        %v1226 = vunpack.c.l.b16 %v1083
        %v1227 = vunpack.c.h.b16 %v1083
        %v1228 = vunpack.c.l.b16 %v1084
        %v1229 = vunpack.c.h.b16 %v1084
        %v1230 = vunpack.c.l.b16 %v1085
        %v1231 = vunpack.c.h.b16 %v1085
        %v1232 = vunpack.c.l.b16 %v1086
        %v1233 = vunpack.c.h.b16 %v1086
        %v1234 = vunpack.c.l.b16 %v1087
        %v1235 = vunpack.c.h.b16 %v1087
        %v1236 = vunpack.c.l.b16 %v1088
        %v1237 = vunpack.c.h.b16 %v1088
        %v1238 = vunpack.c.l.b16 %v1089
        %v1239 = vunpack.c.h.b16 %v1089
        %v1240 = vunpack.c.l.b16 %v1090
        %v1241 = vunpack.c.h.b16 %v1090
        %v1242 = vunpack.c.l.b16 %v1091
        %v1243 = vunpack.c.h.b16 %v1091
        %v1244 = vunpack.c.l.b16 %v1092
        %v1245 = vunpack.c.h.b16 %v1092
        %v1246 = vunpack.c.l.b16 %v1093
        %v1247 = vunpack.c.h.b16 %v1093
        %v1248 = vunpack.c.l.b16 %v1094
        %v1249 = vunpack.c.h.b16 %v1094
        %v1250 = vunpack.c.l.b16 %v1095
        %v1251 = vunpack.c.h.b16 %v1095
        %v1252 = vunpack.c.l.b16 %v1096
        %v1253 = vunpack.c.h.b16 %v1096
        %v1254 = vunpack.c.l.b16 %v1097
        %v1255 = vunpack.c.h.b16 %v1097
        %v1256 = vunpack.c.l.b16 %v1098
        %v1257 = vunpack.c.h.b16 %v1098
        %v1258 = vunpack.c.l.b16 %v1099
        %v1259 = vunpack.c.h.b16 %v1099
        %v1260 = vunpack.c.l.b16 %v1100
        %v1261 = vunpack.c.h.b16 %v1100
        %v1262 = vunpack.c.l.b16 %v1101
        %v1263 = vunpack.c.h.b16 %v1101
        %v1264 = vunpack.c.l.b16 %v1102
        %v1265 = vunpack.c.h.b16 %v1102
        %v1266 = vunpack.c.l.b16 %v1103
        %v1267 = vunpack.c.h.b16 %v1103
        %v1268 = vunpack.c.l.b16 %v1104
        %v1269 = vunpack.c.h.b16 %v1104
        %v1270 = vunpack.c.l.b16 %v1105
        %v1271 = vunpack.c.h.b16 %v1105
        %v1272 = vunpack.c.l.b16 %v1106
        %v1273 = vunpack.c.h.b16 %v1106
        %v1274 = vunpack.c.l.b16 %v1107
        %v1275 = vunpack.c.h.b16 %v1107
        %v1276 = vunpack.c.l.b16 %v1108
        %v1277 = vunpack.c.h.b16 %v1108
        %v1278 = vunpack.c.l.b16 %v1109
        %v1279 = vunpack.c.h.b16 %v1109
        %v1280 = vunpack.c.l.b16 %v1110
        %v1281 = vunpack.c.h.b16 %v1110
        %v1282 = vunpack.c.l.b16 %v1111
        %v1283 = vunpack.c.h.b16 %v1111
        %v1284 = vunpack.c.l.b16 %v1112
        %v1285 = vunpack.c.h.b16 %v1112
        %v1286 = vunpack.c.l.b16 %v1113
        %v1287 = vunpack.c.h.b16 %v1113
        %v1288 = vunpack.c.l.b16 %v1114
        %v1289 = vunpack.c.h.b16 %v1114
        %v1290 = vunpack.c.l.b16 %v1115
        %v1291 = vunpack.c.h.b16 %v1115
        %v1292 = vunpack.c.l.b16 %v1116
        %v1293 = vunpack.c.h.b16 %v1116
        %v1294 = vunpack.c.l.b16 %v1117
        %v1295 = vunpack.c.h.b16 %v1117
        %v1296 = vunpack.c.l.b16 %v1118
        %v1297 = vunpack.c.h.b16 %v1118
        %v1298 = vunpack.c.l.b16 %v1119
        %v1299 = vunpack.c.h.b16 %v1119
        %v1300 = vunpack.c.l.b16 %v1120
        %v1301 = vunpack.c.h.b16 %v1120
        %v1302 = vunpack.c.l.b16 %v1121
        %v1303 = vunpack.c.h.b16 %v1121
        %v1304 = vunpack.c.l.b16 %v1122
        %v1305 = vunpack.c.h.b16 %v1122
        %v1306 = vunpack.c.l.b16 %v1123
        %v1307 = vunpack.c.h.b16 %v1123
        %v1308 = vunpack.c.l.b16 %v1124
        %v1309 = vunpack.c.h.b16 %v1124
        %v1310 = vunpack.c.l.b16 %v1125
        %v1311 = vunpack.c.h.b16 %v1125
        %v1312 = vunpack.c.l.b16 %v1126
        %v1313 = vunpack.c.h.b16 %v1126
        %v1314 = vunpack.c.l.b16 %v1127
        %v1315 = vunpack.c.h.b16 %v1127
        %v1316 = vunpack.c.l.b16 %v1128
        %v1317 = vunpack.c.h.b16 %v1128
        %v1318 = vunpack.c.l.b16 %v1129
        %v1319 = vunpack.c.h.b16 %v1129
        %v1320 = vunpack.c.l.b16 %v1130
        %v1321 = vunpack.c.h.b16 %v1130
        %v1322 = vunpack.c.l.b16 %v1131
        %v1323 = vunpack.c.h.b16 %v1131
        %v1324 = vpack.c.b16 %v1200, %v1196
        %v1325 = vpack.c.b16 %v1201, %v1197
        %v1326 = vpack.c.b16 %v1202, %v1198
        %v1327 = vpack.c.b16 %v1203, %v1199
        %v1328 = vpack.c.b16 %v1208, %v1204
        %v1329 = vpack.c.b16 %v1209, %v1205
        %v1330 = vpack.c.b16 %v1210, %v1206
        %v1331 = vpack.c.b16 %v1211, %v1207
        %v1332 = vpack.c.b16 %v1216, %v1212
        %v1333 = vpack.c.b16 %v1217, %v1213
        %v1334 = vpack.c.b16 %v1218, %v1214
        %v1335 = vpack.c.b16 %v1219, %v1215
        %v1336 = vpack.c.b16 %v1224, %v1220
        %v1337 = vpack.c.b16 %v1225, %v1221
        %v1338 = vpack.c.b16 %v1226, %v1222
        %v1339 = vpack.c.b16 %v1227, %v1223
        %v1340 = vpack.c.b16 %v1232, %v1228
        %v1341 = vpack.c.b16 %v1233, %v1229
        %v1342 = vpack.c.b16 %v1234, %v1230
        %v1343 = vpack.c.b16 %v1235, %v1231
        %v1344 = vpack.c.b16 %v1240, %v1236
        %v1345 = vpack.c.b16 %v1241, %v1237
        %v1346 = vpack.c.b16 %v1242, %v1238
        %v1347 = vpack.c.b16 %v1243, %v1239
        %v1348 = vpack.c.b16 %v1248, %v1244
        %v1349 = vpack.c.b16 %v1249, %v1245
        %v1350 = vpack.c.b16 %v1250, %v1246
        %v1351 = vpack.c.b16 %v1251, %v1247
        %v1352 = vpack.c.b16 %v1256, %v1252
        %v1353 = vpack.c.b16 %v1257, %v1253
        %v1354 = vpack.c.b16 %v1258, %v1254
        %v1355 = vpack.c.b16 %v1259, %v1255
        %v1356 = vpack.c.b16 %v1264, %v1260
        %v1357 = vpack.c.b16 %v1265, %v1261
        %v1358 = vpack.c.b16 %v1266, %v1262
        %v1359 = vpack.c.b16 %v1267, %v1263
        %v1360 = vpack.c.b16 %v1272, %v1268
        %v1361 = vpack.c.b16 %v1273, %v1269
        %v1362 = vpack.c.b16 %v1274, %v1270
        %v1363 = vpack.c.b16 %v1275, %v1271
        %v1364 = vpack.c.b16 %v1280, %v1276
        %v1365 = vpack.c.b16 %v1281, %v1277
        %v1366 = vpack.c.b16 %v1282, %v1278
        %v1367 = vpack.c.b16 %v1283, %v1279
        %v1368 = vpack.c.b16 %v1288, %v1284
        %v1369 = vpack.c.b16 %v1289, %v1285
        %v1370 = vpack.c.b16 %v1290, %v1286
        %v1371 = vpack.c.b16 %v1291, %v1287
        %v1372 = vpack.c.b16 %v1296, %v1292
        %v1373 = vpack.c.b16 %v1297, %v1293
        %v1374 = vpack.c.b16 %v1298, %v1294
        %v1375 = vpack.c.b16 %v1299, %v1295
        %v1376 = vpack.c.b16 %v1304, %v1300
        %v1377 = vpack.c.b16 %v1305, %v1301
        %v1378 = vpack.c.b16 %v1306, %v1302
        %v1379 = vpack.c.b16 %v1307, %v1303
        %v1380 = vpack.c.b16 %v1312, %v1308
        %v1381 = vpack.c.b16 %v1313, %v1309
        %v1382 = vpack.c.b16 %v1314, %v1310
        %v1383 = vpack.c.b16 %v1315, %v1311
        %v1384 = vpack.c.b16 %v1320, %v1316
        %v1385 = vpack.c.b16 %v1321, %v1317
        %v1386 = vpack.c.b16 %v1322, %v1318
        %v1387 = vpack.c.b16 %v1323, %v1319
        %1452 = vmatprep.subr.bf16.mxu0 %v1325
        %1453 = vmatpush1.bf16.msra.mxu0 %v1324
        %1454 = vmatprep.subr.bf16.mxu0 %v1329
        %1455 = vmatpush1.bf16.msra.mxu0 %v1328
        %1456 = vmatprep.subr.bf16.mxu0 %v1333
        %1457 = vmatpush1.bf16.msra.mxu0 %v1332
        %1458 = vmatprep.subr.bf16.mxu0 %v1337
        %1459 = vmatpush1.bf16.msra.mxu0 %v1336
        %1460 = vmatprep.subr.bf16.mxu0 %v1341
        %1461 = vmatpush1.bf16.msra.mxu0 %v1340
        %1462 = vmatprep.subr.bf16.mxu0 %v1345
        %1463 = vmatpush1.bf16.msra.mxu0 %v1344
        %1464 = vmatprep.subr.bf16.mxu0 %v1349
        %1465 = vmatpush1.bf16.msra.mxu0 %v1348
        %1466 = vmatprep.subr.bf16.mxu0 %v1353
        %1467 = vmatpush1.bf16.msra.mxu0 %v1352
        %1468 = vmatprep.subr.bf16.mxu0 %v1357
        %1469 = vmatpush1.bf16.msra.mxu0 %v1356
        %1470 = vmatprep.subr.bf16.mxu0 %v1361
        %1471 = vmatpush1.bf16.msra.mxu0 %v1360
        %1472 = vmatprep.subr.bf16.mxu0 %v1365
        %1473 = vmatpush1.bf16.msra.mxu0 %v1364
        %1474 = vmatprep.subr.bf16.mxu0 %v1369
        %1475 = vmatpush1.bf16.msra.mxu0 %v1368
        %1476 = vmatprep.subr.bf16.mxu0 %v1373
        %1477 = vmatpush1.bf16.msra.mxu0 %v1372
        %1478 = vmatprep.subr.bf16.mxu0 %v1377
        %1479 = vmatpush1.bf16.msra.mxu0 %v1376
        %1480 = vmatprep.subr.bf16.mxu0 %v1381
        %1481 = vmatpush1.bf16.msra.mxu0 %v1380
        %1482 = vmatprep.subr.bf16.mxu0 %v1385
        %1483 = vmatpush1.bf16.msra.mxu0 %v1384
        %1484 = vmatprep.mubr.bf16.mxu0 %v1037
        %1485 = vmatmul.mubr.bf16.gmra.mrb[0].mxu0 %v1036
        %v1486 = vpop.f32.mrb[0].mxu0
        %v1487 = vadd.f32 0.0, %v1486
        %v1488 = vpop.f32.mrb[0].mxu0
        %v1489 = vadd.f32 0.0, %v1488
        %v1490 = vpop.f32.mrb[0].mxu0
        %v1491 = vadd.f32 0.0, %v1490
        %v1492 = vpop.f32.mrb[0].mxu0
        %v1493 = vadd.f32 0.0, %v1492
        %1494 = vmatprep.mubr.bf16.mxu0 %v1039
        %1495 = vmatmul.mubr.bf16.gmra.mrb[0].mxu0 %v1038
        %v1496 = vpop.f32.mrb[0].mxu0
        %v1497 = vadd.f32 0.0, %v1496
        %v1498 = vpop.f32.mrb[0].mxu0
        %v1499 = vadd.f32 0.0, %v1498
        %v1500 = vpop.f32.mrb[0].mxu0
        %v1501 = vadd.f32 0.0, %v1500
        %v1502 = vpop.f32.mrb[0].mxu0
        %v1503 = vadd.f32 0.0, %v1502
        %1504 = vmatprep.mubr.bf16.mxu0 %v1041
        %1505 = vmatmul.mubr.bf16.gmra.mrb[0].mxu0 %v1040
        %v1506 = vpop.f32.mrb[0].mxu0
        %v1507 = vadd.f32 0.0, %v1506
        %v1508 = vpop.f32.mrb[0].mxu0
        %v1509 = vadd.f32 0.0, %v1508
        %v1510 = vpop.f32.mrb[0].mxu0
        %v1511 = vadd.f32 0.0, %v1510
        %v1512 = vpop.f32.mrb[0].mxu0
        %v1513 = vadd.f32 0.0, %v1512
        %1514 = vmatprep.mubr.bf16.mxu0 %v1043
        %1515 = vmatmul.mubr.bf16.gmra.mrb[0].mxu0 %v1042
        %v1516 = vpop.f32.mrb[0].mxu0
        %v1517 = vadd.f32 0.0, %v1516
        %v1518 = vpop.f32.mrb[0].mxu0
        %v1519 = vadd.f32 0.0, %v1518
        %v1520 = vpop.f32.mrb[0].mxu0
        %v1521 = vadd.f32 0.0, %v1520
        %v1522 = vpop.f32.mrb[0].mxu0
        %v1523 = vadd.f32 0.0, %v1522
        %1524 = vmatprep.mubr.bf16.mxu0 %v1045
        %1525 = vmatmul.mubr.bf16.gmra.mrb[0].mxu0 %v1044
        %v1526 = vpop.f32.mrb[0].mxu0
        %v1527 = vadd.f32 0.0, %v1526
        %v1528 = vpop.f32.mrb[0].mxu0
        %v1529 = vadd.f32 0.0, %v1528
        %v1530 = vpop.f32.mrb[0].mxu0
        %v1531 = vadd.f32 0.0, %v1530
        %v1532 = vpop.f32.mrb[0].mxu0
        %v1533 = vadd.f32 0.0, %v1532
        %1534 = vmatprep.mubr.bf16.mxu0 %v1047
        %1535 = vmatmul.mubr.bf16.gmra.mrb[0].mxu0 %v1046
        %v1536 = vpop.f32.mrb[0].mxu0
        %v1537 = vadd.f32 0.0, %v1536
        %v1538 = vpop.f32.mrb[0].mxu0
        %v1539 = vadd.f32 0.0, %v1538
        %v1540 = vpop.f32.mrb[0].mxu0
        %v1541 = vadd.f32 0.0, %v1540
        %v1542 = vpop.f32.mrb[0].mxu0
        %v1543 = vadd.f32 0.0, %v1542
        %1544 = vmatprep.mubr.bf16.mxu0 %v1049
        %1545 = vmatmul.mubr.bf16.gmra.mrb[0].mxu0 %v1048
        %v1546 = vpop.f32.mrb[0].mxu0
        %v1547 = vadd.f32 0.0, %v1546
        %v1548 = vpop.f32.mrb[0].mxu0
        %v1549 = vadd.f32 0.0, %v1548
        %v1550 = vpop.f32.mrb[0].mxu0
        %v1551 = vadd.f32 0.0, %v1550
        %v1552 = vpop.f32.mrb[0].mxu0
        %v1553 = vadd.f32 0.0, %v1552
        %1554 = vmatprep.mubr.bf16.mxu0 %v1051
        %1555 = vmatmul.mubr.bf16.gmra.mrb[0].mxu0 %v1050
        %v1556 = vpop.f32.mrb[0].mxu0
        %v1557 = vadd.f32 0.0, %v1556
        %v1558 = vpop.f32.mrb[0].mxu0
        %v1559 = vadd.f32 0.0, %v1558
        %v1560 = vpop.f32.mrb[0].mxu0
        %v1561 = vadd.f32 0.0, %v1560
        %v1562 = vpop.f32.mrb[0].mxu0
        %v1563 = vadd.f32 0.0, %v1562
        %1564 = vmatprep.mubr.bf16.mxu0 %v1053
        %1565 = vmatmul.mubr.bf16.gmra.mrb[0].mxu0 %v1052
        %v1566 = vpop.f32.mrb[0].mxu0
        %v1567 = vadd.f32 0.0, %v1566
        %v1568 = vpop.f32.mrb[0].mxu0
        %v1569 = vadd.f32 0.0, %v1568
        %v1570 = vpop.f32.mrb[0].mxu0
        %v1571 = vadd.f32 0.0, %v1570
        %v1572 = vpop.f32.mrb[0].mxu0
        %v1573 = vadd.f32 0.0, %v1572
        %1574 = vmatprep.mubr.bf16.mxu0 %v1055
        %1575 = vmatmul.mubr.bf16.gmra.mrb[0].mxu0 %v1054
        %v1576 = vpop.f32.mrb[0].mxu0
        %v1577 = vadd.f32 0.0, %v1576
        %v1578 = vpop.f32.mrb[0].mxu0
        %v1579 = vadd.f32 0.0, %v1578
        %v1580 = vpop.f32.mrb[0].mxu0
        %v1581 = vadd.f32 0.0, %v1580
        %v1582 = vpop.f32.mrb[0].mxu0
        %v1583 = vadd.f32 0.0, %v1582
        %1584 = vmatprep.mubr.bf16.mxu0 %v1057
        %1585 = vmatmul.mubr.bf16.gmra.mrb[0].mxu0 %v1056
        %v1586 = vpop.f32.mrb[0].mxu0
        %v1587 = vadd.f32 0.0, %v1586
        %v1588 = vpop.f32.mrb[0].mxu0
        %v1589 = vadd.f32 0.0, %v1588
        %v1590 = vpop.f32.mrb[0].mxu0
        %v1591 = vadd.f32 0.0, %v1590
        %v1592 = vpop.f32.mrb[0].mxu0
        %v1593 = vadd.f32 0.0, %v1592
        %1594 = vmatprep.mubr.bf16.mxu0 %v1059
        %1595 = vmatmul.mubr.bf16.gmra.mrb[0].mxu0 %v1058
        %v1596 = vpop.f32.mrb[0].mxu0
        %v1597 = vadd.f32 0.0, %v1596
        %v1598 = vpop.f32.mrb[0].mxu0
        %v1599 = vadd.f32 0.0, %v1598
        %v1600 = vpop.f32.mrb[0].mxu0
        %v1601 = vadd.f32 0.0, %v1600
        %v1602 = vpop.f32.mrb[0].mxu0
        %v1603 = vadd.f32 0.0, %v1602
        %1604 = vmatprep.mubr.bf16.mxu0 %v1061
        %1605 = vmatmul.mubr.bf16.gmra.mrb[0].mxu0 %v1060
        %v1606 = vpop.f32.mrb[0].mxu0
        %v1607 = vadd.f32 0.0, %v1606
        %v1608 = vpop.f32.mrb[0].mxu0
        %v1609 = vadd.f32 0.0, %v1608
        %v1610 = vpop.f32.mrb[0].mxu0
        %v1611 = vadd.f32 0.0, %v1610
        %v1612 = vpop.f32.mrb[0].mxu0
        %v1613 = vadd.f32 0.0, %v1612
        %1614 = vmatprep.mubr.bf16.mxu0 %v1063
        %1615 = vmatmul.mubr.bf16.gmra.mrb[0].mxu0 %v1062
        %v1616 = vpop.f32.mrb[0].mxu0
        %v1617 = vadd.f32 0.0, %v1616
        %v1618 = vpop.f32.mrb[0].mxu0
        %v1619 = vadd.f32 0.0, %v1618
        %v1620 = vpop.f32.mrb[0].mxu0
        %v1621 = vadd.f32 0.0, %v1620
        %v1622 = vpop.f32.mrb[0].mxu0
        %v1623 = vadd.f32 0.0, %v1622
        %1624 = vmatprep.mubr.bf16.mxu0 %v1065
        %1625 = vmatmul.mubr.bf16.gmra.mrb[0].mxu0 %v1064
        %v1626 = vpop.f32.mrb[0].mxu0
        %v1627 = vadd.f32 0.0, %v1626
        %v1628 = vpop.f32.mrb[0].mxu0
        %v1629 = vadd.f32 0.0, %v1628
        %v1630 = vpop.f32.mrb[0].mxu0
        %v1631 = vadd.f32 0.0, %v1630
        %v1632 = vpop.f32.mrb[0].mxu0
        %v1633 = vadd.f32 0.0, %v1632
        %1634 = vmatprep.mubr.bf16.mxu0 %v1067
        %1635 = vmatmul.mubr.bf16.gmra.mrb[0].mxu0 %v1066
        %v1636 = vpop.f32.mrb[0].mxu0
        %v1637 = vadd.f32 0.0, %v1636
        %v1638 = vpop.f32.mrb[0].mxu0
        %v1639 = vadd.f32 0.0, %v1638
        %v1640 = vpop.f32.mrb[0].mxu0
        %v1641 = vadd.f32 0.0, %v1640
        %v1642 = vpop.f32.mrb[0].mxu0
        %v1643 = vadd.f32 0.0, %v1642
        %1644 = vdwg.mxu0
        %1645 = vmatprep.subr.bf16.mxu0 %v1327
        %1646 = vmatpush1.bf16.msra.mxu0 %v1326
        %1647 = vmatprep.subr.bf16.mxu0 %v1331
        %1648 = vmatpush1.bf16.msra.mxu0 %v1330
        %1649 = vmatprep.subr.bf16.mxu0 %v1335
        %1650 = vmatpush1.bf16.msra.mxu0 %v1334
        %1651 = vmatprep.subr.bf16.mxu0 %v1339
        %1652 = vmatpush1.bf16.msra.mxu0 %v1338
        %1653 = vmatprep.subr.bf16.mxu0 %v1343
        %1654 = vmatpush1.bf16.msra.mxu0 %v1342
        %1655 = vmatprep.subr.bf16.mxu0 %v1347
        %1656 = vmatpush1.bf16.msra.mxu0 %v1346
        %1657 = vmatprep.subr.bf16.mxu0 %v1351
        %1658 = vmatpush1.bf16.msra.mxu0 %v1350
        %1659 = vmatprep.subr.bf16.mxu0 %v1355
        %1660 = vmatpush1.bf16.msra.mxu0 %v1354
        %1661 = vmatprep.subr.bf16.mxu0 %v1359
        %1662 = vmatpush1.bf16.msra.mxu0 %v1358
        %1663 = vmatprep.subr.bf16.mxu0 %v1363
        %1664 = vmatpush1.bf16.msra.mxu0 %v1362
        %1665 = vmatprep.subr.bf16.mxu0 %v1367
        %1666 = vmatpush1.bf16.msra.mxu0 %v1366
        %1667 = vmatprep.subr.bf16.mxu0 %v1371
        %1668 = vmatpush1.bf16.msra.mxu0 %v1370
        %1669 = vmatprep.subr.bf16.mxu0 %v1375
        %1670 = vmatpush1.bf16.msra.mxu0 %v1374
        %1671 = vmatprep.subr.bf16.mxu0 %v1379
        %1672 = vmatpush1.bf16.msra.mxu0 %v1378
        %1673 = vmatprep.subr.bf16.mxu0 %v1383
        %1674 = vmatpush1.bf16.msra.mxu0 %v1382
        %1675 = vmatprep.subr.bf16.mxu0 %v1387
        %1676 = vmatpush1.bf16.msra.mxu0 %v1386
        %1677 = vmatprep.mubr.bf16.mxu0 %v1037
        %1678 = vmatmul.mubr.bf16.gmra.mrb[0].mxu0 %v1036
        %v1679 = vpop.f32.mrb[0].mxu0
        %v1680 = vadd.f32 0.0, %v1679
        %v1681 = vpop.f32.mrb[0].mxu0
        %v1682 = vadd.f32 0.0, %v1681
        %v1683 = vpop.f32.mrb[0].mxu0
        %v1684 = vadd.f32 0.0, %v1683
        %v1685 = vpop.f32.mrb[0].mxu0
        %v1686 = vadd.f32 0.0, %v1685
        %1687 = vmatprep.mubr.bf16.mxu0 %v1039
        %1688 = vmatmul.mubr.bf16.gmra.mrb[0].mxu0 %v1038
        %v1689 = vpop.f32.mrb[0].mxu0
        %v1690 = vadd.f32 0.0, %v1689
        %v1691 = vpop.f32.mrb[0].mxu0
        %v1692 = vadd.f32 0.0, %v1691
        %v1693 = vpop.f32.mrb[0].mxu0
        %v1694 = vadd.f32 0.0, %v1693
        %v1695 = vpop.f32.mrb[0].mxu0
        %v1696 = vadd.f32 0.0, %v1695
        %1697 = vmatprep.mubr.bf16.mxu0 %v1041
        %1698 = vmatmul.mubr.bf16.gmra.mrb[0].mxu0 %v1040
        %v1699 = vpop.f32.mrb[0].mxu0
        %v1700 = vadd.f32 0.0, %v1699
        %v1701 = vpop.f32.mrb[0].mxu0
        %v1702 = vadd.f32 0.0, %v1701
        %v1703 = vpop.f32.mrb[0].mxu0
        %v1704 = vadd.f32 0.0, %v1703
        %v1705 = vpop.f32.mrb[0].mxu0
        %v1706 = vadd.f32 0.0, %v1705
        %1707 = vmatprep.mubr.bf16.mxu0 %v1043
        %1708 = vmatmul.mubr.bf16.gmra.mrb[0].mxu0 %v1042
        %v1709 = vpop.f32.mrb[0].mxu0
        %v1710 = vadd.f32 0.0, %v1709
        %v1711 = vpop.f32.mrb[0].mxu0
        %v1712 = vadd.f32 0.0, %v1711
        %v1713 = vpop.f32.mrb[0].mxu0
        %v1714 = vadd.f32 0.0, %v1713
        %v1715 = vpop.f32.mrb[0].mxu0
        %v1716 = vadd.f32 0.0, %v1715
        %1717 = vmatprep.mubr.bf16.mxu0 %v1045
        %1718 = vmatmul.mubr.bf16.gmra.mrb[0].mxu0 %v1044
        %v1719 = vpop.f32.mrb[0].mxu0
        %v1720 = vadd.f32 0.0, %v1719
        %v1721 = vpop.f32.mrb[0].mxu0
        %v1722 = vadd.f32 0.0, %v1721
        %v1723 = vpop.f32.mrb[0].mxu0
        %v1724 = vadd.f32 0.0, %v1723
        %v1725 = vpop.f32.mrb[0].mxu0
        %v1726 = vadd.f32 0.0, %v1725
        %1727 = vmatprep.mubr.bf16.mxu0 %v1047
        %1728 = vmatmul.mubr.bf16.gmra.mrb[0].mxu0 %v1046
        %v1729 = vpop.f32.mrb[0].mxu0
        %v1730 = vadd.f32 0.0, %v1729
        %v1731 = vpop.f32.mrb[0].mxu0
        %v1732 = vadd.f32 0.0, %v1731
        %v1733 = vpop.f32.mrb[0].mxu0
        %v1734 = vadd.f32 0.0, %v1733
        %v1735 = vpop.f32.mrb[0].mxu0
        %v1736 = vadd.f32 0.0, %v1735
        %1737 = vmatprep.mubr.bf16.mxu0 %v1049
        %1738 = vmatmul.mubr.bf16.gmra.mrb[0].mxu0 %v1048
        %v1739 = vpop.f32.mrb[0].mxu0
        %v1740 = vadd.f32 0.0, %v1739
        %v1741 = vpop.f32.mrb[0].mxu0
        %v1742 = vadd.f32 0.0, %v1741
        %v1743 = vpop.f32.mrb[0].mxu0
        %v1744 = vadd.f32 0.0, %v1743
        %v1745 = vpop.f32.mrb[0].mxu0
        %v1746 = vadd.f32 0.0, %v1745
        %1747 = vmatprep.mubr.bf16.mxu0 %v1051
        %1748 = vmatmul.mubr.bf16.gmra.mrb[0].mxu0 %v1050
        %v1749 = vpop.f32.mrb[0].mxu0
        %v1750 = vadd.f32 0.0, %v1749
        %v1751 = vpop.f32.mrb[0].mxu0
        %v1752 = vadd.f32 0.0, %v1751
        %v1753 = vpop.f32.mrb[0].mxu0
        %v1754 = vadd.f32 0.0, %v1753
        %v1755 = vpop.f32.mrb[0].mxu0
        %v1756 = vadd.f32 0.0, %v1755
        %1757 = vmatprep.mubr.bf16.mxu0 %v1053
        %1758 = vmatmul.mubr.bf16.gmra.mrb[0].mxu0 %v1052
        %v1759 = vpop.f32.mrb[0].mxu0
        %v1760 = vadd.f32 0.0, %v1759
        %v1761 = vpop.f32.mrb[0].mxu0
        %v1762 = vadd.f32 0.0, %v1761
        %v1763 = vpop.f32.mrb[0].mxu0
        %v1764 = vadd.f32 0.0, %v1763
        %v1765 = vpop.f32.mrb[0].mxu0
        %v1766 = vadd.f32 0.0, %v1765
        %1767 = vmatprep.mubr.bf16.mxu0 %v1055
        %1768 = vmatmul.mubr.bf16.gmra.mrb[0].mxu0 %v1054
        %v1769 = vpop.f32.mrb[0].mxu0
        %v1770 = vadd.f32 0.0, %v1769
        %v1771 = vpop.f32.mrb[0].mxu0
        %v1772 = vadd.f32 0.0, %v1771
        %v1773 = vpop.f32.mrb[0].mxu0
        %v1774 = vadd.f32 0.0, %v1773
        %v1775 = vpop.f32.mrb[0].mxu0
        %v1776 = vadd.f32 0.0, %v1775
        %1777 = vmatprep.mubr.bf16.mxu0 %v1057
        %1778 = vmatmul.mubr.bf16.gmra.mrb[0].mxu0 %v1056
        %v1779 = vpop.f32.mrb[0].mxu0
        %v1780 = vadd.f32 0.0, %v1779
        %v1781 = vpop.f32.mrb[0].mxu0
        %v1782 = vadd.f32 0.0, %v1781
        %v1783 = vpop.f32.mrb[0].mxu0
        %v1784 = vadd.f32 0.0, %v1783
        %v1785 = vpop.f32.mrb[0].mxu0
        %v1786 = vadd.f32 0.0, %v1785
        %1787 = vmatprep.mubr.bf16.mxu0 %v1059
        %1788 = vmatmul.mubr.bf16.gmra.mrb[0].mxu0 %v1058
        %v1789 = vpop.f32.mrb[0].mxu0
        %v1790 = vadd.f32 0.0, %v1789
        %v1791 = vpop.f32.mrb[0].mxu0
        %v1792 = vadd.f32 0.0, %v1791
        %v1793 = vpop.f32.mrb[0].mxu0
        %v1794 = vadd.f32 0.0, %v1793
        %v1795 = vpop.f32.mrb[0].mxu0
        %v1796 = vadd.f32 0.0, %v1795
        %1797 = vmatprep.mubr.bf16.mxu0 %v1061
        %1798 = vmatmul.mubr.bf16.gmra.mrb[0].mxu0 %v1060
        %v1799 = vpop.f32.mrb[0].mxu0
        %v1800 = vadd.f32 0.0, %v1799
        %v1801 = vpop.f32.mrb[0].mxu0
        %v1802 = vadd.f32 0.0, %v1801
        %v1803 = vpop.f32.mrb[0].mxu0
        %v1804 = vadd.f32 0.0, %v1803
        %v1805 = vpop.f32.mrb[0].mxu0
        %v1806 = vadd.f32 0.0, %v1805
        %1807 = vmatprep.mubr.bf16.mxu0 %v1063
        %1808 = vmatmul.mubr.bf16.gmra.mrb[0].mxu0 %v1062
        %v1809 = vpop.f32.mrb[0].mxu0
        %v1810 = vadd.f32 0.0, %v1809
        %v1811 = vpop.f32.mrb[0].mxu0
        %v1812 = vadd.f32 0.0, %v1811
        %v1813 = vpop.f32.mrb[0].mxu0
        %v1814 = vadd.f32 0.0, %v1813
        %v1815 = vpop.f32.mrb[0].mxu0
        %v1816 = vadd.f32 0.0, %v1815
        %1817 = vmatprep.mubr.bf16.mxu0 %v1065
        %1818 = vmatmul.mubr.bf16.gmra.mrb[0].mxu0 %v1064
        %v1819 = vpop.f32.mrb[0].mxu0
        %v1820 = vadd.f32 0.0, %v1819
        %v1821 = vpop.f32.mrb[0].mxu0
        %v1822 = vadd.f32 0.0, %v1821
        %v1823 = vpop.f32.mrb[0].mxu0
        %v1824 = vadd.f32 0.0, %v1823
        %v1825 = vpop.f32.mrb[0].mxu0
        %v1826 = vadd.f32 0.0, %v1825
        %1827 = vmatprep.mubr.bf16.mxu0 %v1067
        %1828 = vmatmul.mubr.bf16.gmra.mrb[0].mxu0 %v1066
        %v1829 = vpop.f32.mrb[0].mxu0
        %v1830 = vadd.f32 0.0, %v1829
        %v1831 = vpop.f32.mrb[0].mxu0
        %v1832 = vadd.f32 0.0, %v1831
        %v1833 = vpop.f32.mrb[0].mxu0
        %v1834 = vadd.f32 0.0, %v1833
        %v1835 = vpop.f32.mrb[0].mxu0
        %v1836 = vadd.f32 0.0, %v1835
        %1837 = vdwg.mxu0
        %v1838 = vadd.f32 %v908, %v1487
        %v1839 = vadd.f32 %v909, %v1489
        %v1840 = vadd.f32 %v910, %v1680
        %v1841 = vadd.f32 %v911, %v1682
        %v1842 = vadd.f32 %v912, %v1491
        %v1843 = vadd.f32 %v913, %v1493
        %v1844 = vadd.f32 %v914, %v1684
        %v1845 = vadd.f32 %v915, %v1686
        %v1846 = vadd.f32 %v916, %v1497
        %v1847 = vadd.f32 %v917, %v1499
        %v1848 = vadd.f32 %v918, %v1690
        %v1849 = vadd.f32 %v919, %v1692
        %v1850 = vadd.f32 %v920, %v1501
        %v1851 = vadd.f32 %v921, %v1503
        %v1852 = vadd.f32 %v922, %v1694
        %v1853 = vadd.f32 %v923, %v1696
        %v1854 = vadd.f32 %v924, %v1507
        %v1855 = vadd.f32 %v925, %v1509
        %v1856 = vadd.f32 %v926, %v1700
        %v1857 = vadd.f32 %v927, %v1702
        %v1858 = vadd.f32 %v928, %v1511
        %v1859 = vadd.f32 %v929, %v1513
        %v1860 = vadd.f32 %v930, %v1704
        %v1861 = vadd.f32 %v931, %v1706
        %v1862 = vadd.f32 %v932, %v1517
        %v1863 = vadd.f32 %v933, %v1519
        %v1864 = vadd.f32 %v934, %v1710
        %v1865 = vadd.f32 %v935, %v1712
        %v1866 = vadd.f32 %v936, %v1521
        %v1867 = vadd.f32 %v937, %v1523
        %v1868 = vadd.f32 %v938, %v1714
        %v1869 = vadd.f32 %v939, %v1716
        %v1870 = vadd.f32 %v940, %v1527
        %v1871 = vadd.f32 %v941, %v1529
        %v1872 = vadd.f32 %v942, %v1720
        %v1873 = vadd.f32 %v943, %v1722
        %v1874 = vadd.f32 %v944, %v1531
        %v1875 = vadd.f32 %v945, %v1533
        %v1876 = vadd.f32 %v946, %v1724
        %v1877 = vadd.f32 %v947, %v1726
        %v1878 = vadd.f32 %v948, %v1537
        %v1879 = vadd.f32 %v949, %v1539
        %v1880 = vadd.f32 %v950, %v1730
        %v1881 = vadd.f32 %v951, %v1732
        %v1882 = vadd.f32 %v952, %v1541
        %v1883 = vadd.f32 %v953, %v1543
        %v1884 = vadd.f32 %v954, %v1734
        %v1885 = vadd.f32 %v955, %v1736
        %v1886 = vadd.f32 %v956, %v1547
        %v1887 = vadd.f32 %v957, %v1549
        %v1888 = vadd.f32 %v958, %v1740
        %v1889 = vadd.f32 %v959, %v1742
        %v1890 = vadd.f32 %v960, %v1551
        %v1891 = vadd.f32 %v961, %v1553
        %v1892 = vadd.f32 %v962, %v1744
        %v1893 = vadd.f32 %v963, %v1746
        %v1894 = vadd.f32 %v964, %v1557
        %v1895 = vadd.f32 %v965, %v1559
        %v1896 = vadd.f32 %v966, %v1750
        %v1897 = vadd.f32 %v967, %v1752
        %v1898 = vadd.f32 %v968, %v1561
        %v1899 = vadd.f32 %v969, %v1563
        %v1900 = vadd.f32 %v970, %v1754
        %v1901 = vadd.f32 %v971, %v1756
        %v1902 = vadd.f32 %v972, %v1567
        %v1903 = vadd.f32 %v973, %v1569
        %v1904 = vadd.f32 %v974, %v1760
        %v1905 = vadd.f32 %v975, %v1762
        %v1906 = vadd.f32 %v976, %v1571
        %v1907 = vadd.f32 %v977, %v1573
        %v1908 = vadd.f32 %v978, %v1764
        %v1909 = vadd.f32 %v979, %v1766
        %v1910 = vadd.f32 %v980, %v1577
        %v1911 = vadd.f32 %v981, %v1579
        %v1912 = vadd.f32 %v982, %v1770
        %v1913 = vadd.f32 %v983, %v1772
        %v1914 = vadd.f32 %v984, %v1581
        %v1915 = vadd.f32 %v985, %v1583
        %v1916 = vadd.f32 %v986, %v1774
        %v1917 = vadd.f32 %v987, %v1776
        %v1918 = vadd.f32 %v988, %v1587
        %v1919 = vadd.f32 %v989, %v1589
        %v1920 = vadd.f32 %v990, %v1780
        %v1921 = vadd.f32 %v991, %v1782
        %v1922 = vadd.f32 %v992, %v1591
        %v1923 = vadd.f32 %v993, %v1593
        %v1924 = vadd.f32 %v994, %v1784
        %v1925 = vadd.f32 %v995, %v1786
        %v1926 = vadd.f32 %v996, %v1597
        %v1927 = vadd.f32 %v997, %v1599
        %v1928 = vadd.f32 %v998, %v1790
        %v1929 = vadd.f32 %v999, %v1792
        %v1930 = vadd.f32 %v1000, %v1601
        %v1931 = vadd.f32 %v1001, %v1603
        %v1932 = vadd.f32 %v1002, %v1794
        %v1933 = vadd.f32 %v1003, %v1796
        %v1934 = vadd.f32 %v1004, %v1607
        %v1935 = vadd.f32 %v1005, %v1609
        %v1936 = vadd.f32 %v1006, %v1800
        %v1937 = vadd.f32 %v1007, %v1802
        %v1938 = vadd.f32 %v1008, %v1611
        %v1939 = vadd.f32 %v1009, %v1613
        %v1940 = vadd.f32 %v1010, %v1804
        %v1941 = vadd.f32 %v1011, %v1806
        %v1942 = vadd.f32 %v1012, %v1617
        %v1943 = vadd.f32 %v1013, %v1619
        %v1944 = vadd.f32 %v1014, %v1810
        %v1945 = vadd.f32 %v1015, %v1812
        %v1946 = vadd.f32 %v1016, %v1621
        %v1947 = vadd.f32 %v1017, %v1623
        %v1948 = vadd.f32 %v1018, %v1814
        %v1949 = vadd.f32 %v1019, %v1816
        %v1950 = vadd.f32 %v1020, %v1627
        %v1951 = vadd.f32 %v1021, %v1629
        %v1952 = vadd.f32 %v1022, %v1820
        %v1953 = vadd.f32 %v1023, %v1822
        %v1954 = vadd.f32 %v1024, %v1631
        %v1955 = vadd.f32 %v1025, %v1633
        %v1956 = vadd.f32 %v1026, %v1824
        %v1957 = vadd.f32 %v1027, %v1826
        %v1958 = vadd.f32 %v1028, %v1637
        %v1959 = vadd.f32 %v1029, %v1639
        %v1960 = vadd.f32 %v1030, %v1830
        %v1961 = vadd.f32 %v1031, %v1832
        %v1962 = vadd.f32 %v1032, %v1641
        %v1963 = vadd.f32 %v1033, %v1643
        %v1964 = vadd.f32 %v1034, %v1834
        %v1965 = vadd.f32 %v1035, %v1836
        %1966 = vst [vmem:[#allocation2] sm:$0xff] %v1838
        %1967 = vst [vmem:[#allocation2 + $0x8] sm:$0xff] %v1839
        %1968 = vst [vmem:[#allocation2 + $0x10] sm:$0xff] %v1840
        %1969 = vst [vmem:[#allocation2 + $0x18] sm:$0xff] %v1841
        %1970 = vst [vmem:[#allocation2 + $0x20] sm:$0xff] %v1842
        %1971 = vst [vmem:[#allocation2 + $0x28] sm:$0xff] %v1843
        %1972 = vst [vmem:[#allocation2 + $0x30] sm:$0xff] %v1844
        %1973 = vst [vmem:[#allocation2 + $0x38] sm:$0xff] %v1845
        %1974 = vst [vmem:[#allocation2 + $0x40] sm:$0xff] %v1846
        %1975 = vst [vmem:[#allocation2 + $0x48] sm:$0xff] %v1847
        %1976 = vst [vmem:[#allocation2 + $0x50] sm:$0xff] %v1848
        %1977 = vst [vmem:[#allocation2 + $0x58] sm:$0xff] %v1849
        %1978 = vst [vmem:[#allocation2 + $0x60] sm:$0xff] %v1850
        %1979 = vst [vmem:[#allocation2 + $0x68] sm:$0xff] %v1851
        %1980 = vst [vmem:[#allocation2 + $0x70] sm:$0xff] %v1852
        %1981 = vst [vmem:[#allocation2 + $0x78] sm:$0xff] %v1853
        %1982 = vst [vmem:[#allocation2 + $0x80] sm:$0xff] %v1854
        %1983 = vst [vmem:[#allocation2 + $0x88] sm:$0xff] %v1855
        %1984 = vst [vmem:[#allocation2 + $0x90] sm:$0xff] %v1856
        %1985 = vst [vmem:[#allocation2 + $0x98] sm:$0xff] %v1857
        %1986 = vst [vmem:[#allocation2 + $0xa0] sm:$0xff] %v1858
        %1987 = vst [vmem:[#allocation2 + $0xa8] sm:$0xff] %v1859
        %1988 = vst [vmem:[#allocation2 + $0xb0] sm:$0xff] %v1860
        %1989 = vst [vmem:[#allocation2 + $0xb8] sm:$0xff] %v1861
        %1990 = vst [vmem:[#allocation2 + $0xc0] sm:$0xff] %v1862
        %1991 = vst [vmem:[#allocation2 + $0xc8] sm:$0xff] %v1863
        %1992 = vst [vmem:[#allocation2 + $0xd0] sm:$0xff] %v1864
        %1993 = vst [vmem:[#allocation2 + $0xd8] sm:$0xff] %v1865
        %1994 = vst [vmem:[#allocation2 + $0xe0] sm:$0xff] %v1866
        %1995 = vst [vmem:[#allocation2 + $0xe8] sm:$0xff] %v1867
        %1996 = vst [vmem:[#allocation2 + $0xf0] sm:$0xff] %v1868
        %1997 = vst [vmem:[#allocation2 + $0xf8] sm:$0xff] %v1869
        %1998 = vst [vmem:[#allocation2 + $0x100] sm:$0xff] %v1870
        %1999 = vst [vmem:[#allocation2 + $0x108] sm:$0xff] %v1871
        %2000 = vst [vmem:[#allocation2 + $0x110] sm:$0xff] %v1872
        %2001 = vst [vmem:[#allocation2 + $0x118] sm:$0xff] %v1873
        %2002 = vst [vmem:[#allocation2 + $0x120] sm:$0xff] %v1874
        %2003 = vst [vmem:[#allocation2 + $0x128] sm:$0xff] %v1875
        %2004 = vst [vmem:[#allocation2 + $0x130] sm:$0xff] %v1876
        %2005 = vst [vmem:[#allocation2 + $0x138] sm:$0xff] %v1877
        %2006 = vst [vmem:[#allocation2 + $0x140] sm:$0xff] %v1878
        %2007 = vst [vmem:[#allocation2 + $0x148] sm:$0xff] %v1879
        %2008 = vst [vmem:[#allocation2 + $0x150] sm:$0xff] %v1880
        %2009 = vst [vmem:[#allocation2 + $0x158] sm:$0xff] %v1881
        %2010 = vst [vmem:[#allocation2 + $0x160] sm:$0xff] %v1882
        %2011 = vst [vmem:[#allocation2 + $0x168] sm:$0xff] %v1883
        %2012 = vst [vmem:[#allocation2 + $0x170] sm:$0xff] %v1884
        %2013 = vst [vmem:[#allocation2 + $0x178] sm:$0xff] %v1885
        %2014 = vst [vmem:[#allocation2 + $0x180] sm:$0xff] %v1886
        %2015 = vst [vmem:[#allocation2 + $0x188] sm:$0xff] %v1887
        %2016 = vst [vmem:[#allocation2 + $0x190] sm:$0xff] %v1888
        %2017 = vst [vmem:[#allocation2 + $0x198] sm:$0xff] %v1889
        %2018 = vst [vmem:[#allocation2 + $0x1a0] sm:$0xff] %v1890
        %2019 = vst [vmem:[#allocation2 + $0x1a8] sm:$0xff] %v1891
        %2020 = vst [vmem:[#allocation2 + $0x1b0] sm:$0xff] %v1892
        %2021 = vst [vmem:[#allocation2 + $0x1b8] sm:$0xff] %v1893
        %2022 = vst [vmem:[#allocation2 + $0x1c0] sm:$0xff] %v1894
        %2023 = vst [vmem:[#allocation2 + $0x1c8] sm:$0xff] %v1895
        %2024 = vst [vmem:[#allocation2 + $0x1d0] sm:$0xff] %v1896
        %2025 = vst [vmem:[#allocation2 + $0x1d8] sm:$0xff] %v1897
        %2026 = vst [vmem:[#allocation2 + $0x1e0] sm:$0xff] %v1898
        %2027 = vst [vmem:[#allocation2 + $0x1e8] sm:$0xff] %v1899
        %2028 = vst [vmem:[#allocation2 + $0x1f0] sm:$0xff] %v1900
        %2029 = vst [vmem:[#allocation2 + $0x1f8] sm:$0xff] %v1901
        %2030 = vst [vmem:[#allocation2 + $0x200] sm:$0xff] %v1902
        %2031 = vst [vmem:[#allocation2 + $0x208] sm:$0xff] %v1903
        %2032 = vst [vmem:[#allocation2 + $0x210] sm:$0xff] %v1904
        %2033 = vst [vmem:[#allocation2 + $0x218] sm:$0xff] %v1905
        %2034 = vst [vmem:[#allocation2 + $0x220] sm:$0xff] %v1906
        %2035 = vst [vmem:[#allocation2 + $0x228] sm:$0xff] %v1907
        %2036 = vst [vmem:[#allocation2 + $0x230] sm:$0xff] %v1908
        %2037 = vst [vmem:[#allocation2 + $0x238] sm:$0xff] %v1909
        %2038 = vst [vmem:[#allocation2 + $0x240] sm:$0xff] %v1910
        %2039 = vst [vmem:[#allocation2 + $0x248] sm:$0xff] %v1911
        %2040 = vst [vmem:[#allocation2 + $0x250] sm:$0xff] %v1912
        %2041 = vst [vmem:[#allocation2 + $0x258] sm:$0xff] %v1913
        %2042 = vst [vmem:[#allocation2 + $0x260] sm:$0xff] %v1914
        %2043 = vst [vmem:[#allocation2 + $0x268] sm:$0xff] %v1915
        %2044 = vst [vmem:[#allocation2 + $0x270] sm:$0xff] %v1916
        %2045 = vst [vmem:[#allocation2 + $0x278] sm:$0xff] %v1917
        %2046 = vst [vmem:[#allocation2 + $0x280] sm:$0xff] %v1918
        %2047 = vst [vmem:[#allocation2 + $0x288] sm:$0xff] %v1919
        %2048 = vst [vmem:[#allocation2 + $0x290] sm:$0xff] %v1920
        %2049 = vst [vmem:[#allocation2 + $0x298] sm:$0xff] %v1921
        %2050 = vst [vmem:[#allocation2 + $0x2a0] sm:$0xff] %v1922
        %2051 = vst [vmem:[#allocation2 + $0x2a8] sm:$0xff] %v1923
        %2052 = vst [vmem:[#allocation2 + $0x2b0] sm:$0xff] %v1924
        %2053 = vst [vmem:[#allocation2 + $0x2b8] sm:$0xff] %v1925
        %2054 = vst [vmem:[#allocation2 + $0x2c0] sm:$0xff] %v1926
        %2055 = vst [vmem:[#allocation2 + $0x2c8] sm:$0xff] %v1927
        %2056 = vst [vmem:[#allocation2 + $0x2d0] sm:$0xff] %v1928
        %2057 = vst [vmem:[#allocation2 + $0x2d8] sm:$0xff] %v1929
        %2058 = vst [vmem:[#allocation2 + $0x2e0] sm:$0xff] %v1930
        %2059 = vst [vmem:[#allocation2 + $0x2e8] sm:$0xff] %v1931
        %2060 = vst [vmem:[#allocation2 + $0x2f0] sm:$0xff] %v1932
        %2061 = vst [vmem:[#allocation2 + $0x2f8] sm:$0xff] %v1933
        %2062 = vst [vmem:[#allocation2 + $0x300] sm:$0xff] %v1934
        %2063 = vst [vmem:[#allocation2 + $0x308] sm:$0xff] %v1935
        %2064 = vst [vmem:[#allocation2 + $0x310] sm:$0xff] %v1936
        %2065 = vst [vmem:[#allocation2 + $0x318] sm:$0xff] %v1937
        %2066 = vst [vmem:[#allocation2 + $0x320] sm:$0xff] %v1938
        %2067 = vst [vmem:[#allocation2 + $0x328] sm:$0xff] %v1939
        %2068 = vst [vmem:[#allocation2 + $0x330] sm:$0xff] %v1940
        %2069 = vst [vmem:[#allocation2 + $0x338] sm:$0xff] %v1941
        %2070 = vst [vmem:[#allocation2 + $0x340] sm:$0xff] %v1942
        %2071 = vst [vmem:[#allocation2 + $0x348] sm:$0xff] %v1943
        %2072 = vst [vmem:[#allocation2 + $0x350] sm:$0xff] %v1944
        %2073 = vst [vmem:[#allocation2 + $0x358] sm:$0xff] %v1945
        %2074 = vst [vmem:[#allocation2 + $0x360] sm:$0xff] %v1946
        %2075 = vst [vmem:[#allocation2 + $0x368] sm:$0xff] %v1947
        %2076 = vst [vmem:[#allocation2 + $0x370] sm:$0xff] %v1948
        %2077 = vst [vmem:[#allocation2 + $0x378] sm:$0xff] %v1949
        %2078 = vst [vmem:[#allocation2 + $0x380] sm:$0xff] %v1950
        %2079 = vst [vmem:[#allocation2 + $0x388] sm:$0xff] %v1951
        %2080 = vst [vmem:[#allocation2 + $0x390] sm:$0xff] %v1952
        %2081 = vst [vmem:[#allocation2 + $0x398] sm:$0xff] %v1953
        %2082 = vst [vmem:[#allocation2 + $0x3a0] sm:$0xff] %v1954
        %2083 = vst [vmem:[#allocation2 + $0x3a8] sm:$0xff] %v1955
        %2084 = vst [vmem:[#allocation2 + $0x3b0] sm:$0xff] %v1956
        %2085 = vst [vmem:[#allocation2 + $0x3b8] sm:$0xff] %v1957
        %2086 = vst [vmem:[#allocation2 + $0x3c0] sm:$0xff] %v1958
        %2087 = vst [vmem:[#allocation2 + $0x3c8] sm:$0xff] %v1959
        %2088 = vst [vmem:[#allocation2 + $0x3d0] sm:$0xff] %v1960
        %2089 = vst [vmem:[#allocation2 + $0x3d8] sm:$0xff] %v1961
        %2090 = vst [vmem:[#allocation2 + $0x3e0] sm:$0xff] %v1962
        %2091 = vst [vmem:[#allocation2 + $0x3e8] sm:$0xff] %v1963
        %2092 = vst [vmem:[#allocation2 + $0x3f0] sm:$0xff] %v1964
        %2093 = vst [vmem:[#allocation2 + $0x3f8] sm:$0xff] %v1965
        %p2094 = scmp.eq.s32.totalorder %s23, 1
        // Predicated region
        $region68: #{simclr_projection_head.4} parent=58 // pred_check
          %p2095 = pneg %p2094
        $region69: #{simclr_projection_head.4} parent=58 // pred_check_branch
          %2097 = sbr.rel (%p2095) target = $region71
        $region70: #{simclr_projection_head.4} parent=58 // pred_region
          %v2098 = vld [vmem:[#allocation2] sm:$0xff]
          %v2099 = vld [vmem:[#allocation2 + $0x8] sm:$0xff]
          %v2100 = vld [vmem:[#allocation2 + $0x10] sm:$0xff]
          %v2101 = vld [vmem:[#allocation2 + $0x18] sm:$0xff]
          %v2102 = vld [vmem:[#allocation2 + $0x20] sm:$0xff]
          %v2103 = vld [vmem:[#allocation2 + $0x28] sm:$0xff]
          %v2104 = vld [vmem:[#allocation2 + $0x30] sm:$0xff]
          %v2105 = vld [vmem:[#allocation2 + $0x38] sm:$0xff]
          %v2106 = vld [vmem:[#allocation2 + $0x40] sm:$0xff]
          %v2107 = vld [vmem:[#allocation2 + $0x48] sm:$0xff]
          %v2108 = vld [vmem:[#allocation2 + $0x50] sm:$0xff]
          %v2109 = vld [vmem:[#allocation2 + $0x58] sm:$0xff]
          %v2110 = vld [vmem:[#allocation2 + $0x60] sm:$0xff]
          %v2111 = vld [vmem:[#allocation2 + $0x68] sm:$0xff]
          %v2112 = vld [vmem:[#allocation2 + $0x70] sm:$0xff]
          %v2113 = vld [vmem:[#allocation2 + $0x78] sm:$0xff]
          %v2114 = vld [vmem:[#allocation2 + $0x80] sm:$0xff]
          %v2115 = vld [vmem:[#allocation2 + $0x88] sm:$0xff]
          %v2116 = vld [vmem:[#allocation2 + $0x90] sm:$0xff]
          %v2117 = vld [vmem:[#allocation2 + $0x98] sm:$0xff]
          %v2118 = vld [vmem:[#allocation2 + $0xa0] sm:$0xff]
          %v2119 = vld [vmem:[#allocation2 + $0xa8] sm:$0xff]
          %v2120 = vld [vmem:[#allocation2 + $0xb0] sm:$0xff]
          %v2121 = vld [vmem:[#allocation2 + $0xb8] sm:$0xff]
          %v2122 = vld [vmem:[#allocation2 + $0xc0] sm:$0xff]
          %v2123 = vld [vmem:[#allocation2 + $0xc8] sm:$0xff]
          %v2124 = vld [vmem:[#allocation2 + $0xd0] sm:$0xff]
          %v2125 = vld [vmem:[#allocation2 + $0xd8] sm:$0xff]
          %v2126 = vld [vmem:[#allocation2 + $0xe0] sm:$0xff]
          %v2127 = vld [vmem:[#allocation2 + $0xe8] sm:$0xff]
          %v2128 = vld [vmem:[#allocation2 + $0xf0] sm:$0xff]
          %v2129 = vld [vmem:[#allocation2 + $0xf8] sm:$0xff]
          %v2130 = vld [vmem:[#allocation2 + $0x100] sm:$0xff]
          %v2131 = vld [vmem:[#allocation2 + $0x108] sm:$0xff]
          %v2132 = vld [vmem:[#allocation2 + $0x110] sm:$0xff]
          %v2133 = vld [vmem:[#allocation2 + $0x118] sm:$0xff]
          %v2134 = vld [vmem:[#allocation2 + $0x120] sm:$0xff]
          %v2135 = vld [vmem:[#allocation2 + $0x128] sm:$0xff]
          %v2136 = vld [vmem:[#allocation2 + $0x130] sm:$0xff]
          %v2137 = vld [vmem:[#allocation2 + $0x138] sm:$0xff]
          %v2138 = vld [vmem:[#allocation2 + $0x140] sm:$0xff]
          %v2139 = vld [vmem:[#allocation2 + $0x148] sm:$0xff]
          %v2140 = vld [vmem:[#allocation2 + $0x150] sm:$0xff]
          %v2141 = vld [vmem:[#allocation2 + $0x158] sm:$0xff]
          %v2142 = vld [vmem:[#allocation2 + $0x160] sm:$0xff]
          %v2143 = vld [vmem:[#allocation2 + $0x168] sm:$0xff]
          %v2144 = vld [vmem:[#allocation2 + $0x170] sm:$0xff]
          %v2145 = vld [vmem:[#allocation2 + $0x178] sm:$0xff]
          %v2146 = vld [vmem:[#allocation2 + $0x180] sm:$0xff]
          %v2147 = vld [vmem:[#allocation2 + $0x188] sm:$0xff]
          %v2148 = vld [vmem:[#allocation2 + $0x190] sm:$0xff]
          %v2149 = vld [vmem:[#allocation2 + $0x198] sm:$0xff]
          %v2150 = vld [vmem:[#allocation2 + $0x1a0] sm:$0xff]
          %v2151 = vld [vmem:[#allocation2 + $0x1a8] sm:$0xff]
          %v2152 = vld [vmem:[#allocation2 + $0x1b0] sm:$0xff]
          %v2153 = vld [vmem:[#allocation2 + $0x1b8] sm:$0xff]
          %v2154 = vld [vmem:[#allocation2 + $0x1c0] sm:$0xff]
          %v2155 = vld [vmem:[#allocation2 + $0x1c8] sm:$0xff]
          %v2156 = vld [vmem:[#allocation2 + $0x1d0] sm:$0xff]
          %v2157 = vld [vmem:[#allocation2 + $0x1d8] sm:$0xff]
          %v2158 = vld [vmem:[#allocation2 + $0x1e0] sm:$0xff]
          %v2159 = vld [vmem:[#allocation2 + $0x1e8] sm:$0xff]
          %v2160 = vld [vmem:[#allocation2 + $0x1f0] sm:$0xff]
          %v2161 = vld [vmem:[#allocation2 + $0x1f8] sm:$0xff]
          %v2162 = vld [vmem:[#allocation2 + $0x200] sm:$0xff]
          %v2163 = vld [vmem:[#allocation2 + $0x208] sm:$0xff]
          %v2164 = vld [vmem:[#allocation2 + $0x210] sm:$0xff]
          %v2165 = vld [vmem:[#allocation2 + $0x218] sm:$0xff]
          %v2166 = vld [vmem:[#allocation2 + $0x220] sm:$0xff]
          %v2167 = vld [vmem:[#allocation2 + $0x228] sm:$0xff]
          %v2168 = vld [vmem:[#allocation2 + $0x230] sm:$0xff]
          %v2169 = vld [vmem:[#allocation2 + $0x238] sm:$0xff]
          %v2170 = vld [vmem:[#allocation2 + $0x240] sm:$0xff]
          %v2171 = vld [vmem:[#allocation2 + $0x248] sm:$0xff]
          %v2172 = vld [vmem:[#allocation2 + $0x250] sm:$0xff]
          %v2173 = vld [vmem:[#allocation2 + $0x258] sm:$0xff]
          %v2174 = vld [vmem:[#allocation2 + $0x260] sm:$0xff]
          %v2175 = vld [vmem:[#allocation2 + $0x268] sm:$0xff]
          %v2176 = vld [vmem:[#allocation2 + $0x270] sm:$0xff]
          %v2177 = vld [vmem:[#allocation2 + $0x278] sm:$0xff]
          %v2178 = vld [vmem:[#allocation2 + $0x280] sm:$0xff]
          %v2179 = vld [vmem:[#allocation2 + $0x288] sm:$0xff]
          %v2180 = vld [vmem:[#allocation2 + $0x290] sm:$0xff]
          %v2181 = vld [vmem:[#allocation2 + $0x298] sm:$0xff]
          %v2182 = vld [vmem:[#allocation2 + $0x2a0] sm:$0xff]
          %v2183 = vld [vmem:[#allocation2 + $0x2a8] sm:$0xff]
          %v2184 = vld [vmem:[#allocation2 + $0x2b0] sm:$0xff]
          %v2185 = vld [vmem:[#allocation2 + $0x2b8] sm:$0xff]
          %v2186 = vld [vmem:[#allocation2 + $0x2c0] sm:$0xff]
          %v2187 = vld [vmem:[#allocation2 + $0x2c8] sm:$0xff]
          %v2188 = vld [vmem:[#allocation2 + $0x2d0] sm:$0xff]
          %v2189 = vld [vmem:[#allocation2 + $0x2d8] sm:$0xff]
          %v2190 = vld [vmem:[#allocation2 + $0x2e0] sm:$0xff]
          %v2191 = vld [vmem:[#allocation2 + $0x2e8] sm:$0xff]
          %v2192 = vld [vmem:[#allocation2 + $0x2f0] sm:$0xff]
          %v2193 = vld [vmem:[#allocation2 + $0x2f8] sm:$0xff]
          %v2194 = vld [vmem:[#allocation2 + $0x300] sm:$0xff]
          %v2195 = vld [vmem:[#allocation2 + $0x308] sm:$0xff]
          %v2196 = vld [vmem:[#allocation2 + $0x310] sm:$0xff]
          %v2197 = vld [vmem:[#allocation2 + $0x318] sm:$0xff]
          %v2198 = vld [vmem:[#allocation2 + $0x320] sm:$0xff]
          %v2199 = vld [vmem:[#allocation2 + $0x328] sm:$0xff]
          %v2200 = vld [vmem:[#allocation2 + $0x330] sm:$0xff]
          %v2201 = vld [vmem:[#allocation2 + $0x338] sm:$0xff]
          %v2202 = vld [vmem:[#allocation2 + $0x340] sm:$0xff]
          %v2203 = vld [vmem:[#allocation2 + $0x348] sm:$0xff]
          %v2204 = vld [vmem:[#allocation2 + $0x350] sm:$0xff]
          %v2205 = vld [vmem:[#allocation2 + $0x358] sm:$0xff]
          %v2206 = vld [vmem:[#allocation2 + $0x360] sm:$0xff]
          %v2207 = vld [vmem:[#allocation2 + $0x368] sm:$0xff]
          %v2208 = vld [vmem:[#allocation2 + $0x370] sm:$0xff]
          %v2209 = vld [vmem:[#allocation2 + $0x378] sm:$0xff]
          %v2210 = vld [vmem:[#allocation2 + $0x380] sm:$0xff]
          %v2211 = vld [vmem:[#allocation2 + $0x388] sm:$0xff]
          %v2212 = vld [vmem:[#allocation2 + $0x390] sm:$0xff]
          %v2213 = vld [vmem:[#allocation2 + $0x398] sm:$0xff]
          %v2214 = vld [vmem:[#allocation2 + $0x3a0] sm:$0xff]
          %v2215 = vld [vmem:[#allocation2 + $0x3a8] sm:$0xff]
          %v2216 = vld [vmem:[#allocation2 + $0x3b0] sm:$0xff]
          %v2217 = vld [vmem:[#allocation2 + $0x3b8] sm:$0xff]
          %v2218 = vld [vmem:[#allocation2 + $0x3c0] sm:$0xff]
          %v2219 = vld [vmem:[#allocation2 + $0x3c8] sm:$0xff]
          %v2220 = vld [vmem:[#allocation2 + $0x3d0] sm:$0xff]
          %v2221 = vld [vmem:[#allocation2 + $0x3d8] sm:$0xff]
          %v2222 = vld [vmem:[#allocation2 + $0x3e0] sm:$0xff]
          %v2223 = vld [vmem:[#allocation2 + $0x3e8] sm:$0xff]
          %v2224 = vld [vmem:[#allocation2 + $0x3f0] sm:$0xff]
          %v2225 = vld [vmem:[#allocation2 + $0x3f8] sm:$0xff]
          %v2226 = vld [vmem:[%s4] sm:$0xf]
          %v2228 = vlaneseq
          %v2229 = vshrl.u32 %v2228, 7
          %v2230 = vsub.s32 0, %v2229
          %v2231 = vrot.slane %v2226, %v2230
          %v2232 = vlaneseq
          %v2233 = vshrl.u32 %v2232, 7
          %v2234 = vsub.s32 1, %v2233
          %v2235 = vrot.slane %v2226, %v2234
          %v2236 = vlaneseq
          %v2237 = vshrl.u32 %v2236, 7
          %v2238 = vsub.s32 2, %v2237
          %v2239 = vrot.slane %v2226, %v2238
          %v2240 = vlaneseq
          %v2241 = vshrl.u32 %v2240, 7
          %v2242 = vsub.s32 3, %v2241
          %v2243 = vrot.slane %v2226, %v2242
          %v2248 = vadd.f32 %v2098, %v2231
          %v2249 = vadd.f32 %v2099, %v2235
          %v2250 = vadd.f32 %v2100, %v2239
          %v2251 = vadd.f32 %v2101, %v2243
          %v2252 = vadd.f32 %v2102, %v2231
          %v2253 = vadd.f32 %v2103, %v2235
          %v2254 = vadd.f32 %v2104, %v2239
          %v2255 = vadd.f32 %v2105, %v2243
          %v2256 = vadd.f32 %v2106, %v2231
          %v2257 = vadd.f32 %v2107, %v2235
          %v2258 = vadd.f32 %v2108, %v2239
          %v2259 = vadd.f32 %v2109, %v2243
          %v2260 = vadd.f32 %v2110, %v2231
          %v2261 = vadd.f32 %v2111, %v2235
          %v2262 = vadd.f32 %v2112, %v2239
          %v2263 = vadd.f32 %v2113, %v2243
          %v2264 = vadd.f32 %v2114, %v2231
          %v2265 = vadd.f32 %v2115, %v2235
          %v2266 = vadd.f32 %v2116, %v2239
          %v2267 = vadd.f32 %v2117, %v2243
          %v2268 = vadd.f32 %v2118, %v2231
          %v2269 = vadd.f32 %v2119, %v2235
          %v2270 = vadd.f32 %v2120, %v2239
          %v2271 = vadd.f32 %v2121, %v2243
          %v2272 = vadd.f32 %v2122, %v2231
          %v2273 = vadd.f32 %v2123, %v2235
          %v2274 = vadd.f32 %v2124, %v2239
          %v2275 = vadd.f32 %v2125, %v2243
          %v2276 = vadd.f32 %v2126, %v2231
          %v2277 = vadd.f32 %v2127, %v2235
          %v2278 = vadd.f32 %v2128, %v2239
          %v2279 = vadd.f32 %v2129, %v2243
          %v2280 = vadd.f32 %v2130, %v2231
          %v2281 = vadd.f32 %v2131, %v2235
          %v2282 = vadd.f32 %v2132, %v2239
          %v2283 = vadd.f32 %v2133, %v2243
          %v2284 = vadd.f32 %v2134, %v2231
          %v2285 = vadd.f32 %v2135, %v2235
          %v2286 = vadd.f32 %v2136, %v2239
          %v2287 = vadd.f32 %v2137, %v2243
          %v2288 = vadd.f32 %v2138, %v2231
          %v2289 = vadd.f32 %v2139, %v2235
          %v2290 = vadd.f32 %v2140, %v2239
          %v2291 = vadd.f32 %v2141, %v2243
          %v2292 = vadd.f32 %v2142, %v2231
          %v2293 = vadd.f32 %v2143, %v2235
          %v2294 = vadd.f32 %v2144, %v2239
          %v2295 = vadd.f32 %v2145, %v2243
          %v2296 = vadd.f32 %v2146, %v2231
          %v2297 = vadd.f32 %v2147, %v2235
          %v2298 = vadd.f32 %v2148, %v2239
          %v2299 = vadd.f32 %v2149, %v2243
          %v2300 = vadd.f32 %v2150, %v2231
          %v2301 = vadd.f32 %v2151, %v2235
          %v2302 = vadd.f32 %v2152, %v2239
          %v2303 = vadd.f32 %v2153, %v2243
          %v2304 = vadd.f32 %v2154, %v2231
          %v2305 = vadd.f32 %v2155, %v2235
          %v2306 = vadd.f32 %v2156, %v2239
          %v2307 = vadd.f32 %v2157, %v2243
          %v2308 = vadd.f32 %v2158, %v2231
          %v2309 = vadd.f32 %v2159, %v2235
          %v2310 = vadd.f32 %v2160, %v2239
          %v2311 = vadd.f32 %v2161, %v2243
          %v2312 = vadd.f32 %v2162, %v2231
          %v2313 = vadd.f32 %v2163, %v2235
          %v2314 = vadd.f32 %v2164, %v2239
          %v2315 = vadd.f32 %v2165, %v2243
          %v2316 = vadd.f32 %v2166, %v2231
          %v2317 = vadd.f32 %v2167, %v2235
          %v2318 = vadd.f32 %v2168, %v2239
          %v2319 = vadd.f32 %v2169, %v2243
          %v2320 = vadd.f32 %v2170, %v2231
          %v2321 = vadd.f32 %v2171, %v2235
          %v2322 = vadd.f32 %v2172, %v2239
          %v2323 = vadd.f32 %v2173, %v2243
          %v2324 = vadd.f32 %v2174, %v2231
          %v2325 = vadd.f32 %v2175, %v2235
          %v2326 = vadd.f32 %v2176, %v2239
          %v2327 = vadd.f32 %v2177, %v2243
          %v2328 = vadd.f32 %v2178, %v2231
          %v2329 = vadd.f32 %v2179, %v2235
          %v2330 = vadd.f32 %v2180, %v2239
          %v2331 = vadd.f32 %v2181, %v2243
          %v2332 = vadd.f32 %v2182, %v2231
          %v2333 = vadd.f32 %v2183, %v2235
          %v2334 = vadd.f32 %v2184, %v2239
          %v2335 = vadd.f32 %v2185, %v2243
          %v2336 = vadd.f32 %v2186, %v2231
          %v2337 = vadd.f32 %v2187, %v2235
          %v2338 = vadd.f32 %v2188, %v2239
          %v2339 = vadd.f32 %v2189, %v2243
          %v2340 = vadd.f32 %v2190, %v2231
          %v2341 = vadd.f32 %v2191, %v2235
          %v2342 = vadd.f32 %v2192, %v2239
          %v2343 = vadd.f32 %v2193, %v2243
          %v2344 = vadd.f32 %v2194, %v2231
          %v2345 = vadd.f32 %v2195, %v2235
          %v2346 = vadd.f32 %v2196, %v2239
          %v2347 = vadd.f32 %v2197, %v2243
          %v2348 = vadd.f32 %v2198, %v2231
          %v2349 = vadd.f32 %v2199, %v2235
          %v2350 = vadd.f32 %v2200, %v2239
          %v2351 = vadd.f32 %v2201, %v2243
          %v2352 = vadd.f32 %v2202, %v2231
          %v2353 = vadd.f32 %v2203, %v2235
          %v2354 = vadd.f32 %v2204, %v2239
          %v2355 = vadd.f32 %v2205, %v2243
          %v2356 = vadd.f32 %v2206, %v2231
          %v2357 = vadd.f32 %v2207, %v2235
          %v2358 = vadd.f32 %v2208, %v2239
          %v2359 = vadd.f32 %v2209, %v2243
          %v2360 = vadd.f32 %v2210, %v2231
          %v2361 = vadd.f32 %v2211, %v2235
          %v2362 = vadd.f32 %v2212, %v2239
          %v2363 = vadd.f32 %v2213, %v2243
          %v2364 = vadd.f32 %v2214, %v2231
          %v2365 = vadd.f32 %v2215, %v2235
          %v2366 = vadd.f32 %v2216, %v2239
          %v2367 = vadd.f32 %v2217, %v2243
          %v2368 = vadd.f32 %v2218, %v2231
          %v2369 = vadd.f32 %v2219, %v2235
          %v2370 = vadd.f32 %v2220, %v2239
          %v2371 = vadd.f32 %v2221, %v2243
          %v2372 = vadd.f32 %v2222, %v2231
          %v2373 = vadd.f32 %v2223, %v2235
          %v2374 = vadd.f32 %v2224, %v2239
          %v2375 = vadd.f32 %v2225, %v2243
          %2376 = vst [vmem:[%s489] sm:$0xff] %v2248
          %2377 = vst [vmem:[%s489 + $0x8] sm:$0xff] %v2249
          %2378 = vst [vmem:[%s489 + $0x10] sm:$0xff] %v2250
          %2379 = vst [vmem:[%s489 + $0x18] sm:$0xff] %v2251
          %2380 = vst [vmem:[%s489 + $0x20] sm:$0xff] %v2252
          %2381 = vst [vmem:[%s489 + $0x28] sm:$0xff] %v2253
          %2382 = vst [vmem:[%s489 + $0x30] sm:$0xff] %v2254
          %2383 = vst [vmem:[%s489 + $0x38] sm:$0xff] %v2255
          %2384 = vst [vmem:[%s489 + $0x40] sm:$0xff] %v2256
          %2385 = vst [vmem:[%s489 + $0x48] sm:$0xff] %v2257
          %2386 = vst [vmem:[%s489 + $0x50] sm:$0xff] %v2258
          %2387 = vst [vmem:[%s489 + $0x58] sm:$0xff] %v2259
          %2388 = vst [vmem:[%s489 + $0x60] sm:$0xff] %v2260
          %2389 = vst [vmem:[%s489 + $0x68] sm:$0xff] %v2261
          %2390 = vst [vmem:[%s489 + $0x70] sm:$0xff] %v2262
          %2391 = vst [vmem:[%s489 + $0x78] sm:$0xff] %v2263
          %2392 = vst [vmem:[%s489 + $0x80] sm:$0xff] %v2264
          %2393 = vst [vmem:[%s489 + $0x88] sm:$0xff] %v2265
          %2394 = vst [vmem:[%s489 + $0x90] sm:$0xff] %v2266
          %2395 = vst [vmem:[%s489 + $0x98] sm:$0xff] %v2267
          %2396 = vst [vmem:[%s489 + $0xa0] sm:$0xff] %v2268
          %2397 = vst [vmem:[%s489 + $0xa8] sm:$0xff] %v2269
          %2398 = vst [vmem:[%s489 + $0xb0] sm:$0xff] %v2270
          %2399 = vst [vmem:[%s489 + $0xb8] sm:$0xff] %v2271
          %2400 = vst [vmem:[%s489 + $0xc0] sm:$0xff] %v2272
          %2401 = vst [vmem:[%s489 + $0xc8] sm:$0xff] %v2273
          %2402 = vst [vmem:[%s489 + $0xd0] sm:$0xff] %v2274
          %2403 = vst [vmem:[%s489 + $0xd8] sm:$0xff] %v2275
          %2404 = vst [vmem:[%s489 + $0xe0] sm:$0xff] %v2276
          %2405 = vst [vmem:[%s489 + $0xe8] sm:$0xff] %v2277
          %2406 = vst [vmem:[%s489 + $0xf0] sm:$0xff] %v2278
          %2407 = vst [vmem:[%s489 + $0xf8] sm:$0xff] %v2279
          %2408 = vst [vmem:[%s489 + $0x100] sm:$0xff] %v2280
          %2409 = vst [vmem:[%s489 + $0x108] sm:$0xff] %v2281
          %2410 = vst [vmem:[%s489 + $0x110] sm:$0xff] %v2282
          %2411 = vst [vmem:[%s489 + $0x118] sm:$0xff] %v2283
          %2412 = vst [vmem:[%s489 + $0x120] sm:$0xff] %v2284
          %2413 = vst [vmem:[%s489 + $0x128] sm:$0xff] %v2285
          %2414 = vst [vmem:[%s489 + $0x130] sm:$0xff] %v2286
          %2415 = vst [vmem:[%s489 + $0x138] sm:$0xff] %v2287
          %2416 = vst [vmem:[%s489 + $0x140] sm:$0xff] %v2288
          %2417 = vst [vmem:[%s489 + $0x148] sm:$0xff] %v2289
          %2418 = vst [vmem:[%s489 + $0x150] sm:$0xff] %v2290
          %2419 = vst [vmem:[%s489 + $0x158] sm:$0xff] %v2291
          %2420 = vst [vmem:[%s489 + $0x160] sm:$0xff] %v2292
          %2421 = vst [vmem:[%s489 + $0x168] sm:$0xff] %v2293
          %2422 = vst [vmem:[%s489 + $0x170] sm:$0xff] %v2294
          %2423 = vst [vmem:[%s489 + $0x178] sm:$0xff] %v2295
          %2424 = vst [vmem:[%s489 + $0x180] sm:$0xff] %v2296
          %2425 = vst [vmem:[%s489 + $0x188] sm:$0xff] %v2297
          %2426 = vst [vmem:[%s489 + $0x190] sm:$0xff] %v2298
          %2427 = vst [vmem:[%s489 + $0x198] sm:$0xff] %v2299
          %2428 = vst [vmem:[%s489 + $0x1a0] sm:$0xff] %v2300
          %2429 = vst [vmem:[%s489 + $0x1a8] sm:$0xff] %v2301
          %2430 = vst [vmem:[%s489 + $0x1b0] sm:$0xff] %v2302
          %2431 = vst [vmem:[%s489 + $0x1b8] sm:$0xff] %v2303
          %2432 = vst [vmem:[%s489 + $0x1c0] sm:$0xff] %v2304
          %2433 = vst [vmem:[%s489 + $0x1c8] sm:$0xff] %v2305
          %2434 = vst [vmem:[%s489 + $0x1d0] sm:$0xff] %v2306
          %2435 = vst [vmem:[%s489 + $0x1d8] sm:$0xff] %v2307
          %2436 = vst [vmem:[%s489 + $0x1e0] sm:$0xff] %v2308
          %2437 = vst [vmem:[%s489 + $0x1e8] sm:$0xff] %v2309
          %2438 = vst [vmem:[%s489 + $0x1f0] sm:$0xff] %v2310
          %2439 = vst [vmem:[%s489 + $0x1f8] sm:$0xff] %v2311
          %2440 = vst [vmem:[%s489 + $0x200] sm:$0xff] %v2312
          %2441 = vst [vmem:[%s489 + $0x208] sm:$0xff] %v2313
          %2442 = vst [vmem:[%s489 + $0x210] sm:$0xff] %v2314
          %2443 = vst [vmem:[%s489 + $0x218] sm:$0xff] %v2315
          %2444 = vst [vmem:[%s489 + $0x220] sm:$0xff] %v2316
          %2445 = vst [vmem:[%s489 + $0x228] sm:$0xff] %v2317
          %2446 = vst [vmem:[%s489 + $0x230] sm:$0xff] %v2318
          %2447 = vst [vmem:[%s489 + $0x238] sm:$0xff] %v2319
          %2448 = vst [vmem:[%s489 + $0x240] sm:$0xff] %v2320
          %2449 = vst [vmem:[%s489 + $0x248] sm:$0xff] %v2321
          %2450 = vst [vmem:[%s489 + $0x250] sm:$0xff] %v2322
          %2451 = vst [vmem:[%s489 + $0x258] sm:$0xff] %v2323
          %2452 = vst [vmem:[%s489 + $0x260] sm:$0xff] %v2324
          %2453 = vst [vmem:[%s489 + $0x268] sm:$0xff] %v2325
          %2454 = vst [vmem:[%s489 + $0x270] sm:$0xff] %v2326
          %2455 = vst [vmem:[%s489 + $0x278] sm:$0xff] %v2327
          %2456 = vst [vmem:[%s489 + $0x280] sm:$0xff] %v2328
          %2457 = vst [vmem:[%s489 + $0x288] sm:$0xff] %v2329
          %2458 = vst [vmem:[%s489 + $0x290] sm:$0xff] %v2330
          %2459 = vst [vmem:[%s489 + $0x298] sm:$0xff] %v2331
          %2460 = vst [vmem:[%s489 + $0x2a0] sm:$0xff] %v2332
          %2461 = vst [vmem:[%s489 + $0x2a8] sm:$0xff] %v2333
          %2462 = vst [vmem:[%s489 + $0x2b0] sm:$0xff] %v2334
          %2463 = vst [vmem:[%s489 + $0x2b8] sm:$0xff] %v2335
          %2464 = vst [vmem:[%s489 + $0x2c0] sm:$0xff] %v2336
          %2465 = vst [vmem:[%s489 + $0x2c8] sm:$0xff] %v2337
          %2466 = vst [vmem:[%s489 + $0x2d0] sm:$0xff] %v2338
          %2467 = vst [vmem:[%s489 + $0x2d8] sm:$0xff] %v2339
          %2468 = vst [vmem:[%s489 + $0x2e0] sm:$0xff] %v2340
          %2469 = vst [vmem:[%s489 + $0x2e8] sm:$0xff] %v2341
          %2470 = vst [vmem:[%s489 + $0x2f0] sm:$0xff] %v2342
          %2471 = vst [vmem:[%s489 + $0x2f8] sm:$0xff] %v2343
          %2472 = vst [vmem:[%s489 + $0x300] sm:$0xff] %v2344
          %2473 = vst [vmem:[%s489 + $0x308] sm:$0xff] %v2345
          %2474 = vst [vmem:[%s489 + $0x310] sm:$0xff] %v2346
          %2475 = vst [vmem:[%s489 + $0x318] sm:$0xff] %v2347
          %2476 = vst [vmem:[%s489 + $0x320] sm:$0xff] %v2348
          %2477 = vst [vmem:[%s489 + $0x328] sm:$0xff] %v2349
          %2478 = vst [vmem:[%s489 + $0x330] sm:$0xff] %v2350
          %2479 = vst [vmem:[%s489 + $0x338] sm:$0xff] %v2351
          %2480 = vst [vmem:[%s489 + $0x340] sm:$0xff] %v2352
          %2481 = vst [vmem:[%s489 + $0x348] sm:$0xff] %v2353
          %2482 = vst [vmem:[%s489 + $0x350] sm:$0xff] %v2354
          %2483 = vst [vmem:[%s489 + $0x358] sm:$0xff] %v2355
          %2484 = vst [vmem:[%s489 + $0x360] sm:$0xff] %v2356
          %2485 = vst [vmem:[%s489 + $0x368] sm:$0xff] %v2357
          %2486 = vst [vmem:[%s489 + $0x370] sm:$0xff] %v2358
          %2487 = vst [vmem:[%s489 + $0x378] sm:$0xff] %v2359
          %2488 = vst [vmem:[%s489 + $0x380] sm:$0xff] %v2360
          %2489 = vst [vmem:[%s489 + $0x388] sm:$0xff] %v2361
          %2490 = vst [vmem:[%s489 + $0x390] sm:$0xff] %v2362
          %2491 = vst [vmem:[%s489 + $0x398] sm:$0xff] %v2363
          %2492 = vst [vmem:[%s489 + $0x3a0] sm:$0xff] %v2364
          %2493 = vst [vmem:[%s489 + $0x3a8] sm:$0xff] %v2365
          %2494 = vst [vmem:[%s489 + $0x3b0] sm:$0xff] %v2366
          %2495 = vst [vmem:[%s489 + $0x3b8] sm:$0xff] %v2367
          %2496 = vst [vmem:[%s489 + $0x3c0] sm:$0xff] %v2368
          %2497 = vst [vmem:[%s489 + $0x3c8] sm:$0xff] %v2369
          %2498 = vst [vmem:[%s489 + $0x3d0] sm:$0xff] %v2370
          %2499 = vst [vmem:[%s489 + $0x3d8] sm:$0xff] %v2371
          %2500 = vst [vmem:[%s489 + $0x3e0] sm:$0xff] %v2372
          %2501 = vst [vmem:[%s489 + $0x3e8] sm:$0xff] %v2373
          %2502 = vst [vmem:[%s489 + $0x3f0] sm:$0xff] %v2374
          %2503 = vst [vmem:[%s489 + $0x3f8] sm:$0xff] %v2375
          %v2504 = vadd.f32 %v2248, %v2252
          %v2505 = vadd.f32 %v2504, %v2256
          %v2506 = vadd.f32 %v2505, %v2260
          %v2507 = vadd.f32 %v2506, %v2264
          %v2508 = vadd.f32 %v2507, %v2268
          %v2509 = vadd.f32 %v2508, %v2272
          %v2510 = vadd.f32 %v2509, %v2276
          %v2511 = vadd.f32 %v2510, %v2280
          %v2512 = vadd.f32 %v2511, %v2284
          %v2513 = vadd.f32 %v2512, %v2288
          %v2514 = vadd.f32 %v2513, %v2292
          %v2515 = vadd.f32 %v2514, %v2296
          %v2516 = vadd.f32 %v2515, %v2300
          %v2517 = vadd.f32 %v2516, %v2304
          %v2518 = vadd.f32 %v2517, %v2308
          %v2519 = vadd.f32 %v2518, %v2312
          %v2520 = vadd.f32 %v2519, %v2316
          %v2521 = vadd.f32 %v2520, %v2320
          %v2522 = vadd.f32 %v2521, %v2324
          %v2523 = vadd.f32 %v2522, %v2328
          %v2524 = vadd.f32 %v2523, %v2332
          %v2525 = vadd.f32 %v2524, %v2336
          %v2526 = vadd.f32 %v2525, %v2340
          %v2527 = vadd.f32 %v2526, %v2344
          %v2528 = vadd.f32 %v2527, %v2348
          %v2529 = vadd.f32 %v2528, %v2352
          %v2530 = vadd.f32 %v2529, %v2356
          %v2531 = vadd.f32 %v2530, %v2360
          %v2532 = vadd.f32 %v2531, %v2364
          %v2533 = vadd.f32 %v2532, %v2368
          %v2534 = vadd.f32 %v2533, %v2372
          %v2535 = vrot.slane %v2534, 4
          %v2536 = vadd.f32 %v2534, %v2535
          %v2537 = vrot.slane %v2536, 2
          %v2538 = vadd.f32 %v2536, %v2537
          %v2539 = vrot.slane %v2538, 1
          %v2540 = vadd.f32 %v2538, %v2539
          %v2541 = vadd.f32 %v2249, %v2253
          %v2542 = vadd.f32 %v2541, %v2257
          %v2543 = vadd.f32 %v2542, %v2261
          %v2544 = vadd.f32 %v2543, %v2265
          %v2545 = vadd.f32 %v2544, %v2269
          %v2546 = vadd.f32 %v2545, %v2273
          %v2547 = vadd.f32 %v2546, %v2277
          %v2548 = vadd.f32 %v2547, %v2281
          %v2549 = vadd.f32 %v2548, %v2285
          %v2550 = vadd.f32 %v2549, %v2289
          %v2551 = vadd.f32 %v2550, %v2293
          %v2552 = vadd.f32 %v2551, %v2297
          %v2553 = vadd.f32 %v2552, %v2301
          %v2554 = vadd.f32 %v2553, %v2305
          %v2555 = vadd.f32 %v2554, %v2309
          %v2556 = vadd.f32 %v2555, %v2313
          %v2557 = vadd.f32 %v2556, %v2317
          %v2558 = vadd.f32 %v2557, %v2321
          %v2559 = vadd.f32 %v2558, %v2325
          %v2560 = vadd.f32 %v2559, %v2329
          %v2561 = vadd.f32 %v2560, %v2333
          %v2562 = vadd.f32 %v2561, %v2337
          %v2563 = vadd.f32 %v2562, %v2341
          %v2564 = vadd.f32 %v2563, %v2345
          %v2565 = vadd.f32 %v2564, %v2349
          %v2566 = vadd.f32 %v2565, %v2353
          %v2567 = vadd.f32 %v2566, %v2357
          %v2568 = vadd.f32 %v2567, %v2361
          %v2569 = vadd.f32 %v2568, %v2365
          %v2570 = vadd.f32 %v2569, %v2369
          %v2571 = vadd.f32 %v2570, %v2373
          %v2572 = vrot.slane %v2571, 4
          %v2573 = vadd.f32 %v2571, %v2572
          %v2574 = vrot.slane %v2573, 2
          %v2575 = vadd.f32 %v2573, %v2574
          %v2576 = vrot.slane %v2575, 1
          %v2577 = vadd.f32 %v2575, %v2576
          %v2578 = vadd.f32 %v2250, %v2254
          %v2579 = vadd.f32 %v2578, %v2258
          %v2580 = vadd.f32 %v2579, %v2262
          %v2581 = vadd.f32 %v2580, %v2266
          %v2582 = vadd.f32 %v2581, %v2270
          %v2583 = vadd.f32 %v2582, %v2274
          %v2584 = vadd.f32 %v2583, %v2278
          %v2585 = vadd.f32 %v2584, %v2282
          %v2586 = vadd.f32 %v2585, %v2286
          %v2587 = vadd.f32 %v2586, %v2290
          %v2588 = vadd.f32 %v2587, %v2294
          %v2589 = vadd.f32 %v2588, %v2298
          %v2590 = vadd.f32 %v2589, %v2302
          %v2591 = vadd.f32 %v2590, %v2306
          %v2592 = vadd.f32 %v2591, %v2310
          %v2593 = vadd.f32 %v2592, %v2314
          %v2594 = vadd.f32 %v2593, %v2318
          %v2595 = vadd.f32 %v2594, %v2322
          %v2596 = vadd.f32 %v2595, %v2326
          %v2597 = vadd.f32 %v2596, %v2330
          %v2598 = vadd.f32 %v2597, %v2334
          %v2599 = vadd.f32 %v2598, %v2338
          %v2600 = vadd.f32 %v2599, %v2342
          %v2601 = vadd.f32 %v2600, %v2346
          %v2602 = vadd.f32 %v2601, %v2350
          %v2603 = vadd.f32 %v2602, %v2354
          %v2604 = vadd.f32 %v2603, %v2358
          %v2605 = vadd.f32 %v2604, %v2362
          %v2606 = vadd.f32 %v2605, %v2366
          %v2607 = vadd.f32 %v2606, %v2370
          %v2608 = vadd.f32 %v2607, %v2374
          %v2609 = vrot.slane %v2608, 4
          %v2610 = vadd.f32 %v2608, %v2609
          %v2611 = vrot.slane %v2610, 2
          %v2612 = vadd.f32 %v2610, %v2611
          %v2613 = vrot.slane %v2612, 1
          %v2614 = vadd.f32 %v2612, %v2613
          %v2615 = vadd.f32 %v2251, %v2255
          %v2616 = vadd.f32 %v2615, %v2259
          %v2617 = vadd.f32 %v2616, %v2263
          %v2618 = vadd.f32 %v2617, %v2267
          %v2619 = vadd.f32 %v2618, %v2271
          %v2620 = vadd.f32 %v2619, %v2275
          %v2621 = vadd.f32 %v2620, %v2279
          %v2622 = vadd.f32 %v2621, %v2283
          %v2623 = vadd.f32 %v2622, %v2287
          %v2624 = vadd.f32 %v2623, %v2291
          %v2625 = vadd.f32 %v2624, %v2295
          %v2626 = vadd.f32 %v2625, %v2299
          %v2627 = vadd.f32 %v2626, %v2303
          %v2628 = vadd.f32 %v2627, %v2307
          %v2629 = vadd.f32 %v2628, %v2311
          %v2630 = vadd.f32 %v2629, %v2315
          %v2631 = vadd.f32 %v2630, %v2319
          %v2632 = vadd.f32 %v2631, %v2323
          %v2633 = vadd.f32 %v2632, %v2327
          %v2634 = vadd.f32 %v2633, %v2331
          %v2635 = vadd.f32 %v2634, %v2335
          %v2636 = vadd.f32 %v2635, %v2339
          %v2637 = vadd.f32 %v2636, %v2343
          %v2638 = vadd.f32 %v2637, %v2347
          %v2639 = vadd.f32 %v2638, %v2351
          %v2640 = vadd.f32 %v2639, %v2355
          %v2641 = vadd.f32 %v2640, %v2359
          %v2642 = vadd.f32 %v2641, %v2363
          %v2643 = vadd.f32 %v2642, %v2367
          %v2644 = vadd.f32 %v2643, %v2371
          %v2645 = vadd.f32 %v2644, %v2375
          %v2646 = vrot.slane %v2645, 4
          %v2647 = vadd.f32 %v2645, %v2646
          %v2648 = vrot.slane %v2647, 2
          %v2649 = vadd.f32 %v2647, %v2648
          %v2650 = vrot.slane %v2649, 1
          %v2651 = vadd.f32 %v2649, %v2650
          %v2652 = vmul.f32 %v2248, %v2248
          %v2653 = vmul.f32 %v2249, %v2249
          %v2654 = vmul.f32 %v2250, %v2250
          %v2655 = vmul.f32 %v2251, %v2251
          %v2656 = vmul.f32 %v2252, %v2252
          %v2657 = vmul.f32 %v2253, %v2253
          %v2658 = vmul.f32 %v2254, %v2254
          %v2659 = vmul.f32 %v2255, %v2255
          %v2660 = vmul.f32 %v2256, %v2256
          %v2661 = vmul.f32 %v2257, %v2257
          %v2662 = vmul.f32 %v2258, %v2258
          %v2663 = vmul.f32 %v2259, %v2259
          %v2664 = vmul.f32 %v2260, %v2260
          %v2665 = vmul.f32 %v2261, %v2261
          %v2666 = vmul.f32 %v2262, %v2262
          %v2667 = vmul.f32 %v2263, %v2263
          %v2668 = vmul.f32 %v2264, %v2264
          %v2669 = vmul.f32 %v2265, %v2265
          %v2670 = vmul.f32 %v2266, %v2266
          %v2671 = vmul.f32 %v2267, %v2267
          %v2672 = vmul.f32 %v2268, %v2268
          %v2673 = vmul.f32 %v2269, %v2269
          %v2674 = vmul.f32 %v2270, %v2270
          %v2675 = vmul.f32 %v2271, %v2271
          %v2676 = vmul.f32 %v2272, %v2272
          %v2677 = vmul.f32 %v2273, %v2273
          %v2678 = vmul.f32 %v2274, %v2274
          %v2679 = vmul.f32 %v2275, %v2275
          %v2680 = vmul.f32 %v2276, %v2276
          %v2681 = vmul.f32 %v2277, %v2277
          %v2682 = vmul.f32 %v2278, %v2278
          %v2683 = vmul.f32 %v2279, %v2279
          %v2684 = vmul.f32 %v2280, %v2280
          %v2685 = vmul.f32 %v2281, %v2281
          %v2686 = vmul.f32 %v2282, %v2282
          %v2687 = vmul.f32 %v2283, %v2283
          %v2688 = vmul.f32 %v2284, %v2284
          %v2689 = vmul.f32 %v2285, %v2285
          %v2690 = vmul.f32 %v2286, %v2286
          %v2691 = vmul.f32 %v2287, %v2287
          %v2692 = vmul.f32 %v2288, %v2288
          %v2693 = vmul.f32 %v2289, %v2289
          %v2694 = vmul.f32 %v2290, %v2290
          %v2695 = vmul.f32 %v2291, %v2291
          %v2696 = vmul.f32 %v2292, %v2292
          %v2697 = vmul.f32 %v2293, %v2293
          %v2698 = vmul.f32 %v2294, %v2294
          %v2699 = vmul.f32 %v2295, %v2295
          %v2700 = vmul.f32 %v2296, %v2296
          %v2701 = vmul.f32 %v2297, %v2297
          %v2702 = vmul.f32 %v2298, %v2298
          %v2703 = vmul.f32 %v2299, %v2299
          %v2704 = vmul.f32 %v2300, %v2300
          %v2705 = vmul.f32 %v2301, %v2301
          %v2706 = vmul.f32 %v2302, %v2302
          %v2707 = vmul.f32 %v2303, %v2303
          %v2708 = vmul.f32 %v2304, %v2304
          %v2709 = vmul.f32 %v2305, %v2305
          %v2710 = vmul.f32 %v2306, %v2306
          %v2711 = vmul.f32 %v2307, %v2307
          %v2712 = vmul.f32 %v2308, %v2308
          %v2713 = vmul.f32 %v2309, %v2309
          %v2714 = vmul.f32 %v2310, %v2310
          %v2715 = vmul.f32 %v2311, %v2311
          %v2716 = vmul.f32 %v2312, %v2312
          %v2717 = vmul.f32 %v2313, %v2313
          %v2718 = vmul.f32 %v2314, %v2314
          %v2719 = vmul.f32 %v2315, %v2315
          %v2720 = vmul.f32 %v2316, %v2316
          %v2721 = vmul.f32 %v2317, %v2317
          %v2722 = vmul.f32 %v2318, %v2318
          %v2723 = vmul.f32 %v2319, %v2319
          %v2724 = vmul.f32 %v2320, %v2320
          %v2725 = vmul.f32 %v2321, %v2321
          %v2726 = vmul.f32 %v2322, %v2322
          %v2727 = vmul.f32 %v2323, %v2323
          %v2728 = vmul.f32 %v2324, %v2324
          %v2729 = vmul.f32 %v2325, %v2325
          %v2730 = vmul.f32 %v2326, %v2326
          %v2731 = vmul.f32 %v2327, %v2327
          %v2732 = vmul.f32 %v2328, %v2328
          %v2733 = vmul.f32 %v2329, %v2329
          %v2734 = vmul.f32 %v2330, %v2330
          %v2735 = vmul.f32 %v2331, %v2331
          %v2736 = vmul.f32 %v2332, %v2332
          %v2737 = vmul.f32 %v2333, %v2333
          %v2738 = vmul.f32 %v2334, %v2334
          %v2739 = vmul.f32 %v2335, %v2335
          %v2740 = vmul.f32 %v2336, %v2336
          %v2741 = vmul.f32 %v2337, %v2337
          %v2742 = vmul.f32 %v2338, %v2338
          %v2743 = vmul.f32 %v2339, %v2339
          %v2744 = vmul.f32 %v2340, %v2340
          %v2745 = vmul.f32 %v2341, %v2341
          %v2746 = vmul.f32 %v2342, %v2342
          %v2747 = vmul.f32 %v2343, %v2343
          %v2748 = vmul.f32 %v2344, %v2344
          %v2749 = vmul.f32 %v2345, %v2345
          %v2750 = vmul.f32 %v2346, %v2346
          %v2751 = vmul.f32 %v2347, %v2347
          %v2752 = vmul.f32 %v2348, %v2348
          %v2753 = vmul.f32 %v2349, %v2349
          %v2754 = vmul.f32 %v2350, %v2350
          %v2755 = vmul.f32 %v2351, %v2351
          %v2756 = vmul.f32 %v2352, %v2352
          %v2757 = vmul.f32 %v2353, %v2353
          %v2758 = vmul.f32 %v2354, %v2354
          %v2759 = vmul.f32 %v2355, %v2355
          %v2760 = vmul.f32 %v2356, %v2356
          %v2761 = vmul.f32 %v2357, %v2357
          %v2762 = vmul.f32 %v2358, %v2358
          %v2763 = vmul.f32 %v2359, %v2359
          %v2764 = vmul.f32 %v2360, %v2360
          %v2765 = vmul.f32 %v2361, %v2361
          %v2766 = vmul.f32 %v2362, %v2362
          %v2767 = vmul.f32 %v2363, %v2363
          %v2768 = vmul.f32 %v2364, %v2364
          %v2769 = vmul.f32 %v2365, %v2365
          %v2770 = vmul.f32 %v2366, %v2366
          %v2771 = vmul.f32 %v2367, %v2367
          %v2772 = vmul.f32 %v2368, %v2368
          %v2773 = vmul.f32 %v2369, %v2369
          %v2774 = vmul.f32 %v2370, %v2370
          %v2775 = vmul.f32 %v2371, %v2371
          %v2776 = vmul.f32 %v2372, %v2372
          %v2777 = vmul.f32 %v2373, %v2373
          %v2778 = vmul.f32 %v2374, %v2374
          %v2779 = vmul.f32 %v2375, %v2375
          %v2780 = vadd.f32 %v2652, %v2656
          %v2781 = vadd.f32 %v2780, %v2660
          %v2782 = vadd.f32 %v2781, %v2664
          %v2783 = vadd.f32 %v2782, %v2668
          %v2784 = vadd.f32 %v2783, %v2672
          %v2785 = vadd.f32 %v2784, %v2676
          %v2786 = vadd.f32 %v2785, %v2680
          %v2787 = vadd.f32 %v2786, %v2684
          %v2788 = vadd.f32 %v2787, %v2688
          %v2789 = vadd.f32 %v2788, %v2692
          %v2790 = vadd.f32 %v2789, %v2696
          %v2791 = vadd.f32 %v2790, %v2700
          %v2792 = vadd.f32 %v2791, %v2704
          %v2793 = vadd.f32 %v2792, %v2708
          %v2794 = vadd.f32 %v2793, %v2712
          %v2795 = vadd.f32 %v2794, %v2716
          %v2796 = vadd.f32 %v2795, %v2720
          %v2797 = vadd.f32 %v2796, %v2724
          %v2798 = vadd.f32 %v2797, %v2728
          %v2799 = vadd.f32 %v2798, %v2732
          %v2800 = vadd.f32 %v2799, %v2736
          %v2801 = vadd.f32 %v2800, %v2740
          %v2802 = vadd.f32 %v2801, %v2744
          %v2803 = vadd.f32 %v2802, %v2748
          %v2804 = vadd.f32 %v2803, %v2752
          %v2805 = vadd.f32 %v2804, %v2756
          %v2806 = vadd.f32 %v2805, %v2760
          %v2807 = vadd.f32 %v2806, %v2764
          %v2808 = vadd.f32 %v2807, %v2768
          %v2809 = vadd.f32 %v2808, %v2772
          %v2810 = vadd.f32 %v2809, %v2776
          %v2811 = vrot.slane %v2810, 4
          %v2812 = vadd.f32 %v2810, %v2811
          %v2813 = vrot.slane %v2812, 2
          %v2814 = vadd.f32 %v2812, %v2813
          %v2815 = vrot.slane %v2814, 1
          %v2816 = vadd.f32 %v2814, %v2815
          %v2817 = vadd.f32 %v2653, %v2657
          %v2818 = vadd.f32 %v2817, %v2661
          %v2819 = vadd.f32 %v2818, %v2665
          %v2820 = vadd.f32 %v2819, %v2669
          %v2821 = vadd.f32 %v2820, %v2673
          %v2822 = vadd.f32 %v2821, %v2677
          %v2823 = vadd.f32 %v2822, %v2681
          %v2824 = vadd.f32 %v2823, %v2685
          %v2825 = vadd.f32 %v2824, %v2689
          %v2826 = vadd.f32 %v2825, %v2693
          %v2827 = vadd.f32 %v2826, %v2697
          %v2828 = vadd.f32 %v2827, %v2701
          %v2829 = vadd.f32 %v2828, %v2705
          %v2830 = vadd.f32 %v2829, %v2709
          %v2831 = vadd.f32 %v2830, %v2713
          %v2832 = vadd.f32 %v2831, %v2717
          %v2833 = vadd.f32 %v2832, %v2721
          %v2834 = vadd.f32 %v2833, %v2725
          %v2835 = vadd.f32 %v2834, %v2729
          %v2836 = vadd.f32 %v2835, %v2733
          %v2837 = vadd.f32 %v2836, %v2737
          %v2838 = vadd.f32 %v2837, %v2741
          %v2839 = vadd.f32 %v2838, %v2745
          %v2840 = vadd.f32 %v2839, %v2749
          %v2841 = vadd.f32 %v2840, %v2753
          %v2842 = vadd.f32 %v2841, %v2757
          %v2843 = vadd.f32 %v2842, %v2761
          %v2844 = vadd.f32 %v2843, %v2765
          %v2845 = vadd.f32 %v2844, %v2769
          %v2846 = vadd.f32 %v2845, %v2773
          %v2847 = vadd.f32 %v2846, %v2777
          %v2848 = vrot.slane %v2847, 4
          %v2849 = vadd.f32 %v2847, %v2848
          %v2850 = vrot.slane %v2849, 2
          %v2851 = vadd.f32 %v2849, %v2850
          %v2852 = vrot.slane %v2851, 1
          %v2853 = vadd.f32 %v2851, %v2852
          %v2854 = vadd.f32 %v2654, %v2658
          %v2855 = vadd.f32 %v2854, %v2662
          %v2856 = vadd.f32 %v2855, %v2666
          %v2857 = vadd.f32 %v2856, %v2670
          %v2858 = vadd.f32 %v2857, %v2674
          %v2859 = vadd.f32 %v2858, %v2678
          %v2860 = vadd.f32 %v2859, %v2682
          %v2861 = vadd.f32 %v2860, %v2686
          %v2862 = vadd.f32 %v2861, %v2690
          %v2863 = vadd.f32 %v2862, %v2694
          %v2864 = vadd.f32 %v2863, %v2698
          %v2865 = vadd.f32 %v2864, %v2702
          %v2866 = vadd.f32 %v2865, %v2706
          %v2867 = vadd.f32 %v2866, %v2710
          %v2868 = vadd.f32 %v2867, %v2714
          %v2869 = vadd.f32 %v2868, %v2718
          %v2870 = vadd.f32 %v2869, %v2722
          %v2871 = vadd.f32 %v2870, %v2726
          %v2872 = vadd.f32 %v2871, %v2730
          %v2873 = vadd.f32 %v2872, %v2734
          %v2874 = vadd.f32 %v2873, %v2738
          %v2875 = vadd.f32 %v2874, %v2742
          %v2876 = vadd.f32 %v2875, %v2746
          %v2877 = vadd.f32 %v2876, %v2750
          %v2878 = vadd.f32 %v2877, %v2754
          %v2879 = vadd.f32 %v2878, %v2758
          %v2880 = vadd.f32 %v2879, %v2762
          %v2881 = vadd.f32 %v2880, %v2766
          %v2882 = vadd.f32 %v2881, %v2770
          %v2883 = vadd.f32 %v2882, %v2774
          %v2884 = vadd.f32 %v2883, %v2778
          %v2885 = vrot.slane %v2884, 4
          %v2886 = vadd.f32 %v2884, %v2885
          %v2887 = vrot.slane %v2886, 2
          %v2888 = vadd.f32 %v2886, %v2887
          %v2889 = vrot.slane %v2888, 1
          %v2890 = vadd.f32 %v2888, %v2889
          %v2891 = vadd.f32 %v2655, %v2659
          %v2892 = vadd.f32 %v2891, %v2663
          %v2893 = vadd.f32 %v2892, %v2667
          %v2894 = vadd.f32 %v2893, %v2671
          %v2895 = vadd.f32 %v2894, %v2675
          %v2896 = vadd.f32 %v2895, %v2679
          %v2897 = vadd.f32 %v2896, %v2683
          %v2898 = vadd.f32 %v2897, %v2687
          %v2899 = vadd.f32 %v2898, %v2691
          %v2900 = vadd.f32 %v2899, %v2695
          %v2901 = vadd.f32 %v2900, %v2699
          %v2902 = vadd.f32 %v2901, %v2703
          %v2903 = vadd.f32 %v2902, %v2707
          %v2904 = vadd.f32 %v2903, %v2711
          %v2905 = vadd.f32 %v2904, %v2715
          %v2906 = vadd.f32 %v2905, %v2719
          %v2907 = vadd.f32 %v2906, %v2723
          %v2908 = vadd.f32 %v2907, %v2727
          %v2909 = vadd.f32 %v2908, %v2731
          %v2910 = vadd.f32 %v2909, %v2735
          %v2911 = vadd.f32 %v2910, %v2739
          %v2912 = vadd.f32 %v2911, %v2743
          %v2913 = vadd.f32 %v2912, %v2747
          %v2914 = vadd.f32 %v2913, %v2751
          %v2915 = vadd.f32 %v2914, %v2755
          %v2916 = vadd.f32 %v2915, %v2759
          %v2917 = vadd.f32 %v2916, %v2763
          %v2918 = vadd.f32 %v2917, %v2767
          %v2919 = vadd.f32 %v2918, %v2771
          %v2920 = vadd.f32 %v2919, %v2775
          %v2921 = vadd.f32 %v2920, %v2779
          %v2922 = vrot.slane %v2921, 4
          %v2923 = vadd.f32 %v2921, %v2922
          %v2924 = vrot.slane %v2923, 2
          %v2925 = vadd.f32 %v2923, %v2924
          %v2926 = vrot.slane %v2925, 1
          %v2927 = vadd.f32 %v2925, %v2926
          %vm2928 = vcmask 1040384
          %v2929 = vsel %vm2928, %v2540, %v2816
          %v2930 = vsel %vm2928, %v2577, %v2853
          %v2931 = vsel %vm2928, %v2614, %v2890
          %v2932 = vsel %vm2928, %v2651, %v2927
          %v2937 = vcombine.low %v2929, %v2930
          %v2938 = vcombine.low %v2931, %v2932
          %v2940 = vunpack.c.l.s4 1983009808
          %v2941 = vunpack.c.0.s8 %v2940
          %v2942 = vlaneseq
          %v2943 = vshrl.u32 %v2942, 7
          %v2944 = vsub.s32 %v2941, %v2943
          %v2945 = vrot.slane %v2937, %v2944
          %v2947 = vunpack.c.l.s4 1983009808
          %v2948 = vunpack.c.0.s8 %v2947
          %v2949 = vlaneseq
          %v2950 = vshrl.u32 %v2949, 7
          %v2951 = vsub.s32 %v2948, %v2950
          %v2952 = vrot.slane %v2938, %v2951
          %v2953 = vcombine.low %v2945, %v2952
          %2955 = vst [vmem:[%s495] sm:$0xff] %v2953
        $region71: #{simclr_projection_head.4} parent=58 // pred_fallthru
          _
        %s2956 = smul.u32 32, %s22
        %p2957 = scmp.lt.s32.totalorder %s2956, 63
        %s2958 = scalar_select %p2957, %s2956, 63
        %s2959 = smul.addr %s2958, 4
        %s2960 = smul.addr %s2959, 8
        %s2961 = scalar_lea.vmem %s5, %s2960
        %p2962 = scmp.lt.s32.totalorder %s22, 1
        %s2963 = scalar_select %p2962, %s22, 1
        %s2964 = smul.addr %s2963, 4
        %s2965 = smul.addr %s2964, 2
        %s2966 = scalar_lea.vmem %s6, %s2965
        // Predicated region
        $region72: #{simclr_projection_head.4} parent=58 // pred_check
          %p2967 = pneg %p175
        $region73: #{simclr_projection_head.4} parent=58 // pred_check_branch
          %2969 = sbr.rel (%p2967) target = $region75
        $region74: #{simclr_projection_head.4} parent=58 // pred_region
          %s2970 = smul.u32 32, %s22
        $region75: #{simclr_projection_head.4} parent=58 // pred_fallthru
          _
        // Predicated region
        $region76: #{simclr_projection_head.4} parent=58 // pred_check
          %p2971 = pneg %p201
        $region77: #{simclr_projection_head.4} parent=58 // pred_check_branch
          %2973 = sbr.rel (%p2971) target = $region79
        $region78: #{simclr_projection_head.4} parent=58 // pred_region
          _
        $region79: #{simclr_projection_head.4} parent=58 // pred_fallthru
          _
      $region59: #{simclr_projection_head.4} parent=5 // pred_fallthru
        _
      %p2974 = scmp.le.s32.totalorder 2, %s13
      // Predicated region
      $region80: #{simclr_projection_head.4} parent=5 // pred_check
        %p2975 = pneg %p2974
      $region81: #{simclr_projection_head.4} parent=5 // pred_check_branch
        %2977 = sbr.rel (%p2975) target = $region83
      $region82: #{simclr_projection_head.4} parent=5 // pred_region
        %s2978 = ssub.s32 %s13, 2
        // Predicated region
        $region84: #{simclr_projection_head.4} parent=82 // pred_check
          %p2979 = pneg %p181
        $region85: #{simclr_projection_head.4} parent=82 // pred_check_branch
          %2981 = sbr.rel (%p2979) target = $region87
        $region86: #{simclr_projection_head.4} parent=82 // pred_region
          %s2982 = smul.u32 32, %s24
          %p2983 = scmp.lt.s32.totalorder %s2982, 63
          %s2984 = scalar_select %p2983, %s2982, 63
          %s2985 = smul.addr %s2984, 4
          %s2986 = smul.addr %s2985, 8
          %s2987 = scalar_lea.vmem %s5, %s2986
        $region87: #{simclr_projection_head.4} parent=82 // pred_fallthru
          _
        // Predicated region
        $region88: #{simclr_projection_head.4} parent=82 // pred_check
          %p2988 = pneg %p207
        $region89: #{simclr_projection_head.4} parent=82 // pred_check_branch
          %2990 = sbr.rel (%p2988) target = $region91
        $region90: #{simclr_projection_head.4} parent=82 // pred_region
          %p2991 = scmp.lt.s32.totalorder %s24, 1
          %s2992 = scalar_select %p2991, %s24, 1
          %s2993 = smul.addr %s2992, 4
          %s2994 = smul.addr %s2993, 2
          %s2995 = scalar_lea.vmem %s6, %s2994
        $region91: #{simclr_projection_head.4} parent=82 // pred_fallthru
          _
      $region83: #{simclr_projection_head.4} parent=5 // pred_fallthru
        _
    $region6: #{simclr_projection_head.4} parent=1 // loop_footer
      %s17 = sadd.s32 1, %s13
    $region7: #{simclr_projection_head.4} parent=1 // loop_footer_branch
      %12 = sbr.rel target = $region3
    $region8: #{simclr_projection_head.4} parent=1 // loop_exit
      _

</llo_original>
